<compile_context>
chip_gen: v5e
topology: v5e:2x2
jax: 0.10.0
libtpu: 0.0.40
codegen_flags: <defaults>
</compile_context>

<pallas_src>
import functools

import jax
import jax.numpy as jnp
from jax.experimental import pallas as pl
from jax.experimental.pallas import tpu as pltpu

_VMEM_LIMIT_BYTES = 32 * 1024 * 1024   # safe on v5e/v6e (128 MiB) and v7x (64 MiB)


# ----------------------------- Pallas kernels ------------------------------ #

def _conv_row_kernel(w_ref, scale_ref, shift_ref, *rest, kh, kw, wo, relu,
                     collect_stats):
    """One output row of a KxK stride-1 conv (+ fused scale/shift/ReLU epilogue).

    in refs : w (kh,kw,Cin,Cout), scale (1,Cout) f32, shift (1,Cout) f32,
              kh rows of the padded NHWC activation, each (W_in, Cin).
    out refs: o (Wo, Cout) f32  [+ sum (1,Cout), sumsq (1,Cout) if collect_stats].
    """
    x_refs = rest[:kh]
    o_ref = rest[kh]
    cin = x_refs[0].shape[-1]
    cout = o_ref.shape[-1]

    acc = jnp.zeros((wo, cout), jnp.float32)
    for di in range(kh):
        row = x_refs[di][...]                       # (W_in, Cin)
        for dj in range(kw):
            tap = row[dj:dj + wo, :]                # (Wo, Cin)
            wk = w_ref[di, dj]                      # (Cin, Cout)
            if cin == 1:
                # Degenerate K=1 contraction: cheaper as a VPU broadcast-multiply.
                acc = acc + tap.astype(jnp.float32) * wk.astype(jnp.float32)
            else:
                acc = acc + jnp.dot(tap, wk, preferred_element_type=jnp.float32)

    y = acc * scale_ref[...] + shift_ref[...]
    if relu:
        y = jnp.maximum(y, 0.0)
    o_ref[...] = y.astype(o_ref.dtype)

    if collect_stats:
        sum_ref, sq_ref = rest[kh + 1], rest[kh + 2]

        @pl.when((pl.program_id(0) == 0) & (pl.program_id(1) == 0))
        def _init():
            sum_ref[...] = jnp.zeros_like(sum_ref)
            sq_ref[...] = jnp.zeros_like(sq_ref)

        # Per-channel partial sums for BatchNorm batch statistics; XLU column
        # reductions replace the old (1,P)@(P,C) ones-matmuls.
        sum_ref[...] += jnp.sum(acc, axis=0, keepdims=True)
        sq_ref[...] += jnp.sum(acc * acc, axis=0, keepdims=True)


def _affine_relu_kernel(scale_ref, shift_ref, y_ref, o_ref):
    # BatchNorm pass 2: relu(y * scale + shift) on one (Wo, C) row block.
    o_ref[...] = jnp.maximum(
        y_ref[...] * scale_ref[...] + shift_ref[...], 0.0).astype(o_ref.dtype)


def _pool_kernel(x_ref, o_ref, *, ph, pw, c):
    # x block: (ph, Wo, pw*C) -> max over the ph row taps and pw column taps.
    x = x_ref[...]
    m = x[0]
    for i in range(1, ph):
        m = jnp.maximum(m, x[i])
    r = m[:, :c]
    for j in range(1, pw):
        r = jnp.maximum(r, m[:, j * c:(j + 1) * c])
    o_ref[...] = r.astype(o_ref.dtype)


# ------------------------------ layer wrappers ----------------------------- #

def _conv_call(x, w_oihw, scale, shift, *, pad, relu, collect_stats, mxu_dtype):
    n, h, w, cin = x.shape
    cout, cin_w, kh, kw = w_oihw.shape
    assert cin == cin_w
    ho = h + 2 * pad - kh + 1
    wo = w + 2 * pad - kw + 1
    win = w + 2 * pad

    xp = jnp.pad(x, ((0, 0), (pad, pad), (pad, pad), (0, 0))) if pad else x
    xp = xp.astype(mxu_dtype)                                     # bf16 to the MXU
    wt = jnp.transpose(w_oihw, (2, 3, 1, 0)).astype(mxu_dtype)    # (kh,kw,Cin,Cout)
    scale = jnp.asarray(scale, jnp.float32).reshape(1, cout)
    shift = jnp.asarray(shift, jnp.float32).reshape(1, cout)

    in_specs = [
        # constant index_maps -> single DMA, VMEM-resident for the whole grid
        pl.BlockSpec((kh, kw, cin, cout), lambda i, j: (0, 0, 0, 0)),
        pl.BlockSpec((1, cout), lambda i, j: (0, 0)),
        pl.BlockSpec((1, cout), lambda i, j: (0, 0)),
    ] + [
        # kh views of the same padded activation, one per vertical tap (row j+di)
        pl.BlockSpec((None, None, win, cin), lambda i, j, d=di: (i, j + d, 0, 0))
        for di in range(kh)
    ]

    out_shape = [jax.ShapeDtypeStruct((n, ho, wo, cout), jnp.float32)]
    out_specs = [pl.BlockSpec((None, None, wo, cout), lambda i, j: (i, j, 0, 0))]
    if collect_stats:
        # cross-grid (1,C) accumulators -> keep the whole grid sequential
        out_shape += [jax.ShapeDtypeStruct((1, cout), jnp.float32)] * 2
        out_specs += [pl.BlockSpec((1, cout), lambda i, j: (0, 0))] * 2
        dims = ("arbitrary", "arbitrary")
    else:
        dims = ("parallel", "parallel")            # megacore-shardable on v7x

    flops = 2 * n * ho * wo * kh * kw * cin * cout
    bytes_accessed = (kh * xp.size * xp.dtype.itemsize
                      + wt.size * wt.dtype.itemsize
                      + n * ho * wo * cout * 4)

    outs = pl.pallas_call(
        functools.partial(_conv_row_kernel, kh=kh, kw=kw, wo=wo, relu=relu,
                          collect_stats=collect_stats),
        grid=(n, ho),
        in_specs=in_specs,
        out_specs=out_specs,
        out_shape=out_shape,
        compiler_params=pltpu.CompilerParams(
            dimension_semantics=dims, vmem_limit_bytes=_VMEM_LIMIT_BYTES),
        cost_estimate=pl.CostEstimate(flops=flops, transcendentals=0,
                                      bytes_accessed=bytes_accessed),
    )(wt, scale, shift, *([xp] * kh))
    return tuple(outs) if collect_stats else outs[0]


def conv_bias_relu(x, w, b, *, pad, mxu_dtype):
    cout = w.shape[0]
    return _conv_call(x, w, jnp.ones((cout,), jnp.float32), b, pad=pad,
                      relu=True, collect_stats=False, mxu_dtype=mxu_dtype)


def _affine_relu(y, scale, shift):
    n, ho, wo, c = y.shape
    return pl.pallas_call(
        _affine_relu_kernel,
        grid=(n, ho),
        in_specs=[pl.BlockSpec((1, c), lambda i, j: (0, 0)),
                  pl.BlockSpec((1, c), lambda i, j: (0, 0)),
                  pl.BlockSpec((None, None, wo, c), lambda i, j: (i, j, 0, 0))],
        out_specs=pl.BlockSpec((None, None, wo, c), lambda i, j: (i, j, 0, 0)),
        out_shape=jax.ShapeDtypeStruct((n, ho, wo, c), jnp.float32),
        compiler_params=pltpu.CompilerParams(
            dimension_semantics=("parallel", "parallel"),
            vmem_limit_bytes=_VMEM_LIMIT_BYTES),
    )(scale, shift, y)


def conv_bn_relu(x, w, gamma, beta, *, pad, mxu_dtype, eps=1e-5):
    """Conv (no bias) -> BatchNorm (batch stats) -> ReLU, as two tiled passes."""
    cout = w.shape[0]
    y, s, sq = _conv_call(x, w, jnp.ones((cout,), jnp.float32),
                          jnp.zeros((cout,), jnp.float32), pad=pad,
                          relu=False, collect_stats=True, mxu_dtype=mxu_dtype)
    n, ho, wo, _ = y.shape
    p = float(n * ho * wo)
    mean = s / p
    var = jnp.maximum(sq / p - mean * mean, 0.0)       # biased var, clamped >= 0
    scale = gamma.reshape(1, cout) * jax.lax.rsqrt(var + eps)
    shift = beta.reshape(1, cout) - mean * scale
    return _affine_relu(y, scale, shift)


def maxpool2d_pallas(x, ph, pw):
    n, h, w, c = x.shape
    ho, wo = h // ph, w // pw
    x = x[:, :ho * ph, :wo * pw, :]
    xr = x.reshape(n, ho, ph, wo, pw * c)     # free row-major reshape (no HBM copy)
    return pl.pallas_call(
        functools.partial(_pool_kernel, ph=ph, pw=pw, c=c),
        grid=(n, ho),
        in_specs=[pl.BlockSpec((None, None, ph, wo, pw * c),
                               lambda i, j: (i, j, 0, 0, 0))],
        out_specs=pl.BlockSpec((None, None, wo, c), lambda i, j: (i, j, 0, 0)),
        out_shape=jax.ShapeDtypeStruct((n, ho, wo, c), jnp.float32),
        compiler_params=pltpu.CompilerParams(
            dimension_semantics=("parallel", "parallel"),
            vmem_limit_bytes=_VMEM_LIMIT_BYTES),
    )(xr)


# ------------------------------ full forward ------------------------------- #

def crnn_vgg_forward(x_nchw, params, *, mxu_dtype=jnp.bfloat16):
    x = jnp.transpose(x_nchw, (0, 2, 3, 1)).astype(jnp.float32)   # NCHW -> NHWC
    x = conv_bias_relu(x, params["w1"], params["b1"], pad=1, mxu_dtype=mxu_dtype)
    x = maxpool2d_pallas(x, 2, 2)
    x = conv_bias_relu(x, params["w2"], params["b2"], pad=1, mxu_dtype=mxu_dtype)
    x = maxpool2d_pallas(x, 2, 2)
    x = conv_bias_relu(x, params["w3"], params["b3"], pad=1, mxu_dtype=mxu_dtype)
    x = conv_bias_relu(x, params["w4"], params["b4"], pad=1, mxu_dtype=mxu_dtype)
    x = maxpool2d_pallas(x, 2, 1)
    x = conv_bn_relu(x, params["w5"], params["g5"], params["beta5"], pad=1,
                     mxu_dtype=mxu_dtype)
    x = conv_bn_relu(x, params["w6"], params["g6"], params["beta6"], pad=1,
                     mxu_dtype=mxu_dtype)
    x = maxpool2d_pallas(x, 2, 1)
    x = conv_bias_relu(x, params["w7"], params["b7"], pad=0, mxu_dtype=mxu_dtype)
    return jnp.transpose(x, (0, 3, 1, 2))                         # NHWC -> NCHW


# -------------------------- deterministic parameters ------------------------ #

def init_params(key, input_channel=1, output_channel=32):
    oc = [output_channel // 8, output_channel // 4, output_channel // 2, output_channel]
    convs = [
        ("w1", "b1", input_channel, oc[0], 3),
        ("w2", "b2", oc[0], oc[1], 3),
        ("w3", "b3", oc[1], oc[2], 3),
        ("w4", "b4", oc[2], oc[2], 3),
        ("w5", None, oc[2], oc[3], 3),   # bias=False (followed by BN)
        ("w6", None, oc[3], oc[3], 3),   # bias=False (followed by BN)
        ("w7", "b7", oc[3], oc[3], 2),
    ]
    keys = jax.random.split(key, 2 * len(convs) + 4)
    params = {}
    ki = 0
    for wname, bname, cin, cout, k in convs:
        std = (2.0 / (cin * k * k)) ** 0.5
        params[wname] = std * jax.random.normal(keys[ki], (cout, cin, k, k), jnp.float32)
        ki += 1
        if bname is not None:
            params[bname] = 0.05 * jax.random.normal(keys[ki], (cout,), jnp.float32)
        ki += 1
    params["g5"] = 1.0 + 0.1 * jax.random.normal(keys[ki], (oc[3],), jnp.float32); ki += 1
    params["beta5"] = 0.1 * jax.random.normal(keys[ki], (oc[3],), jnp.float32); ki += 1
    params["g6"] = 1.0 + 0.1 * jax.random.normal(keys[ki], (oc[3],), jnp.float32); ki += 1
    params["beta6"] = 0.1 * jax.random.normal(keys[ki], (oc[3],), jnp.float32); ki += 1
    return params


# ----------------------------- pure-JAX reference --------------------------- #

def _ref_forward(x, p):
    def conv(x, w, b, pad):
        y = jax.lax.conv_general_dilated(
            x, w, (1, 1), [(pad, pad), (pad, pad)],
            dimension_numbers=("NCHW", "OIHW", "NCHW"))
        if b is not None:
            y = y + b.reshape(1, -1, 1, 1)
        return y

    def bn(x, g, b, eps=1e-5):
        mean = jnp.mean(x, axis=(0, 2, 3), keepdims=True)
        var = jnp.mean((x - mean) ** 2, axis=(0, 2, 3), keepdims=True)
        return (x - mean) / jnp.sqrt(var + eps) * g.reshape(1, -1, 1, 1) + b.reshape(1, -1, 1, 1)

    def pool(x, ph, pw):
        return jax.lax.reduce_window(x, -jnp.inf, jax.lax.max,
                                     (1, 1, ph, pw), (1, 1, ph, pw), "VALID")

    relu = lambda v: jnp.maximum(v, 0.0)
    x = relu(conv(x, p["w1"], p["b1"], 1)); x = pool(x, 2, 2)
    x = relu(conv(x, p["w2"], p["b2"], 1)); x = pool(x, 2, 2)
    x = relu(conv(x, p["w3"], p["b3"], 1))
    x = relu(conv(x, p["w4"], p["b4"], 1)); x = pool(x, 2, 1)
    x = relu(bn(conv(x, p["w5"], None, 1), p["g5"], p["beta5"]))
    x = relu(bn(conv(x, p["w6"], None, 1), p["g6"], p["beta6"])); x = pool(x, 2, 1)
    x = relu(conv(x, p["w7"], p["b7"], 0))
    return x


if __name__ == "__main__":
    key = jax.random.PRNGKey(0)
    kp, kx = jax.random.split(key)

    # Small but structurally valid CRNN input: NCHW, H=32 so the final height is 1.
    params = init_params(kp, input_channel=1, output_channel=32)
    x = jax.random.normal(kx, (2, 1, 32, 16), jnp.float32)

    fwd = jax.jit(crnn_vgg_forward)
    out = jax.block_until_ready(fwd(x, params))

    ref = _ref_forward(x, params)
    assert out.shape == ref.shape == (2, 32, 1, 3), (out.shape, ref.shape)
    # Tolerance accounts for bfloat16 MXU inputs (f32 accumulation) across 7 layers;
    # the f32 structural path matches the reference to ~1e-3.
    max_err = float(jnp.max(jnp.abs(out - ref)))
    assert jnp.allclose(out, ref, atol=1e-1, rtol=1e-1), max_err

    print("KERNEL_OK")
</pallas_src>

<mosaic_0001>
module attributes {stable_mosaic.version = 11 : i64} {
  func.func @_conv_row_kernel(%arg0: i32, %arg1: i32, %arg2: memref<3x3x1x4xbf16, #tpu.memory_space<vmem>>, %arg3: memref<1x4xf32, #tpu.memory_space<vmem>>, %arg4: memref<1x4xf32, #tpu.memory_space<vmem>>, %arg5: memref<1x1x18x1xbf16, #tpu.memory_space<vmem>>, %arg6: memref<1x1x18x1xbf16, #tpu.memory_space<vmem>>, %arg7: memref<1x1x18x1xbf16, #tpu.memory_space<vmem>>, %arg8: memref<1x1x16x4xf32, #tpu.memory_space<vmem>>) attributes {dimension_semantics = [#tpu.dimension_semantics<parallel>, #tpu.dimension_semantics<parallel>], iteration_bounds = array<i64: 2, 32>, scalar_prefetch = 0 : i64, scratch_operands = 0 : i64, tpu.core_type = #tpu.core_type<tc>, window_params = [{pipeline_mode = #tpu.pipeline_mode<synchronous>, transform_indices = @transform_0, window_bounds = array<i64: 3, 3, 1, 4>}, {pipeline_mode = #tpu.pipeline_mode<synchronous>, transform_indices = @transform_1, window_bounds = array<i64: 1, 4>}, {pipeline_mode = #tpu.pipeline_mode<synchronous>, transform_indices = @transform_2, window_bounds = array<i64: 1, 4>}, {transform_indices = @transform_3, window_bounds = array<i64: 1, 1, 18, 1>}, {transform_indices = @transform_4, window_bounds = array<i64: 1, 1, 18, 1>}, {transform_indices = @transform_5, window_bounds = array<i64: 1, 1, 18, 1>}, {transform_indices = @transform_6, window_bounds = array<i64: 1, 1, 16, 4>}]} {
    %cst = arith.constant 0.000000e+00 : f32
    %0 = vector.broadcast %cst : f32 to vector<16x4xf32>
    %c0 = arith.constant 0 : index
    %c0_0 = arith.constant 0 : index
    %c0_1 = arith.constant 0 : index
    %c0_2 = arith.constant 0 : index
    %1 = vector.load %arg5[%c0, %c0_0, %c0_1, %c0_2] : memref<1x1x18x1xbf16, #tpu.memory_space<vmem>>, vector<1x1x18x1xbf16>
    %2 = vector.shape_cast %1 : vector<1x1x18x1xbf16> to vector<18x1xbf16>
    %3 = vector.extract_strided_slice %2 {offsets = [0, 0], sizes = [16, 1], strides = [1, 1]} : vector<18x1xbf16> to vector<16x1xbf16>
    %c0_3 = arith.constant 0 : index
    %c0_4 = arith.constant 0 : index
    %c0_5 = arith.constant 0 : index
    %c0_6 = arith.constant 0 : index
    %4 = vector.load %arg2[%c0_3, %c0_4, %c0_5, %c0_6] : memref<3x3x1x4xbf16, #tpu.memory_space<vmem>>, vector<1x1x1x4xbf16>
    %5 = vector.shape_cast %4 : vector<1x1x1x4xbf16> to vector<1x4xbf16>
    %6 = arith.extf %3 : vector<16x1xbf16> to vector<16x1xf32>
    %7 = arith.extf %5 : vector<1x4xbf16> to vector<1x4xf32>
    %8 = vector.broadcast %6 : vector<16x1xf32> to vector<16x4xf32>
    %9 = vector.broadcast %7 : vector<1x4xf32> to vector<16x4xf32>
    %10 = arith.mulf %8, %9 : vector<16x4xf32>
    %11 = arith.addf %0, %10 : vector<16x4xf32>
    %12 = vector.extract_strided_slice %2 {offsets = [1, 0], sizes = [16, 1], strides = [1, 1]} : vector<18x1xbf16> to vector<16x1xbf16>
    %c0_7 = arith.constant 0 : index
    %c1 = arith.constant 1 : index
    %c0_8 = arith.constant 0 : index
    %c0_9 = arith.constant 0 : index
    %13 = vector.load %arg2[%c0_7, %c1, %c0_8, %c0_9] : memref<3x3x1x4xbf16, #tpu.memory_space<vmem>>, vector<1x1x1x4xbf16>
    %14 = vector.shape_cast %13 : vector<1x1x1x4xbf16> to vector<1x4xbf16>
    %15 = arith.extf %12 : vector<16x1xbf16> to vector<16x1xf32>
    %16 = arith.extf %14 : vector<1x4xbf16> to vector<1x4xf32>
    %17 = vector.broadcast %15 : vector<16x1xf32> to vector<16x4xf32>
    %18 = vector.broadcast %16 : vector<1x4xf32> to vector<16x4xf32>
    %19 = arith.mulf %17, %18 : vector<16x4xf32>
    %20 = arith.addf %11, %19 : vector<16x4xf32>
    %21 = vector.extract_strided_slice %2 {offsets = [2, 0], sizes = [16, 1], strides = [1, 1]} : vector<18x1xbf16> to vector<16x1xbf16>
    %c0_10 = arith.constant 0 : index
    %c2 = arith.constant 2 : index
    %c0_11 = arith.constant 0 : index
    %c0_12 = arith.constant 0 : index
    %22 = vector.load %arg2[%c0_10, %c2, %c0_11, %c0_12] : memref<3x3x1x4xbf16, #tpu.memory_space<vmem>>, vector<1x1x1x4xbf16>
    %23 = vector.shape_cast %22 : vector<1x1x1x4xbf16> to vector<1x4xbf16>
    %24 = arith.extf %21 : vector<16x1xbf16> to vector<16x1xf32>
    %25 = arith.extf %23 : vector<1x4xbf16> to vector<1x4xf32>
    %26 = vector.broadcast %24 : vector<16x1xf32> to vector<16x4xf32>
    %27 = vector.broadcast %25 : vector<1x4xf32> to vector<16x4xf32>
    %28 = arith.mulf %26, %27 : vector<16x4xf32>
    %29 = arith.addf %20, %28 : vector<16x4xf32>
    %c0_13 = arith.constant 0 : index
    %c0_14 = arith.constant 0 : index
    %c0_15 = arith.constant 0 : index
    %c0_16 = arith.constant 0 : index
    %30 = vector.load %arg6[%c0_13, %c0_14, %c0_15, %c0_16] : memref<1x1x18x1xbf16, #tpu.memory_space<vmem>>, vector<1x1x18x1xbf16>
    %31 = vector.shape_cast %30 : vector<1x1x18x1xbf16> to vector<18x1xbf16>
    %32 = vector.extract_strided_slice %31 {offsets = [0, 0], sizes = [16, 1], strides = [1, 1]} : vector<18x1xbf16> to vector<16x1xbf16>
    %c1_17 = arith.constant 1 : index
    %c0_18 = arith.constant 0 : index
    %c0_19 = arith.constant 0 : index
    %c0_20 = arith.constant 0 : index
    %33 = vector.load %arg2[%c1_17, %c0_18, %c0_19, %c0_20] : memref<3x3x1x4xbf16, #tpu.memory_space<vmem>>, vector<1x1x1x4xbf16>
    %34 = vector.shape_cast %33 : vector<1x1x1x4xbf16> to vector<1x4xbf16>
    %35 = arith.extf %32 : vector<16x1xbf16> to vector<16x1xf32>
    %36 = arith.extf %34 : vector<1x4xbf16> to vector<1x4xf32>
    %37 = vector.broadcast %35 : vector<16x1xf32> to vector<16x4xf32>
    %38 = vector.broadcast %36 : vector<1x4xf32> to vector<16x4xf32>
    %39 = arith.mulf %37, %38 : vector<16x4xf32>
    %40 = arith.addf %29, %39 : vector<16x4xf32>
    %41 = vector.extract_strided_slice %31 {offsets = [1, 0], sizes = [16, 1], strides = [1, 1]} : vector<18x1xbf16> to vector<16x1xbf16>
    %c1_21 = arith.constant 1 : index
    %c1_22 = arith.constant 1 : index
    %c0_23 = arith.constant 0 : index
    %c0_24 = arith.constant 0 : index
    %42 = vector.load %arg2[%c1_21, %c1_22, %c0_23, %c0_24] : memref<3x3x1x4xbf16, #tpu.memory_space<vmem>>, vector<1x1x1x4xbf16>
    %43 = vector.shape_cast %42 : vector<1x1x1x4xbf16> to vector<1x4xbf16>
    %44 = arith.extf %41 : vector<16x1xbf16> to vector<16x1xf32>
    %45 = arith.extf %43 : vector<1x4xbf16> to vector<1x4xf32>
    %46 = vector.broadcast %44 : vector<16x1xf32> to vector<16x4xf32>
    %47 = vector.broadcast %45 : vector<1x4xf32> to vector<16x4xf32>
    %48 = arith.mulf %46, %47 : vector<16x4xf32>
    %49 = arith.addf %40, %48 : vector<16x4xf32>
    %50 = vector.extract_strided_slice %31 {offsets = [2, 0], sizes = [16, 1], strides = [1, 1]} : vector<18x1xbf16> to vector<16x1xbf16>
    %c1_25 = arith.constant 1 : index
    %c2_26 = arith.constant 2 : index
    %c0_27 = arith.constant 0 : index
    %c0_28 = arith.constant 0 : index
    %51 = vector.load %arg2[%c1_25, %c2_26, %c0_27, %c0_28] : memref<3x3x1x4xbf16, #tpu.memory_space<vmem>>, vector<1x1x1x4xbf16>
    %52 = vector.shape_cast %51 : vector<1x1x1x4xbf16> to vector<1x4xbf16>
    %53 = arith.extf %50 : vector<16x1xbf16> to vector<16x1xf32>
    %54 = arith.extf %52 : vector<1x4xbf16> to vector<1x4xf32>
    %55 = vector.broadcast %53 : vector<16x1xf32> to vector<16x4xf32>
    %56 = vector.broadcast %54 : vector<1x4xf32> to vector<16x4xf32>
    %57 = arith.mulf %55, %56 : vector<16x4xf32>
    %58 = arith.addf %49, %57 : vector<16x4xf32>
    %c0_29 = arith.constant 0 : index
    %c0_30 = arith.constant 0 : index
    %c0_31 = arith.constant 0 : index
    %c0_32 = arith.constant 0 : index
    %59 = vector.load %arg7[%c0_29, %c0_30, %c0_31, %c0_32] : memref<1x1x18x1xbf16, #tpu.memory_space<vmem>>, vector<1x1x18x1xbf16>
    %60 = vector.shape_cast %59 : vector<1x1x18x1xbf16> to vector<18x1xbf16>
    %61 = vector.extract_strided_slice %60 {offsets = [0, 0], sizes = [16, 1], strides = [1, 1]} : vector<18x1xbf16> to vector<16x1xbf16>
    %c2_33 = arith.constant 2 : index
    %c0_34 = arith.constant 0 : index
    %c0_35 = arith.constant 0 : index
    %c0_36 = arith.constant 0 : index
    %62 = vector.load %arg2[%c2_33, %c0_34, %c0_35, %c0_36] : memref<3x3x1x4xbf16, #tpu.memory_space<vmem>>, vector<1x1x1x4xbf16>
    %63 = vector.shape_cast %62 : vector<1x1x1x4xbf16> to vector<1x4xbf16>
    %64 = arith.extf %61 : vector<16x1xbf16> to vector<16x1xf32>
    %65 = arith.extf %63 : vector<1x4xbf16> to vector<1x4xf32>
    %66 = vector.broadcast %64 : vector<16x1xf32> to vector<16x4xf32>
    %67 = vector.broadcast %65 : vector<1x4xf32> to vector<16x4xf32>
    %68 = arith.mulf %66, %67 : vector<16x4xf32>
    %69 = arith.addf %58, %68 : vector<16x4xf32>
    %70 = vector.extract_strided_slice %60 {offsets = [1, 0], sizes = [16, 1], strides = [1, 1]} : vector<18x1xbf16> to vector<16x1xbf16>
    %c2_37 = arith.constant 2 : index
    %c1_38 = arith.constant 1 : index
    %c0_39 = arith.constant 0 : index
    %c0_40 = arith.constant 0 : index
    %71 = vector.load %arg2[%c2_37, %c1_38, %c0_39, %c0_40] : memref<3x3x1x4xbf16, #tpu.memory_space<vmem>>, vector<1x1x1x4xbf16>
    %72 = vector.shape_cast %71 : vector<1x1x1x4xbf16> to vector<1x4xbf16>
    %73 = arith.extf %70 : vector<16x1xbf16> to vector<16x1xf32>
    %74 = arith.extf %72 : vector<1x4xbf16> to vector<1x4xf32>
    %75 = vector.broadcast %73 : vector<16x1xf32> to vector<16x4xf32>
    %76 = vector.broadcast %74 : vector<1x4xf32> to vector<16x4xf32>
    %77 = arith.mulf %75, %76 : vector<16x4xf32>
    %78 = arith.addf %69, %77 : vector<16x4xf32>
    %79 = vector.extract_strided_slice %60 {offsets = [2, 0], sizes = [16, 1], strides = [1, 1]} : vector<18x1xbf16> to vector<16x1xbf16>
    %c2_41 = arith.constant 2 : index
    %c2_42 = arith.constant 2 : index
    %c0_43 = arith.constant 0 : index
    %c0_44 = arith.constant 0 : index
    %80 = vector.load %arg2[%c2_41, %c2_42, %c0_43, %c0_44] : memref<3x3x1x4xbf16, #tpu.memory_space<vmem>>, vector<1x1x1x4xbf16>
    %81 = vector.shape_cast %80 : vector<1x1x1x4xbf16> to vector<1x4xbf16>
    %82 = arith.extf %79 : vector<16x1xbf16> to vector<16x1xf32>
    %83 = arith.extf %81 : vector<1x4xbf16> to vector<1x4xf32>
    %84 = vector.broadcast %82 : vector<16x1xf32> to vector<16x4xf32>
    %85 = vector.broadcast %83 : vector<1x4xf32> to vector<16x4xf32>
    %86 = arith.mulf %84, %85 : vector<16x4xf32>
    %87 = arith.addf %78, %86 : vector<16x4xf32>
    %c0_45 = arith.constant 0 : index
    %c0_46 = arith.constant 0 : index
    %88 = vector.load %arg3[%c0_45, %c0_46] : memref<1x4xf32, #tpu.memory_space<vmem>>, vector<1x4xf32>
    %89 = vector.broadcast %88 : vector<1x4xf32> to vector<16x4xf32>
    %90 = arith.mulf %87, %89 : vector<16x4xf32>
    %c0_47 = arith.constant 0 : index
    %c0_48 = arith.constant 0 : index
    %91 = vector.load %arg4[%c0_47, %c0_48] : memref<1x4xf32, #tpu.memory_space<vmem>>, vector<1x4xf32>
    %92 = vector.broadcast %91 : vector<1x4xf32> to vector<16x4xf32>
    %93 = arith.addf %90, %92 : vector<16x4xf32>
    %cst_49 = arith.constant 0.000000e+00 : f32
    %94 = vector.broadcast %cst_49 : f32 to vector<16x4xf32>
    %95 = arith.maximumf %93, %94 : vector<16x4xf32>
    %c0_50 = arith.constant 0 : index
    %c0_51 = arith.constant 0 : index
    %c0_52 = arith.constant 0 : index
    %c0_53 = arith.constant 0 : index
    %96 = vector.load %arg8[%c0_50, %c0_51, %c0_52, %c0_53] : memref<1x1x16x4xf32, #tpu.memory_space<vmem>>, vector<1x1x16x4xf32>
    %97 = vector.shape_cast %96 : vector<1x1x16x4xf32> to vector<16x4xf32>
    %98 = vector.shape_cast %95 : vector<16x4xf32> to vector<1x1x16x4xf32>
    tpu.vector_store %arg8[%c0_50, %c0_51, %c0_52, %c0_53], %98 {strides = array<i32>} : memref<1x1x16x4xf32, #tpu.memory_space<vmem>>, vector<1x1x16x4xf32>,
    return
  }
  func.func @transform_0(%arg0: i32, %arg1: i32) -> (i32, i32, i32, i32) {
    %c0_i32 = arith.constant 0 : i32
    %c0_i32_0 = arith.constant 0 : i32
    %c0_i32_1 = arith.constant 0 : i32
    %c0_i32_2 = arith.constant 0 : i32
    %c0_i32_3 = arith.constant 0 : i32
    return %c0_i32, %c0_i32_0, %c0_i32_1, %c0_i32_2 : i32, i32, i32, i32
  }
  func.func @transform_1(%arg0: i32, %arg1: i32) -> (i32, i32) {
    %c0_i32 = arith.constant 0 : i32
    %c0_i32_0 = arith.constant 0 : i32
    %c0_i32_1 = arith.constant 0 : i32
    return %c0_i32, %c0_i32_0 : i32, i32
  }
  func.func @transform_2(%arg0: i32, %arg1: i32) -> (i32, i32) {
    %c0_i32 = arith.constant 0 : i32
    %c0_i32_0 = arith.constant 0 : i32
    %c0_i32_1 = arith.constant 0 : i32
    return %c0_i32, %c0_i32_0 : i32, i32
  }
  func.func @transform_3(%arg0: i32, %arg1: i32) -> (i32, i32, i32, i32) {
    %c0_i32 = arith.constant 0 : i32
    %0 = arith.addi %arg1, %c0_i32 : i32
    %c0_i32_0 = arith.constant 0 : i32
    %c0_i32_1 = arith.constant 0 : i32
    %c0_i32_2 = arith.constant 0 : i32
    return %arg0, %0, %c0_i32_0, %c0_i32_1 : i32, i32, i32, i32
  }
  func.func @transform_4(%arg0: i32, %arg1: i32) -> (i32, i32, i32, i32) {
    %c1_i32 = arith.constant 1 : i32
    %0 = arith.addi %arg1, %c1_i32 : i32
    %c0_i32 = arith.constant 0 : i32
    %c0_i32_0 = arith.constant 0 : i32
    %c0_i32_1 = arith.constant 0 : i32
    return %arg0, %0, %c0_i32, %c0_i32_0 : i32, i32, i32, i32
  }
  func.func @transform_5(%arg0: i32, %arg1: i32) -> (i32, i32, i32, i32) {
    %c2_i32 = arith.constant 2 : i32
    %0 = arith.addi %arg1, %c2_i32 : i32
    %c0_i32 = arith.constant 0 : i32
    %c0_i32_0 = arith.constant 0 : i32
    %c0_i32_1 = arith.constant 0 : i32
    return %arg0, %0, %c0_i32, %c0_i32_0 : i32, i32, i32, i32
  }
  func.func @transform_6(%arg0: i32, %arg1: i32) -> (i32, i32, i32, i32) {
    %c0_i32 = arith.constant 0 : i32
    %c0_i32_0 = arith.constant 0 : i32
    %c0_i32_1 = arith.constant 0 : i32
    return %arg0, %arg1, %c0_i32, %c0_i32_0 : i32, i32, i32, i32
  }
}

module attributes {stable_mosaic.version = 11 : i64} {
  func.func @_pool_kernel(%arg0: i32, %arg1: i32, %arg2: memref<1x1x2x8x8xf32, #tpu.memory_space<vmem>>, %arg3: memref<1x1x8x4xf32, #tpu.memory_space<vmem>>) attributes {dimension_semantics = [#tpu.dimension_semantics<parallel>, #tpu.dimension_semantics<parallel>], iteration_bounds = array<i64: 2, 16>, scalar_prefetch = 0 : i64, scratch_operands = 0 : i64, tpu.core_type = #tpu.core_type<tc>, window_params = [{transform_indices = @transform_0, window_bounds = array<i64: 1, 1, 2, 8, 8>}, {transform_indices = @transform_1, window_bounds = array<i64: 1, 1, 8, 4>}]} {
    %c0 = arith.constant 0 : index
    %c0_0 = arith.constant 0 : index
    %c0_1 = arith.constant 0 : index
    %c0_2 = arith.constant 0 : index
    %c0_3 = arith.constant 0 : index
    %0 = vector.load %arg2[%c0, %c0_0, %c0_1, %c0_2, %c0_3] : memref<1x1x2x8x8xf32, #tpu.memory_space<vmem>>, vector<1x1x2x8x8xf32>
    %1 = vector.shape_cast %0 : vector<1x1x2x8x8xf32> to vector<2x8x8xf32>
    %2 = vector.extract_strided_slice %1 {offsets = [0, 0, 0], sizes = [1, 8, 8], strides = [1, 1, 1]} : vector<2x8x8xf32> to vector<1x8x8xf32>
    %3 = vector.shape_cast %2 : vector<1x8x8xf32> to vector<8x8xf32>
    %4 = vector.extract_strided_slice %1 {offsets = [1, 0, 0], sizes = [1, 8, 8], strides = [1, 1, 1]} : vector<2x8x8xf32> to vector<1x8x8xf32>
    %5 = vector.shape_cast %4 : vector<1x8x8xf32> to vector<8x8xf32>
    %6 = arith.maximumf %3, %5 : vector<8x8xf32>
    %7 = vector.extract_strided_slice %6 {offsets = [0, 0], sizes = [8, 4], strides = [1, 1]} : vector<8x8xf32> to vector<8x4xf32>
    %8 = vector.extract_strided_slice %6 {offsets = [0, 4], sizes = [8, 4], strides = [1, 1]} : vector<8x8xf32> to vector<8x4xf32>
    %9 = arith.maximumf %7, %8 : vector<8x4xf32>
    %c0_4 = arith.constant 0 : index
    %c0_5 = arith.constant 0 : index
    %c0_6 = arith.constant 0 : index
    %c0_7 = arith.constant 0 : index
    %10 = vector.load %arg3[%c0_4, %c0_5, %c0_6, %c0_7] : memref<1x1x8x4xf32, #tpu.memory_space<vmem>>, vector<1x1x8x4xf32>
    %11 = vector.shape_cast %10 : vector<1x1x8x4xf32> to vector<8x4xf32>
    %12 = vector.shape_cast %9 : vector<8x4xf32> to vector<1x1x8x4xf32>
    tpu.vector_store %arg3[%c0_4, %c0_5, %c0_6, %c0_7], %12 {strides = array<i32>} : memref<1x1x8x4xf32, #tpu.memory_space<vmem>>, vector<1x1x8x4xf32>,
    return
  }
  func.func @transform_0(%arg0: i32, %arg1: i32) -> (i32, i32, i32, i32, i32) {
    %c0_i32 = arith.constant 0 : i32
    %c0_i32_0 = arith.constant 0 : i32
    %c0_i32_1 = arith.constant 0 : i32
    %c0_i32_2 = arith.constant 0 : i32
    return %arg0, %arg1, %c0_i32, %c0_i32_0, %c0_i32_1 : i32, i32, i32, i32, i32
  }
  func.func @transform_1(%arg0: i32, %arg1: i32) -> (i32, i32, i32, i32) {
    %c0_i32 = arith.constant 0 : i32
    %c0_i32_0 = arith.constant 0 : i32
    %c0_i32_1 = arith.constant 0 : i32
    return %arg0, %arg1, %c0_i32, %c0_i32_0 : i32, i32, i32, i32
  }
}

module attributes {stable_mosaic.version = 11 : i64} {
  func.func @_conv_row_kernel(%arg0: i32, %arg1: i32, %arg2: memref<3x3x4x8xbf16, #tpu.memory_space<vmem>>, %arg3: memref<1x8xf32, #tpu.memory_space<vmem>>, %arg4: memref<1x8xf32, #tpu.memory_space<vmem>>, %arg5: memref<1x1x10x4xbf16, #tpu.memory_space<vmem>>, %arg6: memref<1x1x10x4xbf16, #tpu.memory_space<vmem>>, %arg7: memref<1x1x10x4xbf16, #tpu.memory_space<vmem>>, %arg8: memref<1x1x8x8xf32, #tpu.memory_space<vmem>>) attributes {dimension_semantics = [#tpu.dimension_semantics<parallel>, #tpu.dimension_semantics<parallel>], iteration_bounds = array<i64: 2, 16>, scalar_prefetch = 0 : i64, scratch_operands = 0 : i64, tpu.core_type = #tpu.core_type<tc>, window_params = [{pipeline_mode = #tpu.pipeline_mode<synchronous>, transform_indices = @transform_0, window_bounds = array<i64: 3, 3, 4, 8>}, {pipeline_mode = #tpu.pipeline_mode<synchronous>, transform_indices = @transform_1, window_bounds = array<i64: 1, 8>}, {pipeline_mode = #tpu.pipeline_mode<synchronous>, transform_indices = @transform_2, window_bounds = array<i64: 1, 8>}, {transform_indices = @transform_3, window_bounds = array<i64: 1, 1, 10, 4>}, {transform_indices = @transform_4, window_bounds = array<i64: 1, 1, 10, 4>}, {transform_indices = @transform_5, window_bounds = array<i64: 1, 1, 10, 4>}, {transform_indices = @transform_6, window_bounds = array<i64: 1, 1, 8, 8>}]} {
    %cst = arith.constant 0.000000e+00 : f32
    %0 = vector.broadcast %cst : f32 to vector<8x8xf32>
    %c0 = arith.constant 0 : index
    %c0_0 = arith.constant 0 : index
    %c0_1 = arith.constant 0 : index
    %c0_2 = arith.constant 0 : index
    %1 = vector.load %arg5[%c0, %c0_0, %c0_1, %c0_2] : memref<1x1x10x4xbf16, #tpu.memory_space<vmem>>, vector<1x1x10x4xbf16>
    %2 = vector.shape_cast %1 : vector<1x1x10x4xbf16> to vector<10x4xbf16>
    %3 = vector.extract_strided_slice %2 {offsets = [0, 0], sizes = [8, 4], strides = [1, 1]} : vector<10x4xbf16> to vector<8x4xbf16>
    %c0_3 = arith.constant 0 : index
    %c0_4 = arith.constant 0 : index
    %c0_5 = arith.constant 0 : index
    %c0_6 = arith.constant 0 : index
    %4 = vector.load %arg2[%c0_3, %c0_4, %c0_5, %c0_6] : memref<3x3x4x8xbf16, #tpu.memory_space<vmem>>, vector<1x1x4x8xbf16>
    %5 = vector.shape_cast %4 : vector<1x1x4x8xbf16> to vector<4x8xbf16>
    %cst_7 = arith.constant dense<0.000000e+00> : vector<8x8xf32>
    %6 = tpu.matmul %3, %5, %cst_7 {dimension_numbers = #tpu.dot_dimension_numbers<[1], [0], [0], [1], [0, 0, 1, 1], [], []>} : vector<8x4xbf16>, vector<4x8xbf16>, vector<8x8xf32> -> vector<8x8xf32>
    %7 = arith.addf %0, %6 : vector<8x8xf32>
    %8 = vector.extract_strided_slice %2 {offsets = [1, 0], sizes = [8, 4], strides = [1, 1]} : vector<10x4xbf16> to vector<8x4xbf16>
    %c0_8 = arith.constant 0 : index
    %c1 = arith.constant 1 : index
    %c0_9 = arith.constant 0 : index
    %c0_10 = arith.constant 0 : index
    %9 = vector.load %arg2[%c0_8, %c1, %c0_9, %c0_10] : memref<3x3x4x8xbf16, #tpu.memory_space<vmem>>, vector<1x1x4x8xbf16>
    %10 = vector.shape_cast %9 : vector<1x1x4x8xbf16> to vector<4x8xbf16>
    %cst_11 = arith.constant dense<0.000000e+00> : vector<8x8xf32>
    %11 = tpu.matmul %8, %10, %cst_11 {dimension_numbers = #tpu.dot_dimension_numbers<[1], [0], [0], [1], [0, 0, 1, 1], [], []>} : vector<8x4xbf16>, vector<4x8xbf16>, vector<8x8xf32> -> vector<8x8xf32>
    %12 = arith.addf %7, %11 : vector<8x8xf32>
    %13 = vector.extract_strided_slice %2 {offsets = [2, 0], sizes = [8, 4], strides = [1, 1]} : vector<10x4xbf16> to vector<8x4xbf16>
    %c0_12 = arith.constant 0 : index
    %c2 = arith.constant 2 : index
    %c0_13 = arith.constant 0 : index
    %c0_14 = arith.constant 0 : index
    %14 = vector.load %arg2[%c0_12, %c2, %c0_13, %c0_14] : memref<3x3x4x8xbf16, #tpu.memory_space<vmem>>, vector<1x1x4x8xbf16>
    %15 = vector.shape_cast %14 : vector<1x1x4x8xbf16> to vector<4x8xbf16>
    %cst_15 = arith.constant dense<0.000000e+00> : vector<8x8xf32>
    %16 = tpu.matmul %13, %15, %cst_15 {dimension_numbers = #tpu.dot_dimension_numbers<[1], [0], [0], [1], [0, 0, 1, 1], [], []>} : vector<8x4xbf16>, vector<4x8xbf16>, vector<8x8xf32> -> vector<8x8xf32>
    %17 = arith.addf %12, %16 : vector<8x8xf32>
    %c0_16 = arith.constant 0 : index
    %c0_17 = arith.constant 0 : index
    %c0_18 = arith.constant 0 : index
    %c0_19 = arith.constant 0 : index
    %18 = vector.load %arg6[%c0_16, %c0_17, %c0_18, %c0_19] : memref<1x1x10x4xbf16, #tpu.memory_space<vmem>>, vector<1x1x10x4xbf16>
    %19 = vector.shape_cast %18 : vector<1x1x10x4xbf16> to vector<10x4xbf16>
    %20 = vector.extract_strided_slice %19 {offsets = [0, 0], sizes = [8, 4], strides = [1, 1]} : vector<10x4xbf16> to vector<8x4xbf16>
    %c1_20 = arith.constant 1 : index
    %c0_21 = arith.constant 0 : index
    %c0_22 = arith.constant 0 : index
    %c0_23 = arith.constant 0 : index
    %21 = vector.load %arg2[%c1_20, %c0_21, %c0_22, %c0_23] : memref<3x3x4x8xbf16, #tpu.memory_space<vmem>>, vector<1x1x4x8xbf16>
    %22 = vector.shape_cast %21 : vector<1x1x4x8xbf16> to vector<4x8xbf16>
    %cst_24 = arith.constant dense<0.000000e+00> : vector<8x8xf32>
    %23 = tpu.matmul %20, %22, %cst_24 {dimension_numbers = #tpu.dot_dimension_numbers<[1], [0], [0], [1], [0, 0, 1, 1], [], []>} : vector<8x4xbf16>, vector<4x8xbf16>, vector<8x8xf32> -> vector<8x8xf32>
    %24 = arith.addf %17, %23 : vector<8x8xf32>
    %25 = vector.extract_strided_slice %19 {offsets = [1, 0], sizes = [8, 4], strides = [1, 1]} : vector<10x4xbf16> to vector<8x4xbf16>
    %c1_25 = arith.constant 1 : index
    %c1_26 = arith.constant 1 : index
    %c0_27 = arith.constant 0 : index
    %c0_28 = arith.constant 0 : index
    %26 = vector.load %arg2[%c1_25, %c1_26, %c0_27, %c0_28] : memref<3x3x4x8xbf16, #tpu.memory_space<vmem>>, vector<1x1x4x8xbf16>
    %27 = vector.shape_cast %26 : vector<1x1x4x8xbf16> to vector<4x8xbf16>
    %cst_29 = arith.constant dense<0.000000e+00> : vector<8x8xf32>
    %28 = tpu.matmul %25, %27, %cst_29 {dimension_numbers = #tpu.dot_dimension_numbers<[1], [0], [0], [1], [0, 0, 1, 1], [], []>} : vector<8x4xbf16>, vector<4x8xbf16>, vector<8x8xf32> -> vector<8x8xf32>
    %29 = arith.addf %24, %28 : vector<8x8xf32>
    %30 = vector.extract_strided_slice %19 {offsets = [2, 0], sizes = [8, 4], strides = [1, 1]} : vector<10x4xbf16> to vector<8x4xbf16>
    %c1_30 = arith.constant 1 : index
    %c2_31 = arith.constant 2 : index
    %c0_32 = arith.constant 0 : index
    %c0_33 = arith.constant 0 : index
    %31 = vector.load %arg2[%c1_30, %c2_31, %c0_32, %c0_33] : memref<3x3x4x8xbf16, #tpu.memory_space<vmem>>, vector<1x1x4x8xbf16>
    %32 = vector.shape_cast %31 : vector<1x1x4x8xbf16> to vector<4x8xbf16>
    %cst_34 = arith.constant dense<0.000000e+00> : vector<8x8xf32>
    %33 = tpu.matmul %30, %32, %cst_34 {dimension_numbers = #tpu.dot_dimension_numbers<[1], [0], [0], [1], [0, 0, 1, 1], [], []>} : vector<8x4xbf16>, vector<4x8xbf16>, vector<8x8xf32> -> vector<8x8xf32>
    %34 = arith.addf %29, %33 : vector<8x8xf32>
    %c0_35 = arith.constant 0 : index
    %c0_36 = arith.constant 0 : index
    %c0_37 = arith.constant 0 : index
    %c0_38 = arith.constant 0 : index
    %35 = vector.load %arg7[%c0_35, %c0_36, %c0_37, %c0_38] : memref<1x1x10x4xbf16, #tpu.memory_space<vmem>>, vector<1x1x10x4xbf16>
    %36 = vector.shape_cast %35 : vector<1x1x10x4xbf16> to vector<10x4xbf16>
    %37 = vector.extract_strided_slice %36 {offsets = [0, 0], sizes = [8, 4], strides = [1, 1]} : vector<10x4xbf16> to vector<8x4xbf16>
    %c2_39 = arith.constant 2 : index
    %c0_40 = arith.constant 0 : index
    %c0_41 = arith.constant 0 : index
    %c0_42 = arith.constant 0 : index
    %38 = vector.load %arg2[%c2_39, %c0_40, %c0_41, %c0_42] : memref<3x3x4x8xbf16, #tpu.memory_space<vmem>>, vector<1x1x4x8xbf16>
    %39 = vector.shape_cast %38 : vector<1x1x4x8xbf16> to vector<4x8xbf16>
    %cst_43 = arith.constant dense<0.000000e+00> : vector<8x8xf32>
    %40 = tpu.matmul %37, %39, %cst_43 {dimension_numbers = #tpu.dot_dimension_numbers<[1], [0], [0], [1], [0, 0, 1, 1], [], []>} : vector<8x4xbf16>, vector<4x8xbf16>, vector<8x8xf32> -> vector<8x8xf32>
    %41 = arith.addf %34, %40 : vector<8x8xf32>
    %42 = vector.extract_strided_slice %36 {offsets = [1, 0], sizes = [8, 4], strides = [1, 1]} : vector<10x4xbf16> to vector<8x4xbf16>
    %c2_44 = arith.constant 2 : index
    %c1_45 = arith.constant 1 : index
    %c0_46 = arith.constant 0 : index
    %c0_47 = arith.constant 0 : index
    %43 = vector.load %arg2[%c2_44, %c1_45, %c0_46, %c0_47] : memref<3x3x4x8xbf16, #tpu.memory_space<vmem>>, vector<1x1x4x8xbf16>
    %44 = vector.shape_cast %43 : vector<1x1x4x8xbf16> to vector<4x8xbf16>
    %cst_48 = arith.constant dense<0.000000e+00> : vector<8x8xf32>
    %45 = tpu.matmul %42, %44, %cst_48 {dimension_numbers = #tpu.dot_dimension_numbers<[1], [0], [0], [1], [0, 0, 1, 1], [], []>} : vector<8x4xbf16>, vector<4x8xbf16>, vector<8x8xf32> -> vector<8x8xf32>
    %46 = arith.addf %41, %45 : vector<8x8xf32>
    %47 = vector.extract_strided_slice %36 {offsets = [2, 0], sizes = [8, 4], strides = [1, 1]} : vector<10x4xbf16> to vector<8x4xbf16>
    %c2_49 = arith.constant 2 : index
    %c2_50 = arith.constant 2 : index
    %c0_51 = arith.constant 0 : index
    %c0_52 = arith.constant 0 : index
    %48 = vector.load %arg2[%c2_49, %c2_50, %c0_51, %c0_52] : memref<3x3x4x8xbf16, #tpu.memory_space<vmem>>, vector<1x1x4x8xbf16>
    %49 = vector.shape_cast %48 : vector<1x1x4x8xbf16> to vector<4x8xbf16>
    %cst_53 = arith.constant dense<0.000000e+00> : vector<8x8xf32>
    %50 = tpu.matmul %47, %49, %cst_53 {dimension_numbers = #tpu.dot_dimension_numbers<[1], [0], [0], [1], [0, 0, 1, 1], [], []>} : vector<8x4xbf16>, vector<4x8xbf16>, vector<8x8xf32> -> vector<8x8xf32>
    %51 = arith.addf %46, %50 : vector<8x8xf32>
    %c0_54 = arith.constant 0 : index
    %c0_55 = arith.constant 0 : index
    %52 = vector.load %arg3[%c0_54, %c0_55] : memref<1x8xf32, #tpu.memory_space<vmem>>, vector<1x8xf32>
    %53 = vector.broadcast %52 : vector<1x8xf32> to vector<8x8xf32>
    %54 = arith.mulf %51, %53 : vector<8x8xf32>
    %c0_56 = arith.constant 0 : index
    %c0_57 = arith.constant 0 : index
    %55 = vector.load %arg4[%c0_56, %c0_57] : memref<1x8xf32, #tpu.memory_space<vmem>>, vector<1x8xf32>
    %56 = vector.broadcast %55 : vector<1x8xf32> to vector<8x8xf32>
    %57 = arith.addf %54, %56 : vector<8x8xf32>
    %cst_58 = arith.constant 0.000000e+00 : f32
    %58 = vector.broadcast %cst_58 : f32 to vector<8x8xf32>
    %59 = arith.maximumf %57, %58 : vector<8x8xf32>
    %c0_59 = arith.constant 0 : index
    %c0_60 = arith.constant 0 : index
    %c0_61 = arith.constant 0 : index
    %c0_62 = arith.constant 0 : index
    %60 = vector.load %arg8[%c0_59, %c0_60, %c0_61, %c0_62] : memref<1x1x8x8xf32, #tpu.memory_space<vmem>>, vector<1x1x8x8xf32>
    %61 = vector.shape_cast %60 : vector<1x1x8x8xf32> to vector<8x8xf32>
    %62 = vector.shape_cast %59 : vector<8x8xf32> to vector<1x1x8x8xf32>
    tpu.vector_store %arg8[%c0_59, %c0_60, %c0_61, %c0_62], %62 {strides = array<i32>} : memref<1x1x8x8xf32, #tpu.memory_space<vmem>>, vector<1x1x8x8xf32>,
    return
  }
  func.func @transform_0(%arg0: i32, %arg1: i32) -> (i32, i32, i32, i32) {
    %c0_i32 = arith.constant 0 : i32
    %c0_i32_0 = arith.constant 0 : i32
    %c0_i32_1 = arith.constant 0 : i32
    %c0_i32_2 = arith.constant 0 : i32
    %c0_i32_3 = arith.constant 0 : i32
    return %c0_i32, %c0_i32_0, %c0_i32_1, %c0_i32_2 : i32, i32, i32, i32
  }
  func.func @transform_1(%arg0: i32, %arg1: i32) -> (i32, i32) {
    %c0_i32 = arith.constant 0 : i32
    %c0_i32_0 = arith.constant 0 : i32
    %c0_i32_1 = arith.constant 0 : i32
    return %c0_i32, %c0_i32_0 : i32, i32
  }
  func.func @transform_2(%arg0: i32, %arg1: i32) -> (i32, i32) {
    %c0_i32 = arith.constant 0 : i32
    %c0_i32_0 = arith.constant 0 : i32
    %c0_i32_1 = arith.constant 0 : i32
    return %c0_i32, %c0_i32_0 : i32, i32
  }
  func.func @transform_3(%arg0: i32, %arg1: i32) -> (i32, i32, i32, i32) {
    %c0_i32 = arith.constant 0 : i32
    %0 = arith.addi %arg1, %c0_i32 : i32
    %c0_i32_0 = arith.constant 0 : i32
    %c0_i32_1 = arith.constant 0 : i32
    %c0_i32_2 = arith.constant 0 : i32
    return %arg0, %0, %c0_i32_0, %c0_i32_1 : i32, i32, i32, i32
  }
  func.func @transform_4(%arg0: i32, %arg1: i32) -> (i32, i32, i32, i32) {
    %c1_i32 = arith.constant 1 : i32
    %0 = arith.addi %arg1, %c1_i32 : i32
    %c0_i32 = arith.constant 0 : i32
    %c0_i32_0 = arith.constant 0 : i32
    %c0_i32_1 = arith.constant 0 : i32
    return %arg0, %0, %c0_i32, %c0_i32_0 : i32, i32, i32, i32
  }
  func.func @transform_5(%arg0: i32, %arg1: i32) -> (i32, i32, i32, i32) {
    %c2_i32 = arith.constant 2 : i32
    %0 = arith.addi %arg1, %c2_i32 : i32
    %c0_i32 = arith.constant 0 : i32
    %c0_i32_0 = arith.constant 0 : i32
    %c0_i32_1 = arith.constant 0 : i32
    return %arg0, %0, %c0_i32, %c0_i32_0 : i32, i32, i32, i32
  }
  func.func @transform_6(%arg0: i32, %arg1: i32) -> (i32, i32, i32, i32) {
    %c0_i32 = arith.constant 0 : i32
    %c0_i32_0 = arith.constant 0 : i32
    %c0_i32_1 = arith.constant 0 : i32
    return %arg0, %arg1, %c0_i32, %c0_i32_0 : i32, i32, i32, i32
  }
}

module attributes {stable_mosaic.version = 11 : i64} {
  func.func @_pool_kernel(%arg0: i32, %arg1: i32, %arg2: memref<1x1x2x4x16xf32, #tpu.memory_space<vmem>>, %arg3: memref<1x1x4x8xf32, #tpu.memory_space<vmem>>) attributes {dimension_semantics = [#tpu.dimension_semantics<parallel>, #tpu.dimension_semantics<parallel>], iteration_bounds = array<i64: 2, 8>, scalar_prefetch = 0 : i64, scratch_operands = 0 : i64, tpu.core_type = #tpu.core_type<tc>, window_params = [{transform_indices = @transform_0, window_bounds = array<i64: 1, 1, 2, 4, 16>}, {transform_indices = @transform_1, window_bounds = array<i64: 1, 1, 4, 8>}]} {
    %c0 = arith.constant 0 : index
    %c0_0 = arith.constant 0 : index
    %c0_1 = arith.constant 0 : index
    %c0_2 = arith.constant 0 : index
    %c0_3 = arith.constant 0 : index
    %0 = vector.load %arg2[%c0, %c0_0, %c0_1, %c0_2, %c0_3] : memref<1x1x2x4x16xf32, #tpu.memory_space<vmem>>, vector<1x1x2x4x16xf32>
    %1 = vector.shape_cast %0 : vector<1x1x2x4x16xf32> to vector<2x4x16xf32>
    %2 = vector.extract_strided_slice %1 {offsets = [0, 0, 0], sizes = [1, 4, 16], strides = [1, 1, 1]} : vector<2x4x16xf32> to vector<1x4x16xf32>
    %3 = vector.shape_cast %2 : vector<1x4x16xf32> to vector<4x16xf32>
    %4 = vector.extract_strided_slice %1 {offsets = [1, 0, 0], sizes = [1, 4, 16], strides = [1, 1, 1]} : vector<2x4x16xf32> to vector<1x4x16xf32>
    %5 = vector.shape_cast %4 : vector<1x4x16xf32> to vector<4x16xf32>
    %6 = arith.maximumf %3, %5 : vector<4x16xf32>
    %7 = vector.extract_strided_slice %6 {offsets = [0, 0], sizes = [4, 8], strides = [1, 1]} : vector<4x16xf32> to vector<4x8xf32>
    %8 = vector.extract_strided_slice %6 {offsets = [0, 8], sizes = [4, 8], strides = [1, 1]} : vector<4x16xf32> to vector<4x8xf32>
    %9 = arith.maximumf %7, %8 : vector<4x8xf32>
    %c0_4 = arith.constant 0 : index
    %c0_5 = arith.constant 0 : index
    %c0_6 = arith.constant 0 : index
    %c0_7 = arith.constant 0 : index
    %10 = vector.load %arg3[%c0_4, %c0_5, %c0_6, %c0_7] : memref<1x1x4x8xf32, #tpu.memory_space<vmem>>, vector<1x1x4x8xf32>
    %11 = vector.shape_cast %10 : vector<1x1x4x8xf32> to vector<4x8xf32>
    %12 = vector.shape_cast %9 : vector<4x8xf32> to vector<1x1x4x8xf32>
    tpu.vector_store %arg3[%c0_4, %c0_5, %c0_6, %c0_7], %12 {strides = array<i32>} : memref<1x1x4x8xf32, #tpu.memory_space<vmem>>, vector<1x1x4x8xf32>,
    return
  }
  func.func @transform_0(%arg0: i32, %arg1: i32) -> (i32, i32, i32, i32, i32) {
    %c0_i32 = arith.constant 0 : i32
    %c0_i32_0 = arith.constant 0 : i32
    %c0_i32_1 = arith.constant 0 : i32
    %c0_i32_2 = arith.constant 0 : i32
    return %arg0, %arg1, %c0_i32, %c0_i32_0, %c0_i32_1 : i32, i32, i32, i32, i32
  }
  func.func @transform_1(%arg0: i32, %arg1: i32) -> (i32, i32, i32, i32) {
    %c0_i32 = arith.constant 0 : i32
    %c0_i32_0 = arith.constant 0 : i32
    %c0_i32_1 = arith.constant 0 : i32
    return %arg0, %arg1, %c0_i32, %c0_i32_0 : i32, i32, i32, i32
  }
}

module attributes {stable_mosaic.version = 11 : i64} {
  func.func @_conv_row_kernel(%arg0: i32, %arg1: i32, %arg2: memref<3x3x8x16xbf16, #tpu.memory_space<vmem>>, %arg3: memref<1x16xf32, #tpu.memory_space<vmem>>, %arg4: memref<1x16xf32, #tpu.memory_space<vmem>>, %arg5: memref<1x1x6x8xbf16, #tpu.memory_space<vmem>>, %arg6: memref<1x1x6x8xbf16, #tpu.memory_space<vmem>>, %arg7: memref<1x1x6x8xbf16, #tpu.memory_space<vmem>>, %arg8: memref<1x1x4x16xf32, #tpu.memory_space<vmem>>) attributes {dimension_semantics = [#tpu.dimension_semantics<parallel>, #tpu.dimension_semantics<parallel>], iteration_bounds = array<i64: 2, 8>, scalar_prefetch = 0 : i64, scratch_operands = 0 : i64, tpu.core_type = #tpu.core_type<tc>, window_params = [{pipeline_mode = #tpu.pipeline_mode<synchronous>, transform_indices = @transform_0, window_bounds = array<i64: 3, 3, 8, 16>}, {pipeline_mode = #tpu.pipeline_mode<synchronous>, transform_indices = @transform_1, window_bounds = array<i64: 1, 16>}, {pipeline_mode = #tpu.pipeline_mode<synchronous>, transform_indices = @transform_2, window_bounds = array<i64: 1, 16>}, {transform_indices = @transform_3, window_bounds = array<i64: 1, 1, 6, 8>}, {transform_indices = @transform_4, window_bounds = array<i64: 1, 1, 6, 8>}, {transform_indices = @transform_5, window_bounds = array<i64: 1, 1, 6, 8>}, {transform_indices = @transform_6, window_bounds = array<i64: 1, 1, 4, 16>}]} {
    %cst = arith.constant 0.000000e+00 : f32
    %0 = vector.broadcast %cst : f32 to vector<4x16xf32>
    %c0 = arith.constant 0 : index
    %c0_0 = arith.constant 0 : index
    %c0_1 = arith.constant 0 : index
    %c0_2 = arith.constant 0 : index
    %1 = vector.load %arg5[%c0, %c0_0, %c0_1, %c0_2] : memref<1x1x6x8xbf16, #tpu.memory_space<vmem>>, vector<1x1x6x8xbf16>
    %2 = vector.shape_cast %1 : vector<1x1x6x8xbf16> to vector<6x8xbf16>
    %3 = vector.extract_strided_slice %2 {offsets = [0, 0], sizes = [4, 8], strides = [1, 1]} : vector<6x8xbf16> to vector<4x8xbf16>
    %c0_3 = arith.constant 0 : index
    %c0_4 = arith.constant 0 : index
    %c0_5 = arith.constant 0 : index
    %c0_6 = arith.constant 0 : index
    %4 = vector.load %arg2[%c0_3, %c0_4, %c0_5, %c0_6] : memref<3x3x8x16xbf16, #tpu.memory_space<vmem>>, vector<1x1x8x16xbf16>
    %5 = vector.shape_cast %4 : vector<1x1x8x16xbf16> to vector<8x16xbf16>
    %cst_7 = arith.constant dense<0.000000e+00> : vector<4x16xf32>
    %6 = tpu.matmul %3, %5, %cst_7 {dimension_numbers = #tpu.dot_dimension_numbers<[1], [0], [0], [1], [0, 0, 1, 1], [], []>} : vector<4x8xbf16>, vector<8x16xbf16>, vector<4x16xf32> -> vector<4x16xf32>
    %7 = arith.addf %0, %6 : vector<4x16xf32>
    %8 = vector.extract_strided_slice %2 {offsets = [1, 0], sizes = [4, 8], strides = [1, 1]} : vector<6x8xbf16> to vector<4x8xbf16>
    %c0_8 = arith.constant 0 : index
    %c1 = arith.constant 1 : index
    %c0_9 = arith.constant 0 : index
    %c0_10 = arith.constant 0 : index
    %9 = vector.load %arg2[%c0_8, %c1, %c0_9, %c0_10] : memref<3x3x8x16xbf16, #tpu.memory_space<vmem>>, vector<1x1x8x16xbf16>
    %10 = vector.shape_cast %9 : vector<1x1x8x16xbf16> to vector<8x16xbf16>
    %cst_11 = arith.constant dense<0.000000e+00> : vector<4x16xf32>
    %11 = tpu.matmul %8, %10, %cst_11 {dimension_numbers = #tpu.dot_dimension_numbers<[1], [0], [0], [1], [0, 0, 1, 1], [], []>} : vector<4x8xbf16>, vector<8x16xbf16>, vector<4x16xf32> -> vector<4x16xf32>
    %12 = arith.addf %7, %11 : vector<4x16xf32>
    %13 = vector.extract_strided_slice %2 {offsets = [2, 0], sizes = [4, 8], strides = [1, 1]} : vector<6x8xbf16> to vector<4x8xbf16>
    %c0_12 = arith.constant 0 : index
    %c2 = arith.constant 2 : index
    %c0_13 = arith.constant 0 : index
    %c0_14 = arith.constant 0 : index
    %14 = vector.load %arg2[%c0_12, %c2, %c0_13, %c0_14] : memref<3x3x8x16xbf16, #tpu.memory_space<vmem>>, vector<1x1x8x16xbf16>
    %15 = vector.shape_cast %14 : vector<1x1x8x16xbf16> to vector<8x16xbf16>
    %cst_15 = arith.constant dense<0.000000e+00> : vector<4x16xf32>
    %16 = tpu.matmul %13, %15, %cst_15 {dimension_numbers = #tpu.dot_dimension_numbers<[1], [0], [0], [1], [0, 0, 1, 1], [], []>} : vector<4x8xbf16>, vector<8x16xbf16>, vector<4x16xf32> -> vector<4x16xf32>
    %17 = arith.addf %12, %16 : vector<4x16xf32>
    %c0_16 = arith.constant 0 : index
    %c0_17 = arith.constant 0 : index
    %c0_18 = arith.constant 0 : index
    %c0_19 = arith.constant 0 : index
    %18 = vector.load %arg6[%c0_16, %c0_17, %c0_18, %c0_19] : memref<1x1x6x8xbf16, #tpu.memory_space<vmem>>, vector<1x1x6x8xbf16>
    %19 = vector.shape_cast %18 : vector<1x1x6x8xbf16> to vector<6x8xbf16>
    %20 = vector.extract_strided_slice %19 {offsets = [0, 0], sizes = [4, 8], strides = [1, 1]} : vector<6x8xbf16> to vector<4x8xbf16>
    %c1_20 = arith.constant 1 : index
    %c0_21 = arith.constant 0 : index
    %c0_22 = arith.constant 0 : index
    %c0_23 = arith.constant 0 : index
    %21 = vector.load %arg2[%c1_20, %c0_21, %c0_22, %c0_23] : memref<3x3x8x16xbf16, #tpu.memory_space<vmem>>, vector<1x1x8x16xbf16>
    %22 = vector.shape_cast %21 : vector<1x1x8x16xbf16> to vector<8x16xbf16>
    %cst_24 = arith.constant dense<0.000000e+00> : vector<4x16xf32>
    %23 = tpu.matmul %20, %22, %cst_24 {dimension_numbers = #tpu.dot_dimension_numbers<[1], [0], [0], [1], [0, 0, 1, 1], [], []>} : vector<4x8xbf16>, vector<8x16xbf16>, vector<4x16xf32> -> vector<4x16xf32>
    %24 = arith.addf %17, %23 : vector<4x16xf32>
    %25 = vector.extract_strided_slice %19 {offsets = [1, 0], sizes = [4, 8], strides = [1, 1]} : vector<6x8xbf16> to vector<4x8xbf16>
    %c1_25 = arith.constant 1 : index
    %c1_26 = arith.constant 1 : index
    %c0_27 = arith.constant 0 : index
    %c0_28 = arith.constant 0 : index
    %26 = vector.load %arg2[%c1_25, %c1_26, %c0_27, %c0_28] : memref<3x3x8x16xbf16, #tpu.memory_space<vmem>>, vector<1x1x8x16xbf16>
    %27 = vector.shape_cast %26 : vector<1x1x8x16xbf16> to vector<8x16xbf16>
    %cst_29 = arith.constant dense<0.000000e+00> : vector<4x16xf32>
    %28 = tpu.matmul %25, %27, %cst_29 {dimension_numbers = #tpu.dot_dimension_numbers<[1], [0], [0], [1], [0, 0, 1, 1], [], []>} : vector<4x8xbf16>, vector<8x16xbf16>, vector<4x16xf32> -> vector<4x16xf32>
    %29 = arith.addf %24, %28 : vector<4x16xf32>
    %30 = vector.extract_strided_slice %19 {offsets = [2, 0], sizes = [4, 8], strides = [1, 1]} : vector<6x8xbf16> to vector<4x8xbf16>
    %c1_30 = arith.constant 1 : index
    %c2_31 = arith.constant 2 : index
    %c0_32 = arith.constant 0 : index
    %c0_33 = arith.constant 0 : index
    %31 = vector.load %arg2[%c1_30, %c2_31, %c0_32, %c0_33] : memref<3x3x8x16xbf16, #tpu.memory_space<vmem>>, vector<1x1x8x16xbf16>
    %32 = vector.shape_cast %31 : vector<1x1x8x16xbf16> to vector<8x16xbf16>
    %cst_34 = arith.constant dense<0.000000e+00> : vector<4x16xf32>
    %33 = tpu.matmul %30, %32, %cst_34 {dimension_numbers = #tpu.dot_dimension_numbers<[1], [0], [0], [1], [0, 0, 1, 1], [], []>} : vector<4x8xbf16>, vector<8x16xbf16>, vector<4x16xf32> -> vector<4x16xf32>
    %34 = arith.addf %29, %33 : vector<4x16xf32>
    %c0_35 = arith.constant 0 : index
    %c0_36 = arith.constant 0 : index
    %c0_37 = arith.constant 0 : index
    %c0_38 = arith.constant 0 : index
    %35 = vector.load %arg7[%c0_35, %c0_36, %c0_37, %c0_38] : memref<1x1x6x8xbf16, #tpu.memory_space<vmem>>, vector<1x1x6x8xbf16>
    %36 = vector.shape_cast %35 : vector<1x1x6x8xbf16> to vector<6x8xbf16>
    %37 = vector.extract_strided_slice %36 {offsets = [0, 0], sizes = [4, 8], strides = [1, 1]} : vector<6x8xbf16> to vector<4x8xbf16>
    %c2_39 = arith.constant 2 : index
    %c0_40 = arith.constant 0 : index
    %c0_41 = arith.constant 0 : index
    %c0_42 = arith.constant 0 : index
    %38 = vector.load %arg2[%c2_39, %c0_40, %c0_41, %c0_42] : memref<3x3x8x16xbf16, #tpu.memory_space<vmem>>, vector<1x1x8x16xbf16>
    %39 = vector.shape_cast %38 : vector<1x1x8x16xbf16> to vector<8x16xbf16>
    %cst_43 = arith.constant dense<0.000000e+00> : vector<4x16xf32>
    %40 = tpu.matmul %37, %39, %cst_43 {dimension_numbers = #tpu.dot_dimension_numbers<[1], [0], [0], [1], [0, 0, 1, 1], [], []>} : vector<4x8xbf16>, vector<8x16xbf16>, vector<4x16xf32> -> vector<4x16xf32>
    %41 = arith.addf %34, %40 : vector<4x16xf32>
    %42 = vector.extract_strided_slice %36 {offsets = [1, 0], sizes = [4, 8], strides = [1, 1]} : vector<6x8xbf16> to vector<4x8xbf16>
    %c2_44 = arith.constant 2 : index
    %c1_45 = arith.constant 1 : index
    %c0_46 = arith.constant 0 : index
    %c0_47 = arith.constant 0 : index
    %43 = vector.load %arg2[%c2_44, %c1_45, %c0_46, %c0_47] : memref<3x3x8x16xbf16, #tpu.memory_space<vmem>>, vector<1x1x8x16xbf16>
    %44 = vector.shape_cast %43 : vector<1x1x8x16xbf16> to vector<8x16xbf16>
    %cst_48 = arith.constant dense<0.000000e+00> : vector<4x16xf32>
    %45 = tpu.matmul %42, %44, %cst_48 {dimension_numbers = #tpu.dot_dimension_numbers<[1], [0], [0], [1], [0, 0, 1, 1], [], []>} : vector<4x8xbf16>, vector<8x16xbf16>, vector<4x16xf32> -> vector<4x16xf32>
    %46 = arith.addf %41, %45 : vector<4x16xf32>
    %47 = vector.extract_strided_slice %36 {offsets = [2, 0], sizes = [4, 8], strides = [1, 1]} : vector<6x8xbf16> to vector<4x8xbf16>
    %c2_49 = arith.constant 2 : index
    %c2_50 = arith.constant 2 : index
    %c0_51 = arith.constant 0 : index
    %c0_52 = arith.constant 0 : index
    %48 = vector.load %arg2[%c2_49, %c2_50, %c0_51, %c0_52] : memref<3x3x8x16xbf16, #tpu.memory_space<vmem>>, vector<1x1x8x16xbf16>
    %49 = vector.shape_cast %48 : vector<1x1x8x16xbf16> to vector<8x16xbf16>
    %cst_53 = arith.constant dense<0.000000e+00> : vector<4x16xf32>
    %50 = tpu.matmul %47, %49, %cst_53 {dimension_numbers = #tpu.dot_dimension_numbers<[1], [0], [0], [1], [0, 0, 1, 1], [], []>} : vector<4x8xbf16>, vector<8x16xbf16>, vector<4x16xf32> -> vector<4x16xf32>
    %51 = arith.addf %46, %50 : vector<4x16xf32>
    %c0_54 = arith.constant 0 : index
    %c0_55 = arith.constant 0 : index
    %52 = vector.load %arg3[%c0_54, %c0_55] : memref<1x16xf32, #tpu.memory_space<vmem>>, vector<1x16xf32>
    %53 = vector.broadcast %52 : vector<1x16xf32> to vector<4x16xf32>
    %54 = arith.mulf %51, %53 : vector<4x16xf32>
    %c0_56 = arith.constant 0 : index
    %c0_57 = arith.constant 0 : index
    %55 = vector.load %arg4[%c0_56, %c0_57] : memref<1x16xf32, #tpu.memory_space<vmem>>, vector<1x16xf32>
    %56 = vector.broadcast %55 : vector<1x16xf32> to vector<4x16xf32>
    %57 = arith.addf %54, %56 : vector<4x16xf32>
    %cst_58 = arith.constant 0.000000e+00 : f32
    %58 = vector.broadcast %cst_58 : f32 to vector<4x16xf32>
    %59 = arith.maximumf %57, %58 : vector<4x16xf32>
    %c0_59 = arith.constant 0 : index
    %c0_60 = arith.constant 0 : index
    %c0_61 = arith.constant 0 : index
    %c0_62 = arith.constant 0 : index
    %60 = vector.load %arg8[%c0_59, %c0_60, %c0_61, %c0_62] : memref<1x1x4x16xf32, #tpu.memory_space<vmem>>, vector<1x1x4x16xf32>
    %61 = vector.shape_cast %60 : vector<1x1x4x16xf32> to vector<4x16xf32>
    %62 = vector.shape_cast %59 : vector<4x16xf32> to vector<1x1x4x16xf32>
    tpu.vector_store %arg8[%c0_59, %c0_60, %c0_61, %c0_62], %62 {strides = array<i32>} : memref<1x1x4x16xf32, #tpu.memory_space<vmem>>, vector<1x1x4x16xf32>,
    return
  }
  func.func @transform_0(%arg0: i32, %arg1: i32) -> (i32, i32, i32, i32) {
    %c0_i32 = arith.constant 0 : i32
    %c0_i32_0 = arith.constant 0 : i32
    %c0_i32_1 = arith.constant 0 : i32
    %c0_i32_2 = arith.constant 0 : i32
    %c0_i32_3 = arith.constant 0 : i32
    return %c0_i32, %c0_i32_0, %c0_i32_1, %c0_i32_2 : i32, i32, i32, i32
  }
  func.func @transform_1(%arg0: i32, %arg1: i32) -> (i32, i32) {
    %c0_i32 = arith.constant 0 : i32
    %c0_i32_0 = arith.constant 0 : i32
    %c0_i32_1 = arith.constant 0 : i32
    return %c0_i32, %c0_i32_0 : i32, i32
  }
  func.func @transform_2(%arg0: i32, %arg1: i32) -> (i32, i32) {
    %c0_i32 = arith.constant 0 : i32
    %c0_i32_0 = arith.constant 0 : i32
    %c0_i32_1 = arith.constant 0 : i32
    return %c0_i32, %c0_i32_0 : i32, i32
  }
  func.func @transform_3(%arg0: i32, %arg1: i32) -> (i32, i32, i32, i32) {
    %c0_i32 = arith.constant 0 : i32
    %0 = arith.addi %arg1, %c0_i32 : i32
    %c0_i32_0 = arith.constant 0 : i32
    %c0_i32_1 = arith.constant 0 : i32
    %c0_i32_2 = arith.constant 0 : i32
    return %arg0, %0, %c0_i32_0, %c0_i32_1 : i32, i32, i32, i32
  }
  func.func @transform_4(%arg0: i32, %arg1: i32) -> (i32, i32, i32, i32) {
    %c1_i32 = arith.constant 1 : i32
    %0 = arith.addi %arg1, %c1_i32 : i32
    %c0_i32 = arith.constant 0 : i32
    %c0_i32_0 = arith.constant 0 : i32
    %c0_i32_1 = arith.constant 0 : i32
    return %arg0, %0, %c0_i32, %c0_i32_0 : i32, i32, i32, i32
  }
  func.func @transform_5(%arg0: i32, %arg1: i32) -> (i32, i32, i32, i32) {
    %c2_i32 = arith.constant 2 : i32
    %0 = arith.addi %arg1, %c2_i32 : i32
    %c0_i32 = arith.constant 0 : i32
    %c0_i32_0 = arith.constant 0 : i32
    %c0_i32_1 = arith.constant 0 : i32
    return %arg0, %0, %c0_i32, %c0_i32_0 : i32, i32, i32, i32
  }
  func.func @transform_6(%arg0: i32, %arg1: i32) -> (i32, i32, i32, i32) {
    %c0_i32 = arith.constant 0 : i32
    %c0_i32_0 = arith.constant 0 : i32
    %c0_i32_1 = arith.constant 0 : i32
    return %arg0, %arg1, %c0_i32, %c0_i32_0 : i32, i32, i32, i32
  }
}

module attributes {stable_mosaic.version = 11 : i64} {
  func.func @_conv_row_kernel(%arg0: i32, %arg1: i32, %arg2: memref<3x3x16x16xbf16, #tpu.memory_space<vmem>>, %arg3: memref<1x16xf32, #tpu.memory_space<vmem>>, %arg4: memref<1x16xf32, #tpu.memory_space<vmem>>, %arg5: memref<1x1x6x16xbf16, #tpu.memory_space<vmem>>, %arg6: memref<1x1x6x16xbf16, #tpu.memory_space<vmem>>, %arg7: memref<1x1x6x16xbf16, #tpu.memory_space<vmem>>, %arg8: memref<1x1x4x16xf32, #tpu.memory_space<vmem>>) attributes {dimension_semantics = [#tpu.dimension_semantics<parallel>, #tpu.dimension_semantics<parallel>], iteration_bounds = array<i64: 2, 8>, scalar_prefetch = 0 : i64, scratch_operands = 0 : i64, tpu.core_type = #tpu.core_type<tc>, window_params = [{pipeline_mode = #tpu.pipeline_mode<synchronous>, transform_indices = @transform_0, window_bounds = array<i64: 3, 3, 16, 16>}, {pipeline_mode = #tpu.pipeline_mode<synchronous>, transform_indices = @transform_1, window_bounds = array<i64: 1, 16>}, {pipeline_mode = #tpu.pipeline_mode<synchronous>, transform_indices = @transform_2, window_bounds = array<i64: 1, 16>}, {transform_indices = @transform_3, window_bounds = array<i64: 1, 1, 6, 16>}, {transform_indices = @transform_4, window_bounds = array<i64: 1, 1, 6, 16>}, {transform_indices = @transform_5, window_bounds = array<i64: 1, 1, 6, 16>}, {transform_indices = @transform_6, window_bounds = array<i64: 1, 1, 4, 16>}]} {
    %cst = arith.constant 0.000000e+00 : f32
    %0 = vector.broadcast %cst : f32 to vector<4x16xf32>
    %c0 = arith.constant 0 : index
    %c0_0 = arith.constant 0 : index
    %c0_1 = arith.constant 0 : index
    %c0_2 = arith.constant 0 : index
    %1 = vector.load %arg5[%c0, %c0_0, %c0_1, %c0_2] : memref<1x1x6x16xbf16, #tpu.memory_space<vmem>>, vector<1x1x6x16xbf16>
    %2 = vector.shape_cast %1 : vector<1x1x6x16xbf16> to vector<6x16xbf16>
    %3 = vector.extract_strided_slice %2 {offsets = [0, 0], sizes = [4, 16], strides = [1, 1]} : vector<6x16xbf16> to vector<4x16xbf16>
    %c0_3 = arith.constant 0 : index
    %c0_4 = arith.constant 0 : index
    %c0_5 = arith.constant 0 : index
    %c0_6 = arith.constant 0 : index
    %4 = vector.load %arg2[%c0_3, %c0_4, %c0_5, %c0_6] : memref<3x3x16x16xbf16, #tpu.memory_space<vmem>>, vector<1x1x16x16xbf16>
    %5 = vector.shape_cast %4 : vector<1x1x16x16xbf16> to vector<16x16xbf16>
    %cst_7 = arith.constant dense<0.000000e+00> : vector<4x16xf32>
    %6 = tpu.matmul %3, %5, %cst_7 {dimension_numbers = #tpu.dot_dimension_numbers<[1], [0], [0], [1], [0, 0, 1, 1], [], []>} : vector<4x16xbf16>, vector<16x16xbf16>, vector<4x16xf32> -> vector<4x16xf32>
    %7 = arith.addf %0, %6 : vector<4x16xf32>
    %8 = vector.extract_strided_slice %2 {offsets = [1, 0], sizes = [4, 16], strides = [1, 1]} : vector<6x16xbf16> to vector<4x16xbf16>
    %c0_8 = arith.constant 0 : index
    %c1 = arith.constant 1 : index
    %c0_9 = arith.constant 0 : index
    %c0_10 = arith.constant 0 : index
    %9 = vector.load %arg2[%c0_8, %c1, %c0_9, %c0_10] : memref<3x3x16x16xbf16, #tpu.memory_space<vmem>>, vector<1x1x16x16xbf16>
    %10 = vector.shape_cast %9 : vector<1x1x16x16xbf16> to vector<16x16xbf16>
    %cst_11 = arith.constant dense<0.000000e+00> : vector<4x16xf32>
    %11 = tpu.matmul %8, %10, %cst_11 {dimension_numbers = #tpu.dot_dimension_numbers<[1], [0], [0], [1], [0, 0, 1, 1], [], []>} : vector<4x16xbf16>, vector<16x16xbf16>, vector<4x16xf32> -> vector<4x16xf32>
    %12 = arith.addf %7, %11 : vector<4x16xf32>
    %13 = vector.extract_strided_slice %2 {offsets = [2, 0], sizes = [4, 16], strides = [1, 1]} : vector<6x16xbf16> to vector<4x16xbf16>
    %c0_12 = arith.constant 0 : index
    %c2 = arith.constant 2 : index
    %c0_13 = arith.constant 0 : index
    %c0_14 = arith.constant 0 : index
    %14 = vector.load %arg2[%c0_12, %c2, %c0_13, %c0_14] : memref<3x3x16x16xbf16, #tpu.memory_space<vmem>>, vector<1x1x16x16xbf16>
    %15 = vector.shape_cast %14 : vector<1x1x16x16xbf16> to vector<16x16xbf16>
    %cst_15 = arith.constant dense<0.000000e+00> : vector<4x16xf32>
    %16 = tpu.matmul %13, %15, %cst_15 {dimension_numbers = #tpu.dot_dimension_numbers<[1], [0], [0], [1], [0, 0, 1, 1], [], []>} : vector<4x16xbf16>, vector<16x16xbf16>, vector<4x16xf32> -> vector<4x16xf32>
    %17 = arith.addf %12, %16 : vector<4x16xf32>
    %c0_16 = arith.constant 0 : index
    %c0_17 = arith.constant 0 : index
    %c0_18 = arith.constant 0 : index
    %c0_19 = arith.constant 0 : index
    %18 = vector.load %arg6[%c0_16, %c0_17, %c0_18, %c0_19] : memref<1x1x6x16xbf16, #tpu.memory_space<vmem>>, vector<1x1x6x16xbf16>
    %19 = vector.shape_cast %18 : vector<1x1x6x16xbf16> to vector<6x16xbf16>
    %20 = vector.extract_strided_slice %19 {offsets = [0, 0], sizes = [4, 16], strides = [1, 1]} : vector<6x16xbf16> to vector<4x16xbf16>
    %c1_20 = arith.constant 1 : index
    %c0_21 = arith.constant 0 : index
    %c0_22 = arith.constant 0 : index
    %c0_23 = arith.constant 0 : index
    %21 = vector.load %arg2[%c1_20, %c0_21, %c0_22, %c0_23] : memref<3x3x16x16xbf16, #tpu.memory_space<vmem>>, vector<1x1x16x16xbf16>
    %22 = vector.shape_cast %21 : vector<1x1x16x16xbf16> to vector<16x16xbf16>
    %cst_24 = arith.constant dense<0.000000e+00> : vector<4x16xf32>
    %23 = tpu.matmul %20, %22, %cst_24 {dimension_numbers = #tpu.dot_dimension_numbers<[1], [0], [0], [1], [0, 0, 1, 1], [], []>} : vector<4x16xbf16>, vector<16x16xbf16>, vector<4x16xf32> -> vector<4x16xf32>
    %24 = arith.addf %17, %23 : vector<4x16xf32>
    %25 = vector.extract_strided_slice %19 {offsets = [1, 0], sizes = [4, 16], strides = [1, 1]} : vector<6x16xbf16> to vector<4x16xbf16>
    %c1_25 = arith.constant 1 : index
    %c1_26 = arith.constant 1 : index
    %c0_27 = arith.constant 0 : index
    %c0_28 = arith.constant 0 : index
    %26 = vector.load %arg2[%c1_25, %c1_26, %c0_27, %c0_28] : memref<3x3x16x16xbf16, #tpu.memory_space<vmem>>, vector<1x1x16x16xbf16>
    %27 = vector.shape_cast %26 : vector<1x1x16x16xbf16> to vector<16x16xbf16>
    %cst_29 = arith.constant dense<0.000000e+00> : vector<4x16xf32>
    %28 = tpu.matmul %25, %27, %cst_29 {dimension_numbers = #tpu.dot_dimension_numbers<[1], [0], [0], [1], [0, 0, 1, 1], [], []>} : vector<4x16xbf16>, vector<16x16xbf16>, vector<4x16xf32> -> vector<4x16xf32>
    %29 = arith.addf %24, %28 : vector<4x16xf32>
    %30 = vector.extract_strided_slice %19 {offsets = [2, 0], sizes = [4, 16], strides = [1, 1]} : vector<6x16xbf16> to vector<4x16xbf16>
    %c1_30 = arith.constant 1 : index
    %c2_31 = arith.constant 2 : index
    %c0_32 = arith.constant 0 : index
    %c0_33 = arith.constant 0 : index
    %31 = vector.load %arg2[%c1_30, %c2_31, %c0_32, %c0_33] : memref<3x3x16x16xbf16, #tpu.memory_space<vmem>>, vector<1x1x16x16xbf16>
    %32 = vector.shape_cast %31 : vector<1x1x16x16xbf16> to vector<16x16xbf16>
    %cst_34 = arith.constant dense<0.000000e+00> : vector<4x16xf32>
    %33 = tpu.matmul %30, %32, %cst_34 {dimension_numbers = #tpu.dot_dimension_numbers<[1], [0], [0], [1], [0, 0, 1, 1], [], []>} : vector<4x16xbf16>, vector<16x16xbf16>, vector<4x16xf32> -> vector<4x16xf32>
    %34 = arith.addf %29, %33 : vector<4x16xf32>
    %c0_35 = arith.constant 0 : index
    %c0_36 = arith.constant 0 : index
    %c0_37 = arith.constant 0 : index
    %c0_38 = arith.constant 0 : index
    %35 = vector.load %arg7[%c0_35, %c0_36, %c0_37, %c0_38] : memref<1x1x6x16xbf16, #tpu.memory_space<vmem>>, vector<1x1x6x16xbf16>
    %36 = vector.shape_cast %35 : vector<1x1x6x16xbf16> to vector<6x16xbf16>
    %37 = vector.extract_strided_slice %36 {offsets = [0, 0], sizes = [4, 16], strides = [1, 1]} : vector<6x16xbf16> to vector<4x16xbf16>
    %c2_39 = arith.constant 2 : index
    %c0_40 = arith.constant 0 : index
    %c0_41 = arith.constant 0 : index
    %c0_42 = arith.constant 0 : index
    %38 = vector.load %arg2[%c2_39, %c0_40, %c0_41, %c0_42] : memref<3x3x16x16xbf16, #tpu.memory_space<vmem>>, vector<1x1x16x16xbf16>
    %39 = vector.shape_cast %38 : vector<1x1x16x16xbf16> to vector<16x16xbf16>
    %cst_43 = arith.constant dense<0.000000e+00> : vector<4x16xf32>
    %40 = tpu.matmul %37, %39, %cst_43 {dimension_numbers = #tpu.dot_dimension_numbers<[1], [0], [0], [1], [0, 0, 1, 1], [], []>} : vector<4x16xbf16>, vector<16x16xbf16>, vector<4x16xf32> -> vector<4x16xf32>
    %41 = arith.addf %34, %40 : vector<4x16xf32>
    %42 = vector.extract_strided_slice %36 {offsets = [1, 0], sizes = [4, 16], strides = [1, 1]} : vector<6x16xbf16> to vector<4x16xbf16>
    %c2_44 = arith.constant 2 : index
    %c1_45 = arith.constant 1 : index
    %c0_46 = arith.constant 0 : index
    %c0_47 = arith.constant 0 : index
    %43 = vector.load %arg2[%c2_44, %c1_45, %c0_46, %c0_47] : memref<3x3x16x16xbf16, #tpu.memory_space<vmem>>, vector<1x1x16x16xbf16>
    %44 = vector.shape_cast %43 : vector<1x1x16x16xbf16> to vector<16x16xbf16>
    %cst_48 = arith.constant dense<0.000000e+00> : vector<4x16xf32>
    %45 = tpu.matmul %42, %44, %cst_48 {dimension_numbers = #tpu.dot_dimension_numbers<[1], [0], [0], [1], [0, 0, 1, 1], [], []>} : vector<4x16xbf16>, vector<16x16xbf16>, vector<4x16xf32> -> vector<4x16xf32>
    %46 = arith.addf %41, %45 : vector<4x16xf32>
    %47 = vector.extract_strided_slice %36 {offsets = [2, 0], sizes = [4, 16], strides = [1, 1]} : vector<6x16xbf16> to vector<4x16xbf16>
    %c2_49 = arith.constant 2 : index
    %c2_50 = arith.constant 2 : index
    %c0_51 = arith.constant 0 : index
    %c0_52 = arith.constant 0 : index
    %48 = vector.load %arg2[%c2_49, %c2_50, %c0_51, %c0_52] : memref<3x3x16x16xbf16, #tpu.memory_space<vmem>>, vector<1x1x16x16xbf16>
    %49 = vector.shape_cast %48 : vector<1x1x16x16xbf16> to vector<16x16xbf16>
    %cst_53 = arith.constant dense<0.000000e+00> : vector<4x16xf32>
    %50 = tpu.matmul %47, %49, %cst_53 {dimension_numbers = #tpu.dot_dimension_numbers<[1], [0], [0], [1], [0, 0, 1, 1], [], []>} : vector<4x16xbf16>, vector<16x16xbf16>, vector<4x16xf32> -> vector<4x16xf32>
    %51 = arith.addf %46, %50 : vector<4x16xf32>
    %c0_54 = arith.constant 0 : index
    %c0_55 = arith.constant 0 : index
    %52 = vector.load %arg3[%c0_54, %c0_55] : memref<1x16xf32, #tpu.memory_space<vmem>>, vector<1x16xf32>
    %53 = vector.broadcast %52 : vector<1x16xf32> to vector<4x16xf32>
    %54 = arith.mulf %51, %53 : vector<4x16xf32>
    %c0_56 = arith.constant 0 : index
    %c0_57 = arith.constant 0 : index
    %55 = vector.load %arg4[%c0_56, %c0_57] : memref<1x16xf32, #tpu.memory_space<vmem>>, vector<1x16xf32>
    %56 = vector.broadcast %55 : vector<1x16xf32> to vector<4x16xf32>
    %57 = arith.addf %54, %56 : vector<4x16xf32>
    %cst_58 = arith.constant 0.000000e+00 : f32
    %58 = vector.broadcast %cst_58 : f32 to vector<4x16xf32>
    %59 = arith.maximumf %57, %58 : vector<4x16xf32>
    %c0_59 = arith.constant 0 : index
    %c0_60 = arith.constant 0 : index
    %c0_61 = arith.constant 0 : index
    %c0_62 = arith.constant 0 : index
    %60 = vector.load %arg8[%c0_59, %c0_60, %c0_61, %c0_62] : memref<1x1x4x16xf32, #tpu.memory_space<vmem>>, vector<1x1x4x16xf32>
    %61 = vector.shape_cast %60 : vector<1x1x4x16xf32> to vector<4x16xf32>
    %62 = vector.shape_cast %59 : vector<4x16xf32> to vector<1x1x4x16xf32>
    tpu.vector_store %arg8[%c0_59, %c0_60, %c0_61, %c0_62], %62 {strides = array<i32>} : memref<1x1x4x16xf32, #tpu.memory_space<vmem>>, vector<1x1x4x16xf32>,
    return
  }
  func.func @transform_0(%arg0: i32, %arg1: i32) -> (i32, i32, i32, i32) {
    %c0_i32 = arith.constant 0 : i32
    %c0_i32_0 = arith.constant 0 : i32
    %c0_i32_1 = arith.constant 0 : i32
    %c0_i32_2 = arith.constant 0 : i32
    %c0_i32_3 = arith.constant 0 : i32
    return %c0_i32, %c0_i32_0, %c0_i32_1, %c0_i32_2 : i32, i32, i32, i32
  }
  func.func @transform_1(%arg0: i32, %arg1: i32) -> (i32, i32) {
    %c0_i32 = arith.constant 0 : i32
    %c0_i32_0 = arith.constant 0 : i32
    %c0_i32_1 = arith.constant 0 : i32
    return %c0_i32, %c0_i32_0 : i32, i32
  }
  func.func @transform_2(%arg0: i32, %arg1: i32) -> (i32, i32) {
    %c0_i32 = arith.constant 0 : i32
    %c0_i32_0 = arith.constant 0 : i32
    %c0_i32_1 = arith.constant 0 : i32
    return %c0_i32, %c0_i32_0 : i32, i32
  }
  func.func @transform_3(%arg0: i32, %arg1: i32) -> (i32, i32, i32, i32) {
    %c0_i32 = arith.constant 0 : i32
    %0 = arith.addi %arg1, %c0_i32 : i32
    %c0_i32_0 = arith.constant 0 : i32
    %c0_i32_1 = arith.constant 0 : i32
    %c0_i32_2 = arith.constant 0 : i32
    return %arg0, %0, %c0_i32_0, %c0_i32_1 : i32, i32, i32, i32
  }
  func.func @transform_4(%arg0: i32, %arg1: i32) -> (i32, i32, i32, i32) {
    %c1_i32 = arith.constant 1 : i32
    %0 = arith.addi %arg1, %c1_i32 : i32
    %c0_i32 = arith.constant 0 : i32
    %c0_i32_0 = arith.constant 0 : i32
    %c0_i32_1 = arith.constant 0 : i32
    return %arg0, %0, %c0_i32, %c0_i32_0 : i32, i32, i32, i32
  }
  func.func @transform_5(%arg0: i32, %arg1: i32) -> (i32, i32, i32, i32) {
    %c2_i32 = arith.constant 2 : i32
    %0 = arith.addi %arg1, %c2_i32 : i32
    %c0_i32 = arith.constant 0 : i32
    %c0_i32_0 = arith.constant 0 : i32
    %c0_i32_1 = arith.constant 0 : i32
    return %arg0, %0, %c0_i32, %c0_i32_0 : i32, i32, i32, i32
  }
  func.func @transform_6(%arg0: i32, %arg1: i32) -> (i32, i32, i32, i32) {
    %c0_i32 = arith.constant 0 : i32
    %c0_i32_0 = arith.constant 0 : i32
    %c0_i32_1 = arith.constant 0 : i32
    return %arg0, %arg1, %c0_i32, %c0_i32_0 : i32, i32, i32, i32
  }
}

module attributes {stable_mosaic.version = 11 : i64} {
  func.func @_pool_kernel(%arg0: i32, %arg1: i32, %arg2: memref<1x1x2x4x16xf32, #tpu.memory_space<vmem>>, %arg3: memref<1x1x4x16xf32, #tpu.memory_space<vmem>>) attributes {dimension_semantics = [#tpu.dimension_semantics<parallel>, #tpu.dimension_semantics<parallel>], iteration_bounds = array<i64: 2, 4>, scalar_prefetch = 0 : i64, scratch_operands = 0 : i64, tpu.core_type = #tpu.core_type<tc>, window_params = [{transform_indices = @transform_0, window_bounds = array<i64: 1, 1, 2, 4, 16>}, {transform_indices = @transform_1, window_bounds = array<i64: 1, 1, 4, 16>}]} {
    %c0 = arith.constant 0 : index
    %c0_0 = arith.constant 0 : index
    %c0_1 = arith.constant 0 : index
    %c0_2 = arith.constant 0 : index
    %c0_3 = arith.constant 0 : index
    %0 = vector.load %arg2[%c0, %c0_0, %c0_1, %c0_2, %c0_3] : memref<1x1x2x4x16xf32, #tpu.memory_space<vmem>>, vector<1x1x2x4x16xf32>
    %1 = vector.shape_cast %0 : vector<1x1x2x4x16xf32> to vector<2x4x16xf32>
    %2 = vector.extract_strided_slice %1 {offsets = [0, 0, 0], sizes = [1, 4, 16], strides = [1, 1, 1]} : vector<2x4x16xf32> to vector<1x4x16xf32>
    %3 = vector.shape_cast %2 : vector<1x4x16xf32> to vector<4x16xf32>
    %4 = vector.extract_strided_slice %1 {offsets = [1, 0, 0], sizes = [1, 4, 16], strides = [1, 1, 1]} : vector<2x4x16xf32> to vector<1x4x16xf32>
    %5 = vector.shape_cast %4 : vector<1x4x16xf32> to vector<4x16xf32>
    %6 = arith.maximumf %3, %5 : vector<4x16xf32>
    %c0_4 = arith.constant 0 : index
    %c0_5 = arith.constant 0 : index
    %c0_6 = arith.constant 0 : index
    %c0_7 = arith.constant 0 : index
    %7 = vector.load %arg3[%c0_4, %c0_5, %c0_6, %c0_7] : memref<1x1x4x16xf32, #tpu.memory_space<vmem>>, vector<1x1x4x16xf32>
    %8 = vector.shape_cast %7 : vector<1x1x4x16xf32> to vector<4x16xf32>
    %9 = vector.shape_cast %6 : vector<4x16xf32> to vector<1x1x4x16xf32>
    tpu.vector_store %arg3[%c0_4, %c0_5, %c0_6, %c0_7], %9 {strides = array<i32>} : memref<1x1x4x16xf32, #tpu.memory_space<vmem>>, vector<1x1x4x16xf32>,
    return
  }
  func.func @transform_0(%arg0: i32, %arg1: i32) -> (i32, i32, i32, i32, i32) {
    %c0_i32 = arith.constant 0 : i32
    %c0_i32_0 = arith.constant 0 : i32
    %c0_i32_1 = arith.constant 0 : i32
    %c0_i32_2 = arith.constant 0 : i32
    return %arg0, %arg1, %c0_i32, %c0_i32_0, %c0_i32_1 : i32, i32, i32, i32, i32
  }
  func.func @transform_1(%arg0: i32, %arg1: i32) -> (i32, i32, i32, i32) {
    %c0_i32 = arith.constant 0 : i32
    %c0_i32_0 = arith.constant 0 : i32
    %c0_i32_1 = arith.constant 0 : i32
    return %arg0, %arg1, %c0_i32, %c0_i32_0 : i32, i32, i32, i32
  }
}

module attributes {stable_mosaic.version = 11 : i64} {
  func.func @_conv_row_kernel(%arg0: i32, %arg1: i32, %arg2: memref<3x3x16x32xbf16, #tpu.memory_space<vmem>>, %arg3: memref<1x32xf32, #tpu.memory_space<vmem>>, %arg4: memref<1x32xf32, #tpu.memory_space<vmem>>, %arg5: memref<1x1x6x16xbf16, #tpu.memory_space<vmem>>, %arg6: memref<1x1x6x16xbf16, #tpu.memory_space<vmem>>, %arg7: memref<1x1x6x16xbf16, #tpu.memory_space<vmem>>, %arg8: memref<1x1x4x32xf32, #tpu.memory_space<vmem>>, %arg9: memref<1x32xf32, #tpu.memory_space<vmem>>, %arg10: memref<1x32xf32, #tpu.memory_space<vmem>>) attributes {dimension_semantics = [#tpu.dimension_semantics<arbitrary>, #tpu.dimension_semantics<arbitrary>], iteration_bounds = array<i64: 2, 4>, scalar_prefetch = 0 : i64, scratch_operands = 0 : i64, tpu.core_type = #tpu.core_type<tc>, window_params = [{pipeline_mode = #tpu.pipeline_mode<synchronous>, transform_indices = @transform_0, window_bounds = array<i64: 3, 3, 16, 32>}, {pipeline_mode = #tpu.pipeline_mode<synchronous>, transform_indices = @transform_1, window_bounds = array<i64: 1, 32>}, {pipeline_mode = #tpu.pipeline_mode<synchronous>, transform_indices = @transform_2, window_bounds = array<i64: 1, 32>}, {transform_indices = @transform_3, window_bounds = array<i64: 1, 1, 6, 16>}, {transform_indices = @transform_4, window_bounds = array<i64: 1, 1, 6, 16>}, {transform_indices = @transform_5, window_bounds = array<i64: 1, 1, 6, 16>}, {transform_indices = @transform_6, window_bounds = array<i64: 1, 1, 4, 32>}, {pipeline_mode = #tpu.pipeline_mode<synchronous>, transform_indices = @transform_7, window_bounds = array<i64: 1, 32>}, {pipeline_mode = #tpu.pipeline_mode<synchronous>, transform_indices = @transform_8, window_bounds = array<i64: 1, 32>}]} {
    %cst = arith.constant 0.000000e+00 : f32
    %0 = vector.broadcast %cst : f32 to vector<4x32xf32>
    %c0 = arith.constant 0 : index
    %c0_0 = arith.constant 0 : index
    %c0_1 = arith.constant 0 : index
    %c0_2 = arith.constant 0 : index
    %1 = vector.load %arg5[%c0, %c0_0, %c0_1, %c0_2] : memref<1x1x6x16xbf16, #tpu.memory_space<vmem>>, vector<1x1x6x16xbf16>
    %2 = vector.shape_cast %1 : vector<1x1x6x16xbf16> to vector<6x16xbf16>
    %3 = vector.extract_strided_slice %2 {offsets = [0, 0], sizes = [4, 16], strides = [1, 1]} : vector<6x16xbf16> to vector<4x16xbf16>
    %c0_3 = arith.constant 0 : index
    %c0_4 = arith.constant 0 : index
    %c0_5 = arith.constant 0 : index
    %c0_6 = arith.constant 0 : index
    %4 = vector.load %arg2[%c0_3, %c0_4, %c0_5, %c0_6] : memref<3x3x16x32xbf16, #tpu.memory_space<vmem>>, vector<1x1x16x32xbf16>
    %5 = vector.shape_cast %4 : vector<1x1x16x32xbf16> to vector<16x32xbf16>
    %cst_7 = arith.constant dense<0.000000e+00> : vector<4x32xf32>
    %6 = tpu.matmul %3, %5, %cst_7 {dimension_numbers = #tpu.dot_dimension_numbers<[1], [0], [0], [1], [0, 0, 1, 1], [], []>} : vector<4x16xbf16>, vector<16x32xbf16>, vector<4x32xf32> -> vector<4x32xf32>
    %7 = arith.addf %0, %6 : vector<4x32xf32>
    %8 = vector.extract_strided_slice %2 {offsets = [1, 0], sizes = [4, 16], strides = [1, 1]} : vector<6x16xbf16> to vector<4x16xbf16>
    %c0_8 = arith.constant 0 : index
    %c1 = arith.constant 1 : index
    %c0_9 = arith.constant 0 : index
    %c0_10 = arith.constant 0 : index
    %9 = vector.load %arg2[%c0_8, %c1, %c0_9, %c0_10] : memref<3x3x16x32xbf16, #tpu.memory_space<vmem>>, vector<1x1x16x32xbf16>
    %10 = vector.shape_cast %9 : vector<1x1x16x32xbf16> to vector<16x32xbf16>
    %cst_11 = arith.constant dense<0.000000e+00> : vector<4x32xf32>
    %11 = tpu.matmul %8, %10, %cst_11 {dimension_numbers = #tpu.dot_dimension_numbers<[1], [0], [0], [1], [0, 0, 1, 1], [], []>} : vector<4x16xbf16>, vector<16x32xbf16>, vector<4x32xf32> -> vector<4x32xf32>
    %12 = arith.addf %7, %11 : vector<4x32xf32>
    %13 = vector.extract_strided_slice %2 {offsets = [2, 0], sizes = [4, 16], strides = [1, 1]} : vector<6x16xbf16> to vector<4x16xbf16>
    %c0_12 = arith.constant 0 : index
    %c2 = arith.constant 2 : index
    %c0_13 = arith.constant 0 : index
    %c0_14 = arith.constant 0 : index
    %14 = vector.load %arg2[%c0_12, %c2, %c0_13, %c0_14] : memref<3x3x16x32xbf16, #tpu.memory_space<vmem>>, vector<1x1x16x32xbf16>
    %15 = vector.shape_cast %14 : vector<1x1x16x32xbf16> to vector<16x32xbf16>
    %cst_15 = arith.constant dense<0.000000e+00> : vector<4x32xf32>
    %16 = tpu.matmul %13, %15, %cst_15 {dimension_numbers = #tpu.dot_dimension_numbers<[1], [0], [0], [1], [0, 0, 1, 1], [], []>} : vector<4x16xbf16>, vector<16x32xbf16>, vector<4x32xf32> -> vector<4x32xf32>
    %17 = arith.addf %12, %16 : vector<4x32xf32>
    %c0_16 = arith.constant 0 : index
    %c0_17 = arith.constant 0 : index
    %c0_18 = arith.constant 0 : index
    %c0_19 = arith.constant 0 : index
    %18 = vector.load %arg6[%c0_16, %c0_17, %c0_18, %c0_19] : memref<1x1x6x16xbf16, #tpu.memory_space<vmem>>, vector<1x1x6x16xbf16>
    %19 = vector.shape_cast %18 : vector<1x1x6x16xbf16> to vector<6x16xbf16>
    %20 = vector.extract_strided_slice %19 {offsets = [0, 0], sizes = [4, 16], strides = [1, 1]} : vector<6x16xbf16> to vector<4x16xbf16>
    %c1_20 = arith.constant 1 : index
    %c0_21 = arith.constant 0 : index
    %c0_22 = arith.constant 0 : index
    %c0_23 = arith.constant 0 : index
    %21 = vector.load %arg2[%c1_20, %c0_21, %c0_22, %c0_23] : memref<3x3x16x32xbf16, #tpu.memory_space<vmem>>, vector<1x1x16x32xbf16>
    %22 = vector.shape_cast %21 : vector<1x1x16x32xbf16> to vector<16x32xbf16>
    %cst_24 = arith.constant dense<0.000000e+00> : vector<4x32xf32>
    %23 = tpu.matmul %20, %22, %cst_24 {dimension_numbers = #tpu.dot_dimension_numbers<[1], [0], [0], [1], [0, 0, 1, 1], [], []>} : vector<4x16xbf16>, vector<16x32xbf16>, vector<4x32xf32> -> vector<4x32xf32>
    %24 = arith.addf %17, %23 : vector<4x32xf32>
    %25 = vector.extract_strided_slice %19 {offsets = [1, 0], sizes = [4, 16], strides = [1, 1]} : vector<6x16xbf16> to vector<4x16xbf16>
    %c1_25 = arith.constant 1 : index
    %c1_26 = arith.constant 1 : index
    %c0_27 = arith.constant 0 : index
    %c0_28 = arith.constant 0 : index
    %26 = vector.load %arg2[%c1_25, %c1_26, %c0_27, %c0_28] : memref<3x3x16x32xbf16, #tpu.memory_space<vmem>>, vector<1x1x16x32xbf16>
    %27 = vector.shape_cast %26 : vector<1x1x16x32xbf16> to vector<16x32xbf16>
    %cst_29 = arith.constant dense<0.000000e+00> : vector<4x32xf32>
    %28 = tpu.matmul %25, %27, %cst_29 {dimension_numbers = #tpu.dot_dimension_numbers<[1], [0], [0], [1], [0, 0, 1, 1], [], []>} : vector<4x16xbf16>, vector<16x32xbf16>, vector<4x32xf32> -> vector<4x32xf32>
    %29 = arith.addf %24, %28 : vector<4x32xf32>
    %30 = vector.extract_strided_slice %19 {offsets = [2, 0], sizes = [4, 16], strides = [1, 1]} : vector<6x16xbf16> to vector<4x16xbf16>
    %c1_30 = arith.constant 1 : index
    %c2_31 = arith.constant 2 : index
    %c0_32 = arith.constant 0 : index
    %c0_33 = arith.constant 0 : index
    %31 = vector.load %arg2[%c1_30, %c2_31, %c0_32, %c0_33] : memref<3x3x16x32xbf16, #tpu.memory_space<vmem>>, vector<1x1x16x32xbf16>
    %32 = vector.shape_cast %31 : vector<1x1x16x32xbf16> to vector<16x32xbf16>
    %cst_34 = arith.constant dense<0.000000e+00> : vector<4x32xf32>
    %33 = tpu.matmul %30, %32, %cst_34 {dimension_numbers = #tpu.dot_dimension_numbers<[1], [0], [0], [1], [0, 0, 1, 1], [], []>} : vector<4x16xbf16>, vector<16x32xbf16>, vector<4x32xf32> -> vector<4x32xf32>
    %34 = arith.addf %29, %33 : vector<4x32xf32>
    %c0_35 = arith.constant 0 : index
    %c0_36 = arith.constant 0 : index
    %c0_37 = arith.constant 0 : index
    %c0_38 = arith.constant 0 : index
    %35 = vector.load %arg7[%c0_35, %c0_36, %c0_37, %c0_38] : memref<1x1x6x16xbf16, #tpu.memory_space<vmem>>, vector<1x1x6x16xbf16>
    %36 = vector.shape_cast %35 : vector<1x1x6x16xbf16> to vector<6x16xbf16>
    %37 = vector.extract_strided_slice %36 {offsets = [0, 0], sizes = [4, 16], strides = [1, 1]} : vector<6x16xbf16> to vector<4x16xbf16>
    %c2_39 = arith.constant 2 : index
    %c0_40 = arith.constant 0 : index
    %c0_41 = arith.constant 0 : index
    %c0_42 = arith.constant 0 : index
    %38 = vector.load %arg2[%c2_39, %c0_40, %c0_41, %c0_42] : memref<3x3x16x32xbf16, #tpu.memory_space<vmem>>, vector<1x1x16x32xbf16>
    %39 = vector.shape_cast %38 : vector<1x1x16x32xbf16> to vector<16x32xbf16>
    %cst_43 = arith.constant dense<0.000000e+00> : vector<4x32xf32>
    %40 = tpu.matmul %37, %39, %cst_43 {dimension_numbers = #tpu.dot_dimension_numbers<[1], [0], [0], [1], [0, 0, 1, 1], [], []>} : vector<4x16xbf16>, vector<16x32xbf16>, vector<4x32xf32> -> vector<4x32xf32>
    %41 = arith.addf %34, %40 : vector<4x32xf32>
    %42 = vector.extract_strided_slice %36 {offsets = [1, 0], sizes = [4, 16], strides = [1, 1]} : vector<6x16xbf16> to vector<4x16xbf16>
    %c2_44 = arith.constant 2 : index
    %c1_45 = arith.constant 1 : index
    %c0_46 = arith.constant 0 : index
    %c0_47 = arith.constant 0 : index
    %43 = vector.load %arg2[%c2_44, %c1_45, %c0_46, %c0_47] : memref<3x3x16x32xbf16, #tpu.memory_space<vmem>>, vector<1x1x16x32xbf16>
    %44 = vector.shape_cast %43 : vector<1x1x16x32xbf16> to vector<16x32xbf16>
    %cst_48 = arith.constant dense<0.000000e+00> : vector<4x32xf32>
    %45 = tpu.matmul %42, %44, %cst_48 {dimension_numbers = #tpu.dot_dimension_numbers<[1], [0], [0], [1], [0, 0, 1, 1], [], []>} : vector<4x16xbf16>, vector<16x32xbf16>, vector<4x32xf32> -> vector<4x32xf32>
    %46 = arith.addf %41, %45 : vector<4x32xf32>
    %47 = vector.extract_strided_slice %36 {offsets = [2, 0], sizes = [4, 16], strides = [1, 1]} : vector<6x16xbf16> to vector<4x16xbf16>
    %c2_49 = arith.constant 2 : index
    %c2_50 = arith.constant 2 : index
    %c0_51 = arith.constant 0 : index
    %c0_52 = arith.constant 0 : index
    %48 = vector.load %arg2[%c2_49, %c2_50, %c0_51, %c0_52] : memref<3x3x16x32xbf16, #tpu.memory_space<vmem>>, vector<1x1x16x32xbf16>
    %49 = vector.shape_cast %48 : vector<1x1x16x32xbf16> to vector<16x32xbf16>
    %cst_53 = arith.constant dense<0.000000e+00> : vector<4x32xf32>
    %50 = tpu.matmul %47, %49, %cst_53 {dimension_numbers = #tpu.dot_dimension_numbers<[1], [0], [0], [1], [0, 0, 1, 1], [], []>} : vector<4x16xbf16>, vector<16x32xbf16>, vector<4x32xf32> -> vector<4x32xf32>
    %51 = arith.addf %46, %50 : vector<4x32xf32>
    %c0_54 = arith.constant 0 : index
    %c0_55 = arith.constant 0 : index
    %52 = vector.load %arg3[%c0_54, %c0_55] : memref<1x32xf32, #tpu.memory_space<vmem>>, vector<1x32xf32>
    %53 = vector.broadcast %52 : vector<1x32xf32> to vector<4x32xf32>
    %54 = arith.mulf %51, %53 : vector<4x32xf32>
    %c0_56 = arith.constant 0 : index
    %c0_57 = arith.constant 0 : index
    %55 = vector.load %arg4[%c0_56, %c0_57] : memref<1x32xf32, #tpu.memory_space<vmem>>, vector<1x32xf32>
    %56 = vector.broadcast %55 : vector<1x32xf32> to vector<4x32xf32>
    %57 = arith.addf %54, %56 : vector<4x32xf32>
    %c0_58 = arith.constant 0 : index
    %c0_59 = arith.constant 0 : index
    %c0_60 = arith.constant 0 : index
    %c0_61 = arith.constant 0 : index
    %58 = vector.load %arg8[%c0_58, %c0_59, %c0_60, %c0_61] : memref<1x1x4x32xf32, #tpu.memory_space<vmem>>, vector<1x1x4x32xf32>
    %59 = vector.shape_cast %58 : vector<1x1x4x32xf32> to vector<4x32xf32>
    %60 = vector.shape_cast %57 : vector<4x32xf32> to vector<1x1x4x32xf32>
    tpu.vector_store %arg8[%c0_58, %c0_59, %c0_60, %c0_61], %60 {strides = array<i32>} : memref<1x1x4x32xf32, #tpu.memory_space<vmem>>, vector<1x1x4x32xf32>,
    %c0_i32 = arith.constant 0 : i32
    %61 = arith.cmpi eq, %arg0, %c0_i32 : i32
    %c0_i32_62 = arith.constant 0 : i32
    %62 = arith.cmpi eq, %arg1, %c0_i32_62 : i32
    %63 = arith.andi %61, %62 : i1
    %64 = arith.extui %63 : i1 to i32
    %c0_i32_63 = arith.constant 0 : i32
    %65 = arith.cmpi ne, %64, %c0_i32_63 : i32
    scf.if %65 {
      %cst_74 = arith.constant 0.000000e+00 : f32
      %77 = vector.broadcast %cst_74 : f32 to vector<1x32xf32>
      %c0_75 = arith.constant 0 : index
      %c0_76 = arith.constant 0 : index
      %78 = vector.load %arg9[%c0_75, %c0_76] : memref<1x32xf32, #tpu.memory_space<vmem>>, vector<1x32xf32>
      tpu.vector_store %arg9[%c0_75, %c0_76], %77 {strides = array<i32>} : memref<1x32xf32, #tpu.memory_space<vmem>>, vector<1x32xf32>,
      %cst_77 = arith.constant 0.000000e+00 : f32
      %79 = vector.broadcast %cst_77 : f32 to vector<1x32xf32>
      %c0_78 = arith.constant 0 : index
      %c0_79 = arith.constant 0 : index
      %80 = vector.load %arg10[%c0_78, %c0_79] : memref<1x32xf32, #tpu.memory_space<vmem>>, vector<1x32xf32>
      tpu.vector_store %arg10[%c0_78, %c0_79], %79 {strides = array<i32>} : memref<1x32xf32, #tpu.memory_space<vmem>>, vector<1x32xf32>,
    } else {
    }
    %c0_64 = arith.constant 0 : index
    %c0_65 = arith.constant 0 : index
    %66 = vector.load %arg9[%c0_64, %c0_65] : memref<1x32xf32, #tpu.memory_space<vmem>>, vector<1x32xf32>
    %cst_66 = arith.constant dense<0.000000e+00> : vector<32xf32>
    %67 = vector.multi_reduction <add>, %51, %cst_66 [0] : vector<4x32xf32> to vector<32xf32>
    %68 = vector.shape_cast %67 : vector<32xf32> to vector<1x32xf32>
    %69 = arith.addf %66, %68 : vector<1x32xf32>
    %c0_67 = arith.constant 0 : index
    %c0_68 = arith.constant 0 : index
    %70 = vector.load %arg9[%c0_67, %c0_68] : memref<1x32xf32, #tpu.memory_space<vmem>>, vector<1x32xf32>
    tpu.vector_store %arg9[%c0_67, %c0_68], %69 {strides = array<i32>} : memref<1x32xf32, #tpu.memory_space<vmem>>, vector<1x32xf32>,
    %c0_69 = arith.constant 0 : index
    %c0_70 = arith.constant 0 : index
    %71 = vector.load %arg10[%c0_69, %c0_70] : memref<1x32xf32, #tpu.memory_space<vmem>>, vector<1x32xf32>
    %72 = arith.mulf %51, %51 : vector<4x32xf32>
    %cst_71 = arith.constant dense<0.000000e+00> : vector<32xf32>
    %73 = vector.multi_reduction <add>, %72, %cst_71 [0] : vector<4x32xf32> to vector<32xf32>
    %74 = vector.shape_cast %73 : vector<32xf32> to vector<1x32xf32>
    %75 = arith.addf %71, %74 : vector<1x32xf32>
    %c0_72 = arith.constant 0 : index
    %c0_73 = arith.constant 0 : index
    %76 = vector.load %arg10[%c0_72, %c0_73] : memref<1x32xf32, #tpu.memory_space<vmem>>, vector<1x32xf32>
    tpu.vector_store %arg10[%c0_72, %c0_73], %75 {strides = array<i32>} : memref<1x32xf32, #tpu.memory_space<vmem>>, vector<1x32xf32>,
    return
  }
  func.func @transform_0(%arg0: i32, %arg1: i32) -> (i32, i32, i32, i32) {
    %c0_i32 = arith.constant 0 : i32
    %c0_i32_0 = arith.constant 0 : i32
    %c0_i32_1 = arith.constant 0 : i32
    %c0_i32_2 = arith.constant 0 : i32
    %c0_i32_3 = arith.constant 0 : i32
    return %c0_i32, %c0_i32_0, %c0_i32_1, %c0_i32_2 : i32, i32, i32, i32
  }
  func.func @transform_1(%arg0: i32, %arg1: i32) -> (i32, i32) {
    %c0_i32 = arith.constant 0 : i32
    %c0_i32_0 = arith.constant 0 : i32
    %c0_i32_1 = arith.constant 0 : i32
    return %c0_i32, %c0_i32_0 : i32, i32
  }
  func.func @transform_2(%arg0: i32, %arg1: i32) -> (i32, i32) {
    %c0_i32 = arith.constant 0 : i32
    %c0_i32_0 = arith.constant 0 : i32
    %c0_i32_1 = arith.constant 0 : i32
    return %c0_i32, %c0_i32_0 : i32, i32
  }
  func.func @transform_3(%arg0: i32, %arg1: i32) -> (i32, i32, i32, i32) {
    %c0_i32 = arith.constant 0 : i32
    %0 = arith.addi %arg1, %c0_i32 : i32
    %c0_i32_0 = arith.constant 0 : i32
    %c0_i32_1 = arith.constant 0 : i32
    %c0_i32_2 = arith.constant 0 : i32
    return %arg0, %0, %c0_i32_0, %c0_i32_1 : i32, i32, i32, i32
  }
  func.func @transform_4(%arg0: i32, %arg1: i32) -> (i32, i32, i32, i32) {
    %c1_i32 = arith.constant 1 : i32
    %0 = arith.addi %arg1, %c1_i32 : i32
    %c0_i32 = arith.constant 0 : i32
    %c0_i32_0 = arith.constant 0 : i32
    %c0_i32_1 = arith.constant 0 : i32
    return %arg0, %0, %c0_i32, %c0_i32_0 : i32, i32, i32, i32
  }
  func.func @transform_5(%arg0: i32, %arg1: i32) -> (i32, i32, i32, i32) {
    %c2_i32 = arith.constant 2 : i32
    %0 = arith.addi %arg1, %c2_i32 : i32
    %c0_i32 = arith.constant 0 : i32
    %c0_i32_0 = arith.constant 0 : i32
    %c0_i32_1 = arith.constant 0 : i32
    return %arg0, %0, %c0_i32, %c0_i32_0 : i32, i32, i32, i32
  }
  func.func @transform_6(%arg0: i32, %arg1: i32) -> (i32, i32, i32, i32) {
    %c0_i32 = arith.constant 0 : i32
    %c0_i32_0 = arith.constant 0 : i32
    %c0_i32_1 = arith.constant 0 : i32
    return %arg0, %arg1, %c0_i32, %c0_i32_0 : i32, i32, i32, i32
  }
  func.func @transform_7(%arg0: i32, %arg1: i32) -> (i32, i32) {
    %c0_i32 = arith.constant 0 : i32
    %c0_i32_0 = arith.constant 0 : i32
    %c0_i32_1 = arith.constant 0 : i32
    return %c0_i32, %c0_i32_0 : i32, i32
  }
  func.func @transform_8(%arg0: i32, %arg1: i32) -> (i32, i32) {
    %c0_i32 = arith.constant 0 : i32
    %c0_i32_0 = arith.constant 0 : i32
    %c0_i32_1 = arith.constant 0 : i32
    return %c0_i32, %c0_i32_0 : i32, i32
  }
}

module attributes {stable_mosaic.version = 11 : i64} {
  func.func @_affine_relu_kernel(%arg0: i32, %arg1: i32, %arg2: memref<1x32xf32, #tpu.memory_space<vmem>>, %arg3: memref<1x32xf32, #tpu.memory_space<vmem>>, %arg4: memref<1x1x4x32xf32, #tpu.memory_space<vmem>>, %arg5: memref<1x1x4x32xf32, #tpu.memory_space<vmem>>) attributes {dimension_semantics = [#tpu.dimension_semantics<parallel>, #tpu.dimension_semantics<parallel>], iteration_bounds = array<i64: 2, 4>, scalar_prefetch = 0 : i64, scratch_operands = 0 : i64, tpu.core_type = #tpu.core_type<tc>, window_params = [{pipeline_mode = #tpu.pipeline_mode<synchronous>, transform_indices = @transform_0, window_bounds = array<i64: 1, 32>}, {pipeline_mode = #tpu.pipeline_mode<synchronous>, transform_indices = @transform_1, window_bounds = array<i64: 1, 32>}, {transform_indices = @transform_2, window_bounds = array<i64: 1, 1, 4, 32>}, {transform_indices = @transform_3, window_bounds = array<i64: 1, 1, 4, 32>}]} {
    %c0 = arith.constant 0 : index
    %c0_0 = arith.constant 0 : index
    %c0_1 = arith.constant 0 : index
    %c0_2 = arith.constant 0 : index
    %0 = vector.load %arg4[%c0, %c0_0, %c0_1, %c0_2] : memref<1x1x4x32xf32, #tpu.memory_space<vmem>>, vector<1x1x4x32xf32>
    %1 = vector.shape_cast %0 : vector<1x1x4x32xf32> to vector<4x32xf32>
    %c0_3 = arith.constant 0 : index
    %c0_4 = arith.constant 0 : index
    %2 = vector.load %arg2[%c0_3, %c0_4] : memref<1x32xf32, #tpu.memory_space<vmem>>, vector<1x32xf32>
    %3 = vector.broadcast %2 : vector<1x32xf32> to vector<4x32xf32>
    %4 = arith.mulf %1, %3 : vector<4x32xf32>
    %c0_5 = arith.constant 0 : index
    %c0_6 = arith.constant 0 : index
    %5 = vector.load %arg3[%c0_5, %c0_6] : memref<1x32xf32, #tpu.memory_space<vmem>>, vector<1x32xf32>
    %6 = vector.broadcast %5 : vector<1x32xf32> to vector<4x32xf32>
    %7 = arith.addf %4, %6 : vector<4x32xf32>
    %cst = arith.constant 0.000000e+00 : f32
    %8 = vector.broadcast %cst : f32 to vector<4x32xf32>
    %9 = arith.maximumf %7, %8 : vector<4x32xf32>
    %c0_7 = arith.constant 0 : index
    %c0_8 = arith.constant 0 : index
    %c0_9 = arith.constant 0 : index
    %c0_10 = arith.constant 0 : index
    %10 = vector.load %arg5[%c0_7, %c0_8, %c0_9, %c0_10] : memref<1x1x4x32xf32, #tpu.memory_space<vmem>>, vector<1x1x4x32xf32>
    %11 = vector.shape_cast %10 : vector<1x1x4x32xf32> to vector<4x32xf32>
    %12 = vector.shape_cast %9 : vector<4x32xf32> to vector<1x1x4x32xf32>
    tpu.vector_store %arg5[%c0_7, %c0_8, %c0_9, %c0_10], %12 {strides = array<i32>} : memref<1x1x4x32xf32, #tpu.memory_space<vmem>>, vector<1x1x4x32xf32>,
    return
  }
  func.func @transform_0(%arg0: i32, %arg1: i32) -> (i32, i32) {
    %c0_i32 = arith.constant 0 : i32
    %c0_i32_0 = arith.constant 0 : i32
    %c0_i32_1 = arith.constant 0 : i32
    return %c0_i32, %c0_i32_0 : i32, i32
  }
  func.func @transform_1(%arg0: i32, %arg1: i32) -> (i32, i32) {
    %c0_i32 = arith.constant 0 : i32
    %c0_i32_0 = arith.constant 0 : i32
    %c0_i32_1 = arith.constant 0 : i32
    return %c0_i32, %c0_i32_0 : i32, i32
  }
  func.func @transform_2(%arg0: i32, %arg1: i32) -> (i32, i32, i32, i32) {
    %c0_i32 = arith.constant 0 : i32
    %c0_i32_0 = arith.constant 0 : i32
    %c0_i32_1 = arith.constant 0 : i32
    return %arg0, %arg1, %c0_i32, %c0_i32_0 : i32, i32, i32, i32
  }
  func.func @transform_3(%arg0: i32, %arg1: i32) -> (i32, i32, i32, i32) {
    %c0_i32 = arith.constant 0 : i32
    %c0_i32_0 = arith.constant 0 : i32
    %c0_i32_1 = arith.constant 0 : i32
    return %arg0, %arg1, %c0_i32, %c0_i32_0 : i32, i32, i32, i32
  }
}

module attributes {stable_mosaic.version = 11 : i64} {
  func.func @_conv_row_kernel(%arg0: i32, %arg1: i32, %arg2: memref<3x3x32x32xbf16, #tpu.memory_space<vmem>>, %arg3: memref<1x32xf32, #tpu.memory_space<vmem>>, %arg4: memref<1x32xf32, #tpu.memory_space<vmem>>, %arg5: memref<1x1x6x32xbf16, #tpu.memory_space<vmem>>, %arg6: memref<1x1x6x32xbf16, #tpu.memory_space<vmem>>, %arg7: memref<1x1x6x32xbf16, #tpu.memory_space<vmem>>, %arg8: memref<1x1x4x32xf32, #tpu.memory_space<vmem>>, %arg9: memref<1x32xf32, #tpu.memory_space<vmem>>, %arg10: memref<1x32xf32, #tpu.memory_space<vmem>>) attributes {dimension_semantics = [#tpu.dimension_semantics<arbitrary>, #tpu.dimension_semantics<arbitrary>], iteration_bounds = array<i64: 2, 4>, scalar_prefetch = 0 : i64, scratch_operands = 0 : i64, tpu.core_type = #tpu.core_type<tc>, window_params = [{pipeline_mode = #tpu.pipeline_mode<synchronous>, transform_indices = @transform_0, window_bounds = array<i64: 3, 3, 32, 32>}, {pipeline_mode = #tpu.pipeline_mode<synchronous>, transform_indices = @transform_1, window_bounds = array<i64: 1, 32>}, {pipeline_mode = #tpu.pipeline_mode<synchronous>, transform_indices = @transform_2, window_bounds = array<i64: 1, 32>}, {transform_indices = @transform_3, window_bounds = array<i64: 1, 1, 6, 32>}, {transform_indices = @transform_4, window_bounds = array<i64: 1, 1, 6, 32>}, {transform_indices = @transform_5, window_bounds = array<i64: 1, 1, 6, 32>}, {transform_indices = @transform_6, window_bounds = array<i64: 1, 1, 4, 32>}, {pipeline_mode = #tpu.pipeline_mode<synchronous>, transform_indices = @transform_7, window_bounds = array<i64: 1, 32>}, {pipeline_mode = #tpu.pipeline_mode<synchronous>, transform_indices = @transform_8, window_bounds = array<i64: 1, 32>}]} {
    %cst = arith.constant 0.000000e+00 : f32
    %0 = vector.broadcast %cst : f32 to vector<4x32xf32>
    %c0 = arith.constant 0 : index
    %c0_0 = arith.constant 0 : index
    %c0_1 = arith.constant 0 : index
    %c0_2 = arith.constant 0 : index
    %1 = vector.load %arg5[%c0, %c0_0, %c0_1, %c0_2] : memref<1x1x6x32xbf16, #tpu.memory_space<vmem>>, vector<1x1x6x32xbf16>
    %2 = vector.shape_cast %1 : vector<1x1x6x32xbf16> to vector<6x32xbf16>
    %3 = vector.extract_strided_slice %2 {offsets = [0, 0], sizes = [4, 32], strides = [1, 1]} : vector<6x32xbf16> to vector<4x32xbf16>
    %c0_3 = arith.constant 0 : index
    %c0_4 = arith.constant 0 : index
    %c0_5 = arith.constant 0 : index
    %c0_6 = arith.constant 0 : index
    %4 = vector.load %arg2[%c0_3, %c0_4, %c0_5, %c0_6] : memref<3x3x32x32xbf16, #tpu.memory_space<vmem>>, vector<1x1x32x32xbf16>
    %5 = vector.shape_cast %4 : vector<1x1x32x32xbf16> to vector<32x32xbf16>
    %cst_7 = arith.constant dense<0.000000e+00> : vector<4x32xf32>
    %6 = tpu.matmul %3, %5, %cst_7 {dimension_numbers = #tpu.dot_dimension_numbers<[1], [0], [0], [1], [0, 0, 1, 1], [], []>} : vector<4x32xbf16>, vector<32x32xbf16>, vector<4x32xf32> -> vector<4x32xf32>
    %7 = arith.addf %0, %6 : vector<4x32xf32>
    %8 = vector.extract_strided_slice %2 {offsets = [1, 0], sizes = [4, 32], strides = [1, 1]} : vector<6x32xbf16> to vector<4x32xbf16>
    %c0_8 = arith.constant 0 : index
    %c1 = arith.constant 1 : index
    %c0_9 = arith.constant 0 : index
    %c0_10 = arith.constant 0 : index
    %9 = vector.load %arg2[%c0_8, %c1, %c0_9, %c0_10] : memref<3x3x32x32xbf16, #tpu.memory_space<vmem>>, vector<1x1x32x32xbf16>
    %10 = vector.shape_cast %9 : vector<1x1x32x32xbf16> to vector<32x32xbf16>
    %cst_11 = arith.constant dense<0.000000e+00> : vector<4x32xf32>
    %11 = tpu.matmul %8, %10, %cst_11 {dimension_numbers = #tpu.dot_dimension_numbers<[1], [0], [0], [1], [0, 0, 1, 1], [], []>} : vector<4x32xbf16>, vector<32x32xbf16>, vector<4x32xf32> -> vector<4x32xf32>
    %12 = arith.addf %7, %11 : vector<4x32xf32>
    %13 = vector.extract_strided_slice %2 {offsets = [2, 0], sizes = [4, 32], strides = [1, 1]} : vector<6x32xbf16> to vector<4x32xbf16>
    %c0_12 = arith.constant 0 : index
    %c2 = arith.constant 2 : index
    %c0_13 = arith.constant 0 : index
    %c0_14 = arith.constant 0 : index
    %14 = vector.load %arg2[%c0_12, %c2, %c0_13, %c0_14] : memref<3x3x32x32xbf16, #tpu.memory_space<vmem>>, vector<1x1x32x32xbf16>
    %15 = vector.shape_cast %14 : vector<1x1x32x32xbf16> to vector<32x32xbf16>
    %cst_15 = arith.constant dense<0.000000e+00> : vector<4x32xf32>
    %16 = tpu.matmul %13, %15, %cst_15 {dimension_numbers = #tpu.dot_dimension_numbers<[1], [0], [0], [1], [0, 0, 1, 1], [], []>} : vector<4x32xbf16>, vector<32x32xbf16>, vector<4x32xf32> -> vector<4x32xf32>
    %17 = arith.addf %12, %16 : vector<4x32xf32>
    %c0_16 = arith.constant 0 : index
    %c0_17 = arith.constant 0 : index
    %c0_18 = arith.constant 0 : index
    %c0_19 = arith.constant 0 : index
    %18 = vector.load %arg6[%c0_16, %c0_17, %c0_18, %c0_19] : memref<1x1x6x32xbf16, #tpu.memory_space<vmem>>, vector<1x1x6x32xbf16>
    %19 = vector.shape_cast %18 : vector<1x1x6x32xbf16> to vector<6x32xbf16>
    %20 = vector.extract_strided_slice %19 {offsets = [0, 0], sizes = [4, 32], strides = [1, 1]} : vector<6x32xbf16> to vector<4x32xbf16>
    %c1_20 = arith.constant 1 : index
    %c0_21 = arith.constant 0 : index
    %c0_22 = arith.constant 0 : index
    %c0_23 = arith.constant 0 : index
    %21 = vector.load %arg2[%c1_20, %c0_21, %c0_22, %c0_23] : memref<3x3x32x32xbf16, #tpu.memory_space<vmem>>, vector<1x1x32x32xbf16>
    %22 = vector.shape_cast %21 : vector<1x1x32x32xbf16> to vector<32x32xbf16>
    %cst_24 = arith.constant dense<0.000000e+00> : vector<4x32xf32>
    %23 = tpu.matmul %20, %22, %cst_24 {dimension_numbers = #tpu.dot_dimension_numbers<[1], [0], [0], [1], [0, 0, 1, 1], [], []>} : vector<4x32xbf16>, vector<32x32xbf16>, vector<4x32xf32> -> vector<4x32xf32>
    %24 = arith.addf %17, %23 : vector<4x32xf32>
    %25 = vector.extract_strided_slice %19 {offsets = [1, 0], sizes = [4, 32], strides = [1, 1]} : vector<6x32xbf16> to vector<4x32xbf16>
    %c1_25 = arith.constant 1 : index
    %c1_26 = arith.constant 1 : index
    %c0_27 = arith.constant 0 : index
    %c0_28 = arith.constant 0 : index
    %26 = vector.load %arg2[%c1_25, %c1_26, %c0_27, %c0_28] : memref<3x3x32x32xbf16, #tpu.memory_space<vmem>>, vector<1x1x32x32xbf16>
    %27 = vector.shape_cast %26 : vector<1x1x32x32xbf16> to vector<32x32xbf16>
    %cst_29 = arith.constant dense<0.000000e+00> : vector<4x32xf32>
    %28 = tpu.matmul %25, %27, %cst_29 {dimension_numbers = #tpu.dot_dimension_numbers<[1], [0], [0], [1], [0, 0, 1, 1], [], []>} : vector<4x32xbf16>, vector<32x32xbf16>, vector<4x32xf32> -> vector<4x32xf32>
    %29 = arith.addf %24, %28 : vector<4x32xf32>
    %30 = vector.extract_strided_slice %19 {offsets = [2, 0], sizes = [4, 32], strides = [1, 1]} : vector<6x32xbf16> to vector<4x32xbf16>
    %c1_30 = arith.constant 1 : index
    %c2_31 = arith.constant 2 : index
    %c0_32 = arith.constant 0 : index
    %c0_33 = arith.constant 0 : index
    %31 = vector.load %arg2[%c1_30, %c2_31, %c0_32, %c0_33] : memref<3x3x32x32xbf16, #tpu.memory_space<vmem>>, vector<1x1x32x32xbf16>
    %32 = vector.shape_cast %31 : vector<1x1x32x32xbf16> to vector<32x32xbf16>
    %cst_34 = arith.constant dense<0.000000e+00> : vector<4x32xf32>
    %33 = tpu.matmul %30, %32, %cst_34 {dimension_numbers = #tpu.dot_dimension_numbers<[1], [0], [0], [1], [0, 0, 1, 1], [], []>} : vector<4x32xbf16>, vector<32x32xbf16>, vector<4x32xf32> -> vector<4x32xf32>
    %34 = arith.addf %29, %33 : vector<4x32xf32>
    %c0_35 = arith.constant 0 : index
    %c0_36 = arith.constant 0 : index
    %c0_37 = arith.constant 0 : index
    %c0_38 = arith.constant 0 : index
    %35 = vector.load %arg7[%c0_35, %c0_36, %c0_37, %c0_38] : memref<1x1x6x32xbf16, #tpu.memory_space<vmem>>, vector<1x1x6x32xbf16>
    %36 = vector.shape_cast %35 : vector<1x1x6x32xbf16> to vector<6x32xbf16>
    %37 = vector.extract_strided_slice %36 {offsets = [0, 0], sizes = [4, 32], strides = [1, 1]} : vector<6x32xbf16> to vector<4x32xbf16>
    %c2_39 = arith.constant 2 : index
    %c0_40 = arith.constant 0 : index
    %c0_41 = arith.constant 0 : index
    %c0_42 = arith.constant 0 : index
    %38 = vector.load %arg2[%c2_39, %c0_40, %c0_41, %c0_42] : memref<3x3x32x32xbf16, #tpu.memory_space<vmem>>, vector<1x1x32x32xbf16>
    %39 = vector.shape_cast %38 : vector<1x1x32x32xbf16> to vector<32x32xbf16>
    %cst_43 = arith.constant dense<0.000000e+00> : vector<4x32xf32>
    %40 = tpu.matmul %37, %39, %cst_43 {dimension_numbers = #tpu.dot_dimension_numbers<[1], [0], [0], [1], [0, 0, 1, 1], [], []>} : vector<4x32xbf16>, vector<32x32xbf16>, vector<4x32xf32> -> vector<4x32xf32>
    %41 = arith.addf %34, %40 : vector<4x32xf32>
    %42 = vector.extract_strided_slice %36 {offsets = [1, 0], sizes = [4, 32], strides = [1, 1]} : vector<6x32xbf16> to vector<4x32xbf16>
    %c2_44 = arith.constant 2 : index
    %c1_45 = arith.constant 1 : index
    %c0_46 = arith.constant 0 : index
    %c0_47 = arith.constant 0 : index
    %43 = vector.load %arg2[%c2_44, %c1_45, %c0_46, %c0_47] : memref<3x3x32x32xbf16, #tpu.memory_space<vmem>>, vector<1x1x32x32xbf16>
    %44 = vector.shape_cast %43 : vector<1x1x32x32xbf16> to vector<32x32xbf16>
    %cst_48 = arith.constant dense<0.000000e+00> : vector<4x32xf32>
    %45 = tpu.matmul %42, %44, %cst_48 {dimension_numbers = #tpu.dot_dimension_numbers<[1], [0], [0], [1], [0, 0, 1, 1], [], []>} : vector<4x32xbf16>, vector<32x32xbf16>, vector<4x32xf32> -> vector<4x32xf32>
    %46 = arith.addf %41, %45 : vector<4x32xf32>
    %47 = vector.extract_strided_slice %36 {offsets = [2, 0], sizes = [4, 32], strides = [1, 1]} : vector<6x32xbf16> to vector<4x32xbf16>
    %c2_49 = arith.constant 2 : index
    %c2_50 = arith.constant 2 : index
    %c0_51 = arith.constant 0 : index
    %c0_52 = arith.constant 0 : index
    %48 = vector.load %arg2[%c2_49, %c2_50, %c0_51, %c0_52] : memref<3x3x32x32xbf16, #tpu.memory_space<vmem>>, vector<1x1x32x32xbf16>
    %49 = vector.shape_cast %48 : vector<1x1x32x32xbf16> to vector<32x32xbf16>
    %cst_53 = arith.constant dense<0.000000e+00> : vector<4x32xf32>
    %50 = tpu.matmul %47, %49, %cst_53 {dimension_numbers = #tpu.dot_dimension_numbers<[1], [0], [0], [1], [0, 0, 1, 1], [], []>} : vector<4x32xbf16>, vector<32x32xbf16>, vector<4x32xf32> -> vector<4x32xf32>
    %51 = arith.addf %46, %50 : vector<4x32xf32>
    %c0_54 = arith.constant 0 : index
    %c0_55 = arith.constant 0 : index
    %52 = vector.load %arg3[%c0_54, %c0_55] : memref<1x32xf32, #tpu.memory_space<vmem>>, vector<1x32xf32>
    %53 = vector.broadcast %52 : vector<1x32xf32> to vector<4x32xf32>
    %54 = arith.mulf %51, %53 : vector<4x32xf32>
    %c0_56 = arith.constant 0 : index
    %c0_57 = arith.constant 0 : index
    %55 = vector.load %arg4[%c0_56, %c0_57] : memref<1x32xf32, #tpu.memory_space<vmem>>, vector<1x32xf32>
    %56 = vector.broadcast %55 : vector<1x32xf32> to vector<4x32xf32>
    %57 = arith.addf %54, %56 : vector<4x32xf32>
    %c0_58 = arith.constant 0 : index
    %c0_59 = arith.constant 0 : index
    %c0_60 = arith.constant 0 : index
    %c0_61 = arith.constant 0 : index
    %58 = vector.load %arg8[%c0_58, %c0_59, %c0_60, %c0_61] : memref<1x1x4x32xf32, #tpu.memory_space<vmem>>, vector<1x1x4x32xf32>
    %59 = vector.shape_cast %58 : vector<1x1x4x32xf32> to vector<4x32xf32>
    %60 = vector.shape_cast %57 : vector<4x32xf32> to vector<1x1x4x32xf32>
    tpu.vector_store %arg8[%c0_58, %c0_59, %c0_60, %c0_61], %60 {strides = array<i32>} : memref<1x1x4x32xf32, #tpu.memory_space<vmem>>, vector<1x1x4x32xf32>,
    %c0_i32 = arith.constant 0 : i32
    %61 = arith.cmpi eq, %arg0, %c0_i32 : i32
    %c0_i32_62 = arith.constant 0 : i32
    %62 = arith.cmpi eq, %arg1, %c0_i32_62 : i32
    %63 = arith.andi %61, %62 : i1
    %64 = arith.extui %63 : i1 to i32
    %c0_i32_63 = arith.constant 0 : i32
    %65 = arith.cmpi ne, %64, %c0_i32_63 : i32
    scf.if %65 {
      %cst_74 = arith.constant 0.000000e+00 : f32
      %77 = vector.broadcast %cst_74 : f32 to vector<1x32xf32>
      %c0_75 = arith.constant 0 : index
      %c0_76 = arith.constant 0 : index
      %78 = vector.load %arg9[%c0_75, %c0_76] : memref<1x32xf32, #tpu.memory_space<vmem>>, vector<1x32xf32>
      tpu.vector_store %arg9[%c0_75, %c0_76], %77 {strides = array<i32>} : memref<1x32xf32, #tpu.memory_space<vmem>>, vector<1x32xf32>,
      %cst_77 = arith.constant 0.000000e+00 : f32
      %79 = vector.broadcast %cst_77 : f32 to vector<1x32xf32>
      %c0_78 = arith.constant 0 : index
      %c0_79 = arith.constant 0 : index
      %80 = vector.load %arg10[%c0_78, %c0_79] : memref<1x32xf32, #tpu.memory_space<vmem>>, vector<1x32xf32>
      tpu.vector_store %arg10[%c0_78, %c0_79], %79 {strides = array<i32>} : memref<1x32xf32, #tpu.memory_space<vmem>>, vector<1x32xf32>,
    } else {
    }
    %c0_64 = arith.constant 0 : index
    %c0_65 = arith.constant 0 : index
    %66 = vector.load %arg9[%c0_64, %c0_65] : memref<1x32xf32, #tpu.memory_space<vmem>>, vector<1x32xf32>
    %cst_66 = arith.constant dense<0.000000e+00> : vector<32xf32>
    %67 = vector.multi_reduction <add>, %51, %cst_66 [0] : vector<4x32xf32> to vector<32xf32>
    %68 = vector.shape_cast %67 : vector<32xf32> to vector<1x32xf32>
    %69 = arith.addf %66, %68 : vector<1x32xf32>
    %c0_67 = arith.constant 0 : index
    %c0_68 = arith.constant 0 : index
    %70 = vector.load %arg9[%c0_67, %c0_68] : memref<1x32xf32, #tpu.memory_space<vmem>>, vector<1x32xf32>
    tpu.vector_store %arg9[%c0_67, %c0_68], %69 {strides = array<i32>} : memref<1x32xf32, #tpu.memory_space<vmem>>, vector<1x32xf32>,
    %c0_69 = arith.constant 0 : index
    %c0_70 = arith.constant 0 : index
    %71 = vector.load %arg10[%c0_69, %c0_70] : memref<1x32xf32, #tpu.memory_space<vmem>>, vector<1x32xf32>
    %72 = arith.mulf %51, %51 : vector<4x32xf32>
    %cst_71 = arith.constant dense<0.000000e+00> : vector<32xf32>
    %73 = vector.multi_reduction <add>, %72, %cst_71 [0] : vector<4x32xf32> to vector<32xf32>
    %74 = vector.shape_cast %73 : vector<32xf32> to vector<1x32xf32>
    %75 = arith.addf %71, %74 : vector<1x32xf32>
    %c0_72 = arith.constant 0 : index
    %c0_73 = arith.constant 0 : index
    %76 = vector.load %arg10[%c0_72, %c0_73] : memref<1x32xf32, #tpu.memory_space<vmem>>, vector<1x32xf32>
    tpu.vector_store %arg10[%c0_72, %c0_73], %75 {strides = array<i32>} : memref<1x32xf32, #tpu.memory_space<vmem>>, vector<1x32xf32>,
    return
  }
  func.func @transform_0(%arg0: i32, %arg1: i32) -> (i32, i32, i32, i32) {
    %c0_i32 = arith.constant 0 : i32
    %c0_i32_0 = arith.constant 0 : i32
    %c0_i32_1 = arith.constant 0 : i32
    %c0_i32_2 = arith.constant 0 : i32
    %c0_i32_3 = arith.constant 0 : i32
    return %c0_i32, %c0_i32_0, %c0_i32_1, %c0_i32_2 : i32, i32, i32, i32
  }
  func.func @transform_1(%arg0: i32, %arg1: i32) -> (i32, i32) {
    %c0_i32 = arith.constant 0 : i32
    %c0_i32_0 = arith.constant 0 : i32
    %c0_i32_1 = arith.constant 0 : i32
    return %c0_i32, %c0_i32_0 : i32, i32
  }
  func.func @transform_2(%arg0: i32, %arg1: i32) -> (i32, i32) {
    %c0_i32 = arith.constant 0 : i32
    %c0_i32_0 = arith.constant 0 : i32
    %c0_i32_1 = arith.constant 0 : i32
    return %c0_i32, %c0_i32_0 : i32, i32
  }
  func.func @transform_3(%arg0: i32, %arg1: i32) -> (i32, i32, i32, i32) {
    %c0_i32 = arith.constant 0 : i32
    %0 = arith.addi %arg1, %c0_i32 : i32
    %c0_i32_0 = arith.constant 0 : i32
    %c0_i32_1 = arith.constant 0 : i32
    %c0_i32_2 = arith.constant 0 : i32
    return %arg0, %0, %c0_i32_0, %c0_i32_1 : i32, i32, i32, i32
  }
  func.func @transform_4(%arg0: i32, %arg1: i32) -> (i32, i32, i32, i32) {
    %c1_i32 = arith.constant 1 : i32
    %0 = arith.addi %arg1, %c1_i32 : i32
    %c0_i32 = arith.constant 0 : i32
    %c0_i32_0 = arith.constant 0 : i32
    %c0_i32_1 = arith.constant 0 : i32
    return %arg0, %0, %c0_i32, %c0_i32_0 : i32, i32, i32, i32
  }
  func.func @transform_5(%arg0: i32, %arg1: i32) -> (i32, i32, i32, i32) {
    %c2_i32 = arith.constant 2 : i32
    %0 = arith.addi %arg1, %c2_i32 : i32
    %c0_i32 = arith.constant 0 : i32
    %c0_i32_0 = arith.constant 0 : i32
    %c0_i32_1 = arith.constant 0 : i32
    return %arg0, %0, %c0_i32, %c0_i32_0 : i32, i32, i32, i32
  }
  func.func @transform_6(%arg0: i32, %arg1: i32) -> (i32, i32, i32, i32) {
    %c0_i32 = arith.constant 0 : i32
    %c0_i32_0 = arith.constant 0 : i32
    %c0_i32_1 = arith.constant 0 : i32
    return %arg0, %arg1, %c0_i32, %c0_i32_0 : i32, i32, i32, i32
  }
  func.func @transform_7(%arg0: i32, %arg1: i32) -> (i32, i32) {
    %c0_i32 = arith.constant 0 : i32
    %c0_i32_0 = arith.constant 0 : i32
    %c0_i32_1 = arith.constant 0 : i32
    return %c0_i32, %c0_i32_0 : i32, i32
  }
  func.func @transform_8(%arg0: i32, %arg1: i32) -> (i32, i32) {
    %c0_i32 = arith.constant 0 : i32
    %c0_i32_0 = arith.constant 0 : i32
    %c0_i32_1 = arith.constant 0 : i32
    return %c0_i32, %c0_i32_0 : i32, i32
  }
}

module attributes {stable_mosaic.version = 11 : i64} {
  func.func @_pool_kernel(%arg0: i32, %arg1: i32, %arg2: memref<1x1x2x4x32xf32, #tpu.memory_space<vmem>>, %arg3: memref<1x1x4x32xf32, #tpu.memory_space<vmem>>) attributes {dimension_semantics = [#tpu.dimension_semantics<parallel>, #tpu.dimension_semantics<parallel>], iteration_bounds = array<i64: 2, 2>, scalar_prefetch = 0 : i64, scratch_operands = 0 : i64, tpu.core_type = #tpu.core_type<tc>, window_params = [{transform_indices = @transform_0, window_bounds = array<i64: 1, 1, 2, 4, 32>}, {transform_indices = @transform_1, window_bounds = array<i64: 1, 1, 4, 32>}]} {
    %c0 = arith.constant 0 : index
    %c0_0 = arith.constant 0 : index
    %c0_1 = arith.constant 0 : index
    %c0_2 = arith.constant 0 : index
    %c0_3 = arith.constant 0 : index
    %0 = vector.load %arg2[%c0, %c0_0, %c0_1, %c0_2, %c0_3] : memref<1x1x2x4x32xf32, #tpu.memory_space<vmem>>, vector<1x1x2x4x32xf32>
    %1 = vector.shape_cast %0 : vector<1x1x2x4x32xf32> to vector<2x4x32xf32>
    %2 = vector.extract_strided_slice %1 {offsets = [0, 0, 0], sizes = [1, 4, 32], strides = [1, 1, 1]} : vector<2x4x32xf32> to vector<1x4x32xf32>
    %3 = vector.shape_cast %2 : vector<1x4x32xf32> to vector<4x32xf32>
    %4 = vector.extract_strided_slice %1 {offsets = [1, 0, 0], sizes = [1, 4, 32], strides = [1, 1, 1]} : vector<2x4x32xf32> to vector<1x4x32xf32>
    %5 = vector.shape_cast %4 : vector<1x4x32xf32> to vector<4x32xf32>
    %6 = arith.maximumf %3, %5 : vector<4x32xf32>
    %c0_4 = arith.constant 0 : index
    %c0_5 = arith.constant 0 : index
    %c0_6 = arith.constant 0 : index
    %c0_7 = arith.constant 0 : index
    %7 = vector.load %arg3[%c0_4, %c0_5, %c0_6, %c0_7] : memref<1x1x4x32xf32, #tpu.memory_space<vmem>>, vector<1x1x4x32xf32>
    %8 = vector.shape_cast %7 : vector<1x1x4x32xf32> to vector<4x32xf32>
    %9 = vector.shape_cast %6 : vector<4x32xf32> to vector<1x1x4x32xf32>
    tpu.vector_store %arg3[%c0_4, %c0_5, %c0_6, %c0_7], %9 {strides = array<i32>} : memref<1x1x4x32xf32, #tpu.memory_space<vmem>>, vector<1x1x4x32xf32>,
    return
  }
  func.func @transform_0(%arg0: i32, %arg1: i32) -> (i32, i32, i32, i32, i32) {
    %c0_i32 = arith.constant 0 : i32
    %c0_i32_0 = arith.constant 0 : i32
    %c0_i32_1 = arith.constant 0 : i32
    %c0_i32_2 = arith.constant 0 : i32
    return %arg0, %arg1, %c0_i32, %c0_i32_0, %c0_i32_1 : i32, i32, i32, i32, i32
  }
  func.func @transform_1(%arg0: i32, %arg1: i32) -> (i32, i32, i32, i32) {
    %c0_i32 = arith.constant 0 : i32
    %c0_i32_0 = arith.constant 0 : i32
    %c0_i32_1 = arith.constant 0 : i32
    return %arg0, %arg1, %c0_i32, %c0_i32_0 : i32, i32, i32, i32
  }
}

module attributes {stable_mosaic.version = 11 : i64} {
  func.func @_conv_row_kernel(%arg0: i32, %arg1: i32, %arg2: memref<2x2x32x32xbf16, #tpu.memory_space<vmem>>, %arg3: memref<1x32xf32, #tpu.memory_space<vmem>>, %arg4: memref<1x32xf32, #tpu.memory_space<vmem>>, %arg5: memref<1x1x4x32xbf16, #tpu.memory_space<vmem>>, %arg6: memref<1x1x4x32xbf16, #tpu.memory_space<vmem>>, %arg7: memref<1x1x3x32xf32, #tpu.memory_space<vmem>>) attributes {dimension_semantics = [#tpu.dimension_semantics<parallel>, #tpu.dimension_semantics<parallel>], iteration_bounds = array<i64: 2, 1>, scalar_prefetch = 0 : i64, scratch_operands = 0 : i64, tpu.core_type = #tpu.core_type<tc>, window_params = [{pipeline_mode = #tpu.pipeline_mode<synchronous>, transform_indices = @transform_0, window_bounds = array<i64: 2, 2, 32, 32>}, {pipeline_mode = #tpu.pipeline_mode<synchronous>, transform_indices = @transform_1, window_bounds = array<i64: 1, 32>}, {pipeline_mode = #tpu.pipeline_mode<synchronous>, transform_indices = @transform_2, window_bounds = array<i64: 1, 32>}, {transform_indices = @transform_3, window_bounds = array<i64: 1, 1, 4, 32>}, {transform_indices = @transform_4, window_bounds = array<i64: 1, 1, 4, 32>}, {transform_indices = @transform_5, window_bounds = array<i64: 1, 1, 3, 32>}]} {
    %cst = arith.constant 0.000000e+00 : f32
    %0 = vector.broadcast %cst : f32 to vector<3x32xf32>
    %c0 = arith.constant 0 : index
    %c0_0 = arith.constant 0 : index
    %c0_1 = arith.constant 0 : index
    %c0_2 = arith.constant 0 : index
    %1 = vector.load %arg5[%c0, %c0_0, %c0_1, %c0_2] : memref<1x1x4x32xbf16, #tpu.memory_space<vmem>>, vector<1x1x4x32xbf16>
    %2 = vector.shape_cast %1 : vector<1x1x4x32xbf16> to vector<4x32xbf16>
    %3 = vector.extract_strided_slice %2 {offsets = [0, 0], sizes = [3, 32], strides = [1, 1]} : vector<4x32xbf16> to vector<3x32xbf16>
    %c0_3 = arith.constant 0 : index
    %c0_4 = arith.constant 0 : index
    %c0_5 = arith.constant 0 : index
    %c0_6 = arith.constant 0 : index
    %4 = vector.load %arg2[%c0_3, %c0_4, %c0_5, %c0_6] : memref<2x2x32x32xbf16, #tpu.memory_space<vmem>>, vector<1x1x32x32xbf16>
    %5 = vector.shape_cast %4 : vector<1x1x32x32xbf16> to vector<32x32xbf16>
    %cst_7 = arith.constant dense<0.000000e+00> : vector<3x32xf32>
    %6 = tpu.matmul %3, %5, %cst_7 {dimension_numbers = #tpu.dot_dimension_numbers<[1], [0], [0], [1], [0, 0, 1, 1], [], []>} : vector<3x32xbf16>, vector<32x32xbf16>, vector<3x32xf32> -> vector<3x32xf32>
    %7 = arith.addf %0, %6 : vector<3x32xf32>
    %8 = vector.extract_strided_slice %2 {offsets = [1, 0], sizes = [3, 32], strides = [1, 1]} : vector<4x32xbf16> to vector<3x32xbf16>
    %c0_8 = arith.constant 0 : index
    %c1 = arith.constant 1 : index
    %c0_9 = arith.constant 0 : index
    %c0_10 = arith.constant 0 : index
    %9 = vector.load %arg2[%c0_8, %c1, %c0_9, %c0_10] : memref<2x2x32x32xbf16, #tpu.memory_space<vmem>>, vector<1x1x32x32xbf16>
    %10 = vector.shape_cast %9 : vector<1x1x32x32xbf16> to vector<32x32xbf16>
    %cst_11 = arith.constant dense<0.000000e+00> : vector<3x32xf32>
    %11 = tpu.matmul %8, %10, %cst_11 {dimension_numbers = #tpu.dot_dimension_numbers<[1], [0], [0], [1], [0, 0, 1, 1], [], []>} : vector<3x32xbf16>, vector<32x32xbf16>, vector<3x32xf32> -> vector<3x32xf32>
    %12 = arith.addf %7, %11 : vector<3x32xf32>
    %c0_12 = arith.constant 0 : index
    %c0_13 = arith.constant 0 : index
    %c0_14 = arith.constant 0 : index
    %c0_15 = arith.constant 0 : index
    %13 = vector.load %arg6[%c0_12, %c0_13, %c0_14, %c0_15] : memref<1x1x4x32xbf16, #tpu.memory_space<vmem>>, vector<1x1x4x32xbf16>
    %14 = vector.shape_cast %13 : vector<1x1x4x32xbf16> to vector<4x32xbf16>
    %15 = vector.extract_strided_slice %14 {offsets = [0, 0], sizes = [3, 32], strides = [1, 1]} : vector<4x32xbf16> to vector<3x32xbf16>
    %c1_16 = arith.constant 1 : index
    %c0_17 = arith.constant 0 : index
    %c0_18 = arith.constant 0 : index
    %c0_19 = arith.constant 0 : index
    %16 = vector.load %arg2[%c1_16, %c0_17, %c0_18, %c0_19] : memref<2x2x32x32xbf16, #tpu.memory_space<vmem>>, vector<1x1x32x32xbf16>
    %17 = vector.shape_cast %16 : vector<1x1x32x32xbf16> to vector<32x32xbf16>
    %cst_20 = arith.constant dense<0.000000e+00> : vector<3x32xf32>
    %18 = tpu.matmul %15, %17, %cst_20 {dimension_numbers = #tpu.dot_dimension_numbers<[1], [0], [0], [1], [0, 0, 1, 1], [], []>} : vector<3x32xbf16>, vector<32x32xbf16>, vector<3x32xf32> -> vector<3x32xf32>
    %19 = arith.addf %12, %18 : vector<3x32xf32>
    %20 = vector.extract_strided_slice %14 {offsets = [1, 0], sizes = [3, 32], strides = [1, 1]} : vector<4x32xbf16> to vector<3x32xbf16>
    %c1_21 = arith.constant 1 : index
    %c1_22 = arith.constant 1 : index
    %c0_23 = arith.constant 0 : index
    %c0_24 = arith.constant 0 : index
    %21 = vector.load %arg2[%c1_21, %c1_22, %c0_23, %c0_24] : memref<2x2x32x32xbf16, #tpu.memory_space<vmem>>, vector<1x1x32x32xbf16>
    %22 = vector.shape_cast %21 : vector<1x1x32x32xbf16> to vector<32x32xbf16>
    %cst_25 = arith.constant dense<0.000000e+00> : vector<3x32xf32>
    %23 = tpu.matmul %20, %22, %cst_25 {dimension_numbers = #tpu.dot_dimension_numbers<[1], [0], [0], [1], [0, 0, 1, 1], [], []>} : vector<3x32xbf16>, vector<32x32xbf16>, vector<3x32xf32> -> vector<3x32xf32>
    %24 = arith.addf %19, %23 : vector<3x32xf32>
    %c0_26 = arith.constant 0 : index
    %c0_27 = arith.constant 0 : index
    %25 = vector.load %arg3[%c0_26, %c0_27] : memref<1x32xf32, #tpu.memory_space<vmem>>, vector<1x32xf32>
    %26 = vector.broadcast %25 : vector<1x32xf32> to vector<3x32xf32>
    %27 = arith.mulf %24, %26 : vector<3x32xf32>
    %c0_28 = arith.constant 0 : index
    %c0_29 = arith.constant 0 : index
    %28 = vector.load %arg4[%c0_28, %c0_29] : memref<1x32xf32, #tpu.memory_space<vmem>>, vector<1x32xf32>
    %29 = vector.broadcast %28 : vector<1x32xf32> to vector<3x32xf32>
    %30 = arith.addf %27, %29 : vector<3x32xf32>
    %cst_30 = arith.constant 0.000000e+00 : f32
    %31 = vector.broadcast %cst_30 : f32 to vector<3x32xf32>
    %32 = arith.maximumf %30, %31 : vector<3x32xf32>
    %c0_31 = arith.constant 0 : index
    %c0_32 = arith.constant 0 : index
    %c0_33 = arith.constant 0 : index
    %c0_34 = arith.constant 0 : index
    %33 = vector.load %arg7[%c0_31, %c0_32, %c0_33, %c0_34] : memref<1x1x3x32xf32, #tpu.memory_space<vmem>>, vector<1x1x3x32xf32>
    %34 = vector.shape_cast %33 : vector<1x1x3x32xf32> to vector<3x32xf32>
    %35 = vector.shape_cast %32 : vector<3x32xf32> to vector<1x1x3x32xf32>
    tpu.vector_store %arg7[%c0_31, %c0_32, %c0_33, %c0_34], %35 {strides = array<i32>} : memref<1x1x3x32xf32, #tpu.memory_space<vmem>>, vector<1x1x3x32xf32>,
    return
  }
  func.func @transform_0(%arg0: i32, %arg1: i32) -> (i32, i32, i32, i32) {
    %c0_i32 = arith.constant 0 : i32
    %c0_i32_0 = arith.constant 0 : i32
    %c0_i32_1 = arith.constant 0 : i32
    %c0_i32_2 = arith.constant 0 : i32
    %c0_i32_3 = arith.constant 0 : i32
    return %c0_i32, %c0_i32_0, %c0_i32_1, %c0_i32_2 : i32, i32, i32, i32
  }
  func.func @transform_1(%arg0: i32, %arg1: i32) -> (i32, i32) {
    %c0_i32 = arith.constant 0 : i32
    %c0_i32_0 = arith.constant 0 : i32
    %c0_i32_1 = arith.constant 0 : i32
    return %c0_i32, %c0_i32_0 : i32, i32
  }
  func.func @transform_2(%arg0: i32, %arg1: i32) -> (i32, i32) {
    %c0_i32 = arith.constant 0 : i32
    %c0_i32_0 = arith.constant 0 : i32
    %c0_i32_1 = arith.constant 0 : i32
    return %c0_i32, %c0_i32_0 : i32, i32
  }
  func.func @transform_3(%arg0: i32, %arg1: i32) -> (i32, i32, i32, i32) {
    %c0_i32 = arith.constant 0 : i32
    %0 = arith.addi %arg1, %c0_i32 : i32
    %c0_i32_0 = arith.constant 0 : i32
    %c0_i32_1 = arith.constant 0 : i32
    %c0_i32_2 = arith.constant 0 : i32
    return %arg0, %0, %c0_i32_0, %c0_i32_1 : i32, i32, i32, i32
  }
  func.func @transform_4(%arg0: i32, %arg1: i32) -> (i32, i32, i32, i32) {
    %c1_i32 = arith.constant 1 : i32
    %0 = arith.addi %arg1, %c1_i32 : i32
    %c0_i32 = arith.constant 0 : i32
    %c0_i32_0 = arith.constant 0 : i32
    %c0_i32_1 = arith.constant 0 : i32
    return %arg0, %0, %c0_i32, %c0_i32_0 : i32, i32, i32, i32
  }
  func.func @transform_5(%arg0: i32, %arg1: i32) -> (i32, i32, i32, i32) {
    %c0_i32 = arith.constant 0 : i32
    %c0_i32_0 = arith.constant 0 : i32
    %c0_i32_1 = arith.constant 0 : i32
    return %arg0, %arg1, %c0_i32, %c0_i32_0 : i32, i32, i32, i32
  }
}

</mosaic_0001>

<llo_original>
// kernel: crnn_vgg_forward.14
$region0: #{crnn_vgg_forward.14}
  #allocation0 [shape = 'u32[]', space=smem, size = 0x4, offset = 0x4, fixed_abs, tag = 'smem constant byte address 0x4 - core index']
  #allocation1 [shape = 'u32[72,128]{1,0:T(1,128)}', space=vmem, size = 0x9000, scoped, tag = 'internal scratch']
  %s0 = inlined_call_operand.vmem [shape: f32[2,16,2,8,8], index: 0, kind: input, shape index: {}]
  %s1 = inlined_call_operand.vmem [shape: f32[2,16,8,4], index: 1, kind: output, shape index: {}]
  %s2 = sld [smem:[#allocation0]]
  $region37: #{crnn_vgg_forward.14} parent=0
    _
  %s4 = ssub.s32 1, %s2
  %s5 = scalar_select 0, %s4, %s2
  loop: start=0, step=1, limit=34
  $region2: #{crnn_vgg_forward.14} parent=0 // loop_pre_header
    _
  $region3: #{crnn_vgg_forward.14} parent=0 // loop_header
    %s7 = sphi 0, %s11
    %p8 = scmp.ge.s32.totalorder %s7, 34
    %s14 = sphi 0, %s26
    %s15 = sphi 0, %s22
    %s16 = sphi 0, %s14
    %s17 = sphi 0, %s15
    %s18 = sphi 0, %s16
    %s19 = sphi 0, %s17
    %s31 = sphi 0, %s33
    %s34 = sphi 0, %s31
    %s35 = sphi 0, %s34
    %s51 = sphi 0, %s35
    %s59 = sphi 0, %s61
    %s62 = sphi 0, %s59
    %s63 = sphi 0, %s62
    %s79 = sphi 0, %s63
  $region4: #{crnn_vgg_forward.14} parent=0 // loop_header_branch
    %10 = sbr.rel (%p8) target = $region8
  $region5: #{crnn_vgg_forward.14} parent=0 // loop_body
    %s12 = ssub.s32 %s7, 1
    %s13 = ssub.s32 %s7, 2
    %s20 = sadd.s32 1, %s15
    %p21 = scmp.ge.s32.totalorder %s20, 16
    %s22 = scalar_select %p21, 0, %s20
    %s23 = sadd.s32 1, %s14
    %s24 = scalar_select %p21, %s23, %s14
    %p25 = scmp.ge.s32.totalorder %s24, 2
    %s26 = scalar_select %p25, 0, %s24
    %s27 = ssub.s32 %s14, %s26
    %s28 = ssub.s32 %s15, %s22
    %s29 = sor.u32 %s27, %s28
    %p30 = scmp.eq.s32.totalorder %s29, 0
    %s32 = sadd.s32 %s31, 1
    %s33 = scalar_select %p30, %s31, %s32
    %p36 = pneg %p30
    %p37 = scmp.eq.s32.totalorder %s7, 31
    %p38 = por %p36, %p37
    %p39 = scmp.ne.s32.totalorder %s31, %s34
    %p40 = scmp.eq.s32.totalorder %s7, 0
    %p41 = por %p39, %p40
    %p42 = scmp.ne.s32.totalorder %s31, %s34
    %p43 = scmp.eq.s32.totalorder %s12, 31
    %p44 = por %p42, %p43
    %p45 = scmp.ne.s32.totalorder %s34, %s35
    %p46 = scmp.eq.s32.totalorder %s12, 0
    %p47 = por %p45, %p46
    %p48 = scmp.ne.s32.totalorder %s34, %s35
    %p49 = scmp.eq.s32.totalorder %s13, 31
    %p50 = por %p48, %p49
    %p52 = scmp.ne.s32.totalorder %s35, %s51
    %p53 = scmp.eq.s32.totalorder %s13, 0
    %p54 = por %p52, %p53
    %s55 = ssub.s32 %s14, %s26
    %s56 = ssub.s32 %s15, %s22
    %s57 = sor.u32 %s55, %s56
    %p58 = scmp.eq.s32.totalorder %s57, 0
    %s60 = sadd.s32 %s59, 1
    %s61 = scalar_select %p58, %s59, %s60
    %p64 = pneg %p58
    %p65 = scmp.eq.s32.totalorder %s7, 31
    %p66 = por %p64, %p65
    %p67 = scmp.ne.s32.totalorder %s59, %s62
    %p68 = scmp.eq.s32.totalorder %s7, 0
    %p69 = por %p67, %p68
    %p70 = scmp.ne.s32.totalorder %s59, %s62
    %p71 = scmp.eq.s32.totalorder %s12, 31
    %p72 = por %p70, %p71
    %p73 = scmp.ne.s32.totalorder %s62, %s63
    %p74 = scmp.eq.s32.totalorder %s12, 0
    %p75 = por %p73, %p74
    %p76 = scmp.ne.s32.totalorder %s62, %s63
    %p77 = scmp.eq.s32.totalorder %s13, 31
    %p78 = por %p76, %p77
    %p80 = scmp.ne.s32.totalorder %s63, %s79
    %p81 = scmp.eq.s32.totalorder %s13, 0
    %p82 = por %p80, %p81
    %p83 = scmp.le.s32.totalorder 1, %s7
    %p84 = scmp.lt.s32.totalorder %s7, 33
    %p85 = pnand %p83, %p84
    %p86 = pneg %p85
    // Predicated region
    $region9: #{crnn_vgg_forward.14} parent=5 // pred_check
      _
    $region10: #{crnn_vgg_forward.14} parent=5 // pred_check_branch
      %88 = sbr.rel (%p85) target = $region12
    $region11: #{crnn_vgg_forward.14} parent=5 // pred_region
      %s89 = ssub.s32 %s7, 1
    $region12: #{crnn_vgg_forward.14} parent=5 // pred_fallthru
      _
    %p90 = scmp.lt.s32.totalorder %s7, 32
    // Predicated region
    $region13: #{crnn_vgg_forward.14} parent=5 // pred_check
      %p91 = pneg %p90
    $region14: #{crnn_vgg_forward.14} parent=5 // pred_check_branch
      %93 = sbr.rel (%p91) target = $region16
    $region15: #{crnn_vgg_forward.14} parent=5 // pred_region
      // Predicated region
      $region17: #{crnn_vgg_forward.14} parent=15 // pred_check
        %p94 = pneg %p41
      $region18: #{crnn_vgg_forward.14} parent=15 // pred_check_branch
        %96 = sbr.rel (%p94) target = $region20
      $region19: #{crnn_vgg_forward.14} parent=15 // pred_region
        %p97 = scmp.lt.s32.totalorder %s14, 1
        %s98 = scalar_select %p97, %s14, 1
        %p99 = scmp.lt.s32.totalorder %s15, 15
        %s100 = scalar_select %p99, %s15, 15
        %s101 = smul.addr %s100, 2
        %s102 = smul.addr %s98, 32
        %s103 = sadd.s32 %s101, %s102
        %s104 = smul.addr %s103, 8
        %s105 = scalar_lea.vmem %s0, %s104
      $region20: #{crnn_vgg_forward.14} parent=15 // pred_fallthru
        _
    $region16: #{crnn_vgg_forward.14} parent=5 // pred_fallthru
      _
    %p106 = scmp.le.s32.totalorder 1, %s7
    %p107 = scmp.lt.s32.totalorder %s7, 33
    %p108 = pnand %p106, %p107
    %p109 = pneg %p108
    // Predicated region
    $region21: #{crnn_vgg_forward.14} parent=5 // pred_check
      _
    $region22: #{crnn_vgg_forward.14} parent=5 // pred_check_branch
      %111 = sbr.rel (%p108) target = $region24
    $region23: #{crnn_vgg_forward.14} parent=5 // pred_region
      %s112 = ssub.s32 %s7, 1
      %p113 = scmp.lt.s32.totalorder %s16, 1
      %s114 = scalar_select %p113, %s16, 1
      %p115 = scmp.lt.s32.totalorder %s17, 15
      %s116 = scalar_select %p115, %s17, 15
      %s117 = smul.addr %s116, 2
      %s118 = smul.addr %s114, 32
      %s119 = sadd.s32 %s117, %s118
      %s120 = smul.addr %s119, 8
      %s121 = scalar_lea.vmem %s0, %s120
      %p122 = pneg %p47
      %p123 = pneg %p44
      %p124 = pneg %p75
      %p125 = pneg %p72
      %p126 = scmp.lt.s32.totalorder %s16, 1
      %s127 = scalar_select %p126, %s16, 1
      %p128 = scmp.lt.s32.totalorder %s17, 15
      %s129 = scalar_select %p128, %s17, 15
      %s130 = smul.addr %s127, 16
      %s131 = sadd.s32 %s129, %s130
      %s132 = smul.addr %s131, 8
      %s133 = scalar_lea.vmem %s1, %s132
      %p134 = scmp.lt.s32.totalorder %s16, 1
      %s135 = scalar_select %p134, %s16, 1
      %p136 = scmp.lt.s32.totalorder %s17, 15
      %s137 = scalar_select %p136, %s17, 15
      %s138 = smul.addr %s137, 2
      %s139 = smul.addr %s135, 32
      %s140 = sadd.s32 %s138, %s139
      %s141 = smul.addr %s140, 8
      %s142 = scalar_lea.vmem %s0, %s141
      %p143 = scmp.lt.s32.totalorder %s16, 1
      %s144 = scalar_select %p143, %s16, 1
      %p145 = scmp.lt.s32.totalorder %s17, 15
      %s146 = scalar_select %p145, %s17, 15
      %s147 = smul.addr %s144, 16
      %s148 = sadd.s32 %s146, %s147
      %s149 = smul.addr %s148, 8
      %s150 = scalar_lea.vmem %s1, %s149
      %v151 = vld [vmem:[%s142] sm:$0xff]
      %v152 = vld [vmem:[%s142 + $0x8] sm:$0xff]
      %v153 = vmax.f32 %v151, %v152
      %155 = vrot.lane.b32.xlu0 %v153, 124
      %v156 = vpop.permute.xlu0 %155
      %v158 = vmax.f32 %v153, %v156
      %vm159 = vcmask 31744
      %160 = vst.msk [vmem:[%s150] sm:$0xff] %vm159, %v158
      %p161 = scmp.lt.s32.totalorder %s16, 1
      %s162 = scalar_select %p161, %s16, 1
      %p163 = scmp.lt.s32.totalorder %s17, 15
      %s164 = scalar_select %p163, %s17, 15
      %s165 = smul.addr %s162, 16
      %s166 = sadd.s32 %s164, %s165
      %s167 = smul.addr %s166, 8
      %s168 = scalar_lea.vmem %s1, %s167
      // Predicated region
      $region25: #{crnn_vgg_forward.14} parent=23 // pred_check
        %p169 = pneg %p72
      $region26: #{crnn_vgg_forward.14} parent=23 // pred_check_branch
        %171 = sbr.rel (%p169) target = $region28
      $region27: #{crnn_vgg_forward.14} parent=23 // pred_region
        _
      $region28: #{crnn_vgg_forward.14} parent=23 // pred_fallthru
        _
    $region24: #{crnn_vgg_forward.14} parent=5 // pred_fallthru
      _
    %p172 = scmp.le.s32.totalorder 2, %s7
    // Predicated region
    $region29: #{crnn_vgg_forward.14} parent=5 // pred_check
      %p173 = pneg %p172
    $region30: #{crnn_vgg_forward.14} parent=5 // pred_check_branch
      %175 = sbr.rel (%p173) target = $region32
    $region31: #{crnn_vgg_forward.14} parent=5 // pred_region
      %s176 = ssub.s32 %s7, 2
      // Predicated region
      $region33: #{crnn_vgg_forward.14} parent=31 // pred_check
        %p177 = pneg %p78
      $region34: #{crnn_vgg_forward.14} parent=31 // pred_check_branch
        %179 = sbr.rel (%p177) target = $region36
      $region35: #{crnn_vgg_forward.14} parent=31 // pred_region
        %p180 = scmp.lt.s32.totalorder %s18, 1
        %s181 = scalar_select %p180, %s18, 1
        %p182 = scmp.lt.s32.totalorder %s19, 15
        %s183 = scalar_select %p182, %s19, 15
        %s184 = smul.addr %s181, 16
        %s185 = sadd.s32 %s183, %s184
        %s186 = smul.addr %s185, 8
        %s187 = scalar_lea.vmem %s1, %s186
      $region36: #{crnn_vgg_forward.14} parent=31 // pred_fallthru
        _
    $region32: #{crnn_vgg_forward.14} parent=5 // pred_fallthru
      _
  $region6: #{crnn_vgg_forward.14} parent=0 // loop_footer
    %s11 = sadd.s32 1, %s7
  $region7: #{crnn_vgg_forward.14} parent=0 // loop_footer_branch
    %6 = sbr.rel target = $region3
  $region8: #{crnn_vgg_forward.14} parent=0 // loop_exit
    _

// kernel: crnn_vgg_forward.13
$region0: #{crnn_vgg_forward.13}
  #allocation0 [shape = 'u32[]', space=smem, size = 0x4, offset = 0x4, fixed_abs, tag = 'smem constant byte address 0x4 - core index']
  #allocation1 [shape = 'u32[72,128]{1,0:T(1,128)}', space=vmem, size = 0x9000, scoped, tag = 'internal scratch']
  %s0 = inlined_call_operand.vmem [shape: bf16[3,3,1,4], index: 0, kind: input, shape index: {}]
  %s1 = inlined_call_operand.vmem [shape: f32[1,4], index: 1, kind: input, shape index: {}]
  %s2 = inlined_call_operand.vmem [shape: f32[1,4], index: 2, kind: input, shape index: {}]
  %s3 = inlined_call_operand.vmem [shape: bf16[2,34,18,1], index: 3, kind: input, shape index: {}, may-alias: {3,4,5}]
  %s4 = inlined_call_operand.vmem [shape: bf16[2,34,18,1], index: 4, kind: input, shape index: {}, may-alias: {3,4,5}]
  %s5 = inlined_call_operand.vmem [shape: bf16[2,34,18,1], index: 5, kind: input, shape index: {}, may-alias: {3,4,5}]
  %s6 = inlined_call_operand.vmem [shape: f32[2,32,16,4], index: 6, kind: output, shape index: {}]
  %s7 = sld [smem:[#allocation0]]
  $region57: #{crnn_vgg_forward.13} parent=0
    _
  %s9 = ssub.s32 1, %s7
  %s10 = scalar_select 0, %s9, %s7
  loop: start=0, step=1, limit=66
  $region2: #{crnn_vgg_forward.13} parent=0 // loop_pre_header
    _
  $region3: #{crnn_vgg_forward.13} parent=0 // loop_header
    %s12 = sphi 0, %s16
    %p13 = scmp.ge.s32.totalorder %s12, 66
    %s19 = sphi 0, %s31
    %s20 = sphi 0, %s27
    %s21 = sphi 0, %s19
    %s22 = sphi 0, %s20
    %s23 = sphi 0, %s21
    %s24 = sphi 0, %s22
    %s32 = sphi 0, %s32
    %s34 = sphi 0, %s32
    %s35 = sphi 0, %s34
    %s49 = sphi 0, %s35
    %s53 = sphi 0, %s53
    %s55 = sphi 0, %s53
    %s56 = sphi 0, %s55
    %s70 = sphi 0, %s56
    %s74 = sphi 0, %s74
    %s76 = sphi 0, %s74
    %s77 = sphi 0, %s76
    %s91 = sphi 0, %s77
    %s99 = sphi 0, %s101
    %s102 = sphi 0, %s99
    %s103 = sphi 0, %s102
    %s119 = sphi 0, %s103
    %s129 = sphi 0, %s131
    %s132 = sphi 0, %s129
    %s133 = sphi 0, %s132
    %s149 = sphi 0, %s133
    %s159 = sphi 0, %s161
    %s162 = sphi 0, %s159
    %s163 = sphi 0, %s162
    %s179 = sphi 0, %s163
    %s187 = sphi 0, %s189
    %s190 = sphi 0, %s187
    %s191 = sphi 0, %s190
    %s207 = sphi 0, %s191
  $region4: #{crnn_vgg_forward.13} parent=0 // loop_header_branch
    %15 = sbr.rel (%p13) target = $region8
  $region5: #{crnn_vgg_forward.13} parent=0 // loop_body
    %s17 = ssub.s32 %s12, 1
    %s18 = ssub.s32 %s12, 2
    %s25 = sadd.s32 1, %s20
    %p26 = scmp.ge.s32.totalorder %s25, 32
    %s27 = scalar_select %p26, 0, %s25
    %s28 = sadd.s32 1, %s19
    %s29 = scalar_select %p26, %s28, %s19
    %p30 = scmp.ge.s32.totalorder %s29, 2
    %s31 = scalar_select %p30, 0, %s29
    %s33 = sadd.s32 %s32, 1
    %p36 = scmp.eq.s32.totalorder %s12, 63
    %p37 = scmp.ne.s32.totalorder %s32, %s34
    %p38 = scmp.eq.s32.totalorder %s12, 0
    %p39 = por %p37, %p38
    %p40 = scmp.ne.s32.totalorder %s32, %s34
    %p41 = scmp.eq.s32.totalorder %s17, 63
    %p42 = por %p40, %p41
    %p43 = scmp.ne.s32.totalorder %s34, %s35
    %p44 = scmp.eq.s32.totalorder %s17, 0
    %p45 = por %p43, %p44
    %p46 = scmp.ne.s32.totalorder %s34, %s35
    %p47 = scmp.eq.s32.totalorder %s18, 63
    %p48 = por %p46, %p47
    %p50 = scmp.ne.s32.totalorder %s35, %s49
    %p51 = scmp.eq.s32.totalorder %s18, 0
    %p52 = por %p50, %p51
    %s54 = sadd.s32 %s53, 1
    %p57 = scmp.eq.s32.totalorder %s12, 63
    %p58 = scmp.ne.s32.totalorder %s53, %s55
    %p59 = scmp.eq.s32.totalorder %s12, 0
    %p60 = por %p58, %p59
    %p61 = scmp.ne.s32.totalorder %s53, %s55
    %p62 = scmp.eq.s32.totalorder %s17, 63
    %p63 = por %p61, %p62
    %p64 = scmp.ne.s32.totalorder %s55, %s56
    %p65 = scmp.eq.s32.totalorder %s17, 0
    %p66 = por %p64, %p65
    %p67 = scmp.ne.s32.totalorder %s55, %s56
    %p68 = scmp.eq.s32.totalorder %s18, 63
    %p69 = por %p67, %p68
    %p71 = scmp.ne.s32.totalorder %s56, %s70
    %p72 = scmp.eq.s32.totalorder %s18, 0
    %p73 = por %p71, %p72
    %s75 = sadd.s32 %s74, 1
    %p78 = scmp.eq.s32.totalorder %s12, 63
    %p79 = scmp.ne.s32.totalorder %s74, %s76
    %p80 = scmp.eq.s32.totalorder %s12, 0
    %p81 = por %p79, %p80
    %p82 = scmp.ne.s32.totalorder %s74, %s76
    %p83 = scmp.eq.s32.totalorder %s17, 63
    %p84 = por %p82, %p83
    %p85 = scmp.ne.s32.totalorder %s76, %s77
    %p86 = scmp.eq.s32.totalorder %s17, 0
    %p87 = por %p85, %p86
    %p88 = scmp.ne.s32.totalorder %s76, %s77
    %p89 = scmp.eq.s32.totalorder %s18, 63
    %p90 = por %p88, %p89
    %p92 = scmp.ne.s32.totalorder %s77, %s91
    %p93 = scmp.eq.s32.totalorder %s18, 0
    %p94 = por %p92, %p93
    %s95 = ssub.s32 %s19, %s31
    %s96 = ssub.s32 %s20, %s27
    %s97 = sor.u32 %s95, %s96
    %p98 = scmp.eq.s32.totalorder %s97, 0
    %s100 = sadd.s32 %s99, 1
    %s101 = scalar_select %p98, %s99, %s100
    %p104 = pneg %p98
    %p105 = scmp.eq.s32.totalorder %s12, 63
    %p106 = por %p104, %p105
    %p107 = scmp.ne.s32.totalorder %s99, %s102
    %p108 = scmp.eq.s32.totalorder %s12, 0
    %p109 = por %p107, %p108
    %p110 = scmp.ne.s32.totalorder %s99, %s102
    %p111 = scmp.eq.s32.totalorder %s17, 63
    %p112 = por %p110, %p111
    %p113 = scmp.ne.s32.totalorder %s102, %s103
    %p114 = scmp.eq.s32.totalorder %s17, 0
    %p115 = por %p113, %p114
    %p116 = scmp.ne.s32.totalorder %s102, %s103
    %p117 = scmp.eq.s32.totalorder %s18, 63
    %p118 = por %p116, %p117
    %p120 = scmp.ne.s32.totalorder %s103, %s119
    %p121 = scmp.eq.s32.totalorder %s18, 0
    %p122 = por %p120, %p121
    %s123 = sadd.s32 %s20, 1
    %s124 = sadd.s32 %s27, 1
    %s125 = ssub.s32 %s19, %s31
    %s126 = ssub.s32 %s123, %s124
    %s127 = sor.u32 %s125, %s126
    %p128 = scmp.eq.s32.totalorder %s127, 0
    %s130 = sadd.s32 %s129, 1
    %s131 = scalar_select %p128, %s129, %s130
    %p134 = pneg %p128
    %p135 = scmp.eq.s32.totalorder %s12, 63
    %p136 = por %p134, %p135
    %p137 = scmp.ne.s32.totalorder %s129, %s132
    %p138 = scmp.eq.s32.totalorder %s12, 0
    %p139 = por %p137, %p138
    %p140 = scmp.ne.s32.totalorder %s129, %s132
    %p141 = scmp.eq.s32.totalorder %s17, 63
    %p142 = por %p140, %p141
    %p143 = scmp.ne.s32.totalorder %s132, %s133
    %p144 = scmp.eq.s32.totalorder %s17, 0
    %p145 = por %p143, %p144
    %p146 = scmp.ne.s32.totalorder %s132, %s133
    %p147 = scmp.eq.s32.totalorder %s18, 63
    %p148 = por %p146, %p147
    %p150 = scmp.ne.s32.totalorder %s133, %s149
    %p151 = scmp.eq.s32.totalorder %s18, 0
    %p152 = por %p150, %p151
    %s153 = sadd.s32 %s20, 2
    %s154 = sadd.s32 %s27, 2
    %s155 = ssub.s32 %s19, %s31
    %s156 = ssub.s32 %s153, %s154
    %s157 = sor.u32 %s155, %s156
    %p158 = scmp.eq.s32.totalorder %s157, 0
    %s160 = sadd.s32 %s159, 1
    %s161 = scalar_select %p158, %s159, %s160
    %p164 = pneg %p158
    %p165 = scmp.eq.s32.totalorder %s12, 63
    %p166 = por %p164, %p165
    %p167 = scmp.ne.s32.totalorder %s159, %s162
    %p168 = scmp.eq.s32.totalorder %s12, 0
    %p169 = por %p167, %p168
    %p170 = scmp.ne.s32.totalorder %s159, %s162
    %p171 = scmp.eq.s32.totalorder %s17, 63
    %p172 = por %p170, %p171
    %p173 = scmp.ne.s32.totalorder %s162, %s163
    %p174 = scmp.eq.s32.totalorder %s17, 0
    %p175 = por %p173, %p174
    %p176 = scmp.ne.s32.totalorder %s162, %s163
    %p177 = scmp.eq.s32.totalorder %s18, 63
    %p178 = por %p176, %p177
    %p180 = scmp.ne.s32.totalorder %s163, %s179
    %p181 = scmp.eq.s32.totalorder %s18, 0
    %p182 = por %p180, %p181
    %s183 = ssub.s32 %s19, %s31
    %s184 = ssub.s32 %s20, %s27
    %s185 = sor.u32 %s183, %s184
    %p186 = scmp.eq.s32.totalorder %s185, 0
    %s188 = sadd.s32 %s187, 1
    %s189 = scalar_select %p186, %s187, %s188
    %p192 = pneg %p186
    %p193 = scmp.eq.s32.totalorder %s12, 63
    %p194 = por %p192, %p193
    %p195 = scmp.ne.s32.totalorder %s187, %s190
    %p196 = scmp.eq.s32.totalorder %s12, 0
    %p197 = por %p195, %p196
    %p198 = scmp.ne.s32.totalorder %s187, %s190
    %p199 = scmp.eq.s32.totalorder %s17, 63
    %p200 = por %p198, %p199
    %p201 = scmp.ne.s32.totalorder %s190, %s191
    %p202 = scmp.eq.s32.totalorder %s17, 0
    %p203 = por %p201, %p202
    %p204 = scmp.ne.s32.totalorder %s190, %s191
    %p205 = scmp.eq.s32.totalorder %s18, 63
    %p206 = por %p204, %p205
    %p208 = scmp.ne.s32.totalorder %s191, %s207
    %p209 = scmp.eq.s32.totalorder %s18, 0
    %p210 = por %p208, %p209
    %p211 = scmp.le.s32.totalorder 1, %s12
    %p212 = scmp.lt.s32.totalorder %s12, 65
    %p213 = pnand %p211, %p212
    %p214 = pneg %p213
    // Predicated region
    $region9: #{crnn_vgg_forward.13} parent=5 // pred_check
      _
    $region10: #{crnn_vgg_forward.13} parent=5 // pred_check_branch
      %216 = sbr.rel (%p213) target = $region12
    $region11: #{crnn_vgg_forward.13} parent=5 // pred_region
      %s217 = ssub.s32 %s12, 1
      // Predicated region
      $region13: #{crnn_vgg_forward.13} parent=11 // pred_check
        %p218 = pneg %p45
      $region14: #{crnn_vgg_forward.13} parent=11 // pred_check_branch
        %220 = sbr.rel (%p218) target = $region16
      $region15: #{crnn_vgg_forward.13} parent=11 // pred_region
        _
      $region16: #{crnn_vgg_forward.13} parent=11 // pred_fallthru
        _
      // Predicated region
      $region17: #{crnn_vgg_forward.13} parent=11 // pred_check
        %p221 = pneg %p66
      $region18: #{crnn_vgg_forward.13} parent=11 // pred_check_branch
        %223 = sbr.rel (%p221) target = $region20
      $region19: #{crnn_vgg_forward.13} parent=11 // pred_region
        _
      $region20: #{crnn_vgg_forward.13} parent=11 // pred_fallthru
        _
      // Predicated region
      $region21: #{crnn_vgg_forward.13} parent=11 // pred_check
        %p224 = pneg %p87
      $region22: #{crnn_vgg_forward.13} parent=11 // pred_check_branch
        %226 = sbr.rel (%p224) target = $region24
      $region23: #{crnn_vgg_forward.13} parent=11 // pred_region
        _
      $region24: #{crnn_vgg_forward.13} parent=11 // pred_fallthru
        _
    $region12: #{crnn_vgg_forward.13} parent=5 // pred_fallthru
      _
    %p227 = scmp.lt.s32.totalorder %s12, 64
    // Predicated region
    $region25: #{crnn_vgg_forward.13} parent=5 // pred_check
      %p228 = pneg %p227
    $region26: #{crnn_vgg_forward.13} parent=5 // pred_check_branch
      %230 = sbr.rel (%p228) target = $region28
    $region27: #{crnn_vgg_forward.13} parent=5 // pred_region
      // Predicated region
      $region29: #{crnn_vgg_forward.13} parent=27 // pred_check
        %p231 = pneg %p109
      $region30: #{crnn_vgg_forward.13} parent=27 // pred_check_branch
        %233 = sbr.rel (%p231) target = $region32
      $region31: #{crnn_vgg_forward.13} parent=27 // pred_region
        %p234 = scmp.lt.s32.totalorder %s19, 1
        %s235 = scalar_select %p234, %s19, 1
        %p236 = scmp.lt.s32.totalorder %s20, 33
        %s237 = scalar_select %p236, %s20, 33
        %s238 = smul.addr %s237, 3
        %s239 = smul.addr %s235, 102
        %s240 = sadd.s32 %s238, %s239
        %s241 = smul.addr %s240, 4
        %s242 = scalar_lea.vmem %s3, %s241
      $region32: #{crnn_vgg_forward.13} parent=27 // pred_fallthru
        _
      // Predicated region
      $region33: #{crnn_vgg_forward.13} parent=27 // pred_check
        %p243 = pneg %p139
      $region34: #{crnn_vgg_forward.13} parent=27 // pred_check_branch
        %245 = sbr.rel (%p243) target = $region36
      $region35: #{crnn_vgg_forward.13} parent=27 // pred_region
        %s246 = sadd.s32 %s20, 1
        %p247 = scmp.lt.s32.totalorder %s19, 1
        %s248 = scalar_select %p247, %s19, 1
        %p249 = scmp.lt.s32.totalorder %s246, 33
        %s250 = scalar_select %p249, %s246, 33
        %s251 = smul.addr %s250, 3
        %s252 = smul.addr %s248, 102
        %s253 = sadd.s32 %s251, %s252
        %s254 = smul.addr %s253, 4
        %s255 = scalar_lea.vmem %s4, %s254
        %s256 = sadd.s32 %s20, 1
      $region36: #{crnn_vgg_forward.13} parent=27 // pred_fallthru
        _
      // Predicated region
      $region37: #{crnn_vgg_forward.13} parent=27 // pred_check
        %p257 = pneg %p169
      $region38: #{crnn_vgg_forward.13} parent=27 // pred_check_branch
        %259 = sbr.rel (%p257) target = $region40
      $region39: #{crnn_vgg_forward.13} parent=27 // pred_region
        %s260 = sadd.s32 %s20, 2
        %p261 = scmp.lt.s32.totalorder %s19, 1
        %s262 = scalar_select %p261, %s19, 1
        %p263 = scmp.lt.s32.totalorder %s260, 33
        %s264 = scalar_select %p263, %s260, 33
        %s265 = smul.addr %s264, 3
        %s266 = smul.addr %s262, 102
        %s267 = sadd.s32 %s265, %s266
        %s268 = smul.addr %s267, 4
        %s269 = scalar_lea.vmem %s5, %s268
        %s270 = sadd.s32 %s20, 2
      $region40: #{crnn_vgg_forward.13} parent=27 // pred_fallthru
        _
    $region28: #{crnn_vgg_forward.13} parent=5 // pred_fallthru
      _
    %p271 = scmp.le.s32.totalorder 1, %s12
    %p272 = scmp.lt.s32.totalorder %s12, 65
    %p273 = pnand %p271, %p272
    %p274 = pneg %p273
    // Predicated region
    $region41: #{crnn_vgg_forward.13} parent=5 // pred_check
      _
    $region42: #{crnn_vgg_forward.13} parent=5 // pred_check_branch
      %276 = sbr.rel (%p273) target = $region44
    $region43: #{crnn_vgg_forward.13} parent=5 // pred_region
      %s277 = ssub.s32 %s12, 1
      %p278 = pneg %p45
      %p279 = pneg %p42
      %p280 = pneg %p66
      %p281 = pneg %p63
      %p282 = pneg %p87
      %p283 = pneg %p84
      %p284 = scmp.lt.s32.totalorder %s21, 1
      %s285 = scalar_select %p284, %s21, 1
      %p286 = scmp.lt.s32.totalorder %s22, 33
      %s287 = scalar_select %p286, %s22, 33
      %s288 = smul.addr %s287, 3
      %s289 = smul.addr %s285, 102
      %s290 = sadd.s32 %s288, %s289
      %s291 = smul.addr %s290, 4
      %s292 = scalar_lea.vmem %s3, %s291
      %p293 = pneg %p115
      %p294 = pneg %p112
      %s295 = sadd.s32 %s22, 1
      %p296 = scmp.lt.s32.totalorder %s21, 1
      %s297 = scalar_select %p296, %s21, 1
      %p298 = scmp.lt.s32.totalorder %s295, 33
      %s299 = scalar_select %p298, %s295, 33
      %s300 = smul.addr %s299, 3
      %s301 = smul.addr %s297, 102
      %s302 = sadd.s32 %s300, %s301
      %s303 = smul.addr %s302, 4
      %s304 = scalar_lea.vmem %s4, %s303
      %p305 = pneg %p145
      %p306 = pneg %p142
      %s307 = sadd.s32 %s22, 2
      %p308 = scmp.lt.s32.totalorder %s21, 1
      %s309 = scalar_select %p308, %s21, 1
      %p310 = scmp.lt.s32.totalorder %s307, 33
      %s311 = scalar_select %p310, %s307, 33
      %s312 = smul.addr %s311, 3
      %s313 = smul.addr %s309, 102
      %s314 = sadd.s32 %s312, %s313
      %s315 = smul.addr %s314, 4
      %s316 = scalar_lea.vmem %s5, %s315
      %p317 = pneg %p175
      %p318 = pneg %p172
      %p319 = pneg %p203
      %p320 = pneg %p200
      %p321 = scmp.lt.s32.totalorder %s21, 1
      %s322 = scalar_select %p321, %s21, 1
      %p323 = scmp.lt.s32.totalorder %s22, 31
      %s324 = scalar_select %p323, %s22, 31
      %s325 = smul.addr %s324, 2
      %s326 = smul.addr %s322, 64
      %s327 = sadd.s32 %s325, %s326
      %s328 = smul.addr %s327, 8
      %s329 = scalar_lea.vmem %s6, %s328
      %p330 = scmp.lt.s32.totalorder %s21, 1
      %s331 = scalar_select %p330, %s21, 1
      %p332 = scmp.lt.s32.totalorder %s22, 33
      %s333 = scalar_select %p332, %s22, 33
      %s334 = smul.addr %s333, 3
      %s335 = smul.addr %s331, 102
      %s336 = sadd.s32 %s334, %s335
      %s337 = smul.addr %s336, 4
      %s338 = scalar_lea.vmem %s3, %s337
      %s339 = sadd.s32 %s22, 1
      %p340 = scmp.lt.s32.totalorder %s21, 1
      %s341 = scalar_select %p340, %s21, 1
      %p342 = scmp.lt.s32.totalorder %s339, 33
      %s343 = scalar_select %p342, %s339, 33
      %s344 = smul.addr %s343, 3
      %s345 = smul.addr %s341, 102
      %s346 = sadd.s32 %s344, %s345
      %s347 = smul.addr %s346, 4
      %s348 = scalar_lea.vmem %s4, %s347
      %s349 = sadd.s32 %s22, 1
      %s350 = sadd.s32 %s22, 2
      %p351 = scmp.lt.s32.totalorder %s21, 1
      %s352 = scalar_select %p351, %s21, 1
      %p353 = scmp.lt.s32.totalorder %s350, 33
      %s354 = scalar_select %p353, %s350, 33
      %s355 = smul.addr %s354, 3
      %s356 = smul.addr %s352, 102
      %s357 = sadd.s32 %s355, %s356
      %s358 = smul.addr %s357, 4
      %s359 = scalar_lea.vmem %s5, %s358
      %s360 = sadd.s32 %s22, 2
      %p361 = scmp.lt.s32.totalorder %s21, 1
      %s362 = scalar_select %p361, %s21, 1
      %p363 = scmp.lt.s32.totalorder %s22, 31
      %s364 = scalar_select %p363, %s22, 31
      %s365 = smul.addr %s364, 2
      %s366 = smul.addr %s362, 64
      %s367 = sadd.s32 %s365, %s366
      %s368 = smul.addr %s367, 8
      %s369 = scalar_lea.vmem %s6, %s368
      %v370 = vld [vmem:[%s338] sm:$0xf]
      %v371 = vld [vmem:[%s338 + $0x4] sm:$0xf]
      %v372 = vld [vmem:[%s338 + $0x8] sm:$0x1]
      %v373 = vld [vmem:[%s0] sm:$0x1]
      %v374 = vunpack.c.l.bf16 %v370
      %v375 = vunpack.c.l.bf16 %v371
      %v376 = vunpack.c.l.bf16 %v373
      %378 = vset.pattern.permute.xlu0 0
      %379 = vperm.xlu0 %378, %v374
      %v380 = vpop.permute.xlu0 %379
      %383 = vset.pattern.permute.xlu0 0
      %384 = vperm.xlu0 %383, %v375
      %v385 = vpop.permute.xlu0 %384
      %v387 = vperm.slane %v376, 0
      %v388 = vmul.f32 %v380, %v387
      %v389 = vmul.f32 %v385, %v387
      %v390 = vadd.f32 %v388, 0.0
      %v391 = vadd.f32 %v389, 0.0
      %s392 = scalar_lea.vmem %s0, 1
      %v393 = vld [vmem:[%s392] sm:$0x1]
      %v394 = vunpack.c.l.bf16 %v372
      %v395 = vunpack.c.l.bf16 %v393
      %397 = vset.pattern.permute.xlu0 0
      %398 = vperm.xlu0 %397, %v394
      %v399 = vpop.permute.xlu0 %398
      %v401 = vperm.slane %v395, 0
      %v402 = vmul.f32 %v380, %v401
      %v403 = vmul.f32 %v385, %v401
      %v404 = vmul.f32 %v399, %v401
      %vm408 = vcmask 1046528
      %v409 = vrot.slane %v402, 1
      %v410 = vrot.slane %v403, 1
      %v411 = vsel %vm408, %v409, %v410
      %v412 = vrot.slane %v404, 1
      %v413 = vsel %vm408, %v410, %v412
      %v416 = vadd.f32 %v390, %v411
      %v417 = vadd.f32 %v391, %v413
      %s418 = scalar_lea.vmem %s0, 2
      %v419 = vld [vmem:[%s418] sm:$0x1]
      %v420 = vunpack.c.l.bf16 %v419
      %v421 = vperm.slane %v420, 0
      %v422 = vmul.f32 %v380, %v421
      %v423 = vmul.f32 %v385, %v421
      %v424 = vmul.f32 %v399, %v421
      %vm428 = vcmask 1045504
      %v429 = vrot.slane %v422, 2
      %v430 = vrot.slane %v423, 2
      %v431 = vsel %vm428, %v429, %v430
      %v432 = vrot.slane %v424, 2
      %v433 = vsel %vm428, %v430, %v432
      %v436 = vadd.f32 %v416, %v431
      %v437 = vadd.f32 %v417, %v433
      %v438 = vld [vmem:[%s348] sm:$0xf]
      %v439 = vld [vmem:[%s348 + $0x4] sm:$0xf]
      %v440 = vld [vmem:[%s348 + $0x8] sm:$0x1]
      %s441 = scalar_lea.vmem %s0, 3
      %v442 = vld [vmem:[%s441] sm:$0x1]
      %v443 = vunpack.c.l.bf16 %v438
      %v444 = vunpack.c.l.bf16 %v439
      %v445 = vunpack.c.l.bf16 %v442
      %447 = vset.pattern.permute.xlu0 0
      %448 = vperm.xlu0 %447, %v443
      %v449 = vpop.permute.xlu0 %448
      %452 = vset.pattern.permute.xlu0 0
      %453 = vperm.xlu0 %452, %v444
      %v454 = vpop.permute.xlu0 %453
      %v456 = vperm.slane %v445, 0
      %v457 = vmul.f32 %v449, %v456
      %v458 = vmul.f32 %v454, %v456
      %v459 = vadd.f32 %v436, %v457
      %v460 = vadd.f32 %v437, %v458
      %s461 = scalar_lea.vmem %s0, 4
      %v462 = vld [vmem:[%s461] sm:$0x1]
      %v463 = vunpack.c.l.bf16 %v440
      %v464 = vunpack.c.l.bf16 %v462
      %466 = vset.pattern.permute.xlu0 0
      %467 = vperm.xlu0 %466, %v463
      %v468 = vpop.permute.xlu0 %467
      %v470 = vperm.slane %v464, 0
      %v471 = vmul.f32 %v449, %v470
      %v472 = vmul.f32 %v454, %v470
      %v473 = vmul.f32 %v468, %v470
      %v477 = vrot.slane %v471, 1
      %v478 = vrot.slane %v472, 1
      %v479 = vsel %vm408, %v477, %v478
      %v480 = vrot.slane %v473, 1
      %v481 = vsel %vm408, %v478, %v480
      %v484 = vadd.f32 %v459, %v479
      %v485 = vadd.f32 %v460, %v481
      %s486 = scalar_lea.vmem %s0, 5
      %v487 = vld [vmem:[%s486] sm:$0x1]
      %v488 = vunpack.c.l.bf16 %v487
      %v489 = vperm.slane %v488, 0
      %v490 = vmul.f32 %v449, %v489
      %v491 = vmul.f32 %v454, %v489
      %v492 = vmul.f32 %v468, %v489
      %v496 = vrot.slane %v490, 2
      %v497 = vrot.slane %v491, 2
      %v498 = vsel %vm428, %v496, %v497
      %v499 = vrot.slane %v492, 2
      %v500 = vsel %vm428, %v497, %v499
      %v503 = vadd.f32 %v484, %v498
      %v504 = vadd.f32 %v485, %v500
      %v505 = vld [vmem:[%s359] sm:$0xf]
      %v506 = vld [vmem:[%s359 + $0x4] sm:$0xf]
      %v507 = vld [vmem:[%s359 + $0x8] sm:$0x1]
      %s508 = scalar_lea.vmem %s0, 6
      %v509 = vld [vmem:[%s508] sm:$0x1]
      %v510 = vunpack.c.l.bf16 %v505
      %v511 = vunpack.c.l.bf16 %v506
      %v512 = vunpack.c.l.bf16 %v509
      %514 = vset.pattern.permute.xlu0 0
      %515 = vperm.xlu0 %514, %v510
      %v516 = vpop.permute.xlu0 %515
      %519 = vset.pattern.permute.xlu0 0
      %520 = vperm.xlu0 %519, %v511
      %v521 = vpop.permute.xlu0 %520
      %v523 = vperm.slane %v512, 0
      %v524 = vmul.f32 %v516, %v523
      %v525 = vmul.f32 %v521, %v523
      %v526 = vadd.f32 %v503, %v524
      %v527 = vadd.f32 %v504, %v525
      %s528 = scalar_lea.vmem %s0, 7
      %v529 = vld [vmem:[%s528] sm:$0x1]
      %v530 = vunpack.c.l.bf16 %v507
      %v531 = vunpack.c.l.bf16 %v529
      %533 = vset.pattern.permute.xlu0 0
      %534 = vperm.xlu0 %533, %v530
      %v535 = vpop.permute.xlu0 %534
      %v537 = vperm.slane %v531, 0
      %v538 = vmul.f32 %v516, %v537
      %v539 = vmul.f32 %v521, %v537
      %v540 = vmul.f32 %v535, %v537
      %v544 = vrot.slane %v538, 1
      %v545 = vrot.slane %v539, 1
      %v546 = vsel %vm408, %v544, %v545
      %v547 = vrot.slane %v540, 1
      %v548 = vsel %vm408, %v545, %v547
      %v551 = vadd.f32 %v526, %v546
      %v552 = vadd.f32 %v527, %v548
      %s553 = scalar_lea.vmem %s0, 8
      %v554 = vld [vmem:[%s553] sm:$0x1]
      %v555 = vunpack.c.l.bf16 %v554
      %v556 = vperm.slane %v555, 0
      %v557 = vmul.f32 %v516, %v556
      %v558 = vmul.f32 %v521, %v556
      %v559 = vmul.f32 %v535, %v556
      %v563 = vrot.slane %v557, 2
      %v564 = vrot.slane %v558, 2
      %v565 = vsel %vm428, %v563, %v564
      %v566 = vrot.slane %v559, 2
      %v567 = vsel %vm428, %v564, %v566
      %v570 = vadd.f32 %v551, %v565
      %v571 = vadd.f32 %v552, %v567
      %v572 = vld [vmem:[%s1] sm:$0x1]
      %v574 = vperm.slane %v572, 0
      %v576 = vmul.f32 %v570, %v574
      %v577 = vmul.f32 %v571, %v574
      %v578 = vld [vmem:[%s2] sm:$0x1]
      %v580 = vperm.slane %v578, 0
      %v582 = vadd.f32 %v576, %v580
      %v583 = vadd.f32 %v577, %v580
      %v584 = vmax.f32 %v582, 0.0
      %v585 = vmax.f32 %v583, 0.0
      %vm586 = vcmask 31744
      %587 = vst.msk [vmem:[%s369] sm:$0xff] %vm586, %v584
      %588 = vst.msk [vmem:[%s369 + $0x8] sm:$0xff] %vm586, %v585
      %p589 = scmp.lt.s32.totalorder %s21, 1
      %s590 = scalar_select %p589, %s21, 1
      %p591 = scmp.lt.s32.totalorder %s22, 31
      %s592 = scalar_select %p591, %s22, 31
      %s593 = smul.addr %s592, 2
      %s594 = smul.addr %s590, 64
      %s595 = sadd.s32 %s593, %s594
      %s596 = smul.addr %s595, 8
      %s597 = scalar_lea.vmem %s6, %s596
      // Predicated region
      $region45: #{crnn_vgg_forward.13} parent=43 // pred_check
        %p598 = pneg %p200
      $region46: #{crnn_vgg_forward.13} parent=43 // pred_check_branch
        %600 = sbr.rel (%p598) target = $region48
      $region47: #{crnn_vgg_forward.13} parent=43 // pred_region
        _
      $region48: #{crnn_vgg_forward.13} parent=43 // pred_fallthru
        _
    $region44: #{crnn_vgg_forward.13} parent=5 // pred_fallthru
      _
    %p601 = scmp.le.s32.totalorder 2, %s12
    // Predicated region
    $region49: #{crnn_vgg_forward.13} parent=5 // pred_check
      %p602 = pneg %p601
    $region50: #{crnn_vgg_forward.13} parent=5 // pred_check_branch
      %604 = sbr.rel (%p602) target = $region52
    $region51: #{crnn_vgg_forward.13} parent=5 // pred_region
      %s605 = ssub.s32 %s12, 2
      // Predicated region
      $region53: #{crnn_vgg_forward.13} parent=51 // pred_check
        %p606 = pneg %p206
      $region54: #{crnn_vgg_forward.13} parent=51 // pred_check_branch
        %608 = sbr.rel (%p606) target = $region56
      $region55: #{crnn_vgg_forward.13} parent=51 // pred_region
        %p609 = scmp.lt.s32.totalorder %s23, 1
        %s610 = scalar_select %p609, %s23, 1
        %p611 = scmp.lt.s32.totalorder %s24, 31
        %s612 = scalar_select %p611, %s24, 31
        %s613 = smul.addr %s612, 2
        %s614 = smul.addr %s610, 64
        %s615 = sadd.s32 %s613, %s614
        %s616 = smul.addr %s615, 8
        %s617 = scalar_lea.vmem %s6, %s616
      $region56: #{crnn_vgg_forward.13} parent=51 // pred_fallthru
        _
    $region52: #{crnn_vgg_forward.13} parent=5 // pred_fallthru
      _
  $region6: #{crnn_vgg_forward.13} parent=0 // loop_footer
    %s16 = sadd.s32 1, %s12
  $region7: #{crnn_vgg_forward.13} parent=0 // loop_footer_branch
    %11 = sbr.rel target = $region3
  $region8: #{crnn_vgg_forward.13} parent=0 // loop_exit
    _

// kernel: crnn_vgg_forward.16
$region0: #{crnn_vgg_forward.16}
  #allocation0 [shape = 'u32[]', space=smem, size = 0x4, offset = 0x4, fixed_abs, tag = 'smem constant byte address 0x4 - core index']
  #allocation1 [shape = 'u32[72,128]{1,0:T(1,128)}', space=vmem, size = 0x9000, scoped, tag = 'internal scratch']
  %s0 = inlined_call_operand.vmem [shape: f32[2,8,2,4,16], index: 0, kind: input, shape index: {}]
  %s1 = inlined_call_operand.vmem [shape: f32[2,8,4,8], index: 1, kind: output, shape index: {}]
  %s2 = sld [smem:[#allocation0]]
  $region37: #{crnn_vgg_forward.16} parent=0
    _
  %s4 = ssub.s32 1, %s2
  %s5 = scalar_select 0, %s4, %s2
  loop: start=0, step=1, limit=18
  $region2: #{crnn_vgg_forward.16} parent=0 // loop_pre_header
    _
  $region3: #{crnn_vgg_forward.16} parent=0 // loop_header
    %s7 = sphi 0, %s11
    %p8 = scmp.ge.s32.totalorder %s7, 18
    %s14 = sphi 0, %s26
    %s15 = sphi 0, %s22
    %s16 = sphi 0, %s14
    %s17 = sphi 0, %s15
    %s18 = sphi 0, %s16
    %s19 = sphi 0, %s17
    %s31 = sphi 0, %s33
    %s34 = sphi 0, %s31
    %s35 = sphi 0, %s34
    %s51 = sphi 0, %s35
    %s59 = sphi 0, %s61
    %s62 = sphi 0, %s59
    %s63 = sphi 0, %s62
    %s79 = sphi 0, %s63
  $region4: #{crnn_vgg_forward.16} parent=0 // loop_header_branch
    %10 = sbr.rel (%p8) target = $region8
  $region5: #{crnn_vgg_forward.16} parent=0 // loop_body
    %s12 = ssub.s32 %s7, 1
    %s13 = ssub.s32 %s7, 2
    %s20 = sadd.s32 1, %s15
    %p21 = scmp.ge.s32.totalorder %s20, 8
    %s22 = scalar_select %p21, 0, %s20
    %s23 = sadd.s32 1, %s14
    %s24 = scalar_select %p21, %s23, %s14
    %p25 = scmp.ge.s32.totalorder %s24, 2
    %s26 = scalar_select %p25, 0, %s24
    %s27 = ssub.s32 %s14, %s26
    %s28 = ssub.s32 %s15, %s22
    %s29 = sor.u32 %s27, %s28
    %p30 = scmp.eq.s32.totalorder %s29, 0
    %s32 = sadd.s32 %s31, 1
    %s33 = scalar_select %p30, %s31, %s32
    %p36 = pneg %p30
    %p37 = scmp.eq.s32.totalorder %s7, 15
    %p38 = por %p36, %p37
    %p39 = scmp.ne.s32.totalorder %s31, %s34
    %p40 = scmp.eq.s32.totalorder %s7, 0
    %p41 = por %p39, %p40
    %p42 = scmp.ne.s32.totalorder %s31, %s34
    %p43 = scmp.eq.s32.totalorder %s12, 15
    %p44 = por %p42, %p43
    %p45 = scmp.ne.s32.totalorder %s34, %s35
    %p46 = scmp.eq.s32.totalorder %s12, 0
    %p47 = por %p45, %p46
    %p48 = scmp.ne.s32.totalorder %s34, %s35
    %p49 = scmp.eq.s32.totalorder %s13, 15
    %p50 = por %p48, %p49
    %p52 = scmp.ne.s32.totalorder %s35, %s51
    %p53 = scmp.eq.s32.totalorder %s13, 0
    %p54 = por %p52, %p53
    %s55 = ssub.s32 %s14, %s26
    %s56 = ssub.s32 %s15, %s22
    %s57 = sor.u32 %s55, %s56
    %p58 = scmp.eq.s32.totalorder %s57, 0
    %s60 = sadd.s32 %s59, 1
    %s61 = scalar_select %p58, %s59, %s60
    %p64 = pneg %p58
    %p65 = scmp.eq.s32.totalorder %s7, 15
    %p66 = por %p64, %p65
    %p67 = scmp.ne.s32.totalorder %s59, %s62
    %p68 = scmp.eq.s32.totalorder %s7, 0
    %p69 = por %p67, %p68
    %p70 = scmp.ne.s32.totalorder %s59, %s62
    %p71 = scmp.eq.s32.totalorder %s12, 15
    %p72 = por %p70, %p71
    %p73 = scmp.ne.s32.totalorder %s62, %s63
    %p74 = scmp.eq.s32.totalorder %s12, 0
    %p75 = por %p73, %p74
    %p76 = scmp.ne.s32.totalorder %s62, %s63
    %p77 = scmp.eq.s32.totalorder %s13, 15
    %p78 = por %p76, %p77
    %p80 = scmp.ne.s32.totalorder %s63, %s79
    %p81 = scmp.eq.s32.totalorder %s13, 0
    %p82 = por %p80, %p81
    %p83 = scmp.le.s32.totalorder 1, %s7
    %p84 = scmp.lt.s32.totalorder %s7, 17
    %p85 = pnand %p83, %p84
    %p86 = pneg %p85
    // Predicated region
    $region9: #{crnn_vgg_forward.16} parent=5 // pred_check
      _
    $region10: #{crnn_vgg_forward.16} parent=5 // pred_check_branch
      %88 = sbr.rel (%p85) target = $region12
    $region11: #{crnn_vgg_forward.16} parent=5 // pred_region
      %s89 = ssub.s32 %s7, 1
    $region12: #{crnn_vgg_forward.16} parent=5 // pred_fallthru
      _
    %p90 = scmp.lt.s32.totalorder %s7, 16
    // Predicated region
    $region13: #{crnn_vgg_forward.16} parent=5 // pred_check
      %p91 = pneg %p90
    $region14: #{crnn_vgg_forward.16} parent=5 // pred_check_branch
      %93 = sbr.rel (%p91) target = $region16
    $region15: #{crnn_vgg_forward.16} parent=5 // pred_region
      // Predicated region
      $region17: #{crnn_vgg_forward.16} parent=15 // pred_check
        %p94 = pneg %p41
      $region18: #{crnn_vgg_forward.16} parent=15 // pred_check_branch
        %96 = sbr.rel (%p94) target = $region20
      $region19: #{crnn_vgg_forward.16} parent=15 // pred_region
        %p97 = scmp.lt.s32.totalorder %s14, 1
        %s98 = scalar_select %p97, %s14, 1
        %p99 = scmp.lt.s32.totalorder %s15, 7
        %s100 = scalar_select %p99, %s15, 7
        %s101 = smul.addr %s100, 2
        %s102 = smul.addr %s98, 16
        %s103 = sadd.s32 %s101, %s102
        %s104 = smul.addr %s103, 4
        %s105 = scalar_lea.vmem %s0, %s104
      $region20: #{crnn_vgg_forward.16} parent=15 // pred_fallthru
        _
    $region16: #{crnn_vgg_forward.16} parent=5 // pred_fallthru
      _
    %p106 = scmp.le.s32.totalorder 1, %s7
    %p107 = scmp.lt.s32.totalorder %s7, 17
    %p108 = pnand %p106, %p107
    %p109 = pneg %p108
    // Predicated region
    $region21: #{crnn_vgg_forward.16} parent=5 // pred_check
      _
    $region22: #{crnn_vgg_forward.16} parent=5 // pred_check_branch
      %111 = sbr.rel (%p108) target = $region24
    $region23: #{crnn_vgg_forward.16} parent=5 // pred_region
      %s112 = ssub.s32 %s7, 1
      %p113 = scmp.lt.s32.totalorder %s16, 1
      %s114 = scalar_select %p113, %s16, 1
      %p115 = scmp.lt.s32.totalorder %s17, 7
      %s116 = scalar_select %p115, %s17, 7
      %s117 = smul.addr %s116, 2
      %s118 = smul.addr %s114, 16
      %s119 = sadd.s32 %s117, %s118
      %s120 = smul.addr %s119, 4
      %s121 = scalar_lea.vmem %s0, %s120
      %p122 = pneg %p47
      %p123 = pneg %p44
      %p124 = pneg %p75
      %p125 = pneg %p72
      %p126 = scmp.lt.s32.totalorder %s16, 1
      %s127 = scalar_select %p126, %s16, 1
      %p128 = scmp.lt.s32.totalorder %s17, 7
      %s129 = scalar_select %p128, %s17, 7
      %s130 = smul.addr %s127, 8
      %s131 = sadd.s32 %s129, %s130
      %s132 = smul.addr %s131, 4
      %s133 = scalar_lea.vmem %s1, %s132
      %p134 = scmp.lt.s32.totalorder %s16, 1
      %s135 = scalar_select %p134, %s16, 1
      %p136 = scmp.lt.s32.totalorder %s17, 7
      %s137 = scalar_select %p136, %s17, 7
      %s138 = smul.addr %s137, 2
      %s139 = smul.addr %s135, 16
      %s140 = sadd.s32 %s138, %s139
      %s141 = smul.addr %s140, 4
      %s142 = scalar_lea.vmem %s0, %s141
      %p143 = scmp.lt.s32.totalorder %s16, 1
      %s144 = scalar_select %p143, %s16, 1
      %p145 = scmp.lt.s32.totalorder %s17, 7
      %s146 = scalar_select %p145, %s17, 7
      %s147 = smul.addr %s144, 8
      %s148 = sadd.s32 %s146, %s147
      %s149 = smul.addr %s148, 4
      %s150 = scalar_lea.vmem %s1, %s149
      %v151 = vld [vmem:[%s142] sm:$0xf]
      %v152 = vld [vmem:[%s142 + $0x4] sm:$0xf]
      %v153 = vmax.f32 %v151, %v152
      %155 = vrot.lane.b32.xlu0 %v153, 120
      %v156 = vpop.permute.xlu0 %155
      %v158 = vmax.f32 %v153, %v156
      %vm159 = vcmask 60416
      %160 = vst.msk [vmem:[%s150] sm:$0xf] %vm159, %v158
      %p161 = scmp.lt.s32.totalorder %s16, 1
      %s162 = scalar_select %p161, %s16, 1
      %p163 = scmp.lt.s32.totalorder %s17, 7
      %s164 = scalar_select %p163, %s17, 7
      %s165 = smul.addr %s162, 8
      %s166 = sadd.s32 %s164, %s165
      %s167 = smul.addr %s166, 4
      %s168 = scalar_lea.vmem %s1, %s167
      // Predicated region
      $region25: #{crnn_vgg_forward.16} parent=23 // pred_check
        %p169 = pneg %p72
      $region26: #{crnn_vgg_forward.16} parent=23 // pred_check_branch
        %171 = sbr.rel (%p169) target = $region28
      $region27: #{crnn_vgg_forward.16} parent=23 // pred_region
        _
      $region28: #{crnn_vgg_forward.16} parent=23 // pred_fallthru
        _
    $region24: #{crnn_vgg_forward.16} parent=5 // pred_fallthru
      _
    %p172 = scmp.le.s32.totalorder 2, %s7
    // Predicated region
    $region29: #{crnn_vgg_forward.16} parent=5 // pred_check
      %p173 = pneg %p172
    $region30: #{crnn_vgg_forward.16} parent=5 // pred_check_branch
      %175 = sbr.rel (%p173) target = $region32
    $region31: #{crnn_vgg_forward.16} parent=5 // pred_region
      %s176 = ssub.s32 %s7, 2
      // Predicated region
      $region33: #{crnn_vgg_forward.16} parent=31 // pred_check
        %p177 = pneg %p78
      $region34: #{crnn_vgg_forward.16} parent=31 // pred_check_branch
        %179 = sbr.rel (%p177) target = $region36
      $region35: #{crnn_vgg_forward.16} parent=31 // pred_region
        %p180 = scmp.lt.s32.totalorder %s18, 1
        %s181 = scalar_select %p180, %s18, 1
        %p182 = scmp.lt.s32.totalorder %s19, 7
        %s183 = scalar_select %p182, %s19, 7
        %s184 = smul.addr %s181, 8
        %s185 = sadd.s32 %s183, %s184
        %s186 = smul.addr %s185, 4
        %s187 = scalar_lea.vmem %s1, %s186
      $region36: #{crnn_vgg_forward.16} parent=31 // pred_fallthru
        _
    $region32: #{crnn_vgg_forward.16} parent=5 // pred_fallthru
      _
  $region6: #{crnn_vgg_forward.16} parent=0 // loop_footer
    %s11 = sadd.s32 1, %s7
  $region7: #{crnn_vgg_forward.16} parent=0 // loop_footer_branch
    %6 = sbr.rel target = $region3
  $region8: #{crnn_vgg_forward.16} parent=0 // loop_exit
    _

// kernel: crnn_vgg_forward.15
$region0: #{crnn_vgg_forward.15}
  #allocation0 [shape = 'u32[]', space=smem, size = 0x4, offset = 0x4, fixed_abs, tag = 'smem constant byte address 0x4 - core index']
  #allocation1 [shape = 'u32[72,128]{1,0:T(1,128)}', space=vmem, size = 0x9000, scoped, tag = 'internal scratch']
  %s0 = inlined_call_operand.vmem [shape: bf16[3,3,4,8], index: 0, kind: input, shape index: {}]
  %s1 = inlined_call_operand.vmem [shape: f32[1,8], index: 1, kind: input, shape index: {}]
  %s2 = inlined_call_operand.vmem [shape: f32[1,8], index: 2, kind: input, shape index: {}]
  %s3 = inlined_call_operand.vmem [shape: bf16[2,18,10,4], index: 3, kind: input, shape index: {}, may-alias: {3,4,5}]
  %s4 = inlined_call_operand.vmem [shape: bf16[2,18,10,4], index: 4, kind: input, shape index: {}, may-alias: {3,4,5}]
  %s5 = inlined_call_operand.vmem [shape: bf16[2,18,10,4], index: 5, kind: input, shape index: {}, may-alias: {3,4,5}]
  %s6 = inlined_call_operand.vmem [shape: f32[2,16,8,8], index: 6, kind: output, shape index: {}]
  %s7 = sld [smem:[#allocation0]]
  $region57: #{crnn_vgg_forward.15} parent=0
    _
  %s9 = ssub.s32 1, %s7
  %s10 = scalar_select 0, %s9, %s7
  loop: start=0, step=1, limit=34
  $region2: #{crnn_vgg_forward.15} parent=0 // loop_pre_header
    _
  $region3: #{crnn_vgg_forward.15} parent=0 // loop_header
    %s12 = sphi 0, %s16
    %p13 = scmp.ge.s32.totalorder %s12, 34
    %s19 = sphi 0, %s31
    %s20 = sphi 0, %s27
    %s21 = sphi 0, %s19
    %s22 = sphi 0, %s20
    %s23 = sphi 0, %s21
    %s24 = sphi 0, %s22
    %s32 = sphi 0, %s32
    %s34 = sphi 0, %s32
    %s35 = sphi 0, %s34
    %s49 = sphi 0, %s35
    %s53 = sphi 0, %s53
    %s55 = sphi 0, %s53
    %s56 = sphi 0, %s55
    %s70 = sphi 0, %s56
    %s74 = sphi 0, %s74
    %s76 = sphi 0, %s74
    %s77 = sphi 0, %s76
    %s91 = sphi 0, %s77
    %s99 = sphi 0, %s101
    %s102 = sphi 0, %s99
    %s103 = sphi 0, %s102
    %s119 = sphi 0, %s103
    %s129 = sphi 0, %s131
    %s132 = sphi 0, %s129
    %s133 = sphi 0, %s132
    %s149 = sphi 0, %s133
    %s159 = sphi 0, %s161
    %s162 = sphi 0, %s159
    %s163 = sphi 0, %s162
    %s179 = sphi 0, %s163
    %s187 = sphi 0, %s189
    %s190 = sphi 0, %s187
    %s191 = sphi 0, %s190
    %s207 = sphi 0, %s191
  $region4: #{crnn_vgg_forward.15} parent=0 // loop_header_branch
    %15 = sbr.rel (%p13) target = $region8
  $region5: #{crnn_vgg_forward.15} parent=0 // loop_body
    %s17 = ssub.s32 %s12, 1
    %s18 = ssub.s32 %s12, 2
    %s25 = sadd.s32 1, %s20
    %p26 = scmp.ge.s32.totalorder %s25, 16
    %s27 = scalar_select %p26, 0, %s25
    %s28 = sadd.s32 1, %s19
    %s29 = scalar_select %p26, %s28, %s19
    %p30 = scmp.ge.s32.totalorder %s29, 2
    %s31 = scalar_select %p30, 0, %s29
    %s33 = sadd.s32 %s32, 1
    %p36 = scmp.eq.s32.totalorder %s12, 31
    %p37 = scmp.ne.s32.totalorder %s32, %s34
    %p38 = scmp.eq.s32.totalorder %s12, 0
    %p39 = por %p37, %p38
    %p40 = scmp.ne.s32.totalorder %s32, %s34
    %p41 = scmp.eq.s32.totalorder %s17, 31
    %p42 = por %p40, %p41
    %p43 = scmp.ne.s32.totalorder %s34, %s35
    %p44 = scmp.eq.s32.totalorder %s17, 0
    %p45 = por %p43, %p44
    %p46 = scmp.ne.s32.totalorder %s34, %s35
    %p47 = scmp.eq.s32.totalorder %s18, 31
    %p48 = por %p46, %p47
    %p50 = scmp.ne.s32.totalorder %s35, %s49
    %p51 = scmp.eq.s32.totalorder %s18, 0
    %p52 = por %p50, %p51
    %s54 = sadd.s32 %s53, 1
    %p57 = scmp.eq.s32.totalorder %s12, 31
    %p58 = scmp.ne.s32.totalorder %s53, %s55
    %p59 = scmp.eq.s32.totalorder %s12, 0
    %p60 = por %p58, %p59
    %p61 = scmp.ne.s32.totalorder %s53, %s55
    %p62 = scmp.eq.s32.totalorder %s17, 31
    %p63 = por %p61, %p62
    %p64 = scmp.ne.s32.totalorder %s55, %s56
    %p65 = scmp.eq.s32.totalorder %s17, 0
    %p66 = por %p64, %p65
    %p67 = scmp.ne.s32.totalorder %s55, %s56
    %p68 = scmp.eq.s32.totalorder %s18, 31
    %p69 = por %p67, %p68
    %p71 = scmp.ne.s32.totalorder %s56, %s70
    %p72 = scmp.eq.s32.totalorder %s18, 0
    %p73 = por %p71, %p72
    %s75 = sadd.s32 %s74, 1
    %p78 = scmp.eq.s32.totalorder %s12, 31
    %p79 = scmp.ne.s32.totalorder %s74, %s76
    %p80 = scmp.eq.s32.totalorder %s12, 0
    %p81 = por %p79, %p80
    %p82 = scmp.ne.s32.totalorder %s74, %s76
    %p83 = scmp.eq.s32.totalorder %s17, 31
    %p84 = por %p82, %p83
    %p85 = scmp.ne.s32.totalorder %s76, %s77
    %p86 = scmp.eq.s32.totalorder %s17, 0
    %p87 = por %p85, %p86
    %p88 = scmp.ne.s32.totalorder %s76, %s77
    %p89 = scmp.eq.s32.totalorder %s18, 31
    %p90 = por %p88, %p89
    %p92 = scmp.ne.s32.totalorder %s77, %s91
    %p93 = scmp.eq.s32.totalorder %s18, 0
    %p94 = por %p92, %p93
    %s95 = ssub.s32 %s19, %s31
    %s96 = ssub.s32 %s20, %s27
    %s97 = sor.u32 %s95, %s96
    %p98 = scmp.eq.s32.totalorder %s97, 0
    %s100 = sadd.s32 %s99, 1
    %s101 = scalar_select %p98, %s99, %s100
    %p104 = pneg %p98
    %p105 = scmp.eq.s32.totalorder %s12, 31
    %p106 = por %p104, %p105
    %p107 = scmp.ne.s32.totalorder %s99, %s102
    %p108 = scmp.eq.s32.totalorder %s12, 0
    %p109 = por %p107, %p108
    %p110 = scmp.ne.s32.totalorder %s99, %s102
    %p111 = scmp.eq.s32.totalorder %s17, 31
    %p112 = por %p110, %p111
    %p113 = scmp.ne.s32.totalorder %s102, %s103
    %p114 = scmp.eq.s32.totalorder %s17, 0
    %p115 = por %p113, %p114
    %p116 = scmp.ne.s32.totalorder %s102, %s103
    %p117 = scmp.eq.s32.totalorder %s18, 31
    %p118 = por %p116, %p117
    %p120 = scmp.ne.s32.totalorder %s103, %s119
    %p121 = scmp.eq.s32.totalorder %s18, 0
    %p122 = por %p120, %p121
    %s123 = sadd.s32 %s20, 1
    %s124 = sadd.s32 %s27, 1
    %s125 = ssub.s32 %s19, %s31
    %s126 = ssub.s32 %s123, %s124
    %s127 = sor.u32 %s125, %s126
    %p128 = scmp.eq.s32.totalorder %s127, 0
    %s130 = sadd.s32 %s129, 1
    %s131 = scalar_select %p128, %s129, %s130
    %p134 = pneg %p128
    %p135 = scmp.eq.s32.totalorder %s12, 31
    %p136 = por %p134, %p135
    %p137 = scmp.ne.s32.totalorder %s129, %s132
    %p138 = scmp.eq.s32.totalorder %s12, 0
    %p139 = por %p137, %p138
    %p140 = scmp.ne.s32.totalorder %s129, %s132
    %p141 = scmp.eq.s32.totalorder %s17, 31
    %p142 = por %p140, %p141
    %p143 = scmp.ne.s32.totalorder %s132, %s133
    %p144 = scmp.eq.s32.totalorder %s17, 0
    %p145 = por %p143, %p144
    %p146 = scmp.ne.s32.totalorder %s132, %s133
    %p147 = scmp.eq.s32.totalorder %s18, 31
    %p148 = por %p146, %p147
    %p150 = scmp.ne.s32.totalorder %s133, %s149
    %p151 = scmp.eq.s32.totalorder %s18, 0
    %p152 = por %p150, %p151
    %s153 = sadd.s32 %s20, 2
    %s154 = sadd.s32 %s27, 2
    %s155 = ssub.s32 %s19, %s31
    %s156 = ssub.s32 %s153, %s154
    %s157 = sor.u32 %s155, %s156
    %p158 = scmp.eq.s32.totalorder %s157, 0
    %s160 = sadd.s32 %s159, 1
    %s161 = scalar_select %p158, %s159, %s160
    %p164 = pneg %p158
    %p165 = scmp.eq.s32.totalorder %s12, 31
    %p166 = por %p164, %p165
    %p167 = scmp.ne.s32.totalorder %s159, %s162
    %p168 = scmp.eq.s32.totalorder %s12, 0
    %p169 = por %p167, %p168
    %p170 = scmp.ne.s32.totalorder %s159, %s162
    %p171 = scmp.eq.s32.totalorder %s17, 31
    %p172 = por %p170, %p171
    %p173 = scmp.ne.s32.totalorder %s162, %s163
    %p174 = scmp.eq.s32.totalorder %s17, 0
    %p175 = por %p173, %p174
    %p176 = scmp.ne.s32.totalorder %s162, %s163
    %p177 = scmp.eq.s32.totalorder %s18, 31
    %p178 = por %p176, %p177
    %p180 = scmp.ne.s32.totalorder %s163, %s179
    %p181 = scmp.eq.s32.totalorder %s18, 0
    %p182 = por %p180, %p181
    %s183 = ssub.s32 %s19, %s31
    %s184 = ssub.s32 %s20, %s27
    %s185 = sor.u32 %s183, %s184
    %p186 = scmp.eq.s32.totalorder %s185, 0
    %s188 = sadd.s32 %s187, 1
    %s189 = scalar_select %p186, %s187, %s188
    %p192 = pneg %p186
    %p193 = scmp.eq.s32.totalorder %s12, 31
    %p194 = por %p192, %p193
    %p195 = scmp.ne.s32.totalorder %s187, %s190
    %p196 = scmp.eq.s32.totalorder %s12, 0
    %p197 = por %p195, %p196
    %p198 = scmp.ne.s32.totalorder %s187, %s190
    %p199 = scmp.eq.s32.totalorder %s17, 31
    %p200 = por %p198, %p199
    %p201 = scmp.ne.s32.totalorder %s190, %s191
    %p202 = scmp.eq.s32.totalorder %s17, 0
    %p203 = por %p201, %p202
    %p204 = scmp.ne.s32.totalorder %s190, %s191
    %p205 = scmp.eq.s32.totalorder %s18, 31
    %p206 = por %p204, %p205
    %p208 = scmp.ne.s32.totalorder %s191, %s207
    %p209 = scmp.eq.s32.totalorder %s18, 0
    %p210 = por %p208, %p209
    %p211 = scmp.le.s32.totalorder 1, %s12
    %p212 = scmp.lt.s32.totalorder %s12, 33
    %p213 = pnand %p211, %p212
    %p214 = pneg %p213
    // Predicated region
    $region9: #{crnn_vgg_forward.15} parent=5 // pred_check
      _
    $region10: #{crnn_vgg_forward.15} parent=5 // pred_check_branch
      %216 = sbr.rel (%p213) target = $region12
    $region11: #{crnn_vgg_forward.15} parent=5 // pred_region
      %s217 = ssub.s32 %s12, 1
      // Predicated region
      $region13: #{crnn_vgg_forward.15} parent=11 // pred_check
        %p218 = pneg %p45
      $region14: #{crnn_vgg_forward.15} parent=11 // pred_check_branch
        %220 = sbr.rel (%p218) target = $region16
      $region15: #{crnn_vgg_forward.15} parent=11 // pred_region
        _
      $region16: #{crnn_vgg_forward.15} parent=11 // pred_fallthru
        _
      // Predicated region
      $region17: #{crnn_vgg_forward.15} parent=11 // pred_check
        %p221 = pneg %p66
      $region18: #{crnn_vgg_forward.15} parent=11 // pred_check_branch
        %223 = sbr.rel (%p221) target = $region20
      $region19: #{crnn_vgg_forward.15} parent=11 // pred_region
        _
      $region20: #{crnn_vgg_forward.15} parent=11 // pred_fallthru
        _
      // Predicated region
      $region21: #{crnn_vgg_forward.15} parent=11 // pred_check
        %p224 = pneg %p87
      $region22: #{crnn_vgg_forward.15} parent=11 // pred_check_branch
        %226 = sbr.rel (%p224) target = $region24
      $region23: #{crnn_vgg_forward.15} parent=11 // pred_region
        _
      $region24: #{crnn_vgg_forward.15} parent=11 // pred_fallthru
        _
    $region12: #{crnn_vgg_forward.15} parent=5 // pred_fallthru
      _
    %p227 = scmp.lt.s32.totalorder %s12, 32
    // Predicated region
    $region25: #{crnn_vgg_forward.15} parent=5 // pred_check
      %p228 = pneg %p227
    $region26: #{crnn_vgg_forward.15} parent=5 // pred_check_branch
      %230 = sbr.rel (%p228) target = $region28
    $region27: #{crnn_vgg_forward.15} parent=5 // pred_region
      // Predicated region
      $region29: #{crnn_vgg_forward.15} parent=27 // pred_check
        %p231 = pneg %p109
      $region30: #{crnn_vgg_forward.15} parent=27 // pred_check_branch
        %233 = sbr.rel (%p231) target = $region32
      $region31: #{crnn_vgg_forward.15} parent=27 // pred_region
        %p234 = scmp.lt.s32.totalorder %s19, 1
        %s235 = scalar_select %p234, %s19, 1
        %p236 = scmp.lt.s32.totalorder %s20, 17
        %s237 = scalar_select %p236, %s20, 17
        %s238 = smul.addr %s237, 2
        %s239 = smul.addr %s235, 36
        %s240 = sadd.s32 %s238, %s239
        %s241 = smul.addr %s240, 4
        %s242 = scalar_lea.vmem %s3, %s241
      $region32: #{crnn_vgg_forward.15} parent=27 // pred_fallthru
        _
      // Predicated region
      $region33: #{crnn_vgg_forward.15} parent=27 // pred_check
        %p243 = pneg %p139
      $region34: #{crnn_vgg_forward.15} parent=27 // pred_check_branch
        %245 = sbr.rel (%p243) target = $region36
      $region35: #{crnn_vgg_forward.15} parent=27 // pred_region
        %s246 = sadd.s32 %s20, 1
        %p247 = scmp.lt.s32.totalorder %s19, 1
        %s248 = scalar_select %p247, %s19, 1
        %p249 = scmp.lt.s32.totalorder %s246, 17
        %s250 = scalar_select %p249, %s246, 17
        %s251 = smul.addr %s250, 2
        %s252 = smul.addr %s248, 36
        %s253 = sadd.s32 %s251, %s252
        %s254 = smul.addr %s253, 4
        %s255 = scalar_lea.vmem %s4, %s254
        %s256 = sadd.s32 %s20, 1
      $region36: #{crnn_vgg_forward.15} parent=27 // pred_fallthru
        _
      // Predicated region
      $region37: #{crnn_vgg_forward.15} parent=27 // pred_check
        %p257 = pneg %p169
      $region38: #{crnn_vgg_forward.15} parent=27 // pred_check_branch
        %259 = sbr.rel (%p257) target = $region40
      $region39: #{crnn_vgg_forward.15} parent=27 // pred_region
        %s260 = sadd.s32 %s20, 2
        %p261 = scmp.lt.s32.totalorder %s19, 1
        %s262 = scalar_select %p261, %s19, 1
        %p263 = scmp.lt.s32.totalorder %s260, 17
        %s264 = scalar_select %p263, %s260, 17
        %s265 = smul.addr %s264, 2
        %s266 = smul.addr %s262, 36
        %s267 = sadd.s32 %s265, %s266
        %s268 = smul.addr %s267, 4
        %s269 = scalar_lea.vmem %s5, %s268
        %s270 = sadd.s32 %s20, 2
      $region40: #{crnn_vgg_forward.15} parent=27 // pred_fallthru
        _
    $region28: #{crnn_vgg_forward.15} parent=5 // pred_fallthru
      _
    %p271 = scmp.le.s32.totalorder 1, %s12
    %p272 = scmp.lt.s32.totalorder %s12, 33
    %p273 = pnand %p271, %p272
    %p274 = pneg %p273
    // Predicated region
    $region41: #{crnn_vgg_forward.15} parent=5 // pred_check
      _
    $region42: #{crnn_vgg_forward.15} parent=5 // pred_check_branch
      %276 = sbr.rel (%p273) target = $region44
    $region43: #{crnn_vgg_forward.15} parent=5 // pred_region
      %s277 = ssub.s32 %s12, 1
      %p278 = pneg %p45
      %p279 = pneg %p42
      %p280 = pneg %p66
      %p281 = pneg %p63
      %p282 = pneg %p87
      %p283 = pneg %p84
      %p284 = scmp.lt.s32.totalorder %s21, 1
      %s285 = scalar_select %p284, %s21, 1
      %p286 = scmp.lt.s32.totalorder %s22, 17
      %s287 = scalar_select %p286, %s22, 17
      %s288 = smul.addr %s287, 2
      %s289 = smul.addr %s285, 36
      %s290 = sadd.s32 %s288, %s289
      %s291 = smul.addr %s290, 4
      %s292 = scalar_lea.vmem %s3, %s291
      %p293 = pneg %p115
      %p294 = pneg %p112
      %s295 = sadd.s32 %s22, 1
      %p296 = scmp.lt.s32.totalorder %s21, 1
      %s297 = scalar_select %p296, %s21, 1
      %p298 = scmp.lt.s32.totalorder %s295, 17
      %s299 = scalar_select %p298, %s295, 17
      %s300 = smul.addr %s299, 2
      %s301 = smul.addr %s297, 36
      %s302 = sadd.s32 %s300, %s301
      %s303 = smul.addr %s302, 4
      %s304 = scalar_lea.vmem %s4, %s303
      %p305 = pneg %p145
      %p306 = pneg %p142
      %s307 = sadd.s32 %s22, 2
      %p308 = scmp.lt.s32.totalorder %s21, 1
      %s309 = scalar_select %p308, %s21, 1
      %p310 = scmp.lt.s32.totalorder %s307, 17
      %s311 = scalar_select %p310, %s307, 17
      %s312 = smul.addr %s311, 2
      %s313 = smul.addr %s309, 36
      %s314 = sadd.s32 %s312, %s313
      %s315 = smul.addr %s314, 4
      %s316 = scalar_lea.vmem %s5, %s315
      %p317 = pneg %p175
      %p318 = pneg %p172
      %p319 = pneg %p203
      %p320 = pneg %p200
      %p321 = scmp.lt.s32.totalorder %s21, 1
      %s322 = scalar_select %p321, %s21, 1
      %p323 = scmp.lt.s32.totalorder %s22, 15
      %s324 = scalar_select %p323, %s22, 15
      %s325 = smul.addr %s322, 16
      %s326 = sadd.s32 %s324, %s325
      %s327 = smul.addr %s326, 8
      %s328 = scalar_lea.vmem %s6, %s327
      %p329 = scmp.lt.s32.totalorder %s21, 1
      %s330 = scalar_select %p329, %s21, 1
      %p331 = scmp.lt.s32.totalorder %s22, 17
      %s332 = scalar_select %p331, %s22, 17
      %s333 = smul.addr %s332, 2
      %s334 = smul.addr %s330, 36
      %s335 = sadd.s32 %s333, %s334
      %s336 = smul.addr %s335, 4
      %s337 = scalar_lea.vmem %s3, %s336
      %s338 = sadd.s32 %s22, 1
      %p339 = scmp.lt.s32.totalorder %s21, 1
      %s340 = scalar_select %p339, %s21, 1
      %p341 = scmp.lt.s32.totalorder %s338, 17
      %s342 = scalar_select %p341, %s338, 17
      %s343 = smul.addr %s342, 2
      %s344 = smul.addr %s340, 36
      %s345 = sadd.s32 %s343, %s344
      %s346 = smul.addr %s345, 4
      %s347 = scalar_lea.vmem %s4, %s346
      %s348 = sadd.s32 %s22, 1
      %s349 = sadd.s32 %s22, 2
      %p350 = scmp.lt.s32.totalorder %s21, 1
      %s351 = scalar_select %p350, %s21, 1
      %p352 = scmp.lt.s32.totalorder %s349, 17
      %s353 = scalar_select %p352, %s349, 17
      %s354 = smul.addr %s353, 2
      %s355 = smul.addr %s351, 36
      %s356 = sadd.s32 %s354, %s355
      %s357 = smul.addr %s356, 4
      %s358 = scalar_lea.vmem %s5, %s357
      %s359 = sadd.s32 %s22, 2
      %p360 = scmp.lt.s32.totalorder %s21, 1
      %s361 = scalar_select %p360, %s21, 1
      %p362 = scmp.lt.s32.totalorder %s22, 15
      %s363 = scalar_select %p362, %s22, 15
      %s364 = smul.addr %s361, 16
      %s365 = sadd.s32 %s363, %s364
      %s366 = smul.addr %s365, 8
      %s367 = scalar_lea.vmem %s6, %s366
      %v369 = vld [vmem:[%s337] sm:$0xf]
      %v370 = vld [vmem:[%s337 + $0x4] sm:$0x1]
      %v371 = vld [vmem:[%s0] sm:$0x3]
      %s372 = scalar_lea.vmem %s0, 2
      %v373 = vld [vmem:[%s372] sm:$0x3]
      %v376 = vunpack.c.l.b16 %v369
      %v377 = vunpack.c.l.b16 %v370
      %v378 = vpack.c.b16 %v377, %v376
      %v380 = vshrl.u32 %v378, 16
      %v382 = vshll.u32 %v378, 16
      %v384 = vrot.slane %v382, 1
      %v385 = vor.u32 %v380, %v384
      %vm386 = vcmask 31744
      %v388 = vsel %vm386, %v385, 0
      %vm390 = vcmask 1041408
      %v392 = vsel %vm390, %v373, 0
      %394 = vmatpush.bf16.msra.mxu0 0
      %395 = vmatpush.bf16.msra.mxu0 0
      %396 = vmatpush.bf16.msra.mxu0 0
      %397 = vmatpush.bf16.msra.mxu0 0
      %398 = vmatpush.bf16.msra.mxu0 0
      %399 = vmatpush.bf16.msra.mxu0 0
      %400 = vmatpush.bf16.msra.mxu0 0
      %401 = vmatpush.bf16.msra.mxu0 %v392
      %402 = vmatmul.bf16.gmra.mxu0 %v388
      %v403 = vpop.f32.mrf.mxu0
      %v404 = vadd.f32 0.0, %v403
      %v405 = vpop.f32.mrf.mxu0
      %406 = vdwg.mxu0
      %v408 = vsel %vm386, %v369, 0
      %v411 = vsel %vm390, %v371, 0
      %413 = vmatpush.bf16.msra.mxu0 0
      %414 = vmatpush.bf16.msra.mxu0 0
      %415 = vmatpush.bf16.msra.mxu0 0
      %416 = vmatpush.bf16.msra.mxu0 0
      %417 = vmatpush.bf16.msra.mxu0 0
      %418 = vmatpush.bf16.msra.mxu0 0
      %419 = vmatpush.bf16.msra.mxu0 0
      %420 = vmatpush.bf16.msra.mxu0 %v411
      %421 = vmatmul.bf16.gmra.mxu0 %v408
      %v422 = vpop.f32.mrf.mxu0
      %v423 = vadd.f32 %v404, %v422
      %v424 = vpop.f32.mrf.mxu0
      %425 = vdwg.mxu0
      %s426 = scalar_lea.vmem %s0, 4
      %v427 = vld [vmem:[%s426] sm:$0x3]
      %v428 = vrot.slane %v378, 1
      %v430 = vsel %vm386, %v428, 0
      %v433 = vsel %vm390, %v427, 0
      %435 = vmatpush.bf16.msra.mxu0 0
      %436 = vmatpush.bf16.msra.mxu0 0
      %437 = vmatpush.bf16.msra.mxu0 0
      %438 = vmatpush.bf16.msra.mxu0 0
      %439 = vmatpush.bf16.msra.mxu0 0
      %440 = vmatpush.bf16.msra.mxu0 0
      %441 = vmatpush.bf16.msra.mxu0 0
      %442 = vmatpush.bf16.msra.mxu0 %v433
      %443 = vmatmul.bf16.gmra.mxu0 %v430
      %v444 = vpop.f32.mrf.mxu0
      %v445 = vadd.f32 0.0, %v444
      %v446 = vpop.f32.mrf.mxu0
      %447 = vdwg.mxu0
      %v448 = vadd.f32 %v423, %v445
      %v449 = vld [vmem:[%s347] sm:$0xf]
      %v450 = vld [vmem:[%s347 + $0x4] sm:$0x1]
      %s451 = scalar_lea.vmem %s0, 6
      %v452 = vld [vmem:[%s451] sm:$0x3]
      %v454 = vsel %vm386, %v449, 0
      %v457 = vsel %vm390, %v452, 0
      %459 = vmatpush.bf16.msra.mxu0 0
      %460 = vmatpush.bf16.msra.mxu0 0
      %461 = vmatpush.bf16.msra.mxu0 0
      %462 = vmatpush.bf16.msra.mxu0 0
      %463 = vmatpush.bf16.msra.mxu0 0
      %464 = vmatpush.bf16.msra.mxu0 0
      %465 = vmatpush.bf16.msra.mxu0 0
      %466 = vmatpush.bf16.msra.mxu0 %v457
      %467 = vmatmul.bf16.gmra.mxu0 %v454
      %v468 = vpop.f32.mrf.mxu0
      %v469 = vadd.f32 0.0, %v468
      %v470 = vpop.f32.mrf.mxu0
      %471 = vdwg.mxu0
      %v472 = vadd.f32 %v448, %v469
      %s473 = scalar_lea.vmem %s0, 8
      %v474 = vld [vmem:[%s473] sm:$0x3]
      %v477 = vunpack.c.l.b16 %v449
      %v478 = vunpack.c.l.b16 %v450
      %v479 = vpack.c.b16 %v478, %v477
      %v481 = vshrl.u32 %v479, 16
      %v483 = vshll.u32 %v479, 16
      %v485 = vrot.slane %v483, 1
      %v486 = vor.u32 %v481, %v485
      %v488 = vsel %vm386, %v486, 0
      %v491 = vsel %vm390, %v474, 0
      %493 = vmatpush.bf16.msra.mxu0 0
      %494 = vmatpush.bf16.msra.mxu0 0
      %495 = vmatpush.bf16.msra.mxu0 0
      %496 = vmatpush.bf16.msra.mxu0 0
      %497 = vmatpush.bf16.msra.mxu0 0
      %498 = vmatpush.bf16.msra.mxu0 0
      %499 = vmatpush.bf16.msra.mxu0 0
      %500 = vmatpush.bf16.msra.mxu0 %v491
      %501 = vmatmul.bf16.gmra.mxu0 %v488
      %v502 = vpop.f32.mrf.mxu0
      %v503 = vadd.f32 0.0, %v502
      %v504 = vpop.f32.mrf.mxu0
      %505 = vdwg.mxu0
      %v506 = vadd.f32 %v472, %v503
      %s507 = scalar_lea.vmem %s0, 10
      %v508 = vld [vmem:[%s507] sm:$0x3]
      %v509 = vrot.slane %v479, 1
      %v511 = vsel %vm386, %v509, 0
      %v514 = vsel %vm390, %v508, 0
      %516 = vmatpush.bf16.msra.mxu0 0
      %517 = vmatpush.bf16.msra.mxu0 0
      %518 = vmatpush.bf16.msra.mxu0 0
      %519 = vmatpush.bf16.msra.mxu0 0
      %520 = vmatpush.bf16.msra.mxu0 0
      %521 = vmatpush.bf16.msra.mxu0 0
      %522 = vmatpush.bf16.msra.mxu0 0
      %523 = vmatpush.bf16.msra.mxu0 %v514
      %524 = vmatmul.bf16.gmra.mxu0 %v511
      %v525 = vpop.f32.mrf.mxu0
      %v526 = vadd.f32 0.0, %v525
      %v527 = vpop.f32.mrf.mxu0
      %528 = vdwg.mxu0
      %v529 = vadd.f32 %v506, %v526
      %v530 = vld [vmem:[%s358] sm:$0xf]
      %v531 = vld [vmem:[%s358 + $0x4] sm:$0x1]
      %s532 = scalar_lea.vmem %s0, 12
      %v533 = vld [vmem:[%s532] sm:$0x3]
      %v535 = vsel %vm386, %v530, 0
      %v538 = vsel %vm390, %v533, 0
      %540 = vmatpush.bf16.msra.mxu0 0
      %541 = vmatpush.bf16.msra.mxu0 0
      %542 = vmatpush.bf16.msra.mxu0 0
      %543 = vmatpush.bf16.msra.mxu0 0
      %544 = vmatpush.bf16.msra.mxu0 0
      %545 = vmatpush.bf16.msra.mxu0 0
      %546 = vmatpush.bf16.msra.mxu0 0
      %547 = vmatpush.bf16.msra.mxu0 %v538
      %548 = vmatmul.bf16.gmra.mxu0 %v535
      %v549 = vpop.f32.mrf.mxu0
      %v550 = vadd.f32 0.0, %v549
      %v551 = vpop.f32.mrf.mxu0
      %552 = vdwg.mxu0
      %v553 = vadd.f32 %v529, %v550
      %s554 = scalar_lea.vmem %s0, 14
      %v555 = vld [vmem:[%s554] sm:$0x3]
      %v558 = vunpack.c.l.b16 %v530
      %v559 = vunpack.c.l.b16 %v531
      %v560 = vpack.c.b16 %v559, %v558
      %v562 = vshrl.u32 %v560, 16
      %v564 = vshll.u32 %v560, 16
      %v566 = vrot.slane %v564, 1
      %v567 = vor.u32 %v562, %v566
      %v569 = vsel %vm386, %v567, 0
      %v572 = vsel %vm390, %v555, 0
      %574 = vmatpush.bf16.msra.mxu0 0
      %575 = vmatpush.bf16.msra.mxu0 0
      %576 = vmatpush.bf16.msra.mxu0 0
      %577 = vmatpush.bf16.msra.mxu0 0
      %578 = vmatpush.bf16.msra.mxu0 0
      %579 = vmatpush.bf16.msra.mxu0 0
      %580 = vmatpush.bf16.msra.mxu0 0
      %581 = vmatpush.bf16.msra.mxu0 %v572
      %582 = vmatmul.bf16.gmra.mxu0 %v569
      %v583 = vpop.f32.mrf.mxu0
      %v584 = vadd.f32 0.0, %v583
      %v585 = vpop.f32.mrf.mxu0
      %586 = vdwg.mxu0
      %v587 = vadd.f32 %v553, %v584
      %s588 = scalar_lea.vmem %s0, 16
      %v589 = vld [vmem:[%s588] sm:$0x3]
      %v590 = vrot.slane %v560, 1
      %v592 = vsel %vm386, %v590, 0
      %v595 = vsel %vm390, %v589, 0
      %597 = vmatpush.bf16.msra.mxu0 0
      %598 = vmatpush.bf16.msra.mxu0 0
      %599 = vmatpush.bf16.msra.mxu0 0
      %600 = vmatpush.bf16.msra.mxu0 0
      %601 = vmatpush.bf16.msra.mxu0 0
      %602 = vmatpush.bf16.msra.mxu0 0
      %603 = vmatpush.bf16.msra.mxu0 0
      %604 = vmatpush.bf16.msra.mxu0 %v595
      %605 = vmatmul.bf16.gmra.mxu0 %v592
      %v606 = vpop.f32.mrf.mxu0
      %v607 = vadd.f32 0.0, %v606
      %v608 = vpop.f32.mrf.mxu0
      %609 = vdwg.mxu0
      %v610 = vadd.f32 %v587, %v607
      %v611 = vld [vmem:[%s1] sm:$0x1]
      %v613 = vperm.slane %v611, 0
      %v615 = vmul.f32 %v610, %v613
      %v616 = vld [vmem:[%s2] sm:$0x1]
      %v618 = vperm.slane %v616, 0
      %v620 = vadd.f32 %v615, %v618
      %v621 = vmax.f32 %v620, 0.0
      %vm622 = vcmask 64512
      %623 = vst.msk [vmem:[%s367] sm:$0xff] %vm622, %v621
      %p624 = scmp.lt.s32.totalorder %s21, 1
      %s625 = scalar_select %p624, %s21, 1
      %p626 = scmp.lt.s32.totalorder %s22, 15
      %s627 = scalar_select %p626, %s22, 15
      %s628 = smul.addr %s625, 16
      %s629 = sadd.s32 %s627, %s628
      %s630 = smul.addr %s629, 8
      %s631 = scalar_lea.vmem %s6, %s630
      // Predicated region
      $region45: #{crnn_vgg_forward.15} parent=43 // pred_check
        %p632 = pneg %p200
      $region46: #{crnn_vgg_forward.15} parent=43 // pred_check_branch
        %634 = sbr.rel (%p632) target = $region48
      $region47: #{crnn_vgg_forward.15} parent=43 // pred_region
        _
      $region48: #{crnn_vgg_forward.15} parent=43 // pred_fallthru
        _
    $region44: #{crnn_vgg_forward.15} parent=5 // pred_fallthru
      _
    %p635 = scmp.le.s32.totalorder 2, %s12
    // Predicated region
    $region49: #{crnn_vgg_forward.15} parent=5 // pred_check
      %p636 = pneg %p635
    $region50: #{crnn_vgg_forward.15} parent=5 // pred_check_branch
      %638 = sbr.rel (%p636) target = $region52
    $region51: #{crnn_vgg_forward.15} parent=5 // pred_region
      %s639 = ssub.s32 %s12, 2
      // Predicated region
      $region53: #{crnn_vgg_forward.15} parent=51 // pred_check
        %p640 = pneg %p206
      $region54: #{crnn_vgg_forward.15} parent=51 // pred_check_branch
        %642 = sbr.rel (%p640) target = $region56
      $region55: #{crnn_vgg_forward.15} parent=51 // pred_region
        %p643 = scmp.lt.s32.totalorder %s23, 1
        %s644 = scalar_select %p643, %s23, 1
        %p645 = scmp.lt.s32.totalorder %s24, 15
        %s646 = scalar_select %p645, %s24, 15
        %s647 = smul.addr %s644, 16
        %s648 = sadd.s32 %s646, %s647
        %s649 = smul.addr %s648, 8
        %s650 = scalar_lea.vmem %s6, %s649
      $region56: #{crnn_vgg_forward.15} parent=51 // pred_fallthru
        _
    $region52: #{crnn_vgg_forward.15} parent=5 // pred_fallthru
      _
  $region6: #{crnn_vgg_forward.15} parent=0 // loop_footer
    %s16 = sadd.s32 1, %s12
  $region7: #{crnn_vgg_forward.15} parent=0 // loop_footer_branch
    %11 = sbr.rel target = $region3
  $region8: #{crnn_vgg_forward.15} parent=0 // loop_exit
    _

// kernel: crnn_vgg_forward.17
$region0: #{crnn_vgg_forward.17}
  #allocation0 [shape = 'u32[]', space=smem, size = 0x4, offset = 0x4, fixed_abs, tag = 'smem constant byte address 0x4 - core index']
  #allocation1 [shape = 'u32[72,128]{1,0:T(1,128)}', space=vmem, size = 0x9000, scoped, tag = 'internal scratch']
  %s0 = inlined_call_operand.vmem [shape: bf16[3,3,8,16], index: 0, kind: input, shape index: {}]
  %s1 = inlined_call_operand.vmem [shape: f32[1,16], index: 1, kind: input, shape index: {}]
  %s2 = inlined_call_operand.vmem [shape: f32[1,16], index: 2, kind: input, shape index: {}]
  %s3 = inlined_call_operand.vmem [shape: bf16[2,10,6,8], index: 3, kind: input, shape index: {}, may-alias: {3,4,5}]
  %s4 = inlined_call_operand.vmem [shape: bf16[2,10,6,8], index: 4, kind: input, shape index: {}, may-alias: {3,4,5}]
  %s5 = inlined_call_operand.vmem [shape: bf16[2,10,6,8], index: 5, kind: input, shape index: {}, may-alias: {3,4,5}]
  %s6 = inlined_call_operand.vmem [shape: f32[2,8,4,16], index: 6, kind: output, shape index: {}]
  %s7 = sld [smem:[#allocation0]]
  $region57: #{crnn_vgg_forward.17} parent=0
    _
  %s9 = ssub.s32 1, %s7
  %s10 = scalar_select 0, %s9, %s7
  loop: start=0, step=1, limit=18
  $region2: #{crnn_vgg_forward.17} parent=0 // loop_pre_header
    _
  $region3: #{crnn_vgg_forward.17} parent=0 // loop_header
    %s12 = sphi 0, %s16
    %p13 = scmp.ge.s32.totalorder %s12, 18
    %s19 = sphi 0, %s31
    %s20 = sphi 0, %s27
    %s21 = sphi 0, %s19
    %s22 = sphi 0, %s20
    %s23 = sphi 0, %s21
    %s24 = sphi 0, %s22
    %s32 = sphi 0, %s32
    %s34 = sphi 0, %s32
    %s35 = sphi 0, %s34
    %s49 = sphi 0, %s35
    %s53 = sphi 0, %s53
    %s55 = sphi 0, %s53
    %s56 = sphi 0, %s55
    %s70 = sphi 0, %s56
    %s74 = sphi 0, %s74
    %s76 = sphi 0, %s74
    %s77 = sphi 0, %s76
    %s91 = sphi 0, %s77
    %s99 = sphi 0, %s101
    %s102 = sphi 0, %s99
    %s103 = sphi 0, %s102
    %s119 = sphi 0, %s103
    %s129 = sphi 0, %s131
    %s132 = sphi 0, %s129
    %s133 = sphi 0, %s132
    %s149 = sphi 0, %s133
    %s159 = sphi 0, %s161
    %s162 = sphi 0, %s159
    %s163 = sphi 0, %s162
    %s179 = sphi 0, %s163
    %s187 = sphi 0, %s189
    %s190 = sphi 0, %s187
    %s191 = sphi 0, %s190
    %s207 = sphi 0, %s191
  $region4: #{crnn_vgg_forward.17} parent=0 // loop_header_branch
    %15 = sbr.rel (%p13) target = $region8
  $region5: #{crnn_vgg_forward.17} parent=0 // loop_body
    %s17 = ssub.s32 %s12, 1
    %s18 = ssub.s32 %s12, 2
    %s25 = sadd.s32 1, %s20
    %p26 = scmp.ge.s32.totalorder %s25, 8
    %s27 = scalar_select %p26, 0, %s25
    %s28 = sadd.s32 1, %s19
    %s29 = scalar_select %p26, %s28, %s19
    %p30 = scmp.ge.s32.totalorder %s29, 2
    %s31 = scalar_select %p30, 0, %s29
    %s33 = sadd.s32 %s32, 1
    %p36 = scmp.eq.s32.totalorder %s12, 15
    %p37 = scmp.ne.s32.totalorder %s32, %s34
    %p38 = scmp.eq.s32.totalorder %s12, 0
    %p39 = por %p37, %p38
    %p40 = scmp.ne.s32.totalorder %s32, %s34
    %p41 = scmp.eq.s32.totalorder %s17, 15
    %p42 = por %p40, %p41
    %p43 = scmp.ne.s32.totalorder %s34, %s35
    %p44 = scmp.eq.s32.totalorder %s17, 0
    %p45 = por %p43, %p44
    %p46 = scmp.ne.s32.totalorder %s34, %s35
    %p47 = scmp.eq.s32.totalorder %s18, 15
    %p48 = por %p46, %p47
    %p50 = scmp.ne.s32.totalorder %s35, %s49
    %p51 = scmp.eq.s32.totalorder %s18, 0
    %p52 = por %p50, %p51
    %s54 = sadd.s32 %s53, 1
    %p57 = scmp.eq.s32.totalorder %s12, 15
    %p58 = scmp.ne.s32.totalorder %s53, %s55
    %p59 = scmp.eq.s32.totalorder %s12, 0
    %p60 = por %p58, %p59
    %p61 = scmp.ne.s32.totalorder %s53, %s55
    %p62 = scmp.eq.s32.totalorder %s17, 15
    %p63 = por %p61, %p62
    %p64 = scmp.ne.s32.totalorder %s55, %s56
    %p65 = scmp.eq.s32.totalorder %s17, 0
    %p66 = por %p64, %p65
    %p67 = scmp.ne.s32.totalorder %s55, %s56
    %p68 = scmp.eq.s32.totalorder %s18, 15
    %p69 = por %p67, %p68
    %p71 = scmp.ne.s32.totalorder %s56, %s70
    %p72 = scmp.eq.s32.totalorder %s18, 0
    %p73 = por %p71, %p72
    %s75 = sadd.s32 %s74, 1
    %p78 = scmp.eq.s32.totalorder %s12, 15
    %p79 = scmp.ne.s32.totalorder %s74, %s76
    %p80 = scmp.eq.s32.totalorder %s12, 0
    %p81 = por %p79, %p80
    %p82 = scmp.ne.s32.totalorder %s74, %s76
    %p83 = scmp.eq.s32.totalorder %s17, 15
    %p84 = por %p82, %p83
    %p85 = scmp.ne.s32.totalorder %s76, %s77
    %p86 = scmp.eq.s32.totalorder %s17, 0
    %p87 = por %p85, %p86
    %p88 = scmp.ne.s32.totalorder %s76, %s77
    %p89 = scmp.eq.s32.totalorder %s18, 15
    %p90 = por %p88, %p89
    %p92 = scmp.ne.s32.totalorder %s77, %s91
    %p93 = scmp.eq.s32.totalorder %s18, 0
    %p94 = por %p92, %p93
    %s95 = ssub.s32 %s19, %s31
    %s96 = ssub.s32 %s20, %s27
    %s97 = sor.u32 %s95, %s96
    %p98 = scmp.eq.s32.totalorder %s97, 0
    %s100 = sadd.s32 %s99, 1
    %s101 = scalar_select %p98, %s99, %s100
    %p104 = pneg %p98
    %p105 = scmp.eq.s32.totalorder %s12, 15
    %p106 = por %p104, %p105
    %p107 = scmp.ne.s32.totalorder %s99, %s102
    %p108 = scmp.eq.s32.totalorder %s12, 0
    %p109 = por %p107, %p108
    %p110 = scmp.ne.s32.totalorder %s99, %s102
    %p111 = scmp.eq.s32.totalorder %s17, 15
    %p112 = por %p110, %p111
    %p113 = scmp.ne.s32.totalorder %s102, %s103
    %p114 = scmp.eq.s32.totalorder %s17, 0
    %p115 = por %p113, %p114
    %p116 = scmp.ne.s32.totalorder %s102, %s103
    %p117 = scmp.eq.s32.totalorder %s18, 15
    %p118 = por %p116, %p117
    %p120 = scmp.ne.s32.totalorder %s103, %s119
    %p121 = scmp.eq.s32.totalorder %s18, 0
    %p122 = por %p120, %p121
    %s123 = sadd.s32 %s20, 1
    %s124 = sadd.s32 %s27, 1
    %s125 = ssub.s32 %s19, %s31
    %s126 = ssub.s32 %s123, %s124
    %s127 = sor.u32 %s125, %s126
    %p128 = scmp.eq.s32.totalorder %s127, 0
    %s130 = sadd.s32 %s129, 1
    %s131 = scalar_select %p128, %s129, %s130
    %p134 = pneg %p128
    %p135 = scmp.eq.s32.totalorder %s12, 15
    %p136 = por %p134, %p135
    %p137 = scmp.ne.s32.totalorder %s129, %s132
    %p138 = scmp.eq.s32.totalorder %s12, 0
    %p139 = por %p137, %p138
    %p140 = scmp.ne.s32.totalorder %s129, %s132
    %p141 = scmp.eq.s32.totalorder %s17, 15
    %p142 = por %p140, %p141
    %p143 = scmp.ne.s32.totalorder %s132, %s133
    %p144 = scmp.eq.s32.totalorder %s17, 0
    %p145 = por %p143, %p144
    %p146 = scmp.ne.s32.totalorder %s132, %s133
    %p147 = scmp.eq.s32.totalorder %s18, 15
    %p148 = por %p146, %p147
    %p150 = scmp.ne.s32.totalorder %s133, %s149
    %p151 = scmp.eq.s32.totalorder %s18, 0
    %p152 = por %p150, %p151
    %s153 = sadd.s32 %s20, 2
    %s154 = sadd.s32 %s27, 2
    %s155 = ssub.s32 %s19, %s31
    %s156 = ssub.s32 %s153, %s154
    %s157 = sor.u32 %s155, %s156
    %p158 = scmp.eq.s32.totalorder %s157, 0
    %s160 = sadd.s32 %s159, 1
    %s161 = scalar_select %p158, %s159, %s160
    %p164 = pneg %p158
    %p165 = scmp.eq.s32.totalorder %s12, 15
    %p166 = por %p164, %p165
    %p167 = scmp.ne.s32.totalorder %s159, %s162
    %p168 = scmp.eq.s32.totalorder %s12, 0
    %p169 = por %p167, %p168
    %p170 = scmp.ne.s32.totalorder %s159, %s162
    %p171 = scmp.eq.s32.totalorder %s17, 15
    %p172 = por %p170, %p171
    %p173 = scmp.ne.s32.totalorder %s162, %s163
    %p174 = scmp.eq.s32.totalorder %s17, 0
    %p175 = por %p173, %p174
    %p176 = scmp.ne.s32.totalorder %s162, %s163
    %p177 = scmp.eq.s32.totalorder %s18, 15
    %p178 = por %p176, %p177
    %p180 = scmp.ne.s32.totalorder %s163, %s179
    %p181 = scmp.eq.s32.totalorder %s18, 0
    %p182 = por %p180, %p181
    %s183 = ssub.s32 %s19, %s31
    %s184 = ssub.s32 %s20, %s27
    %s185 = sor.u32 %s183, %s184
    %p186 = scmp.eq.s32.totalorder %s185, 0
    %s188 = sadd.s32 %s187, 1
    %s189 = scalar_select %p186, %s187, %s188
    %p192 = pneg %p186
    %p193 = scmp.eq.s32.totalorder %s12, 15
    %p194 = por %p192, %p193
    %p195 = scmp.ne.s32.totalorder %s187, %s190
    %p196 = scmp.eq.s32.totalorder %s12, 0
    %p197 = por %p195, %p196
    %p198 = scmp.ne.s32.totalorder %s187, %s190
    %p199 = scmp.eq.s32.totalorder %s17, 15
    %p200 = por %p198, %p199
    %p201 = scmp.ne.s32.totalorder %s190, %s191
    %p202 = scmp.eq.s32.totalorder %s17, 0
    %p203 = por %p201, %p202
    %p204 = scmp.ne.s32.totalorder %s190, %s191
    %p205 = scmp.eq.s32.totalorder %s18, 15
    %p206 = por %p204, %p205
    %p208 = scmp.ne.s32.totalorder %s191, %s207
    %p209 = scmp.eq.s32.totalorder %s18, 0
    %p210 = por %p208, %p209
    %p211 = scmp.le.s32.totalorder 1, %s12
    %p212 = scmp.lt.s32.totalorder %s12, 17
    %p213 = pnand %p211, %p212
    %p214 = pneg %p213
    // Predicated region
    $region9: #{crnn_vgg_forward.17} parent=5 // pred_check
      _
    $region10: #{crnn_vgg_forward.17} parent=5 // pred_check_branch
      %216 = sbr.rel (%p213) target = $region12
    $region11: #{crnn_vgg_forward.17} parent=5 // pred_region
      %s217 = ssub.s32 %s12, 1
      // Predicated region
      $region13: #{crnn_vgg_forward.17} parent=11 // pred_check
        %p218 = pneg %p45
      $region14: #{crnn_vgg_forward.17} parent=11 // pred_check_branch
        %220 = sbr.rel (%p218) target = $region16
      $region15: #{crnn_vgg_forward.17} parent=11 // pred_region
        _
      $region16: #{crnn_vgg_forward.17} parent=11 // pred_fallthru
        _
      // Predicated region
      $region17: #{crnn_vgg_forward.17} parent=11 // pred_check
        %p221 = pneg %p66
      $region18: #{crnn_vgg_forward.17} parent=11 // pred_check_branch
        %223 = sbr.rel (%p221) target = $region20
      $region19: #{crnn_vgg_forward.17} parent=11 // pred_region
        _
      $region20: #{crnn_vgg_forward.17} parent=11 // pred_fallthru
        _
      // Predicated region
      $region21: #{crnn_vgg_forward.17} parent=11 // pred_check
        %p224 = pneg %p87
      $region22: #{crnn_vgg_forward.17} parent=11 // pred_check_branch
        %226 = sbr.rel (%p224) target = $region24
      $region23: #{crnn_vgg_forward.17} parent=11 // pred_region
        _
      $region24: #{crnn_vgg_forward.17} parent=11 // pred_fallthru
        _
    $region12: #{crnn_vgg_forward.17} parent=5 // pred_fallthru
      _
    %p227 = scmp.lt.s32.totalorder %s12, 16
    // Predicated region
    $region25: #{crnn_vgg_forward.17} parent=5 // pred_check
      %p228 = pneg %p227
    $region26: #{crnn_vgg_forward.17} parent=5 // pred_check_branch
      %230 = sbr.rel (%p228) target = $region28
    $region27: #{crnn_vgg_forward.17} parent=5 // pred_region
      // Predicated region
      $region29: #{crnn_vgg_forward.17} parent=27 // pred_check
        %p231 = pneg %p109
      $region30: #{crnn_vgg_forward.17} parent=27 // pred_check_branch
        %233 = sbr.rel (%p231) target = $region32
      $region31: #{crnn_vgg_forward.17} parent=27 // pred_region
        %p234 = scmp.lt.s32.totalorder %s19, 1
        %s235 = scalar_select %p234, %s19, 1
        %p236 = scmp.lt.s32.totalorder %s20, 9
        %s237 = scalar_select %p236, %s20, 9
        %s238 = smul.addr %s235, 10
        %s239 = sadd.s32 %s237, %s238
        %s240 = smul.addr %s239, 4
        %s241 = scalar_lea.vmem %s3, %s240
      $region32: #{crnn_vgg_forward.17} parent=27 // pred_fallthru
        _
      // Predicated region
      $region33: #{crnn_vgg_forward.17} parent=27 // pred_check
        %p242 = pneg %p139
      $region34: #{crnn_vgg_forward.17} parent=27 // pred_check_branch
        %244 = sbr.rel (%p242) target = $region36
      $region35: #{crnn_vgg_forward.17} parent=27 // pred_region
        %s245 = sadd.s32 %s20, 1
        %p246 = scmp.lt.s32.totalorder %s19, 1
        %s247 = scalar_select %p246, %s19, 1
        %p248 = scmp.lt.s32.totalorder %s245, 9
        %s249 = scalar_select %p248, %s245, 9
        %s250 = smul.addr %s247, 10
        %s251 = sadd.s32 %s249, %s250
        %s252 = smul.addr %s251, 4
        %s253 = scalar_lea.vmem %s4, %s252
        %s254 = sadd.s32 %s20, 1
      $region36: #{crnn_vgg_forward.17} parent=27 // pred_fallthru
        _
      // Predicated region
      $region37: #{crnn_vgg_forward.17} parent=27 // pred_check
        %p255 = pneg %p169
      $region38: #{crnn_vgg_forward.17} parent=27 // pred_check_branch
        %257 = sbr.rel (%p255) target = $region40
      $region39: #{crnn_vgg_forward.17} parent=27 // pred_region
        %s258 = sadd.s32 %s20, 2
        %p259 = scmp.lt.s32.totalorder %s19, 1
        %s260 = scalar_select %p259, %s19, 1
        %p261 = scmp.lt.s32.totalorder %s258, 9
        %s262 = scalar_select %p261, %s258, 9
        %s263 = smul.addr %s260, 10
        %s264 = sadd.s32 %s262, %s263
        %s265 = smul.addr %s264, 4
        %s266 = scalar_lea.vmem %s5, %s265
        %s267 = sadd.s32 %s20, 2
      $region40: #{crnn_vgg_forward.17} parent=27 // pred_fallthru
        _
    $region28: #{crnn_vgg_forward.17} parent=5 // pred_fallthru
      _
    %p268 = scmp.le.s32.totalorder 1, %s12
    %p269 = scmp.lt.s32.totalorder %s12, 17
    %p270 = pnand %p268, %p269
    %p271 = pneg %p270
    // Predicated region
    $region41: #{crnn_vgg_forward.17} parent=5 // pred_check
      _
    $region42: #{crnn_vgg_forward.17} parent=5 // pred_check_branch
      %273 = sbr.rel (%p270) target = $region44
    $region43: #{crnn_vgg_forward.17} parent=5 // pred_region
      %s274 = ssub.s32 %s12, 1
      %p275 = pneg %p45
      %p276 = pneg %p42
      %p277 = pneg %p66
      %p278 = pneg %p63
      %p279 = pneg %p87
      %p280 = pneg %p84
      %p281 = scmp.lt.s32.totalorder %s21, 1
      %s282 = scalar_select %p281, %s21, 1
      %p283 = scmp.lt.s32.totalorder %s22, 9
      %s284 = scalar_select %p283, %s22, 9
      %s285 = smul.addr %s282, 10
      %s286 = sadd.s32 %s284, %s285
      %s287 = smul.addr %s286, 4
      %s288 = scalar_lea.vmem %s3, %s287
      %p289 = pneg %p115
      %p290 = pneg %p112
      %s291 = sadd.s32 %s22, 1
      %p292 = scmp.lt.s32.totalorder %s21, 1
      %s293 = scalar_select %p292, %s21, 1
      %p294 = scmp.lt.s32.totalorder %s291, 9
      %s295 = scalar_select %p294, %s291, 9
      %s296 = smul.addr %s293, 10
      %s297 = sadd.s32 %s295, %s296
      %s298 = smul.addr %s297, 4
      %s299 = scalar_lea.vmem %s4, %s298
      %p300 = pneg %p145
      %p301 = pneg %p142
      %s302 = sadd.s32 %s22, 2
      %p303 = scmp.lt.s32.totalorder %s21, 1
      %s304 = scalar_select %p303, %s21, 1
      %p305 = scmp.lt.s32.totalorder %s302, 9
      %s306 = scalar_select %p305, %s302, 9
      %s307 = smul.addr %s304, 10
      %s308 = sadd.s32 %s306, %s307
      %s309 = smul.addr %s308, 4
      %s310 = scalar_lea.vmem %s5, %s309
      %p311 = pneg %p175
      %p312 = pneg %p172
      %p313 = pneg %p203
      %p314 = pneg %p200
      %p315 = scmp.lt.s32.totalorder %s21, 1
      %s316 = scalar_select %p315, %s21, 1
      %p317 = scmp.lt.s32.totalorder %s22, 7
      %s318 = scalar_select %p317, %s22, 7
      %s319 = smul.addr %s316, 8
      %s320 = sadd.s32 %s318, %s319
      %s321 = smul.addr %s320, 4
      %s322 = scalar_lea.vmem %s6, %s321
      %p323 = scmp.lt.s32.totalorder %s21, 1
      %s324 = scalar_select %p323, %s21, 1
      %p325 = scmp.lt.s32.totalorder %s22, 9
      %s326 = scalar_select %p325, %s22, 9
      %s327 = smul.addr %s324, 10
      %s328 = sadd.s32 %s326, %s327
      %s329 = smul.addr %s328, 4
      %s330 = scalar_lea.vmem %s3, %s329
      %s331 = sadd.s32 %s22, 1
      %p332 = scmp.lt.s32.totalorder %s21, 1
      %s333 = scalar_select %p332, %s21, 1
      %p334 = scmp.lt.s32.totalorder %s331, 9
      %s335 = scalar_select %p334, %s331, 9
      %s336 = smul.addr %s333, 10
      %s337 = sadd.s32 %s335, %s336
      %s338 = smul.addr %s337, 4
      %s339 = scalar_lea.vmem %s4, %s338
      %s340 = sadd.s32 %s22, 1
      %s341 = sadd.s32 %s22, 2
      %p342 = scmp.lt.s32.totalorder %s21, 1
      %s343 = scalar_select %p342, %s21, 1
      %p344 = scmp.lt.s32.totalorder %s341, 9
      %s345 = scalar_select %p344, %s341, 9
      %s346 = smul.addr %s343, 10
      %s347 = sadd.s32 %s345, %s346
      %s348 = smul.addr %s347, 4
      %s349 = scalar_lea.vmem %s5, %s348
      %s350 = sadd.s32 %s22, 2
      %p351 = scmp.lt.s32.totalorder %s21, 1
      %s352 = scalar_select %p351, %s21, 1
      %p353 = scmp.lt.s32.totalorder %s22, 7
      %s354 = scalar_select %p353, %s22, 7
      %s355 = smul.addr %s352, 8
      %s356 = sadd.s32 %s354, %s355
      %s357 = smul.addr %s356, 4
      %s358 = scalar_lea.vmem %s6, %s357
      %v360 = vld [vmem:[%s330] sm:$0x7]
      %v361 = vld [vmem:[%s0] sm:$0xf]
      %s362 = scalar_lea.vmem %s0, 4
      %v363 = vld [vmem:[%s362] sm:$0xf]
      %v365 = vunpack.c.l.b16 %v360
      %v366 = vpack.c.b16 %v365, %v365
      %v368 = vshrl.u32 %v366, 16
      %v370 = vshll.u32 %v366, 16
      %v372 = vrot.slane %v370, 1
      %v373 = vor.u32 %v368, %v372
      %vm374 = vcmask 64512
      %v376 = vsel %vm374, %v373, 0
      %vm378 = vcmask 1043456
      %v380 = vsel %vm378, %v363, 0
      %382 = vmatpush.bf16.msra.mxu0 0
      %383 = vmatpush.bf16.msra.mxu0 0
      %384 = vmatpush.bf16.msra.mxu0 0
      %385 = vmatpush.bf16.msra.mxu0 0
      %386 = vmatpush.bf16.msra.mxu0 0
      %387 = vmatpush.bf16.msra.mxu0 0
      %388 = vmatpush.bf16.msra.mxu0 0
      %389 = vmatpush.bf16.msra.mxu0 %v380
      %390 = vmatmul.bf16.gmra.mxu0 %v376
      %v391 = vpop.f32.mrf.mxu0
      %v392 = vadd.f32 0.0, %v391
      %v393 = vpop.f32.mrf.mxu0
      %394 = vdwg.mxu0
      %v396 = vsel %vm374, %v360, 0
      %v399 = vsel %vm378, %v361, 0
      %401 = vmatpush.bf16.msra.mxu0 0
      %402 = vmatpush.bf16.msra.mxu0 0
      %403 = vmatpush.bf16.msra.mxu0 0
      %404 = vmatpush.bf16.msra.mxu0 0
      %405 = vmatpush.bf16.msra.mxu0 0
      %406 = vmatpush.bf16.msra.mxu0 0
      %407 = vmatpush.bf16.msra.mxu0 0
      %408 = vmatpush.bf16.msra.mxu0 %v399
      %409 = vmatmul.bf16.gmra.mxu0 %v396
      %v410 = vpop.f32.mrf.mxu0
      %v411 = vadd.f32 %v392, %v410
      %v412 = vpop.f32.mrf.mxu0
      %413 = vdwg.mxu0
      %s414 = scalar_lea.vmem %s0, 8
      %v415 = vld [vmem:[%s414] sm:$0xf]
      %v416 = vrot.slane %v366, 1
      %v418 = vsel %vm374, %v416, 0
      %v421 = vsel %vm378, %v415, 0
      %423 = vmatpush.bf16.msra.mxu0 0
      %424 = vmatpush.bf16.msra.mxu0 0
      %425 = vmatpush.bf16.msra.mxu0 0
      %426 = vmatpush.bf16.msra.mxu0 0
      %427 = vmatpush.bf16.msra.mxu0 0
      %428 = vmatpush.bf16.msra.mxu0 0
      %429 = vmatpush.bf16.msra.mxu0 0
      %430 = vmatpush.bf16.msra.mxu0 %v421
      %431 = vmatmul.bf16.gmra.mxu0 %v418
      %v432 = vpop.f32.mrf.mxu0
      %v433 = vadd.f32 0.0, %v432
      %v434 = vpop.f32.mrf.mxu0
      %435 = vdwg.mxu0
      %v436 = vadd.f32 %v411, %v433
      %v437 = vld [vmem:[%s339] sm:$0x7]
      %s438 = scalar_lea.vmem %s0, 12
      %v439 = vld [vmem:[%s438] sm:$0xf]
      %v441 = vsel %vm374, %v437, 0
      %v444 = vsel %vm378, %v439, 0
      %446 = vmatpush.bf16.msra.mxu0 0
      %447 = vmatpush.bf16.msra.mxu0 0
      %448 = vmatpush.bf16.msra.mxu0 0
      %449 = vmatpush.bf16.msra.mxu0 0
      %450 = vmatpush.bf16.msra.mxu0 0
      %451 = vmatpush.bf16.msra.mxu0 0
      %452 = vmatpush.bf16.msra.mxu0 0
      %453 = vmatpush.bf16.msra.mxu0 %v444
      %454 = vmatmul.bf16.gmra.mxu0 %v441
      %v455 = vpop.f32.mrf.mxu0
      %v456 = vadd.f32 0.0, %v455
      %v457 = vpop.f32.mrf.mxu0
      %458 = vdwg.mxu0
      %v459 = vadd.f32 %v436, %v456
      %s460 = scalar_lea.vmem %s0, 16
      %v461 = vld [vmem:[%s460] sm:$0xf]
      %v463 = vunpack.c.l.b16 %v437
      %v464 = vpack.c.b16 %v463, %v463
      %v466 = vshrl.u32 %v464, 16
      %v468 = vshll.u32 %v464, 16
      %v470 = vrot.slane %v468, 1
      %v471 = vor.u32 %v466, %v470
      %v473 = vsel %vm374, %v471, 0
      %v476 = vsel %vm378, %v461, 0
      %478 = vmatpush.bf16.msra.mxu0 0
      %479 = vmatpush.bf16.msra.mxu0 0
      %480 = vmatpush.bf16.msra.mxu0 0
      %481 = vmatpush.bf16.msra.mxu0 0
      %482 = vmatpush.bf16.msra.mxu0 0
      %483 = vmatpush.bf16.msra.mxu0 0
      %484 = vmatpush.bf16.msra.mxu0 0
      %485 = vmatpush.bf16.msra.mxu0 %v476
      %486 = vmatmul.bf16.gmra.mxu0 %v473
      %v487 = vpop.f32.mrf.mxu0
      %v488 = vadd.f32 0.0, %v487
      %v489 = vpop.f32.mrf.mxu0
      %490 = vdwg.mxu0
      %v491 = vadd.f32 %v459, %v488
      %s492 = scalar_lea.vmem %s0, 20
      %v493 = vld [vmem:[%s492] sm:$0xf]
      %v494 = vrot.slane %v464, 1
      %v496 = vsel %vm374, %v494, 0
      %v499 = vsel %vm378, %v493, 0
      %501 = vmatpush.bf16.msra.mxu0 0
      %502 = vmatpush.bf16.msra.mxu0 0
      %503 = vmatpush.bf16.msra.mxu0 0
      %504 = vmatpush.bf16.msra.mxu0 0
      %505 = vmatpush.bf16.msra.mxu0 0
      %506 = vmatpush.bf16.msra.mxu0 0
      %507 = vmatpush.bf16.msra.mxu0 0
      %508 = vmatpush.bf16.msra.mxu0 %v499
      %509 = vmatmul.bf16.gmra.mxu0 %v496
      %v510 = vpop.f32.mrf.mxu0
      %v511 = vadd.f32 0.0, %v510
      %v512 = vpop.f32.mrf.mxu0
      %513 = vdwg.mxu0
      %v514 = vadd.f32 %v491, %v511
      %v515 = vld [vmem:[%s349] sm:$0x7]
      %s516 = scalar_lea.vmem %s0, 24
      %v517 = vld [vmem:[%s516] sm:$0xf]
      %v519 = vsel %vm374, %v515, 0
      %v522 = vsel %vm378, %v517, 0
      %524 = vmatpush.bf16.msra.mxu0 0
      %525 = vmatpush.bf16.msra.mxu0 0
      %526 = vmatpush.bf16.msra.mxu0 0
      %527 = vmatpush.bf16.msra.mxu0 0
      %528 = vmatpush.bf16.msra.mxu0 0
      %529 = vmatpush.bf16.msra.mxu0 0
      %530 = vmatpush.bf16.msra.mxu0 0
      %531 = vmatpush.bf16.msra.mxu0 %v522
      %532 = vmatmul.bf16.gmra.mxu0 %v519
      %v533 = vpop.f32.mrf.mxu0
      %v534 = vadd.f32 0.0, %v533
      %v535 = vpop.f32.mrf.mxu0
      %536 = vdwg.mxu0
      %v537 = vadd.f32 %v514, %v534
      %s538 = scalar_lea.vmem %s0, 28
      %v539 = vld [vmem:[%s538] sm:$0xf]
      %v541 = vunpack.c.l.b16 %v515
      %v542 = vpack.c.b16 %v541, %v541
      %v544 = vshrl.u32 %v542, 16
      %v546 = vshll.u32 %v542, 16
      %v548 = vrot.slane %v546, 1
      %v549 = vor.u32 %v544, %v548
      %v551 = vsel %vm374, %v549, 0
      %v554 = vsel %vm378, %v539, 0
      %556 = vmatpush.bf16.msra.mxu0 0
      %557 = vmatpush.bf16.msra.mxu0 0
      %558 = vmatpush.bf16.msra.mxu0 0
      %559 = vmatpush.bf16.msra.mxu0 0
      %560 = vmatpush.bf16.msra.mxu0 0
      %561 = vmatpush.bf16.msra.mxu0 0
      %562 = vmatpush.bf16.msra.mxu0 0
      %563 = vmatpush.bf16.msra.mxu0 %v554
      %564 = vmatmul.bf16.gmra.mxu0 %v551
      %v565 = vpop.f32.mrf.mxu0
      %v566 = vadd.f32 0.0, %v565
      %v567 = vpop.f32.mrf.mxu0
      %568 = vdwg.mxu0
      %v569 = vadd.f32 %v537, %v566
      %s570 = scalar_lea.vmem %s0, 32
      %v571 = vld [vmem:[%s570] sm:$0xf]
      %v572 = vrot.slane %v542, 1
      %v574 = vsel %vm374, %v572, 0
      %v577 = vsel %vm378, %v571, 0
      %579 = vmatpush.bf16.msra.mxu0 0
      %580 = vmatpush.bf16.msra.mxu0 0
      %581 = vmatpush.bf16.msra.mxu0 0
      %582 = vmatpush.bf16.msra.mxu0 0
      %583 = vmatpush.bf16.msra.mxu0 0
      %584 = vmatpush.bf16.msra.mxu0 0
      %585 = vmatpush.bf16.msra.mxu0 0
      %586 = vmatpush.bf16.msra.mxu0 %v577
      %587 = vmatmul.bf16.gmra.mxu0 %v574
      %v588 = vpop.f32.mrf.mxu0
      %v589 = vadd.f32 0.0, %v588
      %v590 = vpop.f32.mrf.mxu0
      %591 = vdwg.mxu0
      %v592 = vadd.f32 %v569, %v589
      %v593 = vld [vmem:[%s1] sm:$0x1]
      %v595 = vperm.slane %v593, 0
      %v597 = vmul.f32 %v592, %v595
      %v598 = vld [vmem:[%s2] sm:$0x1]
      %v600 = vperm.slane %v598, 0
      %v602 = vadd.f32 %v597, %v600
      %v603 = vmax.f32 %v602, 0.0
      %vm604 = vcmask 125952
      %605 = vst.msk [vmem:[%s358] sm:$0xf] %vm604, %v603
      %p606 = scmp.lt.s32.totalorder %s21, 1
      %s607 = scalar_select %p606, %s21, 1
      %p608 = scmp.lt.s32.totalorder %s22, 7
      %s609 = scalar_select %p608, %s22, 7
      %s610 = smul.addr %s607, 8
      %s611 = sadd.s32 %s609, %s610
      %s612 = smul.addr %s611, 4
      %s613 = scalar_lea.vmem %s6, %s612
      // Predicated region
      $region45: #{crnn_vgg_forward.17} parent=43 // pred_check
        %p614 = pneg %p200
      $region46: #{crnn_vgg_forward.17} parent=43 // pred_check_branch
        %616 = sbr.rel (%p614) target = $region48
      $region47: #{crnn_vgg_forward.17} parent=43 // pred_region
        _
      $region48: #{crnn_vgg_forward.17} parent=43 // pred_fallthru
        _
    $region44: #{crnn_vgg_forward.17} parent=5 // pred_fallthru
      _
    %p617 = scmp.le.s32.totalorder 2, %s12
    // Predicated region
    $region49: #{crnn_vgg_forward.17} parent=5 // pred_check
      %p618 = pneg %p617
    $region50: #{crnn_vgg_forward.17} parent=5 // pred_check_branch
      %620 = sbr.rel (%p618) target = $region52
    $region51: #{crnn_vgg_forward.17} parent=5 // pred_region
      %s621 = ssub.s32 %s12, 2
      // Predicated region
      $region53: #{crnn_vgg_forward.17} parent=51 // pred_check
        %p622 = pneg %p206
      $region54: #{crnn_vgg_forward.17} parent=51 // pred_check_branch
        %624 = sbr.rel (%p622) target = $region56
      $region55: #{crnn_vgg_forward.17} parent=51 // pred_region
        %p625 = scmp.lt.s32.totalorder %s23, 1
        %s626 = scalar_select %p625, %s23, 1
        %p627 = scmp.lt.s32.totalorder %s24, 7
        %s628 = scalar_select %p627, %s24, 7
        %s629 = smul.addr %s626, 8
        %s630 = sadd.s32 %s628, %s629
        %s631 = smul.addr %s630, 4
        %s632 = scalar_lea.vmem %s6, %s631
      $region56: #{crnn_vgg_forward.17} parent=51 // pred_fallthru
        _
    $region52: #{crnn_vgg_forward.17} parent=5 // pred_fallthru
      _
  $region6: #{crnn_vgg_forward.17} parent=0 // loop_footer
    %s16 = sadd.s32 1, %s12
  $region7: #{crnn_vgg_forward.17} parent=0 // loop_footer_branch
    %11 = sbr.rel target = $region3
  $region8: #{crnn_vgg_forward.17} parent=0 // loop_exit
    _

// kernel: crnn_vgg_forward.19
$region0: #{crnn_vgg_forward.19}
  #allocation0 [shape = 'u32[]', space=smem, size = 0x4, offset = 0x4, fixed_abs, tag = 'smem constant byte address 0x4 - core index']
  #allocation1 [shape = 'u32[72,128]{1,0:T(1,128)}', space=vmem, size = 0x9000, scoped, tag = 'internal scratch']
  %s0 = inlined_call_operand.vmem [shape: f32[2,4,2,4,16], index: 0, kind: input, shape index: {}]
  %s1 = inlined_call_operand.vmem [shape: f32[2,4,4,16], index: 1, kind: output, shape index: {}]
  %s2 = sld [smem:[#allocation0]]
  $region37: #{crnn_vgg_forward.19} parent=0
    _
  %s4 = ssub.s32 1, %s2
  %s5 = scalar_select 0, %s4, %s2
  loop: start=0, step=1, limit=10
  $region2: #{crnn_vgg_forward.19} parent=0 // loop_pre_header
    _
  $region3: #{crnn_vgg_forward.19} parent=0 // loop_header
    %s7 = sphi 0, %s11
    %p8 = scmp.ge.s32.totalorder %s7, 10
    %s14 = sphi 0, %s26
    %s15 = sphi 0, %s22
    %s16 = sphi 0, %s14
    %s17 = sphi 0, %s15
    %s18 = sphi 0, %s16
    %s19 = sphi 0, %s17
    %s31 = sphi 0, %s33
    %s34 = sphi 0, %s31
    %s35 = sphi 0, %s34
    %s51 = sphi 0, %s35
    %s59 = sphi 0, %s61
    %s62 = sphi 0, %s59
    %s63 = sphi 0, %s62
    %s79 = sphi 0, %s63
  $region4: #{crnn_vgg_forward.19} parent=0 // loop_header_branch
    %10 = sbr.rel (%p8) target = $region8
  $region5: #{crnn_vgg_forward.19} parent=0 // loop_body
    %s12 = ssub.s32 %s7, 1
    %s13 = ssub.s32 %s7, 2
    %s20 = sadd.s32 1, %s15
    %p21 = scmp.ge.s32.totalorder %s20, 4
    %s22 = scalar_select %p21, 0, %s20
    %s23 = sadd.s32 1, %s14
    %s24 = scalar_select %p21, %s23, %s14
    %p25 = scmp.ge.s32.totalorder %s24, 2
    %s26 = scalar_select %p25, 0, %s24
    %s27 = ssub.s32 %s14, %s26
    %s28 = ssub.s32 %s15, %s22
    %s29 = sor.u32 %s27, %s28
    %p30 = scmp.eq.s32.totalorder %s29, 0
    %s32 = sadd.s32 %s31, 1
    %s33 = scalar_select %p30, %s31, %s32
    %p36 = pneg %p30
    %p37 = scmp.eq.s32.totalorder %s7, 7
    %p38 = por %p36, %p37
    %p39 = scmp.ne.s32.totalorder %s31, %s34
    %p40 = scmp.eq.s32.totalorder %s7, 0
    %p41 = por %p39, %p40
    %p42 = scmp.ne.s32.totalorder %s31, %s34
    %p43 = scmp.eq.s32.totalorder %s12, 7
    %p44 = por %p42, %p43
    %p45 = scmp.ne.s32.totalorder %s34, %s35
    %p46 = scmp.eq.s32.totalorder %s12, 0
    %p47 = por %p45, %p46
    %p48 = scmp.ne.s32.totalorder %s34, %s35
    %p49 = scmp.eq.s32.totalorder %s13, 7
    %p50 = por %p48, %p49
    %p52 = scmp.ne.s32.totalorder %s35, %s51
    %p53 = scmp.eq.s32.totalorder %s13, 0
    %p54 = por %p52, %p53
    %s55 = ssub.s32 %s14, %s26
    %s56 = ssub.s32 %s15, %s22
    %s57 = sor.u32 %s55, %s56
    %p58 = scmp.eq.s32.totalorder %s57, 0
    %s60 = sadd.s32 %s59, 1
    %s61 = scalar_select %p58, %s59, %s60
    %p64 = pneg %p58
    %p65 = scmp.eq.s32.totalorder %s7, 7
    %p66 = por %p64, %p65
    %p67 = scmp.ne.s32.totalorder %s59, %s62
    %p68 = scmp.eq.s32.totalorder %s7, 0
    %p69 = por %p67, %p68
    %p70 = scmp.ne.s32.totalorder %s59, %s62
    %p71 = scmp.eq.s32.totalorder %s12, 7
    %p72 = por %p70, %p71
    %p73 = scmp.ne.s32.totalorder %s62, %s63
    %p74 = scmp.eq.s32.totalorder %s12, 0
    %p75 = por %p73, %p74
    %p76 = scmp.ne.s32.totalorder %s62, %s63
    %p77 = scmp.eq.s32.totalorder %s13, 7
    %p78 = por %p76, %p77
    %p80 = scmp.ne.s32.totalorder %s63, %s79
    %p81 = scmp.eq.s32.totalorder %s13, 0
    %p82 = por %p80, %p81
    %p83 = scmp.le.s32.totalorder 1, %s7
    %p84 = scmp.lt.s32.totalorder %s7, 9
    %p85 = pnand %p83, %p84
    %p86 = pneg %p85
    // Predicated region
    $region9: #{crnn_vgg_forward.19} parent=5 // pred_check
      _
    $region10: #{crnn_vgg_forward.19} parent=5 // pred_check_branch
      %88 = sbr.rel (%p85) target = $region12
    $region11: #{crnn_vgg_forward.19} parent=5 // pred_region
      %s89 = ssub.s32 %s7, 1
    $region12: #{crnn_vgg_forward.19} parent=5 // pred_fallthru
      _
    %p90 = scmp.lt.s32.totalorder %s7, 8
    // Predicated region
    $region13: #{crnn_vgg_forward.19} parent=5 // pred_check
      %p91 = pneg %p90
    $region14: #{crnn_vgg_forward.19} parent=5 // pred_check_branch
      %93 = sbr.rel (%p91) target = $region16
    $region15: #{crnn_vgg_forward.19} parent=5 // pred_region
      // Predicated region
      $region17: #{crnn_vgg_forward.19} parent=15 // pred_check
        %p94 = pneg %p41
      $region18: #{crnn_vgg_forward.19} parent=15 // pred_check_branch
        %96 = sbr.rel (%p94) target = $region20
      $region19: #{crnn_vgg_forward.19} parent=15 // pred_region
        %p97 = scmp.lt.s32.totalorder %s14, 1
        %s98 = scalar_select %p97, %s14, 1
        %p99 = scmp.lt.s32.totalorder %s15, 3
        %s100 = scalar_select %p99, %s15, 3
        %s101 = smul.addr %s100, 2
        %s102 = smul.addr %s98, 8
        %s103 = sadd.s32 %s101, %s102
        %s104 = smul.addr %s103, 4
        %s105 = scalar_lea.vmem %s0, %s104
      $region20: #{crnn_vgg_forward.19} parent=15 // pred_fallthru
        _
    $region16: #{crnn_vgg_forward.19} parent=5 // pred_fallthru
      _
    %p106 = scmp.le.s32.totalorder 1, %s7
    %p107 = scmp.lt.s32.totalorder %s7, 9
    %p108 = pnand %p106, %p107
    %p109 = pneg %p108
    // Predicated region
    $region21: #{crnn_vgg_forward.19} parent=5 // pred_check
      _
    $region22: #{crnn_vgg_forward.19} parent=5 // pred_check_branch
      %111 = sbr.rel (%p108) target = $region24
    $region23: #{crnn_vgg_forward.19} parent=5 // pred_region
      %s112 = ssub.s32 %s7, 1
      %p113 = scmp.lt.s32.totalorder %s16, 1
      %s114 = scalar_select %p113, %s16, 1
      %p115 = scmp.lt.s32.totalorder %s17, 3
      %s116 = scalar_select %p115, %s17, 3
      %s117 = smul.addr %s116, 2
      %s118 = smul.addr %s114, 8
      %s119 = sadd.s32 %s117, %s118
      %s120 = smul.addr %s119, 4
      %s121 = scalar_lea.vmem %s0, %s120
      %p122 = pneg %p47
      %p123 = pneg %p44
      %p124 = pneg %p75
      %p125 = pneg %p72
      %p126 = scmp.lt.s32.totalorder %s16, 1
      %s127 = scalar_select %p126, %s16, 1
      %p128 = scmp.lt.s32.totalorder %s17, 3
      %s129 = scalar_select %p128, %s17, 3
      %s130 = smul.addr %s127, 4
      %s131 = sadd.s32 %s129, %s130
      %s132 = smul.addr %s131, 4
      %s133 = scalar_lea.vmem %s1, %s132
      %p134 = scmp.lt.s32.totalorder %s16, 1
      %s135 = scalar_select %p134, %s16, 1
      %p136 = scmp.lt.s32.totalorder %s17, 3
      %s137 = scalar_select %p136, %s17, 3
      %s138 = smul.addr %s137, 2
      %s139 = smul.addr %s135, 8
      %s140 = sadd.s32 %s138, %s139
      %s141 = smul.addr %s140, 4
      %s142 = scalar_lea.vmem %s0, %s141
      %p143 = scmp.lt.s32.totalorder %s16, 1
      %s144 = scalar_select %p143, %s16, 1
      %p145 = scmp.lt.s32.totalorder %s17, 3
      %s146 = scalar_select %p145, %s17, 3
      %s147 = smul.addr %s144, 4
      %s148 = sadd.s32 %s146, %s147
      %s149 = smul.addr %s148, 4
      %s150 = scalar_lea.vmem %s1, %s149
      %v151 = vld [vmem:[%s142] sm:$0xf]
      %v152 = vld [vmem:[%s142 + $0x4] sm:$0xf]
      %v153 = vmax.f32 %v151, %v152
      %vm154 = vcmask 125952
      %155 = vst.msk [vmem:[%s150] sm:$0xf] %vm154, %v153
      %p156 = scmp.lt.s32.totalorder %s16, 1
      %s157 = scalar_select %p156, %s16, 1
      %p158 = scmp.lt.s32.totalorder %s17, 3
      %s159 = scalar_select %p158, %s17, 3
      %s160 = smul.addr %s157, 4
      %s161 = sadd.s32 %s159, %s160
      %s162 = smul.addr %s161, 4
      %s163 = scalar_lea.vmem %s1, %s162
      // Predicated region
      $region25: #{crnn_vgg_forward.19} parent=23 // pred_check
        %p164 = pneg %p72
      $region26: #{crnn_vgg_forward.19} parent=23 // pred_check_branch
        %166 = sbr.rel (%p164) target = $region28
      $region27: #{crnn_vgg_forward.19} parent=23 // pred_region
        _
      $region28: #{crnn_vgg_forward.19} parent=23 // pred_fallthru
        _
    $region24: #{crnn_vgg_forward.19} parent=5 // pred_fallthru
      _
    %p167 = scmp.le.s32.totalorder 2, %s7
    // Predicated region
    $region29: #{crnn_vgg_forward.19} parent=5 // pred_check
      %p168 = pneg %p167
    $region30: #{crnn_vgg_forward.19} parent=5 // pred_check_branch
      %170 = sbr.rel (%p168) target = $region32
    $region31: #{crnn_vgg_forward.19} parent=5 // pred_region
      %s171 = ssub.s32 %s7, 2
      // Predicated region
      $region33: #{crnn_vgg_forward.19} parent=31 // pred_check
        %p172 = pneg %p78
      $region34: #{crnn_vgg_forward.19} parent=31 // pred_check_branch
        %174 = sbr.rel (%p172) target = $region36
      $region35: #{crnn_vgg_forward.19} parent=31 // pred_region
        %p175 = scmp.lt.s32.totalorder %s18, 1
        %s176 = scalar_select %p175, %s18, 1
        %p177 = scmp.lt.s32.totalorder %s19, 3
        %s178 = scalar_select %p177, %s19, 3
        %s179 = smul.addr %s176, 4
        %s180 = sadd.s32 %s178, %s179
        %s181 = smul.addr %s180, 4
        %s182 = scalar_lea.vmem %s1, %s181
      $region36: #{crnn_vgg_forward.19} parent=31 // pred_fallthru
        _
    $region32: #{crnn_vgg_forward.19} parent=5 // pred_fallthru
      _
  $region6: #{crnn_vgg_forward.19} parent=0 // loop_footer
    %s11 = sadd.s32 1, %s7
  $region7: #{crnn_vgg_forward.19} parent=0 // loop_footer_branch
    %6 = sbr.rel target = $region3
  $region8: #{crnn_vgg_forward.19} parent=0 // loop_exit
    _

// kernel: crnn_vgg_forward.18
$region0: #{crnn_vgg_forward.18}
  #allocation0 [shape = 'u32[]', space=smem, size = 0x4, offset = 0x4, fixed_abs, tag = 'smem constant byte address 0x4 - core index']
  #allocation1 [shape = 'u32[72,128]{1,0:T(1,128)}', space=vmem, size = 0x9000, scoped, tag = 'internal scratch']
  %s0 = inlined_call_operand.vmem [shape: bf16[3,3,16,16], index: 0, kind: input, shape index: {}]
  %s1 = inlined_call_operand.vmem [shape: f32[1,16], index: 1, kind: input, shape index: {}]
  %s2 = inlined_call_operand.vmem [shape: f32[1,16], index: 2, kind: input, shape index: {}]
  %s3 = inlined_call_operand.vmem [shape: bf16[2,10,6,16], index: 3, kind: input, shape index: {}, may-alias: {3,4,5}]
  %s4 = inlined_call_operand.vmem [shape: bf16[2,10,6,16], index: 4, kind: input, shape index: {}, may-alias: {3,4,5}]
  %s5 = inlined_call_operand.vmem [shape: bf16[2,10,6,16], index: 5, kind: input, shape index: {}, may-alias: {3,4,5}]
  %s6 = inlined_call_operand.vmem [shape: f32[2,8,4,16], index: 6, kind: output, shape index: {}]
  %s7 = sld [smem:[#allocation0]]
  $region57: #{crnn_vgg_forward.18} parent=0
    _
  %s9 = ssub.s32 1, %s7
  %s10 = scalar_select 0, %s9, %s7
  loop: start=0, step=1, limit=18
  $region2: #{crnn_vgg_forward.18} parent=0 // loop_pre_header
    _
  $region3: #{crnn_vgg_forward.18} parent=0 // loop_header
    %s12 = sphi 0, %s16
    %p13 = scmp.ge.s32.totalorder %s12, 18
    %s19 = sphi 0, %s31
    %s20 = sphi 0, %s27
    %s21 = sphi 0, %s19
    %s22 = sphi 0, %s20
    %s23 = sphi 0, %s21
    %s24 = sphi 0, %s22
    %s32 = sphi 0, %s32
    %s34 = sphi 0, %s32
    %s35 = sphi 0, %s34
    %s49 = sphi 0, %s35
    %s53 = sphi 0, %s53
    %s55 = sphi 0, %s53
    %s56 = sphi 0, %s55
    %s70 = sphi 0, %s56
    %s74 = sphi 0, %s74
    %s76 = sphi 0, %s74
    %s77 = sphi 0, %s76
    %s91 = sphi 0, %s77
    %s99 = sphi 0, %s101
    %s102 = sphi 0, %s99
    %s103 = sphi 0, %s102
    %s119 = sphi 0, %s103
    %s129 = sphi 0, %s131
    %s132 = sphi 0, %s129
    %s133 = sphi 0, %s132
    %s149 = sphi 0, %s133
    %s159 = sphi 0, %s161
    %s162 = sphi 0, %s159
    %s163 = sphi 0, %s162
    %s179 = sphi 0, %s163
    %s187 = sphi 0, %s189
    %s190 = sphi 0, %s187
    %s191 = sphi 0, %s190
    %s207 = sphi 0, %s191
  $region4: #{crnn_vgg_forward.18} parent=0 // loop_header_branch
    %15 = sbr.rel (%p13) target = $region8
  $region5: #{crnn_vgg_forward.18} parent=0 // loop_body
    %s17 = ssub.s32 %s12, 1
    %s18 = ssub.s32 %s12, 2
    %s25 = sadd.s32 1, %s20
    %p26 = scmp.ge.s32.totalorder %s25, 8
    %s27 = scalar_select %p26, 0, %s25
    %s28 = sadd.s32 1, %s19
    %s29 = scalar_select %p26, %s28, %s19
    %p30 = scmp.ge.s32.totalorder %s29, 2
    %s31 = scalar_select %p30, 0, %s29
    %s33 = sadd.s32 %s32, 1
    %p36 = scmp.eq.s32.totalorder %s12, 15
    %p37 = scmp.ne.s32.totalorder %s32, %s34
    %p38 = scmp.eq.s32.totalorder %s12, 0
    %p39 = por %p37, %p38
    %p40 = scmp.ne.s32.totalorder %s32, %s34
    %p41 = scmp.eq.s32.totalorder %s17, 15
    %p42 = por %p40, %p41
    %p43 = scmp.ne.s32.totalorder %s34, %s35
    %p44 = scmp.eq.s32.totalorder %s17, 0
    %p45 = por %p43, %p44
    %p46 = scmp.ne.s32.totalorder %s34, %s35
    %p47 = scmp.eq.s32.totalorder %s18, 15
    %p48 = por %p46, %p47
    %p50 = scmp.ne.s32.totalorder %s35, %s49
    %p51 = scmp.eq.s32.totalorder %s18, 0
    %p52 = por %p50, %p51
    %s54 = sadd.s32 %s53, 1
    %p57 = scmp.eq.s32.totalorder %s12, 15
    %p58 = scmp.ne.s32.totalorder %s53, %s55
    %p59 = scmp.eq.s32.totalorder %s12, 0
    %p60 = por %p58, %p59
    %p61 = scmp.ne.s32.totalorder %s53, %s55
    %p62 = scmp.eq.s32.totalorder %s17, 15
    %p63 = por %p61, %p62
    %p64 = scmp.ne.s32.totalorder %s55, %s56
    %p65 = scmp.eq.s32.totalorder %s17, 0
    %p66 = por %p64, %p65
    %p67 = scmp.ne.s32.totalorder %s55, %s56
    %p68 = scmp.eq.s32.totalorder %s18, 15
    %p69 = por %p67, %p68
    %p71 = scmp.ne.s32.totalorder %s56, %s70
    %p72 = scmp.eq.s32.totalorder %s18, 0
    %p73 = por %p71, %p72
    %s75 = sadd.s32 %s74, 1
    %p78 = scmp.eq.s32.totalorder %s12, 15
    %p79 = scmp.ne.s32.totalorder %s74, %s76
    %p80 = scmp.eq.s32.totalorder %s12, 0
    %p81 = por %p79, %p80
    %p82 = scmp.ne.s32.totalorder %s74, %s76
    %p83 = scmp.eq.s32.totalorder %s17, 15
    %p84 = por %p82, %p83
    %p85 = scmp.ne.s32.totalorder %s76, %s77
    %p86 = scmp.eq.s32.totalorder %s17, 0
    %p87 = por %p85, %p86
    %p88 = scmp.ne.s32.totalorder %s76, %s77
    %p89 = scmp.eq.s32.totalorder %s18, 15
    %p90 = por %p88, %p89
    %p92 = scmp.ne.s32.totalorder %s77, %s91
    %p93 = scmp.eq.s32.totalorder %s18, 0
    %p94 = por %p92, %p93
    %s95 = ssub.s32 %s19, %s31
    %s96 = ssub.s32 %s20, %s27
    %s97 = sor.u32 %s95, %s96
    %p98 = scmp.eq.s32.totalorder %s97, 0
    %s100 = sadd.s32 %s99, 1
    %s101 = scalar_select %p98, %s99, %s100
    %p104 = pneg %p98
    %p105 = scmp.eq.s32.totalorder %s12, 15
    %p106 = por %p104, %p105
    %p107 = scmp.ne.s32.totalorder %s99, %s102
    %p108 = scmp.eq.s32.totalorder %s12, 0
    %p109 = por %p107, %p108
    %p110 = scmp.ne.s32.totalorder %s99, %s102
    %p111 = scmp.eq.s32.totalorder %s17, 15
    %p112 = por %p110, %p111
    %p113 = scmp.ne.s32.totalorder %s102, %s103
    %p114 = scmp.eq.s32.totalorder %s17, 0
    %p115 = por %p113, %p114
    %p116 = scmp.ne.s32.totalorder %s102, %s103
    %p117 = scmp.eq.s32.totalorder %s18, 15
    %p118 = por %p116, %p117
    %p120 = scmp.ne.s32.totalorder %s103, %s119
    %p121 = scmp.eq.s32.totalorder %s18, 0
    %p122 = por %p120, %p121
    %s123 = sadd.s32 %s20, 1
    %s124 = sadd.s32 %s27, 1
    %s125 = ssub.s32 %s19, %s31
    %s126 = ssub.s32 %s123, %s124
    %s127 = sor.u32 %s125, %s126
    %p128 = scmp.eq.s32.totalorder %s127, 0
    %s130 = sadd.s32 %s129, 1
    %s131 = scalar_select %p128, %s129, %s130
    %p134 = pneg %p128
    %p135 = scmp.eq.s32.totalorder %s12, 15
    %p136 = por %p134, %p135
    %p137 = scmp.ne.s32.totalorder %s129, %s132
    %p138 = scmp.eq.s32.totalorder %s12, 0
    %p139 = por %p137, %p138
    %p140 = scmp.ne.s32.totalorder %s129, %s132
    %p141 = scmp.eq.s32.totalorder %s17, 15
    %p142 = por %p140, %p141
    %p143 = scmp.ne.s32.totalorder %s132, %s133
    %p144 = scmp.eq.s32.totalorder %s17, 0
    %p145 = por %p143, %p144
    %p146 = scmp.ne.s32.totalorder %s132, %s133
    %p147 = scmp.eq.s32.totalorder %s18, 15
    %p148 = por %p146, %p147
    %p150 = scmp.ne.s32.totalorder %s133, %s149
    %p151 = scmp.eq.s32.totalorder %s18, 0
    %p152 = por %p150, %p151
    %s153 = sadd.s32 %s20, 2
    %s154 = sadd.s32 %s27, 2
    %s155 = ssub.s32 %s19, %s31
    %s156 = ssub.s32 %s153, %s154
    %s157 = sor.u32 %s155, %s156
    %p158 = scmp.eq.s32.totalorder %s157, 0
    %s160 = sadd.s32 %s159, 1
    %s161 = scalar_select %p158, %s159, %s160
    %p164 = pneg %p158
    %p165 = scmp.eq.s32.totalorder %s12, 15
    %p166 = por %p164, %p165
    %p167 = scmp.ne.s32.totalorder %s159, %s162
    %p168 = scmp.eq.s32.totalorder %s12, 0
    %p169 = por %p167, %p168
    %p170 = scmp.ne.s32.totalorder %s159, %s162
    %p171 = scmp.eq.s32.totalorder %s17, 15
    %p172 = por %p170, %p171
    %p173 = scmp.ne.s32.totalorder %s162, %s163
    %p174 = scmp.eq.s32.totalorder %s17, 0
    %p175 = por %p173, %p174
    %p176 = scmp.ne.s32.totalorder %s162, %s163
    %p177 = scmp.eq.s32.totalorder %s18, 15
    %p178 = por %p176, %p177
    %p180 = scmp.ne.s32.totalorder %s163, %s179
    %p181 = scmp.eq.s32.totalorder %s18, 0
    %p182 = por %p180, %p181
    %s183 = ssub.s32 %s19, %s31
    %s184 = ssub.s32 %s20, %s27
    %s185 = sor.u32 %s183, %s184
    %p186 = scmp.eq.s32.totalorder %s185, 0
    %s188 = sadd.s32 %s187, 1
    %s189 = scalar_select %p186, %s187, %s188
    %p192 = pneg %p186
    %p193 = scmp.eq.s32.totalorder %s12, 15
    %p194 = por %p192, %p193
    %p195 = scmp.ne.s32.totalorder %s187, %s190
    %p196 = scmp.eq.s32.totalorder %s12, 0
    %p197 = por %p195, %p196
    %p198 = scmp.ne.s32.totalorder %s187, %s190
    %p199 = scmp.eq.s32.totalorder %s17, 15
    %p200 = por %p198, %p199
    %p201 = scmp.ne.s32.totalorder %s190, %s191
    %p202 = scmp.eq.s32.totalorder %s17, 0
    %p203 = por %p201, %p202
    %p204 = scmp.ne.s32.totalorder %s190, %s191
    %p205 = scmp.eq.s32.totalorder %s18, 15
    %p206 = por %p204, %p205
    %p208 = scmp.ne.s32.totalorder %s191, %s207
    %p209 = scmp.eq.s32.totalorder %s18, 0
    %p210 = por %p208, %p209
    %p211 = scmp.le.s32.totalorder 1, %s12
    %p212 = scmp.lt.s32.totalorder %s12, 17
    %p213 = pnand %p211, %p212
    %p214 = pneg %p213
    // Predicated region
    $region9: #{crnn_vgg_forward.18} parent=5 // pred_check
      _
    $region10: #{crnn_vgg_forward.18} parent=5 // pred_check_branch
      %216 = sbr.rel (%p213) target = $region12
    $region11: #{crnn_vgg_forward.18} parent=5 // pred_region
      %s217 = ssub.s32 %s12, 1
      // Predicated region
      $region13: #{crnn_vgg_forward.18} parent=11 // pred_check
        %p218 = pneg %p45
      $region14: #{crnn_vgg_forward.18} parent=11 // pred_check_branch
        %220 = sbr.rel (%p218) target = $region16
      $region15: #{crnn_vgg_forward.18} parent=11 // pred_region
        _
      $region16: #{crnn_vgg_forward.18} parent=11 // pred_fallthru
        _
      // Predicated region
      $region17: #{crnn_vgg_forward.18} parent=11 // pred_check
        %p221 = pneg %p66
      $region18: #{crnn_vgg_forward.18} parent=11 // pred_check_branch
        %223 = sbr.rel (%p221) target = $region20
      $region19: #{crnn_vgg_forward.18} parent=11 // pred_region
        _
      $region20: #{crnn_vgg_forward.18} parent=11 // pred_fallthru
        _
      // Predicated region
      $region21: #{crnn_vgg_forward.18} parent=11 // pred_check
        %p224 = pneg %p87
      $region22: #{crnn_vgg_forward.18} parent=11 // pred_check_branch
        %226 = sbr.rel (%p224) target = $region24
      $region23: #{crnn_vgg_forward.18} parent=11 // pred_region
        _
      $region24: #{crnn_vgg_forward.18} parent=11 // pred_fallthru
        _
    $region12: #{crnn_vgg_forward.18} parent=5 // pred_fallthru
      _
    %p227 = scmp.lt.s32.totalorder %s12, 16
    // Predicated region
    $region25: #{crnn_vgg_forward.18} parent=5 // pred_check
      %p228 = pneg %p227
    $region26: #{crnn_vgg_forward.18} parent=5 // pred_check_branch
      %230 = sbr.rel (%p228) target = $region28
    $region27: #{crnn_vgg_forward.18} parent=5 // pred_region
      // Predicated region
      $region29: #{crnn_vgg_forward.18} parent=27 // pred_check
        %p231 = pneg %p109
      $region30: #{crnn_vgg_forward.18} parent=27 // pred_check_branch
        %233 = sbr.rel (%p231) target = $region32
      $region31: #{crnn_vgg_forward.18} parent=27 // pred_region
        %p234 = scmp.lt.s32.totalorder %s19, 1
        %s235 = scalar_select %p234, %s19, 1
        %p236 = scmp.lt.s32.totalorder %s20, 9
        %s237 = scalar_select %p236, %s20, 9
        %s238 = smul.addr %s235, 10
        %s239 = sadd.s32 %s237, %s238
        %s240 = smul.addr %s239, 4
        %s241 = scalar_lea.vmem %s3, %s240
      $region32: #{crnn_vgg_forward.18} parent=27 // pred_fallthru
        _
      // Predicated region
      $region33: #{crnn_vgg_forward.18} parent=27 // pred_check
        %p242 = pneg %p139
      $region34: #{crnn_vgg_forward.18} parent=27 // pred_check_branch
        %244 = sbr.rel (%p242) target = $region36
      $region35: #{crnn_vgg_forward.18} parent=27 // pred_region
        %s245 = sadd.s32 %s20, 1
        %p246 = scmp.lt.s32.totalorder %s19, 1
        %s247 = scalar_select %p246, %s19, 1
        %p248 = scmp.lt.s32.totalorder %s245, 9
        %s249 = scalar_select %p248, %s245, 9
        %s250 = smul.addr %s247, 10
        %s251 = sadd.s32 %s249, %s250
        %s252 = smul.addr %s251, 4
        %s253 = scalar_lea.vmem %s4, %s252
        %s254 = sadd.s32 %s20, 1
      $region36: #{crnn_vgg_forward.18} parent=27 // pred_fallthru
        _
      // Predicated region
      $region37: #{crnn_vgg_forward.18} parent=27 // pred_check
        %p255 = pneg %p169
      $region38: #{crnn_vgg_forward.18} parent=27 // pred_check_branch
        %257 = sbr.rel (%p255) target = $region40
      $region39: #{crnn_vgg_forward.18} parent=27 // pred_region
        %s258 = sadd.s32 %s20, 2
        %p259 = scmp.lt.s32.totalorder %s19, 1
        %s260 = scalar_select %p259, %s19, 1
        %p261 = scmp.lt.s32.totalorder %s258, 9
        %s262 = scalar_select %p261, %s258, 9
        %s263 = smul.addr %s260, 10
        %s264 = sadd.s32 %s262, %s263
        %s265 = smul.addr %s264, 4
        %s266 = scalar_lea.vmem %s5, %s265
        %s267 = sadd.s32 %s20, 2
      $region40: #{crnn_vgg_forward.18} parent=27 // pred_fallthru
        _
    $region28: #{crnn_vgg_forward.18} parent=5 // pred_fallthru
      _
    %p268 = scmp.le.s32.totalorder 1, %s12
    %p269 = scmp.lt.s32.totalorder %s12, 17
    %p270 = pnand %p268, %p269
    %p271 = pneg %p270
    // Predicated region
    $region41: #{crnn_vgg_forward.18} parent=5 // pred_check
      _
    $region42: #{crnn_vgg_forward.18} parent=5 // pred_check_branch
      %273 = sbr.rel (%p270) target = $region44
    $region43: #{crnn_vgg_forward.18} parent=5 // pred_region
      %s274 = ssub.s32 %s12, 1
      %p275 = pneg %p45
      %p276 = pneg %p42
      %p277 = pneg %p66
      %p278 = pneg %p63
      %p279 = pneg %p87
      %p280 = pneg %p84
      %p281 = scmp.lt.s32.totalorder %s21, 1
      %s282 = scalar_select %p281, %s21, 1
      %p283 = scmp.lt.s32.totalorder %s22, 9
      %s284 = scalar_select %p283, %s22, 9
      %s285 = smul.addr %s282, 10
      %s286 = sadd.s32 %s284, %s285
      %s287 = smul.addr %s286, 4
      %s288 = scalar_lea.vmem %s3, %s287
      %p289 = pneg %p115
      %p290 = pneg %p112
      %s291 = sadd.s32 %s22, 1
      %p292 = scmp.lt.s32.totalorder %s21, 1
      %s293 = scalar_select %p292, %s21, 1
      %p294 = scmp.lt.s32.totalorder %s291, 9
      %s295 = scalar_select %p294, %s291, 9
      %s296 = smul.addr %s293, 10
      %s297 = sadd.s32 %s295, %s296
      %s298 = smul.addr %s297, 4
      %s299 = scalar_lea.vmem %s4, %s298
      %p300 = pneg %p145
      %p301 = pneg %p142
      %s302 = sadd.s32 %s22, 2
      %p303 = scmp.lt.s32.totalorder %s21, 1
      %s304 = scalar_select %p303, %s21, 1
      %p305 = scmp.lt.s32.totalorder %s302, 9
      %s306 = scalar_select %p305, %s302, 9
      %s307 = smul.addr %s304, 10
      %s308 = sadd.s32 %s306, %s307
      %s309 = smul.addr %s308, 4
      %s310 = scalar_lea.vmem %s5, %s309
      %p311 = pneg %p175
      %p312 = pneg %p172
      %p313 = pneg %p203
      %p314 = pneg %p200
      %p315 = scmp.lt.s32.totalorder %s21, 1
      %s316 = scalar_select %p315, %s21, 1
      %p317 = scmp.lt.s32.totalorder %s22, 7
      %s318 = scalar_select %p317, %s22, 7
      %s319 = smul.addr %s316, 8
      %s320 = sadd.s32 %s318, %s319
      %s321 = smul.addr %s320, 4
      %s322 = scalar_lea.vmem %s6, %s321
      %p323 = scmp.lt.s32.totalorder %s21, 1
      %s324 = scalar_select %p323, %s21, 1
      %p325 = scmp.lt.s32.totalorder %s22, 9
      %s326 = scalar_select %p325, %s22, 9
      %s327 = smul.addr %s324, 10
      %s328 = sadd.s32 %s326, %s327
      %s329 = smul.addr %s328, 4
      %s330 = scalar_lea.vmem %s3, %s329
      %s331 = sadd.s32 %s22, 1
      %p332 = scmp.lt.s32.totalorder %s21, 1
      %s333 = scalar_select %p332, %s21, 1
      %p334 = scmp.lt.s32.totalorder %s331, 9
      %s335 = scalar_select %p334, %s331, 9
      %s336 = smul.addr %s333, 10
      %s337 = sadd.s32 %s335, %s336
      %s338 = smul.addr %s337, 4
      %s339 = scalar_lea.vmem %s4, %s338
      %s340 = sadd.s32 %s22, 1
      %s341 = sadd.s32 %s22, 2
      %p342 = scmp.lt.s32.totalorder %s21, 1
      %s343 = scalar_select %p342, %s21, 1
      %p344 = scmp.lt.s32.totalorder %s341, 9
      %s345 = scalar_select %p344, %s341, 9
      %s346 = smul.addr %s343, 10
      %s347 = sadd.s32 %s345, %s346
      %s348 = smul.addr %s347, 4
      %s349 = scalar_lea.vmem %s5, %s348
      %s350 = sadd.s32 %s22, 2
      %p351 = scmp.lt.s32.totalorder %s21, 1
      %s352 = scalar_select %p351, %s21, 1
      %p353 = scmp.lt.s32.totalorder %s22, 7
      %s354 = scalar_select %p353, %s22, 7
      %s355 = smul.addr %s352, 8
      %s356 = sadd.s32 %s354, %s355
      %s357 = smul.addr %s356, 4
      %s358 = scalar_lea.vmem %s6, %s357
      %v360 = vld [vmem:[%s330] sm:$0x7]
      %v361 = vld [vmem:[%s0] sm:$0xf]
      %v362 = vld [vmem:[%s0 + $0x4] sm:$0xf]
      %s363 = scalar_lea.vmem %s0, 8
      %v364 = vld [vmem:[%s363] sm:$0xf]
      %v365 = vld [vmem:[%s363 + $0x4] sm:$0xf]
      %v367 = vunpack.c.l.b16 %v360
      %v368 = vpack.c.b16 %v367, %v367
      %v370 = vshrl.u32 %v368, 16
      %v372 = vshll.u32 %v368, 16
      %v374 = vrot.slane %v372, 1
      %v375 = vor.u32 %v370, %v374
      %v378 = vunpack.c.l.b16 %v364
      %v379 = vunpack.c.l.b16 %v365
      %v380 = vpack.c.b16 %v379, %v378
      %vm382 = vcmask 130048
      %v384 = vsel %vm382, %v375, 0
      %386 = vmatpush.bf16.msra.mxu0 0
      %387 = vmatpush.bf16.msra.mxu0 0
      %388 = vmatpush.bf16.msra.mxu0 0
      %389 = vmatpush.bf16.msra.mxu0 0
      %390 = vmatpush.bf16.msra.mxu0 0
      %391 = vmatpush.bf16.msra.mxu0 0
      %392 = vmatpush.bf16.msra.mxu0 0
      %393 = vmatpush.bf16.msra.mxu0 %v380
      %394 = vmatmul.bf16.gmra.mxu0 %v384
      %v395 = vpop.f32.mrf.mxu0
      %v396 = vadd.f32 0.0, %v395
      %v397 = vpop.f32.mrf.mxu0
      %398 = vdwg.mxu0
      %v401 = vunpack.c.l.b16 %v361
      %v402 = vunpack.c.l.b16 %v362
      %v403 = vpack.c.b16 %v402, %v401
      %v406 = vsel %vm382, %v360, 0
      %408 = vmatpush.bf16.msra.mxu0 0
      %409 = vmatpush.bf16.msra.mxu0 0
      %410 = vmatpush.bf16.msra.mxu0 0
      %411 = vmatpush.bf16.msra.mxu0 0
      %412 = vmatpush.bf16.msra.mxu0 0
      %413 = vmatpush.bf16.msra.mxu0 0
      %414 = vmatpush.bf16.msra.mxu0 0
      %415 = vmatpush.bf16.msra.mxu0 %v403
      %416 = vmatmul.bf16.gmra.mxu0 %v406
      %v417 = vpop.f32.mrf.mxu0
      %v418 = vadd.f32 %v396, %v417
      %v419 = vpop.f32.mrf.mxu0
      %420 = vdwg.mxu0
      %s421 = scalar_lea.vmem %s0, 16
      %v422 = vld [vmem:[%s421] sm:$0xf]
      %v423 = vld [vmem:[%s421 + $0x4] sm:$0xf]
      %v424 = vrot.slane %v368, 1
      %v427 = vunpack.c.l.b16 %v422
      %v428 = vunpack.c.l.b16 %v423
      %v429 = vpack.c.b16 %v428, %v427
      %v432 = vsel %vm382, %v424, 0
      %434 = vmatpush.bf16.msra.mxu0 0
      %435 = vmatpush.bf16.msra.mxu0 0
      %436 = vmatpush.bf16.msra.mxu0 0
      %437 = vmatpush.bf16.msra.mxu0 0
      %438 = vmatpush.bf16.msra.mxu0 0
      %439 = vmatpush.bf16.msra.mxu0 0
      %440 = vmatpush.bf16.msra.mxu0 0
      %441 = vmatpush.bf16.msra.mxu0 %v429
      %442 = vmatmul.bf16.gmra.mxu0 %v432
      %v443 = vpop.f32.mrf.mxu0
      %v444 = vadd.f32 0.0, %v443
      %v445 = vpop.f32.mrf.mxu0
      %446 = vdwg.mxu0
      %v447 = vadd.f32 %v418, %v444
      %v448 = vld [vmem:[%s339] sm:$0x7]
      %s449 = scalar_lea.vmem %s0, 24
      %v450 = vld [vmem:[%s449] sm:$0xf]
      %v451 = vld [vmem:[%s449 + $0x4] sm:$0xf]
      %v454 = vunpack.c.l.b16 %v450
      %v455 = vunpack.c.l.b16 %v451
      %v456 = vpack.c.b16 %v455, %v454
      %v459 = vsel %vm382, %v448, 0
      %461 = vmatpush.bf16.msra.mxu0 0
      %462 = vmatpush.bf16.msra.mxu0 0
      %463 = vmatpush.bf16.msra.mxu0 0
      %464 = vmatpush.bf16.msra.mxu0 0
      %465 = vmatpush.bf16.msra.mxu0 0
      %466 = vmatpush.bf16.msra.mxu0 0
      %467 = vmatpush.bf16.msra.mxu0 0
      %468 = vmatpush.bf16.msra.mxu0 %v456
      %469 = vmatmul.bf16.gmra.mxu0 %v459
      %v470 = vpop.f32.mrf.mxu0
      %v471 = vadd.f32 0.0, %v470
      %v472 = vpop.f32.mrf.mxu0
      %473 = vdwg.mxu0
      %v474 = vadd.f32 %v447, %v471
      %s475 = scalar_lea.vmem %s0, 32
      %v476 = vld [vmem:[%s475] sm:$0xf]
      %v477 = vld [vmem:[%s475 + $0x4] sm:$0xf]
      %v479 = vunpack.c.l.b16 %v448
      %v480 = vpack.c.b16 %v479, %v479
      %v482 = vshrl.u32 %v480, 16
      %v484 = vshll.u32 %v480, 16
      %v486 = vrot.slane %v484, 1
      %v487 = vor.u32 %v482, %v486
      %v490 = vunpack.c.l.b16 %v476
      %v491 = vunpack.c.l.b16 %v477
      %v492 = vpack.c.b16 %v491, %v490
      %v495 = vsel %vm382, %v487, 0
      %497 = vmatpush.bf16.msra.mxu0 0
      %498 = vmatpush.bf16.msra.mxu0 0
      %499 = vmatpush.bf16.msra.mxu0 0
      %500 = vmatpush.bf16.msra.mxu0 0
      %501 = vmatpush.bf16.msra.mxu0 0
      %502 = vmatpush.bf16.msra.mxu0 0
      %503 = vmatpush.bf16.msra.mxu0 0
      %504 = vmatpush.bf16.msra.mxu0 %v492
      %505 = vmatmul.bf16.gmra.mxu0 %v495
      %v506 = vpop.f32.mrf.mxu0
      %v507 = vadd.f32 0.0, %v506
      %v508 = vpop.f32.mrf.mxu0
      %509 = vdwg.mxu0
      %v510 = vadd.f32 %v474, %v507
      %s511 = scalar_lea.vmem %s0, 40
      %v512 = vld [vmem:[%s511] sm:$0xf]
      %v513 = vld [vmem:[%s511 + $0x4] sm:$0xf]
      %v514 = vrot.slane %v480, 1
      %v517 = vunpack.c.l.b16 %v512
      %v518 = vunpack.c.l.b16 %v513
      %v519 = vpack.c.b16 %v518, %v517
      %v522 = vsel %vm382, %v514, 0
      %524 = vmatpush.bf16.msra.mxu0 0
      %525 = vmatpush.bf16.msra.mxu0 0
      %526 = vmatpush.bf16.msra.mxu0 0
      %527 = vmatpush.bf16.msra.mxu0 0
      %528 = vmatpush.bf16.msra.mxu0 0
      %529 = vmatpush.bf16.msra.mxu0 0
      %530 = vmatpush.bf16.msra.mxu0 0
      %531 = vmatpush.bf16.msra.mxu0 %v519
      %532 = vmatmul.bf16.gmra.mxu0 %v522
      %v533 = vpop.f32.mrf.mxu0
      %v534 = vadd.f32 0.0, %v533
      %v535 = vpop.f32.mrf.mxu0
      %536 = vdwg.mxu0
      %v537 = vadd.f32 %v510, %v534
      %v538 = vld [vmem:[%s349] sm:$0x7]
      %s539 = scalar_lea.vmem %s0, 48
      %v540 = vld [vmem:[%s539] sm:$0xf]
      %v541 = vld [vmem:[%s539 + $0x4] sm:$0xf]
      %v544 = vunpack.c.l.b16 %v540
      %v545 = vunpack.c.l.b16 %v541
      %v546 = vpack.c.b16 %v545, %v544
      %v549 = vsel %vm382, %v538, 0
      %551 = vmatpush.bf16.msra.mxu0 0
      %552 = vmatpush.bf16.msra.mxu0 0
      %553 = vmatpush.bf16.msra.mxu0 0
      %554 = vmatpush.bf16.msra.mxu0 0
      %555 = vmatpush.bf16.msra.mxu0 0
      %556 = vmatpush.bf16.msra.mxu0 0
      %557 = vmatpush.bf16.msra.mxu0 0
      %558 = vmatpush.bf16.msra.mxu0 %v546
      %559 = vmatmul.bf16.gmra.mxu0 %v549
      %v560 = vpop.f32.mrf.mxu0
      %v561 = vadd.f32 0.0, %v560
      %v562 = vpop.f32.mrf.mxu0
      %563 = vdwg.mxu0
      %v564 = vadd.f32 %v537, %v561
      %s565 = scalar_lea.vmem %s0, 56
      %v566 = vld [vmem:[%s565] sm:$0xf]
      %v567 = vld [vmem:[%s565 + $0x4] sm:$0xf]
      %v569 = vunpack.c.l.b16 %v538
      %v570 = vpack.c.b16 %v569, %v569
      %v572 = vshrl.u32 %v570, 16
      %v574 = vshll.u32 %v570, 16
      %v576 = vrot.slane %v574, 1
      %v577 = vor.u32 %v572, %v576
      %v580 = vunpack.c.l.b16 %v566
      %v581 = vunpack.c.l.b16 %v567
      %v582 = vpack.c.b16 %v581, %v580
      %v585 = vsel %vm382, %v577, 0
      %587 = vmatpush.bf16.msra.mxu0 0
      %588 = vmatpush.bf16.msra.mxu0 0
      %589 = vmatpush.bf16.msra.mxu0 0
      %590 = vmatpush.bf16.msra.mxu0 0
      %591 = vmatpush.bf16.msra.mxu0 0
      %592 = vmatpush.bf16.msra.mxu0 0
      %593 = vmatpush.bf16.msra.mxu0 0
      %594 = vmatpush.bf16.msra.mxu0 %v582
      %595 = vmatmul.bf16.gmra.mxu0 %v585
      %v596 = vpop.f32.mrf.mxu0
      %v597 = vadd.f32 0.0, %v596
      %v598 = vpop.f32.mrf.mxu0
      %599 = vdwg.mxu0
      %v600 = vadd.f32 %v564, %v597
      %s601 = scalar_lea.vmem %s0, 64
      %v602 = vld [vmem:[%s601] sm:$0xf]
      %v603 = vld [vmem:[%s601 + $0x4] sm:$0xf]
      %v604 = vrot.slane %v570, 1
      %v607 = vunpack.c.l.b16 %v602
      %v608 = vunpack.c.l.b16 %v603
      %v609 = vpack.c.b16 %v608, %v607
      %v612 = vsel %vm382, %v604, 0
      %614 = vmatpush.bf16.msra.mxu0 0
      %615 = vmatpush.bf16.msra.mxu0 0
      %616 = vmatpush.bf16.msra.mxu0 0
      %617 = vmatpush.bf16.msra.mxu0 0
      %618 = vmatpush.bf16.msra.mxu0 0
      %619 = vmatpush.bf16.msra.mxu0 0
      %620 = vmatpush.bf16.msra.mxu0 0
      %621 = vmatpush.bf16.msra.mxu0 %v609
      %622 = vmatmul.bf16.gmra.mxu0 %v612
      %v623 = vpop.f32.mrf.mxu0
      %v624 = vadd.f32 0.0, %v623
      %v625 = vpop.f32.mrf.mxu0
      %626 = vdwg.mxu0
      %v627 = vadd.f32 %v600, %v624
      %v628 = vld [vmem:[%s1] sm:$0x1]
      %v630 = vperm.slane %v628, 0
      %v632 = vmul.f32 %v627, %v630
      %v633 = vld [vmem:[%s2] sm:$0x1]
      %v635 = vperm.slane %v633, 0
      %v637 = vadd.f32 %v632, %v635
      %v638 = vmax.f32 %v637, 0.0
      %vm639 = vcmask 125952
      %640 = vst.msk [vmem:[%s358] sm:$0xf] %vm639, %v638
      %p641 = scmp.lt.s32.totalorder %s21, 1
      %s642 = scalar_select %p641, %s21, 1
      %p643 = scmp.lt.s32.totalorder %s22, 7
      %s644 = scalar_select %p643, %s22, 7
      %s645 = smul.addr %s642, 8
      %s646 = sadd.s32 %s644, %s645
      %s647 = smul.addr %s646, 4
      %s648 = scalar_lea.vmem %s6, %s647
      // Predicated region
      $region45: #{crnn_vgg_forward.18} parent=43 // pred_check
        %p649 = pneg %p200
      $region46: #{crnn_vgg_forward.18} parent=43 // pred_check_branch
        %651 = sbr.rel (%p649) target = $region48
      $region47: #{crnn_vgg_forward.18} parent=43 // pred_region
        _
      $region48: #{crnn_vgg_forward.18} parent=43 // pred_fallthru
        _
    $region44: #{crnn_vgg_forward.18} parent=5 // pred_fallthru
      _
    %p652 = scmp.le.s32.totalorder 2, %s12
    // Predicated region
    $region49: #{crnn_vgg_forward.18} parent=5 // pred_check
      %p653 = pneg %p652
    $region50: #{crnn_vgg_forward.18} parent=5 // pred_check_branch
      %655 = sbr.rel (%p653) target = $region52
    $region51: #{crnn_vgg_forward.18} parent=5 // pred_region
      %s656 = ssub.s32 %s12, 2
      // Predicated region
      $region53: #{crnn_vgg_forward.18} parent=51 // pred_check
        %p657 = pneg %p206
      $region54: #{crnn_vgg_forward.18} parent=51 // pred_check_branch
        %659 = sbr.rel (%p657) target = $region56
      $region55: #{crnn_vgg_forward.18} parent=51 // pred_region
        %p660 = scmp.lt.s32.totalorder %s23, 1
        %s661 = scalar_select %p660, %s23, 1
        %p662 = scmp.lt.s32.totalorder %s24, 7
        %s663 = scalar_select %p662, %s24, 7
        %s664 = smul.addr %s661, 8
        %s665 = sadd.s32 %s663, %s664
        %s666 = smul.addr %s665, 4
        %s667 = scalar_lea.vmem %s6, %s666
      $region56: #{crnn_vgg_forward.18} parent=51 // pred_fallthru
        _
    $region52: #{crnn_vgg_forward.18} parent=5 // pred_fallthru
      _
  $region6: #{crnn_vgg_forward.18} parent=0 // loop_footer
    %s16 = sadd.s32 1, %s12
  $region7: #{crnn_vgg_forward.18} parent=0 // loop_footer_branch
    %11 = sbr.rel target = $region3
  $region8: #{crnn_vgg_forward.18} parent=0 // loop_exit
    _

// kernel: crnn_vgg_forward.21
$region0: #{crnn_vgg_forward.21}
  #allocation0 [shape = 'u32[]', space=smem, size = 0x4, offset = 0x4, fixed_abs, tag = 'smem constant byte address 0x4 - core index']
  #allocation1 [shape = 'u32[72,128]{1,0:T(1,128)}', space=vmem, size = 0x9000, scoped, tag = 'internal scratch']
  %s0 = inlined_call_operand.vmem [shape: f32[1,32], index: 0, kind: input, shape index: {}]
  %s1 = inlined_call_operand.vmem [shape: f32[1,32], index: 1, kind: input, shape index: {}]
  %s2 = inlined_call_operand.vmem [shape: f32[2,4,4,32], index: 2, kind: input, shape index: {}]
  %s3 = inlined_call_operand.vmem [shape: f32[2,4,4,32], index: 3, kind: output, shape index: {}]
  %s4 = sld [smem:[#allocation0]]
  $region45: #{crnn_vgg_forward.21} parent=0
    _
  %s6 = ssub.s32 1, %s4
  %s7 = scalar_select 0, %s6, %s4
  loop: start=0, step=1, limit=10
  $region2: #{crnn_vgg_forward.21} parent=0 // loop_pre_header
    _
  $region3: #{crnn_vgg_forward.21} parent=0 // loop_header
    %s9 = sphi 0, %s13
    %p10 = scmp.ge.s32.totalorder %s9, 10
    %s16 = sphi 0, %s28
    %s17 = sphi 0, %s24
    %s18 = sphi 0, %s16
    %s19 = sphi 0, %s17
    %s20 = sphi 0, %s18
    %s21 = sphi 0, %s19
    %s29 = sphi 0, %s29
    %s31 = sphi 0, %s29
    %s32 = sphi 0, %s31
    %s46 = sphi 0, %s32
    %s50 = sphi 0, %s50
    %s52 = sphi 0, %s50
    %s53 = sphi 0, %s52
    %s67 = sphi 0, %s53
    %s75 = sphi 0, %s77
    %s78 = sphi 0, %s75
    %s79 = sphi 0, %s78
    %s95 = sphi 0, %s79
    %s103 = sphi 0, %s105
    %s106 = sphi 0, %s103
    %s107 = sphi 0, %s106
    %s123 = sphi 0, %s107
  $region4: #{crnn_vgg_forward.21} parent=0 // loop_header_branch
    %12 = sbr.rel (%p10) target = $region8
  $region5: #{crnn_vgg_forward.21} parent=0 // loop_body
    %s14 = ssub.s32 %s9, 1
    %s15 = ssub.s32 %s9, 2
    %s22 = sadd.s32 1, %s17
    %p23 = scmp.ge.s32.totalorder %s22, 4
    %s24 = scalar_select %p23, 0, %s22
    %s25 = sadd.s32 1, %s16
    %s26 = scalar_select %p23, %s25, %s16
    %p27 = scmp.ge.s32.totalorder %s26, 2
    %s28 = scalar_select %p27, 0, %s26
    %s30 = sadd.s32 %s29, 1
    %p33 = scmp.eq.s32.totalorder %s9, 7
    %p34 = scmp.ne.s32.totalorder %s29, %s31
    %p35 = scmp.eq.s32.totalorder %s9, 0
    %p36 = por %p34, %p35
    %p37 = scmp.ne.s32.totalorder %s29, %s31
    %p38 = scmp.eq.s32.totalorder %s14, 7
    %p39 = por %p37, %p38
    %p40 = scmp.ne.s32.totalorder %s31, %s32
    %p41 = scmp.eq.s32.totalorder %s14, 0
    %p42 = por %p40, %p41
    %p43 = scmp.ne.s32.totalorder %s31, %s32
    %p44 = scmp.eq.s32.totalorder %s15, 7
    %p45 = por %p43, %p44
    %p47 = scmp.ne.s32.totalorder %s32, %s46
    %p48 = scmp.eq.s32.totalorder %s15, 0
    %p49 = por %p47, %p48
    %s51 = sadd.s32 %s50, 1
    %p54 = scmp.eq.s32.totalorder %s9, 7
    %p55 = scmp.ne.s32.totalorder %s50, %s52
    %p56 = scmp.eq.s32.totalorder %s9, 0
    %p57 = por %p55, %p56
    %p58 = scmp.ne.s32.totalorder %s50, %s52
    %p59 = scmp.eq.s32.totalorder %s14, 7
    %p60 = por %p58, %p59
    %p61 = scmp.ne.s32.totalorder %s52, %s53
    %p62 = scmp.eq.s32.totalorder %s14, 0
    %p63 = por %p61, %p62
    %p64 = scmp.ne.s32.totalorder %s52, %s53
    %p65 = scmp.eq.s32.totalorder %s15, 7
    %p66 = por %p64, %p65
    %p68 = scmp.ne.s32.totalorder %s53, %s67
    %p69 = scmp.eq.s32.totalorder %s15, 0
    %p70 = por %p68, %p69
    %s71 = ssub.s32 %s16, %s28
    %s72 = ssub.s32 %s17, %s24
    %s73 = sor.u32 %s71, %s72
    %p74 = scmp.eq.s32.totalorder %s73, 0
    %s76 = sadd.s32 %s75, 1
    %s77 = scalar_select %p74, %s75, %s76
    %p80 = pneg %p74
    %p81 = scmp.eq.s32.totalorder %s9, 7
    %p82 = por %p80, %p81
    %p83 = scmp.ne.s32.totalorder %s75, %s78
    %p84 = scmp.eq.s32.totalorder %s9, 0
    %p85 = por %p83, %p84
    %p86 = scmp.ne.s32.totalorder %s75, %s78
    %p87 = scmp.eq.s32.totalorder %s14, 7
    %p88 = por %p86, %p87
    %p89 = scmp.ne.s32.totalorder %s78, %s79
    %p90 = scmp.eq.s32.totalorder %s14, 0
    %p91 = por %p89, %p90
    %p92 = scmp.ne.s32.totalorder %s78, %s79
    %p93 = scmp.eq.s32.totalorder %s15, 7
    %p94 = por %p92, %p93
    %p96 = scmp.ne.s32.totalorder %s79, %s95
    %p97 = scmp.eq.s32.totalorder %s15, 0
    %p98 = por %p96, %p97
    %s99 = ssub.s32 %s16, %s28
    %s100 = ssub.s32 %s17, %s24
    %s101 = sor.u32 %s99, %s100
    %p102 = scmp.eq.s32.totalorder %s101, 0
    %s104 = sadd.s32 %s103, 1
    %s105 = scalar_select %p102, %s103, %s104
    %p108 = pneg %p102
    %p109 = scmp.eq.s32.totalorder %s9, 7
    %p110 = por %p108, %p109
    %p111 = scmp.ne.s32.totalorder %s103, %s106
    %p112 = scmp.eq.s32.totalorder %s9, 0
    %p113 = por %p111, %p112
    %p114 = scmp.ne.s32.totalorder %s103, %s106
    %p115 = scmp.eq.s32.totalorder %s14, 7
    %p116 = por %p114, %p115
    %p117 = scmp.ne.s32.totalorder %s106, %s107
    %p118 = scmp.eq.s32.totalorder %s14, 0
    %p119 = por %p117, %p118
    %p120 = scmp.ne.s32.totalorder %s106, %s107
    %p121 = scmp.eq.s32.totalorder %s15, 7
    %p122 = por %p120, %p121
    %p124 = scmp.ne.s32.totalorder %s107, %s123
    %p125 = scmp.eq.s32.totalorder %s15, 0
    %p126 = por %p124, %p125
    %p127 = scmp.le.s32.totalorder 1, %s9
    %p128 = scmp.lt.s32.totalorder %s9, 9
    %p129 = pnand %p127, %p128
    %p130 = pneg %p129
    // Predicated region
    $region9: #{crnn_vgg_forward.21} parent=5 // pred_check
      _
    $region10: #{crnn_vgg_forward.21} parent=5 // pred_check_branch
      %132 = sbr.rel (%p129) target = $region12
    $region11: #{crnn_vgg_forward.21} parent=5 // pred_region
      %s133 = ssub.s32 %s9, 1
      // Predicated region
      $region13: #{crnn_vgg_forward.21} parent=11 // pred_check
        %p134 = pneg %p42
      $region14: #{crnn_vgg_forward.21} parent=11 // pred_check_branch
        %136 = sbr.rel (%p134) target = $region16
      $region15: #{crnn_vgg_forward.21} parent=11 // pred_region
        _
      $region16: #{crnn_vgg_forward.21} parent=11 // pred_fallthru
        _
      // Predicated region
      $region17: #{crnn_vgg_forward.21} parent=11 // pred_check
        %p137 = pneg %p63
      $region18: #{crnn_vgg_forward.21} parent=11 // pred_check_branch
        %139 = sbr.rel (%p137) target = $region20
      $region19: #{crnn_vgg_forward.21} parent=11 // pred_region
        _
      $region20: #{crnn_vgg_forward.21} parent=11 // pred_fallthru
        _
    $region12: #{crnn_vgg_forward.21} parent=5 // pred_fallthru
      _
    %p140 = scmp.lt.s32.totalorder %s9, 8
    // Predicated region
    $region21: #{crnn_vgg_forward.21} parent=5 // pred_check
      %p141 = pneg %p140
    $region22: #{crnn_vgg_forward.21} parent=5 // pred_check_branch
      %143 = sbr.rel (%p141) target = $region24
    $region23: #{crnn_vgg_forward.21} parent=5 // pred_region
      // Predicated region
      $region25: #{crnn_vgg_forward.21} parent=23 // pred_check
        %p144 = pneg %p85
      $region26: #{crnn_vgg_forward.21} parent=23 // pred_check_branch
        %146 = sbr.rel (%p144) target = $region28
      $region27: #{crnn_vgg_forward.21} parent=23 // pred_region
        %p147 = scmp.lt.s32.totalorder %s16, 1
        %s148 = scalar_select %p147, %s16, 1
        %p149 = scmp.lt.s32.totalorder %s17, 3
        %s150 = scalar_select %p149, %s17, 3
        %s151 = smul.addr %s148, 4
        %s152 = sadd.s32 %s150, %s151
        %s153 = smul.addr %s152, 4
        %s154 = scalar_lea.vmem %s2, %s153
      $region28: #{crnn_vgg_forward.21} parent=23 // pred_fallthru
        _
    $region24: #{crnn_vgg_forward.21} parent=5 // pred_fallthru
      _
    %p155 = scmp.le.s32.totalorder 1, %s9
    %p156 = scmp.lt.s32.totalorder %s9, 9
    %p157 = pnand %p155, %p156
    %p158 = pneg %p157
    // Predicated region
    $region29: #{crnn_vgg_forward.21} parent=5 // pred_check
      _
    $region30: #{crnn_vgg_forward.21} parent=5 // pred_check_branch
      %160 = sbr.rel (%p157) target = $region32
    $region31: #{crnn_vgg_forward.21} parent=5 // pred_region
      %s161 = ssub.s32 %s9, 1
      %p162 = pneg %p42
      %p163 = pneg %p39
      %p164 = pneg %p63
      %p165 = pneg %p60
      %p166 = scmp.lt.s32.totalorder %s18, 1
      %s167 = scalar_select %p166, %s18, 1
      %p168 = scmp.lt.s32.totalorder %s19, 3
      %s169 = scalar_select %p168, %s19, 3
      %s170 = smul.addr %s167, 4
      %s171 = sadd.s32 %s169, %s170
      %s172 = smul.addr %s171, 4
      %s173 = scalar_lea.vmem %s2, %s172
      %p174 = pneg %p91
      %p175 = pneg %p88
      %p176 = pneg %p119
      %p177 = pneg %p116
      %p178 = scmp.lt.s32.totalorder %s18, 1
      %s179 = scalar_select %p178, %s18, 1
      %p180 = scmp.lt.s32.totalorder %s19, 3
      %s181 = scalar_select %p180, %s19, 3
      %s182 = smul.addr %s179, 4
      %s183 = sadd.s32 %s181, %s182
      %s184 = smul.addr %s183, 4
      %s185 = scalar_lea.vmem %s3, %s184
      %p186 = scmp.lt.s32.totalorder %s18, 1
      %s187 = scalar_select %p186, %s18, 1
      %p188 = scmp.lt.s32.totalorder %s19, 3
      %s189 = scalar_select %p188, %s19, 3
      %s190 = smul.addr %s187, 4
      %s191 = sadd.s32 %s189, %s190
      %s192 = smul.addr %s191, 4
      %s193 = scalar_lea.vmem %s2, %s192
      %p194 = scmp.lt.s32.totalorder %s18, 1
      %s195 = scalar_select %p194, %s18, 1
      %p196 = scmp.lt.s32.totalorder %s19, 3
      %s197 = scalar_select %p196, %s19, 3
      %s198 = smul.addr %s195, 4
      %s199 = sadd.s32 %s197, %s198
      %s200 = smul.addr %s199, 4
      %s201 = scalar_lea.vmem %s3, %s200
      %v202 = vld [vmem:[%s193] sm:$0xf]
      %v203 = vld [vmem:[%s0] sm:$0x1]
      %v205 = vperm.slane %v203, 0
      %v207 = vmul.f32 %v202, %v205
      %v208 = vld [vmem:[%s1] sm:$0x1]
      %v210 = vperm.slane %v208, 0
      %v212 = vadd.f32 %v207, %v210
      %v213 = vmax.f32 %v212, 0.0
      %vm214 = vcmask 257024
      %215 = vst.msk [vmem:[%s201] sm:$0xf] %vm214, %v213
      %p216 = scmp.lt.s32.totalorder %s18, 1
      %s217 = scalar_select %p216, %s18, 1
      %p218 = scmp.lt.s32.totalorder %s19, 3
      %s219 = scalar_select %p218, %s19, 3
      %s220 = smul.addr %s217, 4
      %s221 = sadd.s32 %s219, %s220
      %s222 = smul.addr %s221, 4
      %s223 = scalar_lea.vmem %s3, %s222
      // Predicated region
      $region33: #{crnn_vgg_forward.21} parent=31 // pred_check
        %p224 = pneg %p116
      $region34: #{crnn_vgg_forward.21} parent=31 // pred_check_branch
        %226 = sbr.rel (%p224) target = $region36
      $region35: #{crnn_vgg_forward.21} parent=31 // pred_region
        _
      $region36: #{crnn_vgg_forward.21} parent=31 // pred_fallthru
        _
    $region32: #{crnn_vgg_forward.21} parent=5 // pred_fallthru
      _
    %p227 = scmp.le.s32.totalorder 2, %s9
    // Predicated region
    $region37: #{crnn_vgg_forward.21} parent=5 // pred_check
      %p228 = pneg %p227
    $region38: #{crnn_vgg_forward.21} parent=5 // pred_check_branch
      %230 = sbr.rel (%p228) target = $region40
    $region39: #{crnn_vgg_forward.21} parent=5 // pred_region
      %s231 = ssub.s32 %s9, 2
      // Predicated region
      $region41: #{crnn_vgg_forward.21} parent=39 // pred_check
        %p232 = pneg %p122
      $region42: #{crnn_vgg_forward.21} parent=39 // pred_check_branch
        %234 = sbr.rel (%p232) target = $region44
      $region43: #{crnn_vgg_forward.21} parent=39 // pred_region
        %p235 = scmp.lt.s32.totalorder %s20, 1
        %s236 = scalar_select %p235, %s20, 1
        %p237 = scmp.lt.s32.totalorder %s21, 3
        %s238 = scalar_select %p237, %s21, 3
        %s239 = smul.addr %s236, 4
        %s240 = sadd.s32 %s238, %s239
        %s241 = smul.addr %s240, 4
        %s242 = scalar_lea.vmem %s3, %s241
      $region44: #{crnn_vgg_forward.21} parent=39 // pred_fallthru
        _
    $region40: #{crnn_vgg_forward.21} parent=5 // pred_fallthru
      _
  $region6: #{crnn_vgg_forward.21} parent=0 // loop_footer
    %s13 = sadd.s32 1, %s9
  $region7: #{crnn_vgg_forward.21} parent=0 // loop_footer_branch
    %8 = sbr.rel target = $region3
  $region8: #{crnn_vgg_forward.21} parent=0 // loop_exit
    _

// kernel: crnn_vgg_forward.20
$region0: #{crnn_vgg_forward.20}
  #allocation0 [shape = 'u32[]', space=smem, size = 0x4, offset = 0x4, fixed_abs, tag = 'smem constant byte address 0x4 - core index']
  #allocation1 [shape = 'u32[72,128]{1,0:T(1,128)}', space=vmem, size = 0x9000, scoped, tag = 'internal scratch']
  %s0 = inlined_call_operand.vmem [shape: bf16[3,3,16,32], index: 0, kind: input, shape index: {}]
  %s1 = inlined_call_operand.vmem [shape: f32[1,32], index: 1, kind: input, shape index: {}]
  %s2 = inlined_call_operand.vmem [shape: f32[1,32], index: 2, kind: input, shape index: {}]
  %s3 = inlined_call_operand.vmem [shape: bf16[2,6,6,16], index: 3, kind: input, shape index: {}, may-alias: {3,4,5}]
  %s4 = inlined_call_operand.vmem [shape: bf16[2,6,6,16], index: 4, kind: input, shape index: {}, may-alias: {3,4,5}]
  %s5 = inlined_call_operand.vmem [shape: bf16[2,6,6,16], index: 5, kind: input, shape index: {}, may-alias: {3,4,5}]
  %s6 = inlined_call_operand.vmem [shape: f32[2,4,4,32], index: 6, kind: output, shape index: {0}]
  %s7 = inlined_call_operand.vmem [shape: f32[1,32], index: 7, kind: output, shape index: {1}]
  %s8 = inlined_call_operand.vmem [shape: f32[1,32], index: 8, kind: output, shape index: {2}]
  %9 = xla_tuple %s6, %s7, %s8
  %s10 = sld [smem:[#allocation0]]
  $region77: #{crnn_vgg_forward.20} parent=0
    _
  %s12 = ssub.s32 1, %s10
  %s13 = scalar_select 0, %s12, %s10
  loop: start=0, step=1, limit=10
  $region2: #{crnn_vgg_forward.20} parent=0 // loop_pre_header
    _
  $region3: #{crnn_vgg_forward.20} parent=0 // loop_header
    %s15 = sphi 0, %s19
    %p16 = scmp.ge.s32.totalorder %s15, 10
    %s22 = sphi 0, %s34
    %s23 = sphi 0, %s30
    %s24 = sphi 0, %s22
    %s25 = sphi 0, %s23
    %s26 = sphi 0, %s24
    %s27 = sphi 0, %s25
    %s35 = sphi 0, %s35
    %s37 = sphi 0, %s35
    %s38 = sphi 0, %s37
    %s52 = sphi 0, %s38
    %s56 = sphi 0, %s56
    %s58 = sphi 0, %s56
    %s59 = sphi 0, %s58
    %s73 = sphi 0, %s59
    %s77 = sphi 0, %s77
    %s79 = sphi 0, %s77
    %s80 = sphi 0, %s79
    %s94 = sphi 0, %s80
    %s102 = sphi 0, %s104
    %s105 = sphi 0, %s102
    %s106 = sphi 0, %s105
    %s122 = sphi 0, %s106
    %s132 = sphi 0, %s134
    %s135 = sphi 0, %s132
    %s136 = sphi 0, %s135
    %s152 = sphi 0, %s136
    %s162 = sphi 0, %s164
    %s165 = sphi 0, %s162
    %s166 = sphi 0, %s165
    %s182 = sphi 0, %s166
    %s190 = sphi 0, %s192
    %s193 = sphi 0, %s190
    %s194 = sphi 0, %s193
    %s210 = sphi 0, %s194
    %s214 = sphi 0, %s214
    %s216 = sphi 0, %s214
    %s217 = sphi 0, %s216
    %s231 = sphi 0, %s217
    %s235 = sphi 0, %s235
    %s237 = sphi 0, %s235
    %s238 = sphi 0, %s237
    %s252 = sphi 0, %s238
  $region4: #{crnn_vgg_forward.20} parent=0 // loop_header_branch
    %18 = sbr.rel (%p16) target = $region8
  $region5: #{crnn_vgg_forward.20} parent=0 // loop_body
    %s20 = ssub.s32 %s15, 1
    %s21 = ssub.s32 %s15, 2
    %s28 = sadd.s32 1, %s23
    %p29 = scmp.ge.s32.totalorder %s28, 4
    %s30 = scalar_select %p29, 0, %s28
    %s31 = sadd.s32 1, %s22
    %s32 = scalar_select %p29, %s31, %s22
    %p33 = scmp.ge.s32.totalorder %s32, 2
    %s34 = scalar_select %p33, 0, %s32
    %s36 = sadd.s32 %s35, 1
    %p39 = scmp.eq.s32.totalorder %s15, 7
    %p40 = scmp.ne.s32.totalorder %s35, %s37
    %p41 = scmp.eq.s32.totalorder %s15, 0
    %p42 = por %p40, %p41
    %p43 = scmp.ne.s32.totalorder %s35, %s37
    %p44 = scmp.eq.s32.totalorder %s20, 7
    %p45 = por %p43, %p44
    %p46 = scmp.ne.s32.totalorder %s37, %s38
    %p47 = scmp.eq.s32.totalorder %s20, 0
    %p48 = por %p46, %p47
    %p49 = scmp.ne.s32.totalorder %s37, %s38
    %p50 = scmp.eq.s32.totalorder %s21, 7
    %p51 = por %p49, %p50
    %p53 = scmp.ne.s32.totalorder %s38, %s52
    %p54 = scmp.eq.s32.totalorder %s21, 0
    %p55 = por %p53, %p54
    %s57 = sadd.s32 %s56, 1
    %p60 = scmp.eq.s32.totalorder %s15, 7
    %p61 = scmp.ne.s32.totalorder %s56, %s58
    %p62 = scmp.eq.s32.totalorder %s15, 0
    %p63 = por %p61, %p62
    %p64 = scmp.ne.s32.totalorder %s56, %s58
    %p65 = scmp.eq.s32.totalorder %s20, 7
    %p66 = por %p64, %p65
    %p67 = scmp.ne.s32.totalorder %s58, %s59
    %p68 = scmp.eq.s32.totalorder %s20, 0
    %p69 = por %p67, %p68
    %p70 = scmp.ne.s32.totalorder %s58, %s59
    %p71 = scmp.eq.s32.totalorder %s21, 7
    %p72 = por %p70, %p71
    %p74 = scmp.ne.s32.totalorder %s59, %s73
    %p75 = scmp.eq.s32.totalorder %s21, 0
    %p76 = por %p74, %p75
    %s78 = sadd.s32 %s77, 1
    %p81 = scmp.eq.s32.totalorder %s15, 7
    %p82 = scmp.ne.s32.totalorder %s77, %s79
    %p83 = scmp.eq.s32.totalorder %s15, 0
    %p84 = por %p82, %p83
    %p85 = scmp.ne.s32.totalorder %s77, %s79
    %p86 = scmp.eq.s32.totalorder %s20, 7
    %p87 = por %p85, %p86
    %p88 = scmp.ne.s32.totalorder %s79, %s80
    %p89 = scmp.eq.s32.totalorder %s20, 0
    %p90 = por %p88, %p89
    %p91 = scmp.ne.s32.totalorder %s79, %s80
    %p92 = scmp.eq.s32.totalorder %s21, 7
    %p93 = por %p91, %p92
    %p95 = scmp.ne.s32.totalorder %s80, %s94
    %p96 = scmp.eq.s32.totalorder %s21, 0
    %p97 = por %p95, %p96
    %s98 = ssub.s32 %s22, %s34
    %s99 = ssub.s32 %s23, %s30
    %s100 = sor.u32 %s98, %s99
    %p101 = scmp.eq.s32.totalorder %s100, 0
    %s103 = sadd.s32 %s102, 1
    %s104 = scalar_select %p101, %s102, %s103
    %p107 = pneg %p101
    %p108 = scmp.eq.s32.totalorder %s15, 7
    %p109 = por %p107, %p108
    %p110 = scmp.ne.s32.totalorder %s102, %s105
    %p111 = scmp.eq.s32.totalorder %s15, 0
    %p112 = por %p110, %p111
    %p113 = scmp.ne.s32.totalorder %s102, %s105
    %p114 = scmp.eq.s32.totalorder %s20, 7
    %p115 = por %p113, %p114
    %p116 = scmp.ne.s32.totalorder %s105, %s106
    %p117 = scmp.eq.s32.totalorder %s20, 0
    %p118 = por %p116, %p117
    %p119 = scmp.ne.s32.totalorder %s105, %s106
    %p120 = scmp.eq.s32.totalorder %s21, 7
    %p121 = por %p119, %p120
    %p123 = scmp.ne.s32.totalorder %s106, %s122
    %p124 = scmp.eq.s32.totalorder %s21, 0
    %p125 = por %p123, %p124
    %s126 = sadd.s32 %s23, 1
    %s127 = sadd.s32 %s30, 1
    %s128 = ssub.s32 %s22, %s34
    %s129 = ssub.s32 %s126, %s127
    %s130 = sor.u32 %s128, %s129
    %p131 = scmp.eq.s32.totalorder %s130, 0
    %s133 = sadd.s32 %s132, 1
    %s134 = scalar_select %p131, %s132, %s133
    %p137 = pneg %p131
    %p138 = scmp.eq.s32.totalorder %s15, 7
    %p139 = por %p137, %p138
    %p140 = scmp.ne.s32.totalorder %s132, %s135
    %p141 = scmp.eq.s32.totalorder %s15, 0
    %p142 = por %p140, %p141
    %p143 = scmp.ne.s32.totalorder %s132, %s135
    %p144 = scmp.eq.s32.totalorder %s20, 7
    %p145 = por %p143, %p144
    %p146 = scmp.ne.s32.totalorder %s135, %s136
    %p147 = scmp.eq.s32.totalorder %s20, 0
    %p148 = por %p146, %p147
    %p149 = scmp.ne.s32.totalorder %s135, %s136
    %p150 = scmp.eq.s32.totalorder %s21, 7
    %p151 = por %p149, %p150
    %p153 = scmp.ne.s32.totalorder %s136, %s152
    %p154 = scmp.eq.s32.totalorder %s21, 0
    %p155 = por %p153, %p154
    %s156 = sadd.s32 %s23, 2
    %s157 = sadd.s32 %s30, 2
    %s158 = ssub.s32 %s22, %s34
    %s159 = ssub.s32 %s156, %s157
    %s160 = sor.u32 %s158, %s159
    %p161 = scmp.eq.s32.totalorder %s160, 0
    %s163 = sadd.s32 %s162, 1
    %s164 = scalar_select %p161, %s162, %s163
    %p167 = pneg %p161
    %p168 = scmp.eq.s32.totalorder %s15, 7
    %p169 = por %p167, %p168
    %p170 = scmp.ne.s32.totalorder %s162, %s165
    %p171 = scmp.eq.s32.totalorder %s15, 0
    %p172 = por %p170, %p171
    %p173 = scmp.ne.s32.totalorder %s162, %s165
    %p174 = scmp.eq.s32.totalorder %s20, 7
    %p175 = por %p173, %p174
    %p176 = scmp.ne.s32.totalorder %s165, %s166
    %p177 = scmp.eq.s32.totalorder %s20, 0
    %p178 = por %p176, %p177
    %p179 = scmp.ne.s32.totalorder %s165, %s166
    %p180 = scmp.eq.s32.totalorder %s21, 7
    %p181 = por %p179, %p180
    %p183 = scmp.ne.s32.totalorder %s166, %s182
    %p184 = scmp.eq.s32.totalorder %s21, 0
    %p185 = por %p183, %p184
    %s186 = ssub.s32 %s22, %s34
    %s187 = ssub.s32 %s23, %s30
    %s188 = sor.u32 %s186, %s187
    %p189 = scmp.eq.s32.totalorder %s188, 0
    %s191 = sadd.s32 %s190, 1
    %s192 = scalar_select %p189, %s190, %s191
    %p195 = pneg %p189
    %p196 = scmp.eq.s32.totalorder %s15, 7
    %p197 = por %p195, %p196
    %p198 = scmp.ne.s32.totalorder %s190, %s193
    %p199 = scmp.eq.s32.totalorder %s15, 0
    %p200 = por %p198, %p199
    %p201 = scmp.ne.s32.totalorder %s190, %s193
    %p202 = scmp.eq.s32.totalorder %s20, 7
    %p203 = por %p201, %p202
    %p204 = scmp.ne.s32.totalorder %s193, %s194
    %p205 = scmp.eq.s32.totalorder %s20, 0
    %p206 = por %p204, %p205
    %p207 = scmp.ne.s32.totalorder %s193, %s194
    %p208 = scmp.eq.s32.totalorder %s21, 7
    %p209 = por %p207, %p208
    %p211 = scmp.ne.s32.totalorder %s194, %s210
    %p212 = scmp.eq.s32.totalorder %s21, 0
    %p213 = por %p211, %p212
    %s215 = sadd.s32 %s214, 1
    %p218 = scmp.eq.s32.totalorder %s15, 7
    %p219 = scmp.ne.s32.totalorder %s214, %s216
    %p220 = scmp.eq.s32.totalorder %s15, 0
    %p221 = por %p219, %p220
    %p222 = scmp.ne.s32.totalorder %s214, %s216
    %p223 = scmp.eq.s32.totalorder %s20, 7
    %p224 = por %p222, %p223
    %p225 = scmp.ne.s32.totalorder %s216, %s217
    %p226 = scmp.eq.s32.totalorder %s20, 0
    %p227 = por %p225, %p226
    %p228 = scmp.ne.s32.totalorder %s216, %s217
    %p229 = scmp.eq.s32.totalorder %s21, 7
    %p230 = por %p228, %p229
    %p232 = scmp.ne.s32.totalorder %s217, %s231
    %p233 = scmp.eq.s32.totalorder %s21, 0
    %p234 = por %p232, %p233
    %s236 = sadd.s32 %s235, 1
    %p239 = scmp.eq.s32.totalorder %s15, 7
    %p240 = scmp.ne.s32.totalorder %s235, %s237
    %p241 = scmp.eq.s32.totalorder %s15, 0
    %p242 = por %p240, %p241
    %p243 = scmp.ne.s32.totalorder %s235, %s237
    %p244 = scmp.eq.s32.totalorder %s20, 7
    %p245 = por %p243, %p244
    %p246 = scmp.ne.s32.totalorder %s237, %s238
    %p247 = scmp.eq.s32.totalorder %s20, 0
    %p248 = por %p246, %p247
    %p249 = scmp.ne.s32.totalorder %s237, %s238
    %p250 = scmp.eq.s32.totalorder %s21, 7
    %p251 = por %p249, %p250
    %p253 = scmp.ne.s32.totalorder %s238, %s252
    %p254 = scmp.eq.s32.totalorder %s21, 0
    %p255 = por %p253, %p254
    %p256 = scmp.le.s32.totalorder 1, %s15
    %p257 = scmp.lt.s32.totalorder %s15, 9
    %p258 = pnand %p256, %p257
    %p259 = pneg %p258
    // Predicated region
    $region9: #{crnn_vgg_forward.20} parent=5 // pred_check
      _
    $region10: #{crnn_vgg_forward.20} parent=5 // pred_check_branch
      %261 = sbr.rel (%p258) target = $region12
    $region11: #{crnn_vgg_forward.20} parent=5 // pred_region
      %s262 = ssub.s32 %s15, 1
      // Predicated region
      $region13: #{crnn_vgg_forward.20} parent=11 // pred_check
        %p263 = pneg %p48
      $region14: #{crnn_vgg_forward.20} parent=11 // pred_check_branch
        %265 = sbr.rel (%p263) target = $region16
      $region15: #{crnn_vgg_forward.20} parent=11 // pred_region
        _
      $region16: #{crnn_vgg_forward.20} parent=11 // pred_fallthru
        _
      // Predicated region
      $region17: #{crnn_vgg_forward.20} parent=11 // pred_check
        %p266 = pneg %p69
      $region18: #{crnn_vgg_forward.20} parent=11 // pred_check_branch
        %268 = sbr.rel (%p266) target = $region20
      $region19: #{crnn_vgg_forward.20} parent=11 // pred_region
        _
      $region20: #{crnn_vgg_forward.20} parent=11 // pred_fallthru
        _
      // Predicated region
      $region21: #{crnn_vgg_forward.20} parent=11 // pred_check
        %p269 = pneg %p90
      $region22: #{crnn_vgg_forward.20} parent=11 // pred_check_branch
        %271 = sbr.rel (%p269) target = $region24
      $region23: #{crnn_vgg_forward.20} parent=11 // pred_region
        _
      $region24: #{crnn_vgg_forward.20} parent=11 // pred_fallthru
        _
    $region12: #{crnn_vgg_forward.20} parent=5 // pred_fallthru
      _
    %p272 = scmp.lt.s32.totalorder %s15, 8
    // Predicated region
    $region25: #{crnn_vgg_forward.20} parent=5 // pred_check
      %p273 = pneg %p272
    $region26: #{crnn_vgg_forward.20} parent=5 // pred_check_branch
      %275 = sbr.rel (%p273) target = $region28
    $region27: #{crnn_vgg_forward.20} parent=5 // pred_region
      // Predicated region
      $region29: #{crnn_vgg_forward.20} parent=27 // pred_check
        %p276 = pneg %p112
      $region30: #{crnn_vgg_forward.20} parent=27 // pred_check_branch
        %278 = sbr.rel (%p276) target = $region32
      $region31: #{crnn_vgg_forward.20} parent=27 // pred_region
        %p279 = scmp.lt.s32.totalorder %s22, 1
        %s280 = scalar_select %p279, %s22, 1
        %p281 = scmp.lt.s32.totalorder %s23, 5
        %s282 = scalar_select %p281, %s23, 5
        %s283 = smul.addr %s280, 6
        %s284 = sadd.s32 %s282, %s283
        %s285 = smul.addr %s284, 4
        %s286 = scalar_lea.vmem %s3, %s285
      $region32: #{crnn_vgg_forward.20} parent=27 // pred_fallthru
        _
      // Predicated region
      $region33: #{crnn_vgg_forward.20} parent=27 // pred_check
        %p287 = pneg %p142
      $region34: #{crnn_vgg_forward.20} parent=27 // pred_check_branch
        %289 = sbr.rel (%p287) target = $region36
      $region35: #{crnn_vgg_forward.20} parent=27 // pred_region
        %s290 = sadd.s32 %s23, 1
        %p291 = scmp.lt.s32.totalorder %s22, 1
        %s292 = scalar_select %p291, %s22, 1
        %p293 = scmp.lt.s32.totalorder %s290, 5
        %s294 = scalar_select %p293, %s290, 5
        %s295 = smul.addr %s292, 6
        %s296 = sadd.s32 %s294, %s295
        %s297 = smul.addr %s296, 4
        %s298 = scalar_lea.vmem %s4, %s297
        %s299 = sadd.s32 %s23, 1
      $region36: #{crnn_vgg_forward.20} parent=27 // pred_fallthru
        _
      // Predicated region
      $region37: #{crnn_vgg_forward.20} parent=27 // pred_check
        %p300 = pneg %p172
      $region38: #{crnn_vgg_forward.20} parent=27 // pred_check_branch
        %302 = sbr.rel (%p300) target = $region40
      $region39: #{crnn_vgg_forward.20} parent=27 // pred_region
        %s303 = sadd.s32 %s23, 2
        %p304 = scmp.lt.s32.totalorder %s22, 1
        %s305 = scalar_select %p304, %s22, 1
        %p306 = scmp.lt.s32.totalorder %s303, 5
        %s307 = scalar_select %p306, %s303, 5
        %s308 = smul.addr %s305, 6
        %s309 = sadd.s32 %s307, %s308
        %s310 = smul.addr %s309, 4
        %s311 = scalar_lea.vmem %s5, %s310
        %s312 = sadd.s32 %s23, 2
      $region40: #{crnn_vgg_forward.20} parent=27 // pred_fallthru
        _
    $region28: #{crnn_vgg_forward.20} parent=5 // pred_fallthru
      _
    %p313 = scmp.le.s32.totalorder 1, %s15
    %p314 = scmp.lt.s32.totalorder %s15, 9
    %p315 = pnand %p313, %p314
    %p316 = pneg %p315
    // Predicated region
    $region41: #{crnn_vgg_forward.20} parent=5 // pred_check
      _
    $region42: #{crnn_vgg_forward.20} parent=5 // pred_check_branch
      %318 = sbr.rel (%p315) target = $region44
    $region43: #{crnn_vgg_forward.20} parent=5 // pred_region
      %s319 = ssub.s32 %s15, 1
      %p320 = pneg %p48
      %p321 = pneg %p45
      %p322 = pneg %p69
      %p323 = pneg %p66
      %p324 = pneg %p90
      %p325 = pneg %p87
      %p326 = scmp.lt.s32.totalorder %s24, 1
      %s327 = scalar_select %p326, %s24, 1
      %p328 = scmp.lt.s32.totalorder %s25, 5
      %s329 = scalar_select %p328, %s25, 5
      %s330 = smul.addr %s327, 6
      %s331 = sadd.s32 %s329, %s330
      %s332 = smul.addr %s331, 4
      %s333 = scalar_lea.vmem %s3, %s332
      %p334 = pneg %p118
      %p335 = pneg %p115
      %s336 = sadd.s32 %s25, 1
      %p337 = scmp.lt.s32.totalorder %s24, 1
      %s338 = scalar_select %p337, %s24, 1
      %p339 = scmp.lt.s32.totalorder %s336, 5
      %s340 = scalar_select %p339, %s336, 5
      %s341 = smul.addr %s338, 6
      %s342 = sadd.s32 %s340, %s341
      %s343 = smul.addr %s342, 4
      %s344 = scalar_lea.vmem %s4, %s343
      %p345 = pneg %p148
      %p346 = pneg %p145
      %s347 = sadd.s32 %s25, 2
      %p348 = scmp.lt.s32.totalorder %s24, 1
      %s349 = scalar_select %p348, %s24, 1
      %p350 = scmp.lt.s32.totalorder %s347, 5
      %s351 = scalar_select %p350, %s347, 5
      %s352 = smul.addr %s349, 6
      %s353 = sadd.s32 %s351, %s352
      %s354 = smul.addr %s353, 4
      %s355 = scalar_lea.vmem %s5, %s354
      %p356 = pneg %p178
      %p357 = pneg %p175
      %p358 = pneg %p206
      %p359 = pneg %p203
      %p360 = scmp.lt.s32.totalorder %s24, 1
      %s361 = scalar_select %p360, %s24, 1
      %p362 = scmp.lt.s32.totalorder %s25, 3
      %s363 = scalar_select %p362, %s25, 3
      %s364 = smul.addr %s361, 4
      %s365 = sadd.s32 %s363, %s364
      %s366 = smul.addr %s365, 4
      %s367 = scalar_lea.vmem %s6, %s366
      %p368 = pneg %p227
      %p369 = pneg %p224
      %p370 = pneg %p248
      %p371 = pneg %p245
      %p372 = scmp.lt.s32.totalorder %s24, 1
      %s373 = scalar_select %p372, %s24, 1
      %p374 = scmp.lt.s32.totalorder %s25, 5
      %s375 = scalar_select %p374, %s25, 5
      %s376 = smul.addr %s373, 6
      %s377 = sadd.s32 %s375, %s376
      %s378 = smul.addr %s377, 4
      %s379 = scalar_lea.vmem %s3, %s378
      %s380 = sadd.s32 %s25, 1
      %p381 = scmp.lt.s32.totalorder %s24, 1
      %s382 = scalar_select %p381, %s24, 1
      %p383 = scmp.lt.s32.totalorder %s380, 5
      %s384 = scalar_select %p383, %s380, 5
      %s385 = smul.addr %s382, 6
      %s386 = sadd.s32 %s384, %s385
      %s387 = smul.addr %s386, 4
      %s388 = scalar_lea.vmem %s4, %s387
      %s389 = sadd.s32 %s25, 1
      %s390 = sadd.s32 %s25, 2
      %p391 = scmp.lt.s32.totalorder %s24, 1
      %s392 = scalar_select %p391, %s24, 1
      %p393 = scmp.lt.s32.totalorder %s390, 5
      %s394 = scalar_select %p393, %s390, 5
      %s395 = smul.addr %s392, 6
      %s396 = sadd.s32 %s394, %s395
      %s397 = smul.addr %s396, 4
      %s398 = scalar_lea.vmem %s5, %s397
      %s399 = sadd.s32 %s25, 2
      %p400 = scmp.lt.s32.totalorder %s24, 1
      %s401 = scalar_select %p400, %s24, 1
      %p402 = scmp.lt.s32.totalorder %s25, 3
      %s403 = scalar_select %p402, %s25, 3
      %s404 = smul.addr %s401, 4
      %s405 = sadd.s32 %s403, %s404
      %s406 = smul.addr %s405, 4
      %s407 = scalar_lea.vmem %s6, %s406
      %v409 = vld [vmem:[%s379] sm:$0x7]
      %v410 = vld [vmem:[%s0] sm:$0xf]
      %v411 = vld [vmem:[%s0 + $0x4] sm:$0xf]
      %s412 = scalar_lea.vmem %s0, 8
      %v413 = vld [vmem:[%s412] sm:$0xf]
      %v414 = vld [vmem:[%s412 + $0x4] sm:$0xf]
      %v416 = vunpack.c.l.b16 %v409
      %v417 = vpack.c.b16 %v416, %v416
      %v419 = vshrl.u32 %v417, 16
      %v421 = vshll.u32 %v417, 16
      %v423 = vrot.slane %v421, 1
      %v424 = vor.u32 %v419, %v423
      %v427 = vunpack.c.l.b16 %v413
      %v428 = vunpack.c.l.b16 %v414
      %v429 = vpack.c.b16 %v428, %v427
      %vm431 = vcmask 130048
      %v433 = vsel %vm431, %v424, 0
      %435 = vmatpush.bf16.msra.mxu0 0
      %436 = vmatpush.bf16.msra.mxu0 0
      %437 = vmatpush.bf16.msra.mxu0 0
      %438 = vmatpush.bf16.msra.mxu0 0
      %439 = vmatpush.bf16.msra.mxu0 0
      %440 = vmatpush.bf16.msra.mxu0 0
      %441 = vmatpush.bf16.msra.mxu0 0
      %442 = vmatpush.bf16.msra.mxu0 %v429
      %443 = vmatmul.bf16.gmra.mxu0 %v433
      %v444 = vpop.f32.mrf.mxu0
      %v445 = vadd.f32 0.0, %v444
      %v446 = vpop.f32.mrf.mxu0
      %447 = vdwg.mxu0
      %v450 = vunpack.c.l.b16 %v410
      %v451 = vunpack.c.l.b16 %v411
      %v452 = vpack.c.b16 %v451, %v450
      %v455 = vsel %vm431, %v409, 0
      %457 = vmatpush.bf16.msra.mxu0 0
      %458 = vmatpush.bf16.msra.mxu0 0
      %459 = vmatpush.bf16.msra.mxu0 0
      %460 = vmatpush.bf16.msra.mxu0 0
      %461 = vmatpush.bf16.msra.mxu0 0
      %462 = vmatpush.bf16.msra.mxu0 0
      %463 = vmatpush.bf16.msra.mxu0 0
      %464 = vmatpush.bf16.msra.mxu0 %v452
      %465 = vmatmul.bf16.gmra.mxu0 %v455
      %v466 = vpop.f32.mrf.mxu0
      %v467 = vadd.f32 %v445, %v466
      %v468 = vpop.f32.mrf.mxu0
      %469 = vdwg.mxu0
      %s470 = scalar_lea.vmem %s0, 16
      %v471 = vld [vmem:[%s470] sm:$0xf]
      %v472 = vld [vmem:[%s470 + $0x4] sm:$0xf]
      %v473 = vrot.slane %v417, 1
      %v476 = vunpack.c.l.b16 %v471
      %v477 = vunpack.c.l.b16 %v472
      %v478 = vpack.c.b16 %v477, %v476
      %v481 = vsel %vm431, %v473, 0
      %483 = vmatpush.bf16.msra.mxu0 0
      %484 = vmatpush.bf16.msra.mxu0 0
      %485 = vmatpush.bf16.msra.mxu0 0
      %486 = vmatpush.bf16.msra.mxu0 0
      %487 = vmatpush.bf16.msra.mxu0 0
      %488 = vmatpush.bf16.msra.mxu0 0
      %489 = vmatpush.bf16.msra.mxu0 0
      %490 = vmatpush.bf16.msra.mxu0 %v478
      %491 = vmatmul.bf16.gmra.mxu0 %v481
      %v492 = vpop.f32.mrf.mxu0
      %v493 = vadd.f32 0.0, %v492
      %v494 = vpop.f32.mrf.mxu0
      %495 = vdwg.mxu0
      %v496 = vadd.f32 %v467, %v493
      %v497 = vld [vmem:[%s388] sm:$0x7]
      %s498 = scalar_lea.vmem %s0, 24
      %v499 = vld [vmem:[%s498] sm:$0xf]
      %v500 = vld [vmem:[%s498 + $0x4] sm:$0xf]
      %v503 = vunpack.c.l.b16 %v499
      %v504 = vunpack.c.l.b16 %v500
      %v505 = vpack.c.b16 %v504, %v503
      %v508 = vsel %vm431, %v497, 0
      %510 = vmatpush.bf16.msra.mxu0 0
      %511 = vmatpush.bf16.msra.mxu0 0
      %512 = vmatpush.bf16.msra.mxu0 0
      %513 = vmatpush.bf16.msra.mxu0 0
      %514 = vmatpush.bf16.msra.mxu0 0
      %515 = vmatpush.bf16.msra.mxu0 0
      %516 = vmatpush.bf16.msra.mxu0 0
      %517 = vmatpush.bf16.msra.mxu0 %v505
      %518 = vmatmul.bf16.gmra.mxu0 %v508
      %v519 = vpop.f32.mrf.mxu0
      %v520 = vadd.f32 0.0, %v519
      %v521 = vpop.f32.mrf.mxu0
      %522 = vdwg.mxu0
      %v523 = vadd.f32 %v496, %v520
      %s524 = scalar_lea.vmem %s0, 32
      %v525 = vld [vmem:[%s524] sm:$0xf]
      %v526 = vld [vmem:[%s524 + $0x4] sm:$0xf]
      %v528 = vunpack.c.l.b16 %v497
      %v529 = vpack.c.b16 %v528, %v528
      %v531 = vshrl.u32 %v529, 16
      %v533 = vshll.u32 %v529, 16
      %v535 = vrot.slane %v533, 1
      %v536 = vor.u32 %v531, %v535
      %v539 = vunpack.c.l.b16 %v525
      %v540 = vunpack.c.l.b16 %v526
      %v541 = vpack.c.b16 %v540, %v539
      %v544 = vsel %vm431, %v536, 0
      %546 = vmatpush.bf16.msra.mxu0 0
      %547 = vmatpush.bf16.msra.mxu0 0
      %548 = vmatpush.bf16.msra.mxu0 0
      %549 = vmatpush.bf16.msra.mxu0 0
      %550 = vmatpush.bf16.msra.mxu0 0
      %551 = vmatpush.bf16.msra.mxu0 0
      %552 = vmatpush.bf16.msra.mxu0 0
      %553 = vmatpush.bf16.msra.mxu0 %v541
      %554 = vmatmul.bf16.gmra.mxu0 %v544
      %v555 = vpop.f32.mrf.mxu0
      %v556 = vadd.f32 0.0, %v555
      %v557 = vpop.f32.mrf.mxu0
      %558 = vdwg.mxu0
      %v559 = vadd.f32 %v523, %v556
      %s560 = scalar_lea.vmem %s0, 40
      %v561 = vld [vmem:[%s560] sm:$0xf]
      %v562 = vld [vmem:[%s560 + $0x4] sm:$0xf]
      %v563 = vrot.slane %v529, 1
      %v566 = vunpack.c.l.b16 %v561
      %v567 = vunpack.c.l.b16 %v562
      %v568 = vpack.c.b16 %v567, %v566
      %v571 = vsel %vm431, %v563, 0
      %573 = vmatpush.bf16.msra.mxu0 0
      %574 = vmatpush.bf16.msra.mxu0 0
      %575 = vmatpush.bf16.msra.mxu0 0
      %576 = vmatpush.bf16.msra.mxu0 0
      %577 = vmatpush.bf16.msra.mxu0 0
      %578 = vmatpush.bf16.msra.mxu0 0
      %579 = vmatpush.bf16.msra.mxu0 0
      %580 = vmatpush.bf16.msra.mxu0 %v568
      %581 = vmatmul.bf16.gmra.mxu0 %v571
      %v582 = vpop.f32.mrf.mxu0
      %v583 = vadd.f32 0.0, %v582
      %v584 = vpop.f32.mrf.mxu0
      %585 = vdwg.mxu0
      %v586 = vadd.f32 %v559, %v583
      %v587 = vld [vmem:[%s398] sm:$0x7]
      %s588 = scalar_lea.vmem %s0, 48
      %v589 = vld [vmem:[%s588] sm:$0xf]
      %v590 = vld [vmem:[%s588 + $0x4] sm:$0xf]
      %v593 = vunpack.c.l.b16 %v589
      %v594 = vunpack.c.l.b16 %v590
      %v595 = vpack.c.b16 %v594, %v593
      %v598 = vsel %vm431, %v587, 0
      %600 = vmatpush.bf16.msra.mxu0 0
      %601 = vmatpush.bf16.msra.mxu0 0
      %602 = vmatpush.bf16.msra.mxu0 0
      %603 = vmatpush.bf16.msra.mxu0 0
      %604 = vmatpush.bf16.msra.mxu0 0
      %605 = vmatpush.bf16.msra.mxu0 0
      %606 = vmatpush.bf16.msra.mxu0 0
      %607 = vmatpush.bf16.msra.mxu0 %v595
      %608 = vmatmul.bf16.gmra.mxu0 %v598
      %v609 = vpop.f32.mrf.mxu0
      %v610 = vadd.f32 0.0, %v609
      %v611 = vpop.f32.mrf.mxu0
      %612 = vdwg.mxu0
      %v613 = vadd.f32 %v586, %v610
      %s614 = scalar_lea.vmem %s0, 56
      %v615 = vld [vmem:[%s614] sm:$0xf]
      %v616 = vld [vmem:[%s614 + $0x4] sm:$0xf]
      %v618 = vunpack.c.l.b16 %v587
      %v619 = vpack.c.b16 %v618, %v618
      %v621 = vshrl.u32 %v619, 16
      %v623 = vshll.u32 %v619, 16
      %v625 = vrot.slane %v623, 1
      %v626 = vor.u32 %v621, %v625
      %v629 = vunpack.c.l.b16 %v615
      %v630 = vunpack.c.l.b16 %v616
      %v631 = vpack.c.b16 %v630, %v629
      %v634 = vsel %vm431, %v626, 0
      %636 = vmatpush.bf16.msra.mxu0 0
      %637 = vmatpush.bf16.msra.mxu0 0
      %638 = vmatpush.bf16.msra.mxu0 0
      %639 = vmatpush.bf16.msra.mxu0 0
      %640 = vmatpush.bf16.msra.mxu0 0
      %641 = vmatpush.bf16.msra.mxu0 0
      %642 = vmatpush.bf16.msra.mxu0 0
      %643 = vmatpush.bf16.msra.mxu0 %v631
      %644 = vmatmul.bf16.gmra.mxu0 %v634
      %v645 = vpop.f32.mrf.mxu0
      %v646 = vadd.f32 0.0, %v645
      %v647 = vpop.f32.mrf.mxu0
      %648 = vdwg.mxu0
      %v649 = vadd.f32 %v613, %v646
      %s650 = scalar_lea.vmem %s0, 64
      %v651 = vld [vmem:[%s650] sm:$0xf]
      %v652 = vld [vmem:[%s650 + $0x4] sm:$0xf]
      %v653 = vrot.slane %v619, 1
      %v656 = vunpack.c.l.b16 %v651
      %v657 = vunpack.c.l.b16 %v652
      %v658 = vpack.c.b16 %v657, %v656
      %v661 = vsel %vm431, %v653, 0
      %663 = vmatpush.bf16.msra.mxu0 0
      %664 = vmatpush.bf16.msra.mxu0 0
      %665 = vmatpush.bf16.msra.mxu0 0
      %666 = vmatpush.bf16.msra.mxu0 0
      %667 = vmatpush.bf16.msra.mxu0 0
      %668 = vmatpush.bf16.msra.mxu0 0
      %669 = vmatpush.bf16.msra.mxu0 0
      %670 = vmatpush.bf16.msra.mxu0 %v658
      %671 = vmatmul.bf16.gmra.mxu0 %v661
      %v672 = vpop.f32.mrf.mxu0
      %v673 = vadd.f32 0.0, %v672
      %v674 = vpop.f32.mrf.mxu0
      %675 = vdwg.mxu0
      %v676 = vadd.f32 %v649, %v673
      %v677 = vld [vmem:[%s1] sm:$0x1]
      %v679 = vperm.slane %v677, 0
      %v681 = vmul.f32 %v676, %v679
      %v682 = vld [vmem:[%s2] sm:$0x1]
      %v684 = vperm.slane %v682, 0
      %v686 = vadd.f32 %v681, %v684
      %vm687 = vcmask 257024
      %688 = vst.msk [vmem:[%s407] sm:$0xf] %vm687, %v686
      %p689 = scmp.eq.s32.totalorder %s24, 0
      %p690 = scmp.eq.s32.totalorder %s25, 0
      %p691 = pnand %p689, %p690
      %p692 = pneg %p691
      // Predicated region
      $region45: #{crnn_vgg_forward.20} parent=43 // pred_check
        _
      $region46: #{crnn_vgg_forward.20} parent=43 // pred_check_branch
        %694 = sbr.rel (%p691) target = $region48
      $region47: #{crnn_vgg_forward.20} parent=43 // pred_region
        %vm695 = vcmask 253952
        %696 = vst.msk [vmem:[%s7] sm:$0x1] %vm695, 0.0
        %697 = vst.msk [vmem:[%s8] sm:$0x1] %vm695, 0.0
      $region48: #{crnn_vgg_forward.20} parent=43 // pred_fallthru
        _
      %v698 = vld [vmem:[%s7] sm:$0x1]
      %v699 = vsel %vm687, %v676, 0.0
      %v700 = vrot.slane %v699, 4
      %v701 = vadd.f32 %v699, %v700
      %v702 = vrot.slane %v701, 2
      %v703 = vadd.f32 %v701, %v702
      %v704 = vrot.slane %v703, 1
      %v705 = vadd.f32 %v703, %v704
      %v706 = vadd.f32 %v698, %v705
      %vm707 = vcmask 253952
      %708 = vst.msk [vmem:[%s7] sm:$0x1] %vm707, %v706
      %v709 = vld [vmem:[%s8] sm:$0x1]
      %v710 = vmul.f32 %v676, %v676
      %v711 = vsel %vm687, %v710, 0.0
      %v712 = vrot.slane %v711, 4
      %v713 = vadd.f32 %v711, %v712
      %v714 = vrot.slane %v713, 2
      %v715 = vadd.f32 %v713, %v714
      %v716 = vrot.slane %v715, 1
      %v717 = vadd.f32 %v715, %v716
      %v718 = vadd.f32 %v709, %v717
      %719 = vst.msk [vmem:[%s8] sm:$0x1] %vm707, %v718
      %p720 = scmp.lt.s32.totalorder %s24, 1
      %s721 = scalar_select %p720, %s24, 1
      %p722 = scmp.lt.s32.totalorder %s25, 3
      %s723 = scalar_select %p722, %s25, 3
      %s724 = smul.addr %s721, 4
      %s725 = sadd.s32 %s723, %s724
      %s726 = smul.addr %s725, 4
      %s727 = scalar_lea.vmem %s6, %s726
      // Predicated region
      $region49: #{crnn_vgg_forward.20} parent=43 // pred_check
        %p728 = pneg %p203
      $region50: #{crnn_vgg_forward.20} parent=43 // pred_check_branch
        %730 = sbr.rel (%p728) target = $region52
      $region51: #{crnn_vgg_forward.20} parent=43 // pred_region
        _
      $region52: #{crnn_vgg_forward.20} parent=43 // pred_fallthru
        _
      // Predicated region
      $region53: #{crnn_vgg_forward.20} parent=43 // pred_check
        %p731 = pneg %p224
      $region54: #{crnn_vgg_forward.20} parent=43 // pred_check_branch
        %733 = sbr.rel (%p731) target = $region56
      $region55: #{crnn_vgg_forward.20} parent=43 // pred_region
        _
      $region56: #{crnn_vgg_forward.20} parent=43 // pred_fallthru
        _
      // Predicated region
      $region57: #{crnn_vgg_forward.20} parent=43 // pred_check
        %p734 = pneg %p245
      $region58: #{crnn_vgg_forward.20} parent=43 // pred_check_branch
        %736 = sbr.rel (%p734) target = $region60
      $region59: #{crnn_vgg_forward.20} parent=43 // pred_region
        _
      $region60: #{crnn_vgg_forward.20} parent=43 // pred_fallthru
        _
      // Predicated region
      $region61: #{crnn_vgg_forward.20} parent=43 // pred_check
        %p737 = pneg %p224
      $region62: #{crnn_vgg_forward.20} parent=43 // pred_check_branch
        %739 = sbr.rel (%p737) target = $region64
      $region63: #{crnn_vgg_forward.20} parent=43 // pred_region
        _
      $region64: #{crnn_vgg_forward.20} parent=43 // pred_fallthru
        _
      // Predicated region
      $region65: #{crnn_vgg_forward.20} parent=43 // pred_check
        %p740 = pneg %p245
      $region66: #{crnn_vgg_forward.20} parent=43 // pred_check_branch
        %742 = sbr.rel (%p740) target = $region68
      $region67: #{crnn_vgg_forward.20} parent=43 // pred_region
        _
      $region68: #{crnn_vgg_forward.20} parent=43 // pred_fallthru
        _
    $region44: #{crnn_vgg_forward.20} parent=5 // pred_fallthru
      _
    %p743 = scmp.le.s32.totalorder 2, %s15
    // Predicated region
    $region69: #{crnn_vgg_forward.20} parent=5 // pred_check
      %p744 = pneg %p743
    $region70: #{crnn_vgg_forward.20} parent=5 // pred_check_branch
      %746 = sbr.rel (%p744) target = $region72
    $region71: #{crnn_vgg_forward.20} parent=5 // pred_region
      %s747 = ssub.s32 %s15, 2
      // Predicated region
      $region73: #{crnn_vgg_forward.20} parent=71 // pred_check
        %p748 = pneg %p209
      $region74: #{crnn_vgg_forward.20} parent=71 // pred_check_branch
        %750 = sbr.rel (%p748) target = $region76
      $region75: #{crnn_vgg_forward.20} parent=71 // pred_region
        %p751 = scmp.lt.s32.totalorder %s26, 1
        %s752 = scalar_select %p751, %s26, 1
        %p753 = scmp.lt.s32.totalorder %s27, 3
        %s754 = scalar_select %p753, %s27, 3
        %s755 = smul.addr %s752, 4
        %s756 = sadd.s32 %s754, %s755
        %s757 = smul.addr %s756, 4
        %s758 = scalar_lea.vmem %s6, %s757
      $region76: #{crnn_vgg_forward.20} parent=71 // pred_fallthru
        _
    $region72: #{crnn_vgg_forward.20} parent=5 // pred_fallthru
      _
  $region6: #{crnn_vgg_forward.20} parent=0 // loop_footer
    %s19 = sadd.s32 1, %s15
  $region7: #{crnn_vgg_forward.20} parent=0 // loop_footer_branch
    %14 = sbr.rel target = $region3
  $region8: #{crnn_vgg_forward.20} parent=0 // loop_exit
    _

// kernel: crnn_vgg_forward.24
$region0: #{crnn_vgg_forward.24}
  #allocation0 [shape = 'u32[]', space=smem, size = 0x4, offset = 0x4, fixed_abs, tag = 'smem constant byte address 0x4 - core index']
  #allocation1 [shape = 'u32[72,128]{1,0:T(1,128)}', space=vmem, size = 0x9000, scoped, tag = 'internal scratch']
  %s0 = inlined_call_operand.vmem [shape: f32[2,2,2,4,32], index: 0, kind: input, shape index: {}]
  %s1 = inlined_call_operand.vmem [shape: f32[2,2,4,32], index: 1, kind: output, shape index: {}]
  %s2 = sld [smem:[#allocation0]]
  $region37: #{crnn_vgg_forward.24} parent=0
    _
  %s4 = ssub.s32 1, %s2
  %s5 = scalar_select 0, %s4, %s2
  loop: start=0, step=1, limit=6
  $region2: #{crnn_vgg_forward.24} parent=0 // loop_pre_header
    _
  $region3: #{crnn_vgg_forward.24} parent=0 // loop_header
    %s7 = sphi 0, %s11
    %p8 = scmp.ge.s32.totalorder %s7, 6
    %s14 = sphi 0, %s26
    %s15 = sphi 0, %s22
    %s16 = sphi 0, %s14
    %s17 = sphi 0, %s15
    %s18 = sphi 0, %s16
    %s19 = sphi 0, %s17
    %s31 = sphi 0, %s33
    %s34 = sphi 0, %s31
    %s35 = sphi 0, %s34
    %s51 = sphi 0, %s35
    %s59 = sphi 0, %s61
    %s62 = sphi 0, %s59
    %s63 = sphi 0, %s62
    %s79 = sphi 0, %s63
  $region4: #{crnn_vgg_forward.24} parent=0 // loop_header_branch
    %10 = sbr.rel (%p8) target = $region8
  $region5: #{crnn_vgg_forward.24} parent=0 // loop_body
    %s12 = ssub.s32 %s7, 1
    %s13 = ssub.s32 %s7, 2
    %s20 = sadd.s32 1, %s15
    %p21 = scmp.ge.s32.totalorder %s20, 2
    %s22 = scalar_select %p21, 0, %s20
    %s23 = sadd.s32 1, %s14
    %s24 = scalar_select %p21, %s23, %s14
    %p25 = scmp.ge.s32.totalorder %s24, 2
    %s26 = scalar_select %p25, 0, %s24
    %s27 = ssub.s32 %s14, %s26
    %s28 = ssub.s32 %s15, %s22
    %s29 = sor.u32 %s27, %s28
    %p30 = scmp.eq.s32.totalorder %s29, 0
    %s32 = sadd.s32 %s31, 1
    %s33 = scalar_select %p30, %s31, %s32
    %p36 = pneg %p30
    %p37 = scmp.eq.s32.totalorder %s7, 3
    %p38 = por %p36, %p37
    %p39 = scmp.ne.s32.totalorder %s31, %s34
    %p40 = scmp.eq.s32.totalorder %s7, 0
    %p41 = por %p39, %p40
    %p42 = scmp.ne.s32.totalorder %s31, %s34
    %p43 = scmp.eq.s32.totalorder %s12, 3
    %p44 = por %p42, %p43
    %p45 = scmp.ne.s32.totalorder %s34, %s35
    %p46 = scmp.eq.s32.totalorder %s12, 0
    %p47 = por %p45, %p46
    %p48 = scmp.ne.s32.totalorder %s34, %s35
    %p49 = scmp.eq.s32.totalorder %s13, 3
    %p50 = por %p48, %p49
    %p52 = scmp.ne.s32.totalorder %s35, %s51
    %p53 = scmp.eq.s32.totalorder %s13, 0
    %p54 = por %p52, %p53
    %s55 = ssub.s32 %s14, %s26
    %s56 = ssub.s32 %s15, %s22
    %s57 = sor.u32 %s55, %s56
    %p58 = scmp.eq.s32.totalorder %s57, 0
    %s60 = sadd.s32 %s59, 1
    %s61 = scalar_select %p58, %s59, %s60
    %p64 = pneg %p58
    %p65 = scmp.eq.s32.totalorder %s7, 3
    %p66 = por %p64, %p65
    %p67 = scmp.ne.s32.totalorder %s59, %s62
    %p68 = scmp.eq.s32.totalorder %s7, 0
    %p69 = por %p67, %p68
    %p70 = scmp.ne.s32.totalorder %s59, %s62
    %p71 = scmp.eq.s32.totalorder %s12, 3
    %p72 = por %p70, %p71
    %p73 = scmp.ne.s32.totalorder %s62, %s63
    %p74 = scmp.eq.s32.totalorder %s12, 0
    %p75 = por %p73, %p74
    %p76 = scmp.ne.s32.totalorder %s62, %s63
    %p77 = scmp.eq.s32.totalorder %s13, 3
    %p78 = por %p76, %p77
    %p80 = scmp.ne.s32.totalorder %s63, %s79
    %p81 = scmp.eq.s32.totalorder %s13, 0
    %p82 = por %p80, %p81
    %p83 = scmp.le.s32.totalorder 1, %s7
    %p84 = scmp.lt.s32.totalorder %s7, 5
    %p85 = pnand %p83, %p84
    %p86 = pneg %p85
    // Predicated region
    $region9: #{crnn_vgg_forward.24} parent=5 // pred_check
      _
    $region10: #{crnn_vgg_forward.24} parent=5 // pred_check_branch
      %88 = sbr.rel (%p85) target = $region12
    $region11: #{crnn_vgg_forward.24} parent=5 // pred_region
      %s89 = ssub.s32 %s7, 1
    $region12: #{crnn_vgg_forward.24} parent=5 // pred_fallthru
      _
    %p90 = scmp.lt.s32.totalorder %s7, 4
    // Predicated region
    $region13: #{crnn_vgg_forward.24} parent=5 // pred_check
      %p91 = pneg %p90
    $region14: #{crnn_vgg_forward.24} parent=5 // pred_check_branch
      %93 = sbr.rel (%p91) target = $region16
    $region15: #{crnn_vgg_forward.24} parent=5 // pred_region
      // Predicated region
      $region17: #{crnn_vgg_forward.24} parent=15 // pred_check
        %p94 = pneg %p41
      $region18: #{crnn_vgg_forward.24} parent=15 // pred_check_branch
        %96 = sbr.rel (%p94) target = $region20
      $region19: #{crnn_vgg_forward.24} parent=15 // pred_region
        %p97 = scmp.lt.s32.totalorder %s14, 1
        %s98 = scalar_select %p97, %s14, 1
        %p99 = scmp.lt.s32.totalorder %s15, 1
        %s100 = scalar_select %p99, %s15, 1
        %s101 = smul.addr %s100, 2
        %s102 = smul.addr %s98, 4
        %s103 = sadd.s32 %s101, %s102
        %s104 = smul.addr %s103, 4
        %s105 = scalar_lea.vmem %s0, %s104
      $region20: #{crnn_vgg_forward.24} parent=15 // pred_fallthru
        _
    $region16: #{crnn_vgg_forward.24} parent=5 // pred_fallthru
      _
    %p106 = scmp.le.s32.totalorder 1, %s7
    %p107 = scmp.lt.s32.totalorder %s7, 5
    %p108 = pnand %p106, %p107
    %p109 = pneg %p108
    // Predicated region
    $region21: #{crnn_vgg_forward.24} parent=5 // pred_check
      _
    $region22: #{crnn_vgg_forward.24} parent=5 // pred_check_branch
      %111 = sbr.rel (%p108) target = $region24
    $region23: #{crnn_vgg_forward.24} parent=5 // pred_region
      %s112 = ssub.s32 %s7, 1
      %p113 = scmp.lt.s32.totalorder %s16, 1
      %s114 = scalar_select %p113, %s16, 1
      %p115 = scmp.lt.s32.totalorder %s17, 1
      %s116 = scalar_select %p115, %s17, 1
      %s117 = smul.addr %s116, 2
      %s118 = smul.addr %s114, 4
      %s119 = sadd.s32 %s117, %s118
      %s120 = smul.addr %s119, 4
      %s121 = scalar_lea.vmem %s0, %s120
      %p122 = pneg %p47
      %p123 = pneg %p44
      %p124 = pneg %p75
      %p125 = pneg %p72
      %p126 = scmp.lt.s32.totalorder %s16, 1
      %s127 = scalar_select %p126, %s16, 1
      %p128 = scmp.lt.s32.totalorder %s17, 1
      %s129 = scalar_select %p128, %s17, 1
      %s130 = smul.addr %s127, 2
      %s131 = sadd.s32 %s129, %s130
      %s132 = smul.addr %s131, 4
      %s133 = scalar_lea.vmem %s1, %s132
      %p134 = scmp.lt.s32.totalorder %s16, 1
      %s135 = scalar_select %p134, %s16, 1
      %p136 = scmp.lt.s32.totalorder %s17, 1
      %s137 = scalar_select %p136, %s17, 1
      %s138 = smul.addr %s137, 2
      %s139 = smul.addr %s135, 4
      %s140 = sadd.s32 %s138, %s139
      %s141 = smul.addr %s140, 4
      %s142 = scalar_lea.vmem %s0, %s141
      %p143 = scmp.lt.s32.totalorder %s16, 1
      %s144 = scalar_select %p143, %s16, 1
      %p145 = scmp.lt.s32.totalorder %s17, 1
      %s146 = scalar_select %p145, %s17, 1
      %s147 = smul.addr %s144, 2
      %s148 = sadd.s32 %s146, %s147
      %s149 = smul.addr %s148, 4
      %s150 = scalar_lea.vmem %s1, %s149
      %v151 = vld [vmem:[%s142] sm:$0xf]
      %v152 = vld [vmem:[%s142 + $0x4] sm:$0xf]
      %v153 = vmax.f32 %v151, %v152
      %vm154 = vcmask 257024
      %155 = vst.msk [vmem:[%s150] sm:$0xf] %vm154, %v153
      %p156 = scmp.lt.s32.totalorder %s16, 1
      %s157 = scalar_select %p156, %s16, 1
      %p158 = scmp.lt.s32.totalorder %s17, 1
      %s159 = scalar_select %p158, %s17, 1
      %s160 = smul.addr %s157, 2
      %s161 = sadd.s32 %s159, %s160
      %s162 = smul.addr %s161, 4
      %s163 = scalar_lea.vmem %s1, %s162
      // Predicated region
      $region25: #{crnn_vgg_forward.24} parent=23 // pred_check
        %p164 = pneg %p72
      $region26: #{crnn_vgg_forward.24} parent=23 // pred_check_branch
        %166 = sbr.rel (%p164) target = $region28
      $region27: #{crnn_vgg_forward.24} parent=23 // pred_region
        _
      $region28: #{crnn_vgg_forward.24} parent=23 // pred_fallthru
        _
    $region24: #{crnn_vgg_forward.24} parent=5 // pred_fallthru
      _
    %p167 = scmp.le.s32.totalorder 2, %s7
    // Predicated region
    $region29: #{crnn_vgg_forward.24} parent=5 // pred_check
      %p168 = pneg %p167
    $region30: #{crnn_vgg_forward.24} parent=5 // pred_check_branch
      %170 = sbr.rel (%p168) target = $region32
    $region31: #{crnn_vgg_forward.24} parent=5 // pred_region
      %s171 = ssub.s32 %s7, 2
      // Predicated region
      $region33: #{crnn_vgg_forward.24} parent=31 // pred_check
        %p172 = pneg %p78
      $region34: #{crnn_vgg_forward.24} parent=31 // pred_check_branch
        %174 = sbr.rel (%p172) target = $region36
      $region35: #{crnn_vgg_forward.24} parent=31 // pred_region
        %p175 = scmp.lt.s32.totalorder %s18, 1
        %s176 = scalar_select %p175, %s18, 1
        %p177 = scmp.lt.s32.totalorder %s19, 1
        %s178 = scalar_select %p177, %s19, 1
        %s179 = smul.addr %s176, 2
        %s180 = sadd.s32 %s178, %s179
        %s181 = smul.addr %s180, 4
        %s182 = scalar_lea.vmem %s1, %s181
      $region36: #{crnn_vgg_forward.24} parent=31 // pred_fallthru
        _
    $region32: #{crnn_vgg_forward.24} parent=5 // pred_fallthru
      _
  $region6: #{crnn_vgg_forward.24} parent=0 // loop_footer
    %s11 = sadd.s32 1, %s7
  $region7: #{crnn_vgg_forward.24} parent=0 // loop_footer_branch
    %6 = sbr.rel target = $region3
  $region8: #{crnn_vgg_forward.24} parent=0 // loop_exit
    _

// kernel: crnn_vgg_forward.22
$region0: #{crnn_vgg_forward.22}
  #allocation0 [shape = 'u32[]', space=smem, size = 0x4, offset = 0x4, fixed_abs, tag = 'smem constant byte address 0x4 - core index']
  #allocation1 [shape = 'u32[72,128]{1,0:T(1,128)}', space=vmem, size = 0x9000, scoped, tag = 'internal scratch']
  %s0 = inlined_call_operand.vmem [shape: bf16[3,3,32,32], index: 0, kind: input, shape index: {}]
  %s1 = inlined_call_operand.vmem [shape: f32[1,32], index: 1, kind: input, shape index: {}]
  %s2 = inlined_call_operand.vmem [shape: f32[1,32], index: 2, kind: input, shape index: {}]
  %s3 = inlined_call_operand.vmem [shape: bf16[2,6,6,32], index: 3, kind: input, shape index: {}, may-alias: {3,4,5}]
  %s4 = inlined_call_operand.vmem [shape: bf16[2,6,6,32], index: 4, kind: input, shape index: {}, may-alias: {3,4,5}]
  %s5 = inlined_call_operand.vmem [shape: bf16[2,6,6,32], index: 5, kind: input, shape index: {}, may-alias: {3,4,5}]
  %s6 = inlined_call_operand.vmem [shape: f32[2,4,4,32], index: 6, kind: output, shape index: {0}]
  %s7 = inlined_call_operand.vmem [shape: f32[1,32], index: 7, kind: output, shape index: {1}]
  %s8 = inlined_call_operand.vmem [shape: f32[1,32], index: 8, kind: output, shape index: {2}]
  %9 = xla_tuple %s6, %s7, %s8
  %s10 = sld [smem:[#allocation0]]
  $region77: #{crnn_vgg_forward.22} parent=0
    _
  %s12 = ssub.s32 1, %s10
  %s13 = scalar_select 0, %s12, %s10
  loop: start=0, step=1, limit=10
  $region2: #{crnn_vgg_forward.22} parent=0 // loop_pre_header
    _
  $region3: #{crnn_vgg_forward.22} parent=0 // loop_header
    %s15 = sphi 0, %s19
    %p16 = scmp.ge.s32.totalorder %s15, 10
    %s22 = sphi 0, %s34
    %s23 = sphi 0, %s30
    %s24 = sphi 0, %s22
    %s25 = sphi 0, %s23
    %s26 = sphi 0, %s24
    %s27 = sphi 0, %s25
    %s35 = sphi 0, %s35
    %s37 = sphi 0, %s35
    %s38 = sphi 0, %s37
    %s52 = sphi 0, %s38
    %s56 = sphi 0, %s56
    %s58 = sphi 0, %s56
    %s59 = sphi 0, %s58
    %s73 = sphi 0, %s59
    %s77 = sphi 0, %s77
    %s79 = sphi 0, %s77
    %s80 = sphi 0, %s79
    %s94 = sphi 0, %s80
    %s102 = sphi 0, %s104
    %s105 = sphi 0, %s102
    %s106 = sphi 0, %s105
    %s122 = sphi 0, %s106
    %s132 = sphi 0, %s134
    %s135 = sphi 0, %s132
    %s136 = sphi 0, %s135
    %s152 = sphi 0, %s136
    %s162 = sphi 0, %s164
    %s165 = sphi 0, %s162
    %s166 = sphi 0, %s165
    %s182 = sphi 0, %s166
    %s190 = sphi 0, %s192
    %s193 = sphi 0, %s190
    %s194 = sphi 0, %s193
    %s210 = sphi 0, %s194
    %s214 = sphi 0, %s214
    %s216 = sphi 0, %s214
    %s217 = sphi 0, %s216
    %s231 = sphi 0, %s217
    %s235 = sphi 0, %s235
    %s237 = sphi 0, %s235
    %s238 = sphi 0, %s237
    %s252 = sphi 0, %s238
  $region4: #{crnn_vgg_forward.22} parent=0 // loop_header_branch
    %18 = sbr.rel (%p16) target = $region8
  $region5: #{crnn_vgg_forward.22} parent=0 // loop_body
    %s20 = ssub.s32 %s15, 1
    %s21 = ssub.s32 %s15, 2
    %s28 = sadd.s32 1, %s23
    %p29 = scmp.ge.s32.totalorder %s28, 4
    %s30 = scalar_select %p29, 0, %s28
    %s31 = sadd.s32 1, %s22
    %s32 = scalar_select %p29, %s31, %s22
    %p33 = scmp.ge.s32.totalorder %s32, 2
    %s34 = scalar_select %p33, 0, %s32
    %s36 = sadd.s32 %s35, 1
    %p39 = scmp.eq.s32.totalorder %s15, 7
    %p40 = scmp.ne.s32.totalorder %s35, %s37
    %p41 = scmp.eq.s32.totalorder %s15, 0
    %p42 = por %p40, %p41
    %p43 = scmp.ne.s32.totalorder %s35, %s37
    %p44 = scmp.eq.s32.totalorder %s20, 7
    %p45 = por %p43, %p44
    %p46 = scmp.ne.s32.totalorder %s37, %s38
    %p47 = scmp.eq.s32.totalorder %s20, 0
    %p48 = por %p46, %p47
    %p49 = scmp.ne.s32.totalorder %s37, %s38
    %p50 = scmp.eq.s32.totalorder %s21, 7
    %p51 = por %p49, %p50
    %p53 = scmp.ne.s32.totalorder %s38, %s52
    %p54 = scmp.eq.s32.totalorder %s21, 0
    %p55 = por %p53, %p54
    %s57 = sadd.s32 %s56, 1
    %p60 = scmp.eq.s32.totalorder %s15, 7
    %p61 = scmp.ne.s32.totalorder %s56, %s58
    %p62 = scmp.eq.s32.totalorder %s15, 0
    %p63 = por %p61, %p62
    %p64 = scmp.ne.s32.totalorder %s56, %s58
    %p65 = scmp.eq.s32.totalorder %s20, 7
    %p66 = por %p64, %p65
    %p67 = scmp.ne.s32.totalorder %s58, %s59
    %p68 = scmp.eq.s32.totalorder %s20, 0
    %p69 = por %p67, %p68
    %p70 = scmp.ne.s32.totalorder %s58, %s59
    %p71 = scmp.eq.s32.totalorder %s21, 7
    %p72 = por %p70, %p71
    %p74 = scmp.ne.s32.totalorder %s59, %s73
    %p75 = scmp.eq.s32.totalorder %s21, 0
    %p76 = por %p74, %p75
    %s78 = sadd.s32 %s77, 1
    %p81 = scmp.eq.s32.totalorder %s15, 7
    %p82 = scmp.ne.s32.totalorder %s77, %s79
    %p83 = scmp.eq.s32.totalorder %s15, 0
    %p84 = por %p82, %p83
    %p85 = scmp.ne.s32.totalorder %s77, %s79
    %p86 = scmp.eq.s32.totalorder %s20, 7
    %p87 = por %p85, %p86
    %p88 = scmp.ne.s32.totalorder %s79, %s80
    %p89 = scmp.eq.s32.totalorder %s20, 0
    %p90 = por %p88, %p89
    %p91 = scmp.ne.s32.totalorder %s79, %s80
    %p92 = scmp.eq.s32.totalorder %s21, 7
    %p93 = por %p91, %p92
    %p95 = scmp.ne.s32.totalorder %s80, %s94
    %p96 = scmp.eq.s32.totalorder %s21, 0
    %p97 = por %p95, %p96
    %s98 = ssub.s32 %s22, %s34
    %s99 = ssub.s32 %s23, %s30
    %s100 = sor.u32 %s98, %s99
    %p101 = scmp.eq.s32.totalorder %s100, 0
    %s103 = sadd.s32 %s102, 1
    %s104 = scalar_select %p101, %s102, %s103
    %p107 = pneg %p101
    %p108 = scmp.eq.s32.totalorder %s15, 7
    %p109 = por %p107, %p108
    %p110 = scmp.ne.s32.totalorder %s102, %s105
    %p111 = scmp.eq.s32.totalorder %s15, 0
    %p112 = por %p110, %p111
    %p113 = scmp.ne.s32.totalorder %s102, %s105
    %p114 = scmp.eq.s32.totalorder %s20, 7
    %p115 = por %p113, %p114
    %p116 = scmp.ne.s32.totalorder %s105, %s106
    %p117 = scmp.eq.s32.totalorder %s20, 0
    %p118 = por %p116, %p117
    %p119 = scmp.ne.s32.totalorder %s105, %s106
    %p120 = scmp.eq.s32.totalorder %s21, 7
    %p121 = por %p119, %p120
    %p123 = scmp.ne.s32.totalorder %s106, %s122
    %p124 = scmp.eq.s32.totalorder %s21, 0
    %p125 = por %p123, %p124
    %s126 = sadd.s32 %s23, 1
    %s127 = sadd.s32 %s30, 1
    %s128 = ssub.s32 %s22, %s34
    %s129 = ssub.s32 %s126, %s127
    %s130 = sor.u32 %s128, %s129
    %p131 = scmp.eq.s32.totalorder %s130, 0
    %s133 = sadd.s32 %s132, 1
    %s134 = scalar_select %p131, %s132, %s133
    %p137 = pneg %p131
    %p138 = scmp.eq.s32.totalorder %s15, 7
    %p139 = por %p137, %p138
    %p140 = scmp.ne.s32.totalorder %s132, %s135
    %p141 = scmp.eq.s32.totalorder %s15, 0
    %p142 = por %p140, %p141
    %p143 = scmp.ne.s32.totalorder %s132, %s135
    %p144 = scmp.eq.s32.totalorder %s20, 7
    %p145 = por %p143, %p144
    %p146 = scmp.ne.s32.totalorder %s135, %s136
    %p147 = scmp.eq.s32.totalorder %s20, 0
    %p148 = por %p146, %p147
    %p149 = scmp.ne.s32.totalorder %s135, %s136
    %p150 = scmp.eq.s32.totalorder %s21, 7
    %p151 = por %p149, %p150
    %p153 = scmp.ne.s32.totalorder %s136, %s152
    %p154 = scmp.eq.s32.totalorder %s21, 0
    %p155 = por %p153, %p154
    %s156 = sadd.s32 %s23, 2
    %s157 = sadd.s32 %s30, 2
    %s158 = ssub.s32 %s22, %s34
    %s159 = ssub.s32 %s156, %s157
    %s160 = sor.u32 %s158, %s159
    %p161 = scmp.eq.s32.totalorder %s160, 0
    %s163 = sadd.s32 %s162, 1
    %s164 = scalar_select %p161, %s162, %s163
    %p167 = pneg %p161
    %p168 = scmp.eq.s32.totalorder %s15, 7
    %p169 = por %p167, %p168
    %p170 = scmp.ne.s32.totalorder %s162, %s165
    %p171 = scmp.eq.s32.totalorder %s15, 0
    %p172 = por %p170, %p171
    %p173 = scmp.ne.s32.totalorder %s162, %s165
    %p174 = scmp.eq.s32.totalorder %s20, 7
    %p175 = por %p173, %p174
    %p176 = scmp.ne.s32.totalorder %s165, %s166
    %p177 = scmp.eq.s32.totalorder %s20, 0
    %p178 = por %p176, %p177
    %p179 = scmp.ne.s32.totalorder %s165, %s166
    %p180 = scmp.eq.s32.totalorder %s21, 7
    %p181 = por %p179, %p180
    %p183 = scmp.ne.s32.totalorder %s166, %s182
    %p184 = scmp.eq.s32.totalorder %s21, 0
    %p185 = por %p183, %p184
    %s186 = ssub.s32 %s22, %s34
    %s187 = ssub.s32 %s23, %s30
    %s188 = sor.u32 %s186, %s187
    %p189 = scmp.eq.s32.totalorder %s188, 0
    %s191 = sadd.s32 %s190, 1
    %s192 = scalar_select %p189, %s190, %s191
    %p195 = pneg %p189
    %p196 = scmp.eq.s32.totalorder %s15, 7
    %p197 = por %p195, %p196
    %p198 = scmp.ne.s32.totalorder %s190, %s193
    %p199 = scmp.eq.s32.totalorder %s15, 0
    %p200 = por %p198, %p199
    %p201 = scmp.ne.s32.totalorder %s190, %s193
    %p202 = scmp.eq.s32.totalorder %s20, 7
    %p203 = por %p201, %p202
    %p204 = scmp.ne.s32.totalorder %s193, %s194
    %p205 = scmp.eq.s32.totalorder %s20, 0
    %p206 = por %p204, %p205
    %p207 = scmp.ne.s32.totalorder %s193, %s194
    %p208 = scmp.eq.s32.totalorder %s21, 7
    %p209 = por %p207, %p208
    %p211 = scmp.ne.s32.totalorder %s194, %s210
    %p212 = scmp.eq.s32.totalorder %s21, 0
    %p213 = por %p211, %p212
    %s215 = sadd.s32 %s214, 1
    %p218 = scmp.eq.s32.totalorder %s15, 7
    %p219 = scmp.ne.s32.totalorder %s214, %s216
    %p220 = scmp.eq.s32.totalorder %s15, 0
    %p221 = por %p219, %p220
    %p222 = scmp.ne.s32.totalorder %s214, %s216
    %p223 = scmp.eq.s32.totalorder %s20, 7
    %p224 = por %p222, %p223
    %p225 = scmp.ne.s32.totalorder %s216, %s217
    %p226 = scmp.eq.s32.totalorder %s20, 0
    %p227 = por %p225, %p226
    %p228 = scmp.ne.s32.totalorder %s216, %s217
    %p229 = scmp.eq.s32.totalorder %s21, 7
    %p230 = por %p228, %p229
    %p232 = scmp.ne.s32.totalorder %s217, %s231
    %p233 = scmp.eq.s32.totalorder %s21, 0
    %p234 = por %p232, %p233
    %s236 = sadd.s32 %s235, 1
    %p239 = scmp.eq.s32.totalorder %s15, 7
    %p240 = scmp.ne.s32.totalorder %s235, %s237
    %p241 = scmp.eq.s32.totalorder %s15, 0
    %p242 = por %p240, %p241
    %p243 = scmp.ne.s32.totalorder %s235, %s237
    %p244 = scmp.eq.s32.totalorder %s20, 7
    %p245 = por %p243, %p244
    %p246 = scmp.ne.s32.totalorder %s237, %s238
    %p247 = scmp.eq.s32.totalorder %s20, 0
    %p248 = por %p246, %p247
    %p249 = scmp.ne.s32.totalorder %s237, %s238
    %p250 = scmp.eq.s32.totalorder %s21, 7
    %p251 = por %p249, %p250
    %p253 = scmp.ne.s32.totalorder %s238, %s252
    %p254 = scmp.eq.s32.totalorder %s21, 0
    %p255 = por %p253, %p254
    %p256 = scmp.le.s32.totalorder 1, %s15
    %p257 = scmp.lt.s32.totalorder %s15, 9
    %p258 = pnand %p256, %p257
    %p259 = pneg %p258
    // Predicated region
    $region9: #{crnn_vgg_forward.22} parent=5 // pred_check
      _
    $region10: #{crnn_vgg_forward.22} parent=5 // pred_check_branch
      %261 = sbr.rel (%p258) target = $region12
    $region11: #{crnn_vgg_forward.22} parent=5 // pred_region
      %s262 = ssub.s32 %s15, 1
      // Predicated region
      $region13: #{crnn_vgg_forward.22} parent=11 // pred_check
        %p263 = pneg %p48
      $region14: #{crnn_vgg_forward.22} parent=11 // pred_check_branch
        %265 = sbr.rel (%p263) target = $region16
      $region15: #{crnn_vgg_forward.22} parent=11 // pred_region
        _
      $region16: #{crnn_vgg_forward.22} parent=11 // pred_fallthru
        _
      // Predicated region
      $region17: #{crnn_vgg_forward.22} parent=11 // pred_check
        %p266 = pneg %p69
      $region18: #{crnn_vgg_forward.22} parent=11 // pred_check_branch
        %268 = sbr.rel (%p266) target = $region20
      $region19: #{crnn_vgg_forward.22} parent=11 // pred_region
        _
      $region20: #{crnn_vgg_forward.22} parent=11 // pred_fallthru
        _
      // Predicated region
      $region21: #{crnn_vgg_forward.22} parent=11 // pred_check
        %p269 = pneg %p90
      $region22: #{crnn_vgg_forward.22} parent=11 // pred_check_branch
        %271 = sbr.rel (%p269) target = $region24
      $region23: #{crnn_vgg_forward.22} parent=11 // pred_region
        _
      $region24: #{crnn_vgg_forward.22} parent=11 // pred_fallthru
        _
    $region12: #{crnn_vgg_forward.22} parent=5 // pred_fallthru
      _
    %p272 = scmp.lt.s32.totalorder %s15, 8
    // Predicated region
    $region25: #{crnn_vgg_forward.22} parent=5 // pred_check
      %p273 = pneg %p272
    $region26: #{crnn_vgg_forward.22} parent=5 // pred_check_branch
      %275 = sbr.rel (%p273) target = $region28
    $region27: #{crnn_vgg_forward.22} parent=5 // pred_region
      // Predicated region
      $region29: #{crnn_vgg_forward.22} parent=27 // pred_check
        %p276 = pneg %p112
      $region30: #{crnn_vgg_forward.22} parent=27 // pred_check_branch
        %278 = sbr.rel (%p276) target = $region32
      $region31: #{crnn_vgg_forward.22} parent=27 // pred_region
        %p279 = scmp.lt.s32.totalorder %s22, 1
        %s280 = scalar_select %p279, %s22, 1
        %p281 = scmp.lt.s32.totalorder %s23, 5
        %s282 = scalar_select %p281, %s23, 5
        %s283 = smul.addr %s280, 6
        %s284 = sadd.s32 %s282, %s283
        %s285 = smul.addr %s284, 4
        %s286 = scalar_lea.vmem %s3, %s285
      $region32: #{crnn_vgg_forward.22} parent=27 // pred_fallthru
        _
      // Predicated region
      $region33: #{crnn_vgg_forward.22} parent=27 // pred_check
        %p287 = pneg %p142
      $region34: #{crnn_vgg_forward.22} parent=27 // pred_check_branch
        %289 = sbr.rel (%p287) target = $region36
      $region35: #{crnn_vgg_forward.22} parent=27 // pred_region
        %s290 = sadd.s32 %s23, 1
        %p291 = scmp.lt.s32.totalorder %s22, 1
        %s292 = scalar_select %p291, %s22, 1
        %p293 = scmp.lt.s32.totalorder %s290, 5
        %s294 = scalar_select %p293, %s290, 5
        %s295 = smul.addr %s292, 6
        %s296 = sadd.s32 %s294, %s295
        %s297 = smul.addr %s296, 4
        %s298 = scalar_lea.vmem %s4, %s297
        %s299 = sadd.s32 %s23, 1
      $region36: #{crnn_vgg_forward.22} parent=27 // pred_fallthru
        _
      // Predicated region
      $region37: #{crnn_vgg_forward.22} parent=27 // pred_check
        %p300 = pneg %p172
      $region38: #{crnn_vgg_forward.22} parent=27 // pred_check_branch
        %302 = sbr.rel (%p300) target = $region40
      $region39: #{crnn_vgg_forward.22} parent=27 // pred_region
        %s303 = sadd.s32 %s23, 2
        %p304 = scmp.lt.s32.totalorder %s22, 1
        %s305 = scalar_select %p304, %s22, 1
        %p306 = scmp.lt.s32.totalorder %s303, 5
        %s307 = scalar_select %p306, %s303, 5
        %s308 = smul.addr %s305, 6
        %s309 = sadd.s32 %s307, %s308
        %s310 = smul.addr %s309, 4
        %s311 = scalar_lea.vmem %s5, %s310
        %s312 = sadd.s32 %s23, 2
      $region40: #{crnn_vgg_forward.22} parent=27 // pred_fallthru
        _
    $region28: #{crnn_vgg_forward.22} parent=5 // pred_fallthru
      _
    %p313 = scmp.le.s32.totalorder 1, %s15
    %p314 = scmp.lt.s32.totalorder %s15, 9
    %p315 = pnand %p313, %p314
    %p316 = pneg %p315
    // Predicated region
    $region41: #{crnn_vgg_forward.22} parent=5 // pred_check
      _
    $region42: #{crnn_vgg_forward.22} parent=5 // pred_check_branch
      %318 = sbr.rel (%p315) target = $region44
    $region43: #{crnn_vgg_forward.22} parent=5 // pred_region
      %s319 = ssub.s32 %s15, 1
      %p320 = pneg %p48
      %p321 = pneg %p45
      %p322 = pneg %p69
      %p323 = pneg %p66
      %p324 = pneg %p90
      %p325 = pneg %p87
      %p326 = scmp.lt.s32.totalorder %s24, 1
      %s327 = scalar_select %p326, %s24, 1
      %p328 = scmp.lt.s32.totalorder %s25, 5
      %s329 = scalar_select %p328, %s25, 5
      %s330 = smul.addr %s327, 6
      %s331 = sadd.s32 %s329, %s330
      %s332 = smul.addr %s331, 4
      %s333 = scalar_lea.vmem %s3, %s332
      %p334 = pneg %p118
      %p335 = pneg %p115
      %s336 = sadd.s32 %s25, 1
      %p337 = scmp.lt.s32.totalorder %s24, 1
      %s338 = scalar_select %p337, %s24, 1
      %p339 = scmp.lt.s32.totalorder %s336, 5
      %s340 = scalar_select %p339, %s336, 5
      %s341 = smul.addr %s338, 6
      %s342 = sadd.s32 %s340, %s341
      %s343 = smul.addr %s342, 4
      %s344 = scalar_lea.vmem %s4, %s343
      %p345 = pneg %p148
      %p346 = pneg %p145
      %s347 = sadd.s32 %s25, 2
      %p348 = scmp.lt.s32.totalorder %s24, 1
      %s349 = scalar_select %p348, %s24, 1
      %p350 = scmp.lt.s32.totalorder %s347, 5
      %s351 = scalar_select %p350, %s347, 5
      %s352 = smul.addr %s349, 6
      %s353 = sadd.s32 %s351, %s352
      %s354 = smul.addr %s353, 4
      %s355 = scalar_lea.vmem %s5, %s354
      %p356 = pneg %p178
      %p357 = pneg %p175
      %p358 = pneg %p206
      %p359 = pneg %p203
      %p360 = scmp.lt.s32.totalorder %s24, 1
      %s361 = scalar_select %p360, %s24, 1
      %p362 = scmp.lt.s32.totalorder %s25, 3
      %s363 = scalar_select %p362, %s25, 3
      %s364 = smul.addr %s361, 4
      %s365 = sadd.s32 %s363, %s364
      %s366 = smul.addr %s365, 4
      %s367 = scalar_lea.vmem %s6, %s366
      %p368 = pneg %p227
      %p369 = pneg %p224
      %p370 = pneg %p248
      %p371 = pneg %p245
      %p372 = scmp.lt.s32.totalorder %s24, 1
      %s373 = scalar_select %p372, %s24, 1
      %p374 = scmp.lt.s32.totalorder %s25, 5
      %s375 = scalar_select %p374, %s25, 5
      %s376 = smul.addr %s373, 6
      %s377 = sadd.s32 %s375, %s376
      %s378 = smul.addr %s377, 4
      %s379 = scalar_lea.vmem %s3, %s378
      %s380 = sadd.s32 %s25, 1
      %p381 = scmp.lt.s32.totalorder %s24, 1
      %s382 = scalar_select %p381, %s24, 1
      %p383 = scmp.lt.s32.totalorder %s380, 5
      %s384 = scalar_select %p383, %s380, 5
      %s385 = smul.addr %s382, 6
      %s386 = sadd.s32 %s384, %s385
      %s387 = smul.addr %s386, 4
      %s388 = scalar_lea.vmem %s4, %s387
      %s389 = sadd.s32 %s25, 1
      %s390 = sadd.s32 %s25, 2
      %p391 = scmp.lt.s32.totalorder %s24, 1
      %s392 = scalar_select %p391, %s24, 1
      %p393 = scmp.lt.s32.totalorder %s390, 5
      %s394 = scalar_select %p393, %s390, 5
      %s395 = smul.addr %s392, 6
      %s396 = sadd.s32 %s394, %s395
      %s397 = smul.addr %s396, 4
      %s398 = scalar_lea.vmem %s5, %s397
      %s399 = sadd.s32 %s25, 2
      %p400 = scmp.lt.s32.totalorder %s24, 1
      %s401 = scalar_select %p400, %s24, 1
      %p402 = scmp.lt.s32.totalorder %s25, 3
      %s403 = scalar_select %p402, %s25, 3
      %s404 = smul.addr %s401, 4
      %s405 = sadd.s32 %s403, %s404
      %s406 = smul.addr %s405, 4
      %s407 = scalar_lea.vmem %s6, %s406
      %v409 = vld [vmem:[%s379] sm:$0x7]
      %v410 = vld [vmem:[%s0] sm:$0xf]
      %v411 = vld [vmem:[%s0 + $0x4] sm:$0xf]
      %v412 = vld [vmem:[%s0 + $0x8] sm:$0xf]
      %v413 = vld [vmem:[%s0 + $0xc] sm:$0xf]
      %s414 = scalar_lea.vmem %s0, 16
      %v415 = vld [vmem:[%s414] sm:$0xf]
      %v416 = vld [vmem:[%s414 + $0x4] sm:$0xf]
      %v417 = vld [vmem:[%s414 + $0x8] sm:$0xf]
      %v418 = vld [vmem:[%s414 + $0xc] sm:$0xf]
      %v420 = vunpack.c.l.b16 %v409
      %v421 = vpack.c.b16 %v420, %v420
      %v423 = vshrl.u32 %v421, 16
      %v425 = vshll.u32 %v421, 16
      %v427 = vrot.slane %v425, 1
      %v428 = vor.u32 %v423, %v427
      %v433 = vunpack.c.l.b16 %v415
      %v434 = vunpack.c.l.b16 %v416
      %v435 = vunpack.c.l.b16 %v417
      %v436 = vunpack.c.l.b16 %v418
      %v437 = vpack.c.b16 %v434, %v433
      %v438 = vpack.c.b16 %v436, %v435
      %vm441 = vcmask 261120
      %v443 = vsel %vm441, %v428, 0
      %445 = vmatpush.bf16.msra.mxu0 0
      %446 = vmatpush.bf16.msra.mxu0 0
      %447 = vmatpush.bf16.msra.mxu0 0
      %448 = vmatpush.bf16.msra.mxu0 0
      %449 = vmatpush.bf16.msra.mxu0 0
      %450 = vmatpush.bf16.msra.mxu0 0
      %451 = vmatpush.bf16.msra.mxu0 %v438
      %452 = vmatpush.bf16.msra.mxu0 %v437
      %453 = vmatmul.bf16.gmra.mxu0 %v443
      %v454 = vpop.f32.mrf.mxu0
      %v455 = vadd.f32 0.0, %v454
      %v456 = vpop.f32.mrf.mxu0
      %457 = vdwg.mxu0
      %v462 = vunpack.c.l.b16 %v410
      %v463 = vunpack.c.l.b16 %v411
      %v464 = vunpack.c.l.b16 %v412
      %v465 = vunpack.c.l.b16 %v413
      %v466 = vpack.c.b16 %v463, %v462
      %v467 = vpack.c.b16 %v465, %v464
      %v471 = vsel %vm441, %v409, 0
      %473 = vmatpush.bf16.msra.mxu0 0
      %474 = vmatpush.bf16.msra.mxu0 0
      %475 = vmatpush.bf16.msra.mxu0 0
      %476 = vmatpush.bf16.msra.mxu0 0
      %477 = vmatpush.bf16.msra.mxu0 0
      %478 = vmatpush.bf16.msra.mxu0 0
      %479 = vmatpush.bf16.msra.mxu0 %v467
      %480 = vmatpush.bf16.msra.mxu0 %v466
      %481 = vmatmul.bf16.gmra.mxu0 %v471
      %v482 = vpop.f32.mrf.mxu0
      %v483 = vadd.f32 %v455, %v482
      %v484 = vpop.f32.mrf.mxu0
      %485 = vdwg.mxu0
      %s486 = scalar_lea.vmem %s0, 32
      %v487 = vld [vmem:[%s486] sm:$0xf]
      %v488 = vld [vmem:[%s486 + $0x4] sm:$0xf]
      %v489 = vld [vmem:[%s486 + $0x8] sm:$0xf]
      %v490 = vld [vmem:[%s486 + $0xc] sm:$0xf]
      %v491 = vrot.slane %v421, 1
      %v496 = vunpack.c.l.b16 %v487
      %v497 = vunpack.c.l.b16 %v488
      %v498 = vunpack.c.l.b16 %v489
      %v499 = vunpack.c.l.b16 %v490
      %v500 = vpack.c.b16 %v497, %v496
      %v501 = vpack.c.b16 %v499, %v498
      %v505 = vsel %vm441, %v491, 0
      %507 = vmatpush.bf16.msra.mxu0 0
      %508 = vmatpush.bf16.msra.mxu0 0
      %509 = vmatpush.bf16.msra.mxu0 0
      %510 = vmatpush.bf16.msra.mxu0 0
      %511 = vmatpush.bf16.msra.mxu0 0
      %512 = vmatpush.bf16.msra.mxu0 0
      %513 = vmatpush.bf16.msra.mxu0 %v501
      %514 = vmatpush.bf16.msra.mxu0 %v500
      %515 = vmatmul.bf16.gmra.mxu0 %v505
      %v516 = vpop.f32.mrf.mxu0
      %v517 = vadd.f32 0.0, %v516
      %v518 = vpop.f32.mrf.mxu0
      %519 = vdwg.mxu0
      %v520 = vadd.f32 %v483, %v517
      %v521 = vld [vmem:[%s388] sm:$0x7]
      %s522 = scalar_lea.vmem %s0, 48
      %v523 = vld [vmem:[%s522] sm:$0xf]
      %v524 = vld [vmem:[%s522 + $0x4] sm:$0xf]
      %v525 = vld [vmem:[%s522 + $0x8] sm:$0xf]
      %v526 = vld [vmem:[%s522 + $0xc] sm:$0xf]
      %v531 = vunpack.c.l.b16 %v523
      %v532 = vunpack.c.l.b16 %v524
      %v533 = vunpack.c.l.b16 %v525
      %v534 = vunpack.c.l.b16 %v526
      %v535 = vpack.c.b16 %v532, %v531
      %v536 = vpack.c.b16 %v534, %v533
      %v540 = vsel %vm441, %v521, 0
      %542 = vmatpush.bf16.msra.mxu0 0
      %543 = vmatpush.bf16.msra.mxu0 0
      %544 = vmatpush.bf16.msra.mxu0 0
      %545 = vmatpush.bf16.msra.mxu0 0
      %546 = vmatpush.bf16.msra.mxu0 0
      %547 = vmatpush.bf16.msra.mxu0 0
      %548 = vmatpush.bf16.msra.mxu0 %v536
      %549 = vmatpush.bf16.msra.mxu0 %v535
      %550 = vmatmul.bf16.gmra.mxu0 %v540
      %v551 = vpop.f32.mrf.mxu0
      %v552 = vadd.f32 0.0, %v551
      %v553 = vpop.f32.mrf.mxu0
      %554 = vdwg.mxu0
      %v555 = vadd.f32 %v520, %v552
      %s556 = scalar_lea.vmem %s0, 64
      %v557 = vld [vmem:[%s556] sm:$0xf]
      %v558 = vld [vmem:[%s556 + $0x4] sm:$0xf]
      %v559 = vld [vmem:[%s556 + $0x8] sm:$0xf]
      %v560 = vld [vmem:[%s556 + $0xc] sm:$0xf]
      %v562 = vunpack.c.l.b16 %v521
      %v563 = vpack.c.b16 %v562, %v562
      %v565 = vshrl.u32 %v563, 16
      %v567 = vshll.u32 %v563, 16
      %v569 = vrot.slane %v567, 1
      %v570 = vor.u32 %v565, %v569
      %v575 = vunpack.c.l.b16 %v557
      %v576 = vunpack.c.l.b16 %v558
      %v577 = vunpack.c.l.b16 %v559
      %v578 = vunpack.c.l.b16 %v560
      %v579 = vpack.c.b16 %v576, %v575
      %v580 = vpack.c.b16 %v578, %v577
      %v584 = vsel %vm441, %v570, 0
      %586 = vmatpush.bf16.msra.mxu0 0
      %587 = vmatpush.bf16.msra.mxu0 0
      %588 = vmatpush.bf16.msra.mxu0 0
      %589 = vmatpush.bf16.msra.mxu0 0
      %590 = vmatpush.bf16.msra.mxu0 0
      %591 = vmatpush.bf16.msra.mxu0 0
      %592 = vmatpush.bf16.msra.mxu0 %v580
      %593 = vmatpush.bf16.msra.mxu0 %v579
      %594 = vmatmul.bf16.gmra.mxu0 %v584
      %v595 = vpop.f32.mrf.mxu0
      %v596 = vadd.f32 0.0, %v595
      %v597 = vpop.f32.mrf.mxu0
      %598 = vdwg.mxu0
      %v599 = vadd.f32 %v555, %v596
      %s600 = scalar_lea.vmem %s0, 80
      %v601 = vld [vmem:[%s600] sm:$0xf]
      %v602 = vld [vmem:[%s600 + $0x4] sm:$0xf]
      %v603 = vld [vmem:[%s600 + $0x8] sm:$0xf]
      %v604 = vld [vmem:[%s600 + $0xc] sm:$0xf]
      %v605 = vrot.slane %v563, 1
      %v610 = vunpack.c.l.b16 %v601
      %v611 = vunpack.c.l.b16 %v602
      %v612 = vunpack.c.l.b16 %v603
      %v613 = vunpack.c.l.b16 %v604
      %v614 = vpack.c.b16 %v611, %v610
      %v615 = vpack.c.b16 %v613, %v612
      %v619 = vsel %vm441, %v605, 0
      %621 = vmatpush.bf16.msra.mxu0 0
      %622 = vmatpush.bf16.msra.mxu0 0
      %623 = vmatpush.bf16.msra.mxu0 0
      %624 = vmatpush.bf16.msra.mxu0 0
      %625 = vmatpush.bf16.msra.mxu0 0
      %626 = vmatpush.bf16.msra.mxu0 0
      %627 = vmatpush.bf16.msra.mxu0 %v615
      %628 = vmatpush.bf16.msra.mxu0 %v614
      %629 = vmatmul.bf16.gmra.mxu0 %v619
      %v630 = vpop.f32.mrf.mxu0
      %v631 = vadd.f32 0.0, %v630
      %v632 = vpop.f32.mrf.mxu0
      %633 = vdwg.mxu0
      %v634 = vadd.f32 %v599, %v631
      %v635 = vld [vmem:[%s398] sm:$0x7]
      %s636 = scalar_lea.vmem %s0, 96
      %v637 = vld [vmem:[%s636] sm:$0xf]
      %v638 = vld [vmem:[%s636 + $0x4] sm:$0xf]
      %v639 = vld [vmem:[%s636 + $0x8] sm:$0xf]
      %v640 = vld [vmem:[%s636 + $0xc] sm:$0xf]
      %v645 = vunpack.c.l.b16 %v637
      %v646 = vunpack.c.l.b16 %v638
      %v647 = vunpack.c.l.b16 %v639
      %v648 = vunpack.c.l.b16 %v640
      %v649 = vpack.c.b16 %v646, %v645
      %v650 = vpack.c.b16 %v648, %v647
      %v654 = vsel %vm441, %v635, 0
      %656 = vmatpush.bf16.msra.mxu0 0
      %657 = vmatpush.bf16.msra.mxu0 0
      %658 = vmatpush.bf16.msra.mxu0 0
      %659 = vmatpush.bf16.msra.mxu0 0
      %660 = vmatpush.bf16.msra.mxu0 0
      %661 = vmatpush.bf16.msra.mxu0 0
      %662 = vmatpush.bf16.msra.mxu0 %v650
      %663 = vmatpush.bf16.msra.mxu0 %v649
      %664 = vmatmul.bf16.gmra.mxu0 %v654
      %v665 = vpop.f32.mrf.mxu0
      %v666 = vadd.f32 0.0, %v665
      %v667 = vpop.f32.mrf.mxu0
      %668 = vdwg.mxu0
      %v669 = vadd.f32 %v634, %v666
      %s670 = scalar_lea.vmem %s0, 112
      %v671 = vld [vmem:[%s670] sm:$0xf]
      %v672 = vld [vmem:[%s670 + $0x4] sm:$0xf]
      %v673 = vld [vmem:[%s670 + $0x8] sm:$0xf]
      %v674 = vld [vmem:[%s670 + $0xc] sm:$0xf]
      %v676 = vunpack.c.l.b16 %v635
      %v677 = vpack.c.b16 %v676, %v676
      %v679 = vshrl.u32 %v677, 16
      %v681 = vshll.u32 %v677, 16
      %v683 = vrot.slane %v681, 1
      %v684 = vor.u32 %v679, %v683
      %v689 = vunpack.c.l.b16 %v671
      %v690 = vunpack.c.l.b16 %v672
      %v691 = vunpack.c.l.b16 %v673
      %v692 = vunpack.c.l.b16 %v674
      %v693 = vpack.c.b16 %v690, %v689
      %v694 = vpack.c.b16 %v692, %v691
      %v698 = vsel %vm441, %v684, 0
      %700 = vmatpush.bf16.msra.mxu0 0
      %701 = vmatpush.bf16.msra.mxu0 0
      %702 = vmatpush.bf16.msra.mxu0 0
      %703 = vmatpush.bf16.msra.mxu0 0
      %704 = vmatpush.bf16.msra.mxu0 0
      %705 = vmatpush.bf16.msra.mxu0 0
      %706 = vmatpush.bf16.msra.mxu0 %v694
      %707 = vmatpush.bf16.msra.mxu0 %v693
      %708 = vmatmul.bf16.gmra.mxu0 %v698
      %v709 = vpop.f32.mrf.mxu0
      %v710 = vadd.f32 0.0, %v709
      %v711 = vpop.f32.mrf.mxu0
      %712 = vdwg.mxu0
      %v713 = vadd.f32 %v669, %v710
      %s714 = scalar_lea.vmem %s0, 128
      %v715 = vld [vmem:[%s714] sm:$0xf]
      %v716 = vld [vmem:[%s714 + $0x4] sm:$0xf]
      %v717 = vld [vmem:[%s714 + $0x8] sm:$0xf]
      %v718 = vld [vmem:[%s714 + $0xc] sm:$0xf]
      %v719 = vrot.slane %v677, 1
      %v724 = vunpack.c.l.b16 %v715
      %v725 = vunpack.c.l.b16 %v716
      %v726 = vunpack.c.l.b16 %v717
      %v727 = vunpack.c.l.b16 %v718
      %v728 = vpack.c.b16 %v725, %v724
      %v729 = vpack.c.b16 %v727, %v726
      %v733 = vsel %vm441, %v719, 0
      %735 = vmatpush.bf16.msra.mxu0 0
      %736 = vmatpush.bf16.msra.mxu0 0
      %737 = vmatpush.bf16.msra.mxu0 0
      %738 = vmatpush.bf16.msra.mxu0 0
      %739 = vmatpush.bf16.msra.mxu0 0
      %740 = vmatpush.bf16.msra.mxu0 0
      %741 = vmatpush.bf16.msra.mxu0 %v729
      %742 = vmatpush.bf16.msra.mxu0 %v728
      %743 = vmatmul.bf16.gmra.mxu0 %v733
      %v744 = vpop.f32.mrf.mxu0
      %v745 = vadd.f32 0.0, %v744
      %v746 = vpop.f32.mrf.mxu0
      %747 = vdwg.mxu0
      %v748 = vadd.f32 %v713, %v745
      %v749 = vld [vmem:[%s1] sm:$0x1]
      %v751 = vperm.slane %v749, 0
      %v753 = vmul.f32 %v748, %v751
      %v754 = vld [vmem:[%s2] sm:$0x1]
      %v756 = vperm.slane %v754, 0
      %v758 = vadd.f32 %v753, %v756
      %vm759 = vcmask 257024
      %760 = vst.msk [vmem:[%s407] sm:$0xf] %vm759, %v758
      %p761 = scmp.eq.s32.totalorder %s24, 0
      %p762 = scmp.eq.s32.totalorder %s25, 0
      %p763 = pnand %p761, %p762
      %p764 = pneg %p763
      // Predicated region
      $region45: #{crnn_vgg_forward.22} parent=43 // pred_check
        _
      $region46: #{crnn_vgg_forward.22} parent=43 // pred_check_branch
        %766 = sbr.rel (%p763) target = $region48
      $region47: #{crnn_vgg_forward.22} parent=43 // pred_region
        %vm767 = vcmask 253952
        %768 = vst.msk [vmem:[%s7] sm:$0x1] %vm767, 0.0
        %769 = vst.msk [vmem:[%s8] sm:$0x1] %vm767, 0.0
      $region48: #{crnn_vgg_forward.22} parent=43 // pred_fallthru
        _
      %v770 = vld [vmem:[%s7] sm:$0x1]
      %v771 = vsel %vm759, %v748, 0.0
      %v772 = vrot.slane %v771, 4
      %v773 = vadd.f32 %v771, %v772
      %v774 = vrot.slane %v773, 2
      %v775 = vadd.f32 %v773, %v774
      %v776 = vrot.slane %v775, 1
      %v777 = vadd.f32 %v775, %v776
      %v778 = vadd.f32 %v770, %v777
      %vm779 = vcmask 253952
      %780 = vst.msk [vmem:[%s7] sm:$0x1] %vm779, %v778
      %v781 = vld [vmem:[%s8] sm:$0x1]
      %v782 = vmul.f32 %v748, %v748
      %v783 = vsel %vm759, %v782, 0.0
      %v784 = vrot.slane %v783, 4
      %v785 = vadd.f32 %v783, %v784
      %v786 = vrot.slane %v785, 2
      %v787 = vadd.f32 %v785, %v786
      %v788 = vrot.slane %v787, 1
      %v789 = vadd.f32 %v787, %v788
      %v790 = vadd.f32 %v781, %v789
      %791 = vst.msk [vmem:[%s8] sm:$0x1] %vm779, %v790
      %p792 = scmp.lt.s32.totalorder %s24, 1
      %s793 = scalar_select %p792, %s24, 1
      %p794 = scmp.lt.s32.totalorder %s25, 3
      %s795 = scalar_select %p794, %s25, 3
      %s796 = smul.addr %s793, 4
      %s797 = sadd.s32 %s795, %s796
      %s798 = smul.addr %s797, 4
      %s799 = scalar_lea.vmem %s6, %s798
      // Predicated region
      $region49: #{crnn_vgg_forward.22} parent=43 // pred_check
        %p800 = pneg %p203
      $region50: #{crnn_vgg_forward.22} parent=43 // pred_check_branch
        %802 = sbr.rel (%p800) target = $region52
      $region51: #{crnn_vgg_forward.22} parent=43 // pred_region
        _
      $region52: #{crnn_vgg_forward.22} parent=43 // pred_fallthru
        _
      // Predicated region
      $region53: #{crnn_vgg_forward.22} parent=43 // pred_check
        %p803 = pneg %p224
      $region54: #{crnn_vgg_forward.22} parent=43 // pred_check_branch
        %805 = sbr.rel (%p803) target = $region56
      $region55: #{crnn_vgg_forward.22} parent=43 // pred_region
        _
      $region56: #{crnn_vgg_forward.22} parent=43 // pred_fallthru
        _
      // Predicated region
      $region57: #{crnn_vgg_forward.22} parent=43 // pred_check
        %p806 = pneg %p245
      $region58: #{crnn_vgg_forward.22} parent=43 // pred_check_branch
        %808 = sbr.rel (%p806) target = $region60
      $region59: #{crnn_vgg_forward.22} parent=43 // pred_region
        _
      $region60: #{crnn_vgg_forward.22} parent=43 // pred_fallthru
        _
      // Predicated region
      $region61: #{crnn_vgg_forward.22} parent=43 // pred_check
        %p809 = pneg %p224
      $region62: #{crnn_vgg_forward.22} parent=43 // pred_check_branch
        %811 = sbr.rel (%p809) target = $region64
      $region63: #{crnn_vgg_forward.22} parent=43 // pred_region
        _
      $region64: #{crnn_vgg_forward.22} parent=43 // pred_fallthru
        _
      // Predicated region
      $region65: #{crnn_vgg_forward.22} parent=43 // pred_check
        %p812 = pneg %p245
      $region66: #{crnn_vgg_forward.22} parent=43 // pred_check_branch
        %814 = sbr.rel (%p812) target = $region68
      $region67: #{crnn_vgg_forward.22} parent=43 // pred_region
        _
      $region68: #{crnn_vgg_forward.22} parent=43 // pred_fallthru
        _
    $region44: #{crnn_vgg_forward.22} parent=5 // pred_fallthru
      _
    %p815 = scmp.le.s32.totalorder 2, %s15
    // Predicated region
    $region69: #{crnn_vgg_forward.22} parent=5 // pred_check
      %p816 = pneg %p815
    $region70: #{crnn_vgg_forward.22} parent=5 // pred_check_branch
      %818 = sbr.rel (%p816) target = $region72
    $region71: #{crnn_vgg_forward.22} parent=5 // pred_region
      %s819 = ssub.s32 %s15, 2
      // Predicated region
      $region73: #{crnn_vgg_forward.22} parent=71 // pred_check
        %p820 = pneg %p209
      $region74: #{crnn_vgg_forward.22} parent=71 // pred_check_branch
        %822 = sbr.rel (%p820) target = $region76
      $region75: #{crnn_vgg_forward.22} parent=71 // pred_region
        %p823 = scmp.lt.s32.totalorder %s26, 1
        %s824 = scalar_select %p823, %s26, 1
        %p825 = scmp.lt.s32.totalorder %s27, 3
        %s826 = scalar_select %p825, %s27, 3
        %s827 = smul.addr %s824, 4
        %s828 = sadd.s32 %s826, %s827
        %s829 = smul.addr %s828, 4
        %s830 = scalar_lea.vmem %s6, %s829
      $region76: #{crnn_vgg_forward.22} parent=71 // pred_fallthru
        _
    $region72: #{crnn_vgg_forward.22} parent=5 // pred_fallthru
      _
  $region6: #{crnn_vgg_forward.22} parent=0 // loop_footer
    %s19 = sadd.s32 1, %s15
  $region7: #{crnn_vgg_forward.22} parent=0 // loop_footer_branch
    %14 = sbr.rel target = $region3
  $region8: #{crnn_vgg_forward.22} parent=0 // loop_exit
    _

// kernel: crnn_vgg_forward.25
$region0: #{crnn_vgg_forward.25}
  #allocation0 [shape = 'u32[]', space=smem, size = 0x4, offset = 0x4, fixed_abs, tag = 'smem constant byte address 0x4 - core index']
  #allocation1 [shape = 'u32[72,128]{1,0:T(1,128)}', space=vmem, size = 0x9000, scoped, tag = 'internal scratch']
  %s0 = inlined_call_operand.vmem [shape: bf16[2,2,32,32], index: 0, kind: input, shape index: {}]
  %s1 = inlined_call_operand.vmem [shape: f32[1,32], index: 1, kind: input, shape index: {}]
  %s2 = inlined_call_operand.vmem [shape: f32[1,32], index: 2, kind: input, shape index: {}]
  %s3 = inlined_call_operand.vmem [shape: bf16[2,2,4,32], index: 3, kind: input, shape index: {}, may-alias: {3,4}]
  %s4 = inlined_call_operand.vmem [shape: bf16[2,2,4,32], index: 4, kind: input, shape index: {}, may-alias: {3,4}]
  %s5 = inlined_call_operand.vmem [shape: f32[2,1,3,32], index: 5, kind: output, shape index: {}]
  %s6 = sld [smem:[#allocation0]]
  $region53: #{crnn_vgg_forward.25} parent=0
    _
  %s8 = ssub.s32 1, %s6
  %s9 = scalar_select 0, %s8, %s6
  loop: start=0, step=1, limit=4
  $region2: #{crnn_vgg_forward.25} parent=0 // loop_pre_header
    _
  $region3: #{crnn_vgg_forward.25} parent=0 // loop_header
    %s11 = sphi 0, %s15
    %p12 = scmp.ge.s32.totalorder %s11, 4
    %s18 = sphi 0, %s30
    %s19 = sphi 0, %s26
    %s20 = sphi 0, %s18
    %s21 = sphi 0, %s19
    %s22 = sphi 0, %s20
    %s23 = sphi 0, %s21
    %s31 = sphi 0, %s31
    %s33 = sphi 0, %s31
    %s34 = sphi 0, %s33
    %s48 = sphi 0, %s34
    %s52 = sphi 0, %s52
    %s54 = sphi 0, %s52
    %s55 = sphi 0, %s54
    %s69 = sphi 0, %s55
    %s73 = sphi 0, %s73
    %s75 = sphi 0, %s73
    %s76 = sphi 0, %s75
    %s90 = sphi 0, %s76
    %s98 = sphi 0, %s100
    %s101 = sphi 0, %s98
    %s102 = sphi 0, %s101
    %s118 = sphi 0, %s102
    %s128 = sphi 0, %s130
    %s131 = sphi 0, %s128
    %s132 = sphi 0, %s131
    %s148 = sphi 0, %s132
    %s156 = sphi 0, %s158
    %s159 = sphi 0, %s156
    %s160 = sphi 0, %s159
    %s176 = sphi 0, %s160
  $region4: #{crnn_vgg_forward.25} parent=0 // loop_header_branch
    %14 = sbr.rel (%p12) target = $region8
  $region5: #{crnn_vgg_forward.25} parent=0 // loop_body
    %s16 = ssub.s32 %s11, 1
    %s17 = ssub.s32 %s11, 2
    %s24 = sadd.s32 1, %s19
    %p25 = scmp.ge.s32.totalorder %s24, 1
    %s26 = scalar_select %p25, 0, %s24
    %s27 = sadd.s32 1, %s18
    %s28 = scalar_select %p25, %s27, %s18
    %p29 = scmp.ge.s32.totalorder %s28, 2
    %s30 = scalar_select %p29, 0, %s28
    %s32 = sadd.s32 %s31, 1
    %p35 = scmp.eq.s32.totalorder %s11, 1
    %p36 = scmp.ne.s32.totalorder %s31, %s33
    %p37 = scmp.eq.s32.totalorder %s11, 0
    %p38 = por %p36, %p37
    %p39 = scmp.ne.s32.totalorder %s31, %s33
    %p40 = scmp.eq.s32.totalorder %s16, 1
    %p41 = por %p39, %p40
    %p42 = scmp.ne.s32.totalorder %s33, %s34
    %p43 = scmp.eq.s32.totalorder %s16, 0
    %p44 = por %p42, %p43
    %p45 = scmp.ne.s32.totalorder %s33, %s34
    %p46 = scmp.eq.s32.totalorder %s17, 1
    %p47 = por %p45, %p46
    %p49 = scmp.ne.s32.totalorder %s34, %s48
    %p50 = scmp.eq.s32.totalorder %s17, 0
    %p51 = por %p49, %p50
    %s53 = sadd.s32 %s52, 1
    %p56 = scmp.eq.s32.totalorder %s11, 1
    %p57 = scmp.ne.s32.totalorder %s52, %s54
    %p58 = scmp.eq.s32.totalorder %s11, 0
    %p59 = por %p57, %p58
    %p60 = scmp.ne.s32.totalorder %s52, %s54
    %p61 = scmp.eq.s32.totalorder %s16, 1
    %p62 = por %p60, %p61
    %p63 = scmp.ne.s32.totalorder %s54, %s55
    %p64 = scmp.eq.s32.totalorder %s16, 0
    %p65 = por %p63, %p64
    %p66 = scmp.ne.s32.totalorder %s54, %s55
    %p67 = scmp.eq.s32.totalorder %s17, 1
    %p68 = por %p66, %p67
    %p70 = scmp.ne.s32.totalorder %s55, %s69
    %p71 = scmp.eq.s32.totalorder %s17, 0
    %p72 = por %p70, %p71
    %s74 = sadd.s32 %s73, 1
    %p77 = scmp.eq.s32.totalorder %s11, 1
    %p78 = scmp.ne.s32.totalorder %s73, %s75
    %p79 = scmp.eq.s32.totalorder %s11, 0
    %p80 = por %p78, %p79
    %p81 = scmp.ne.s32.totalorder %s73, %s75
    %p82 = scmp.eq.s32.totalorder %s16, 1
    %p83 = por %p81, %p82
    %p84 = scmp.ne.s32.totalorder %s75, %s76
    %p85 = scmp.eq.s32.totalorder %s16, 0
    %p86 = por %p84, %p85
    %p87 = scmp.ne.s32.totalorder %s75, %s76
    %p88 = scmp.eq.s32.totalorder %s17, 1
    %p89 = por %p87, %p88
    %p91 = scmp.ne.s32.totalorder %s76, %s90
    %p92 = scmp.eq.s32.totalorder %s17, 0
    %p93 = por %p91, %p92
    %s94 = ssub.s32 %s18, %s30
    %s95 = ssub.s32 %s19, %s26
    %s96 = sor.u32 %s94, %s95
    %p97 = scmp.eq.s32.totalorder %s96, 0
    %s99 = sadd.s32 %s98, 1
    %s100 = scalar_select %p97, %s98, %s99
    %p103 = pneg %p97
    %p104 = scmp.eq.s32.totalorder %s11, 1
    %p105 = por %p103, %p104
    %p106 = scmp.ne.s32.totalorder %s98, %s101
    %p107 = scmp.eq.s32.totalorder %s11, 0
    %p108 = por %p106, %p107
    %p109 = scmp.ne.s32.totalorder %s98, %s101
    %p110 = scmp.eq.s32.totalorder %s16, 1
    %p111 = por %p109, %p110
    %p112 = scmp.ne.s32.totalorder %s101, %s102
    %p113 = scmp.eq.s32.totalorder %s16, 0
    %p114 = por %p112, %p113
    %p115 = scmp.ne.s32.totalorder %s101, %s102
    %p116 = scmp.eq.s32.totalorder %s17, 1
    %p117 = por %p115, %p116
    %p119 = scmp.ne.s32.totalorder %s102, %s118
    %p120 = scmp.eq.s32.totalorder %s17, 0
    %p121 = por %p119, %p120
    %s122 = sadd.s32 %s19, 1
    %s123 = sadd.s32 %s26, 1
    %s124 = ssub.s32 %s18, %s30
    %s125 = ssub.s32 %s122, %s123
    %s126 = sor.u32 %s124, %s125
    %p127 = scmp.eq.s32.totalorder %s126, 0
    %s129 = sadd.s32 %s128, 1
    %s130 = scalar_select %p127, %s128, %s129
    %p133 = pneg %p127
    %p134 = scmp.eq.s32.totalorder %s11, 1
    %p135 = por %p133, %p134
    %p136 = scmp.ne.s32.totalorder %s128, %s131
    %p137 = scmp.eq.s32.totalorder %s11, 0
    %p138 = por %p136, %p137
    %p139 = scmp.ne.s32.totalorder %s128, %s131
    %p140 = scmp.eq.s32.totalorder %s16, 1
    %p141 = por %p139, %p140
    %p142 = scmp.ne.s32.totalorder %s131, %s132
    %p143 = scmp.eq.s32.totalorder %s16, 0
    %p144 = por %p142, %p143
    %p145 = scmp.ne.s32.totalorder %s131, %s132
    %p146 = scmp.eq.s32.totalorder %s17, 1
    %p147 = por %p145, %p146
    %p149 = scmp.ne.s32.totalorder %s132, %s148
    %p150 = scmp.eq.s32.totalorder %s17, 0
    %p151 = por %p149, %p150
    %s152 = ssub.s32 %s18, %s30
    %s153 = ssub.s32 %s19, %s26
    %s154 = sor.u32 %s152, %s153
    %p155 = scmp.eq.s32.totalorder %s154, 0
    %s157 = sadd.s32 %s156, 1
    %s158 = scalar_select %p155, %s156, %s157
    %p161 = pneg %p155
    %p162 = scmp.eq.s32.totalorder %s11, 1
    %p163 = por %p161, %p162
    %p164 = scmp.ne.s32.totalorder %s156, %s159
    %p165 = scmp.eq.s32.totalorder %s11, 0
    %p166 = por %p164, %p165
    %p167 = scmp.ne.s32.totalorder %s156, %s159
    %p168 = scmp.eq.s32.totalorder %s16, 1
    %p169 = por %p167, %p168
    %p170 = scmp.ne.s32.totalorder %s159, %s160
    %p171 = scmp.eq.s32.totalorder %s16, 0
    %p172 = por %p170, %p171
    %p173 = scmp.ne.s32.totalorder %s159, %s160
    %p174 = scmp.eq.s32.totalorder %s17, 1
    %p175 = por %p173, %p174
    %p177 = scmp.ne.s32.totalorder %s160, %s176
    %p178 = scmp.eq.s32.totalorder %s17, 0
    %p179 = por %p177, %p178
    %p180 = scmp.le.s32.totalorder 1, %s11
    %p181 = scmp.lt.s32.totalorder %s11, 3
    %p182 = pnand %p180, %p181
    %p183 = pneg %p182
    // Predicated region
    $region9: #{crnn_vgg_forward.25} parent=5 // pred_check
      _
    $region10: #{crnn_vgg_forward.25} parent=5 // pred_check_branch
      %185 = sbr.rel (%p182) target = $region12
    $region11: #{crnn_vgg_forward.25} parent=5 // pred_region
      %s186 = ssub.s32 %s11, 1
      // Predicated region
      $region13: #{crnn_vgg_forward.25} parent=11 // pred_check
        %p187 = pneg %p44
      $region14: #{crnn_vgg_forward.25} parent=11 // pred_check_branch
        %189 = sbr.rel (%p187) target = $region16
      $region15: #{crnn_vgg_forward.25} parent=11 // pred_region
        _
      $region16: #{crnn_vgg_forward.25} parent=11 // pred_fallthru
        _
      // Predicated region
      $region17: #{crnn_vgg_forward.25} parent=11 // pred_check
        %p190 = pneg %p65
      $region18: #{crnn_vgg_forward.25} parent=11 // pred_check_branch
        %192 = sbr.rel (%p190) target = $region20
      $region19: #{crnn_vgg_forward.25} parent=11 // pred_region
        _
      $region20: #{crnn_vgg_forward.25} parent=11 // pred_fallthru
        _
      // Predicated region
      $region21: #{crnn_vgg_forward.25} parent=11 // pred_check
        %p193 = pneg %p86
      $region22: #{crnn_vgg_forward.25} parent=11 // pred_check_branch
        %195 = sbr.rel (%p193) target = $region24
      $region23: #{crnn_vgg_forward.25} parent=11 // pred_region
        _
      $region24: #{crnn_vgg_forward.25} parent=11 // pred_fallthru
        _
    $region12: #{crnn_vgg_forward.25} parent=5 // pred_fallthru
      _
    %p196 = scmp.lt.s32.totalorder %s11, 2
    // Predicated region
    $region25: #{crnn_vgg_forward.25} parent=5 // pred_check
      %p197 = pneg %p196
    $region26: #{crnn_vgg_forward.25} parent=5 // pred_check_branch
      %199 = sbr.rel (%p197) target = $region28
    $region27: #{crnn_vgg_forward.25} parent=5 // pred_region
      // Predicated region
      $region29: #{crnn_vgg_forward.25} parent=27 // pred_check
        %p200 = pneg %p108
      $region30: #{crnn_vgg_forward.25} parent=27 // pred_check_branch
        %202 = sbr.rel (%p200) target = $region32
      $region31: #{crnn_vgg_forward.25} parent=27 // pred_region
        %p203 = scmp.lt.s32.totalorder %s18, 1
        %s204 = scalar_select %p203, %s18, 1
        %p205 = scmp.lt.s32.totalorder %s19, 1
        %s206 = scalar_select %p205, %s19, 1
        %s207 = smul.addr %s204, 2
        %s208 = sadd.s32 %s206, %s207
        %s209 = smul.addr %s208, 2
        %s210 = scalar_lea.vmem %s3, %s209
      $region32: #{crnn_vgg_forward.25} parent=27 // pred_fallthru
        _
      // Predicated region
      $region33: #{crnn_vgg_forward.25} parent=27 // pred_check
        %p211 = pneg %p138
      $region34: #{crnn_vgg_forward.25} parent=27 // pred_check_branch
        %213 = sbr.rel (%p211) target = $region36
      $region35: #{crnn_vgg_forward.25} parent=27 // pred_region
        %s214 = sadd.s32 %s19, 1
        %p215 = scmp.lt.s32.totalorder %s18, 1
        %s216 = scalar_select %p215, %s18, 1
        %p217 = scmp.lt.s32.totalorder %s214, 1
        %s218 = scalar_select %p217, %s214, 1
        %s219 = smul.addr %s216, 2
        %s220 = sadd.s32 %s218, %s219
        %s221 = smul.addr %s220, 2
        %s222 = scalar_lea.vmem %s4, %s221
        %s223 = sadd.s32 %s19, 1
      $region36: #{crnn_vgg_forward.25} parent=27 // pred_fallthru
        _
    $region28: #{crnn_vgg_forward.25} parent=5 // pred_fallthru
      _
    %p224 = scmp.le.s32.totalorder 1, %s11
    %p225 = scmp.lt.s32.totalorder %s11, 3
    %p226 = pnand %p224, %p225
    %p227 = pneg %p226
    // Predicated region
    $region37: #{crnn_vgg_forward.25} parent=5 // pred_check
      _
    $region38: #{crnn_vgg_forward.25} parent=5 // pred_check_branch
      %229 = sbr.rel (%p226) target = $region40
    $region39: #{crnn_vgg_forward.25} parent=5 // pred_region
      %s230 = ssub.s32 %s11, 1
      %p231 = pneg %p44
      %p232 = pneg %p41
      %p233 = pneg %p65
      %p234 = pneg %p62
      %p235 = pneg %p86
      %p236 = pneg %p83
      %p237 = scmp.lt.s32.totalorder %s20, 1
      %s238 = scalar_select %p237, %s20, 1
      %p239 = scmp.lt.s32.totalorder %s21, 1
      %s240 = scalar_select %p239, %s21, 1
      %s241 = smul.addr %s238, 2
      %s242 = sadd.s32 %s240, %s241
      %s243 = smul.addr %s242, 2
      %s244 = scalar_lea.vmem %s3, %s243
      %p245 = pneg %p114
      %p246 = pneg %p111
      %s247 = sadd.s32 %s21, 1
      %p248 = scmp.lt.s32.totalorder %s20, 1
      %s249 = scalar_select %p248, %s20, 1
      %p250 = scmp.lt.s32.totalorder %s247, 1
      %s251 = scalar_select %p250, %s247, 1
      %s252 = smul.addr %s249, 2
      %s253 = sadd.s32 %s251, %s252
      %s254 = smul.addr %s253, 2
      %s255 = scalar_lea.vmem %s4, %s254
      %p256 = pneg %p144
      %p257 = pneg %p141
      %p258 = pneg %p172
      %p259 = pneg %p169
      %p260 = scmp.lt.s32.totalorder %s20, 1
      %s261 = scalar_select %p260, %s20, 1
      %p262 = scmp.lt.s32.totalorder %s21, 0
      %s263 = scalar_select %p262, %s21, 0
      %s264 = sadd.s32 %s263, %s261
      %s265 = smul.addr %s264, 4
      %s266 = scalar_lea.vmem %s5, %s265
      %p267 = scmp.lt.s32.totalorder %s20, 1
      %s268 = scalar_select %p267, %s20, 1
      %p269 = scmp.lt.s32.totalorder %s21, 1
      %s270 = scalar_select %p269, %s21, 1
      %s271 = smul.addr %s268, 2
      %s272 = sadd.s32 %s270, %s271
      %s273 = smul.addr %s272, 2
      %s274 = scalar_lea.vmem %s3, %s273
      %s275 = sadd.s32 %s21, 1
      %p276 = scmp.lt.s32.totalorder %s20, 1
      %s277 = scalar_select %p276, %s20, 1
      %p278 = scmp.lt.s32.totalorder %s275, 1
      %s279 = scalar_select %p278, %s275, 1
      %s280 = smul.addr %s277, 2
      %s281 = sadd.s32 %s279, %s280
      %s282 = smul.addr %s281, 2
      %s283 = scalar_lea.vmem %s4, %s282
      %s284 = sadd.s32 %s21, 1
      %p285 = scmp.lt.s32.totalorder %s20, 1
      %s286 = scalar_select %p285, %s20, 1
      %p287 = scmp.lt.s32.totalorder %s21, 0
      %s288 = scalar_select %p287, %s21, 0
      %s289 = sadd.s32 %s288, %s286
      %s290 = smul.addr %s289, 4
      %s291 = scalar_lea.vmem %s5, %s290
      %v293 = vld [vmem:[%s274] sm:$0x3]
      %v294 = vld [vmem:[%s0] sm:$0xf]
      %v295 = vld [vmem:[%s0 + $0x4] sm:$0xf]
      %v296 = vld [vmem:[%s0 + $0x8] sm:$0xf]
      %v297 = vld [vmem:[%s0 + $0xc] sm:$0xf]
      %s298 = scalar_lea.vmem %s0, 16
      %v299 = vld [vmem:[%s298] sm:$0xf]
      %v300 = vld [vmem:[%s298 + $0x4] sm:$0xf]
      %v301 = vld [vmem:[%s298 + $0x8] sm:$0xf]
      %v302 = vld [vmem:[%s298 + $0xc] sm:$0xf]
      %304 = vst [vmem:[#allocation1] ss:$4 sm:$0xff] %v293
      %v305 = vld.sshfl [vmem:[#allocation1] sm:$0xff pattern:$0x73625140]
      %v306 = vshrl.u32 %v305, 16
      %v308 = vshll.u32 %v305, 16
      %v310 = vrot.slane %v308, 1
      %v311 = vor.u32 %v306, %v310
      %v316 = vunpack.c.l.b16 %v299
      %v317 = vunpack.c.l.b16 %v300
      %v318 = vunpack.c.l.b16 %v301
      %v319 = vunpack.c.l.b16 %v302
      %v320 = vpack.c.b16 %v317, %v316
      %v321 = vpack.c.b16 %v319, %v318
      %vm324 = vcmask 261120
      %v326 = vsel %vm324, %v311, 0
      %328 = vmatpush.bf16.msra.mxu0 0
      %329 = vmatpush.bf16.msra.mxu0 0
      %330 = vmatpush.bf16.msra.mxu0 0
      %331 = vmatpush.bf16.msra.mxu0 0
      %332 = vmatpush.bf16.msra.mxu0 0
      %333 = vmatpush.bf16.msra.mxu0 0
      %334 = vmatpush.bf16.msra.mxu0 %v321
      %335 = vmatpush.bf16.msra.mxu0 %v320
      %336 = vmatmul.bf16.gmra.mxu0 %v326
      %v337 = vpop.f32.mrf.mxu0
      %v338 = vadd.f32 0.0, %v337
      %v339 = vpop.f32.mrf.mxu0
      %340 = vdwg.mxu0
      %v345 = vunpack.c.l.b16 %v294
      %v346 = vunpack.c.l.b16 %v295
      %v347 = vunpack.c.l.b16 %v296
      %v348 = vunpack.c.l.b16 %v297
      %v349 = vpack.c.b16 %v346, %v345
      %v350 = vpack.c.b16 %v348, %v347
      %v353 = vsel %vm324, %v293, 0
      %355 = vmatpush.bf16.msra.mxu0 0
      %356 = vmatpush.bf16.msra.mxu0 0
      %357 = vmatpush.bf16.msra.mxu0 0
      %358 = vmatpush.bf16.msra.mxu0 0
      %359 = vmatpush.bf16.msra.mxu0 0
      %360 = vmatpush.bf16.msra.mxu0 0
      %361 = vmatpush.bf16.msra.mxu0 %v350
      %362 = vmatpush.bf16.msra.mxu0 %v349
      %363 = vmatmul.bf16.gmra.mxu0 %v353
      %v364 = vpop.f32.mrf.mxu0
      %v365 = vadd.f32 %v338, %v364
      %v366 = vpop.f32.mrf.mxu0
      %367 = vdwg.mxu0
      %v368 = vld [vmem:[%s283] sm:$0x3]
      %s369 = scalar_lea.vmem %s0, 32
      %v370 = vld [vmem:[%s369] sm:$0xf]
      %v371 = vld [vmem:[%s369 + $0x4] sm:$0xf]
      %v372 = vld [vmem:[%s369 + $0x8] sm:$0xf]
      %v373 = vld [vmem:[%s369 + $0xc] sm:$0xf]
      %v378 = vunpack.c.l.b16 %v370
      %v379 = vunpack.c.l.b16 %v371
      %v380 = vunpack.c.l.b16 %v372
      %v381 = vunpack.c.l.b16 %v373
      %v382 = vpack.c.b16 %v379, %v378
      %v383 = vpack.c.b16 %v381, %v380
      %v387 = vsel %vm324, %v368, 0
      %389 = vmatpush.bf16.msra.mxu0 0
      %390 = vmatpush.bf16.msra.mxu0 0
      %391 = vmatpush.bf16.msra.mxu0 0
      %392 = vmatpush.bf16.msra.mxu0 0
      %393 = vmatpush.bf16.msra.mxu0 0
      %394 = vmatpush.bf16.msra.mxu0 0
      %395 = vmatpush.bf16.msra.mxu0 %v383
      %396 = vmatpush.bf16.msra.mxu0 %v382
      %397 = vmatmul.bf16.gmra.mxu0 %v387
      %v398 = vpop.f32.mrf.mxu0
      %v399 = vadd.f32 0.0, %v398
      %v400 = vpop.f32.mrf.mxu0
      %401 = vdwg.mxu0
      %v402 = vadd.f32 %v365, %v399
      %s403 = scalar_lea.vmem %s0, 48
      %v404 = vld [vmem:[%s403] sm:$0xf]
      %v405 = vld [vmem:[%s403 + $0x4] sm:$0xf]
      %v406 = vld [vmem:[%s403 + $0x8] sm:$0xf]
      %v407 = vld [vmem:[%s403 + $0xc] sm:$0xf]
      %408 = vst [vmem:[#allocation1] ss:$4 sm:$0xff] %v368
      %v409 = vld.sshfl [vmem:[#allocation1] sm:$0xff pattern:$0x73625140]
      %v410 = vshrl.u32 %v409, 16
      %v412 = vshll.u32 %v409, 16
      %v414 = vrot.slane %v412, 1
      %v415 = vor.u32 %v410, %v414
      %v420 = vunpack.c.l.b16 %v404
      %v421 = vunpack.c.l.b16 %v405
      %v422 = vunpack.c.l.b16 %v406
      %v423 = vunpack.c.l.b16 %v407
      %v424 = vpack.c.b16 %v421, %v420
      %v425 = vpack.c.b16 %v423, %v422
      %v429 = vsel %vm324, %v415, 0
      %431 = vmatpush.bf16.msra.mxu0 0
      %432 = vmatpush.bf16.msra.mxu0 0
      %433 = vmatpush.bf16.msra.mxu0 0
      %434 = vmatpush.bf16.msra.mxu0 0
      %435 = vmatpush.bf16.msra.mxu0 0
      %436 = vmatpush.bf16.msra.mxu0 0
      %437 = vmatpush.bf16.msra.mxu0 %v425
      %438 = vmatpush.bf16.msra.mxu0 %v424
      %439 = vmatmul.bf16.gmra.mxu0 %v429
      %v440 = vpop.f32.mrf.mxu0
      %v441 = vadd.f32 0.0, %v440
      %v442 = vpop.f32.mrf.mxu0
      %443 = vdwg.mxu0
      %v444 = vadd.f32 %v402, %v441
      %v445 = vld [vmem:[%s1] sm:$0x1]
      %v447 = vperm.slane %v445, 0
      %v449 = vmul.f32 %v444, %v447
      %v450 = vld [vmem:[%s2] sm:$0x1]
      %v452 = vperm.slane %v450, 0
      %v454 = vadd.f32 %v449, %v452
      %v455 = vmax.f32 %v454, 0.0
      %vm456 = vcmask 256000
      %457 = vst.msk [vmem:[%s291] sm:$0x7] %vm456, %v455
      %p458 = scmp.lt.s32.totalorder %s20, 1
      %s459 = scalar_select %p458, %s20, 1
      %p460 = scmp.lt.s32.totalorder %s21, 0
      %s461 = scalar_select %p460, %s21, 0
      %s462 = sadd.s32 %s461, %s459
      %s463 = smul.addr %s462, 4
      %s464 = scalar_lea.vmem %s5, %s463
      // Predicated region
      $region41: #{crnn_vgg_forward.25} parent=39 // pred_check
        %p465 = pneg %p169
      $region42: #{crnn_vgg_forward.25} parent=39 // pred_check_branch
        %467 = sbr.rel (%p465) target = $region44
      $region43: #{crnn_vgg_forward.25} parent=39 // pred_region
        _
      $region44: #{crnn_vgg_forward.25} parent=39 // pred_fallthru
        _
    $region40: #{crnn_vgg_forward.25} parent=5 // pred_fallthru
      _
    %p468 = scmp.le.s32.totalorder 2, %s11
    // Predicated region
    $region45: #{crnn_vgg_forward.25} parent=5 // pred_check
      %p469 = pneg %p468
    $region46: #{crnn_vgg_forward.25} parent=5 // pred_check_branch
      %471 = sbr.rel (%p469) target = $region48
    $region47: #{crnn_vgg_forward.25} parent=5 // pred_region
      %s472 = ssub.s32 %s11, 2
      // Predicated region
      $region49: #{crnn_vgg_forward.25} parent=47 // pred_check
        %p473 = pneg %p175
      $region50: #{crnn_vgg_forward.25} parent=47 // pred_check_branch
        %475 = sbr.rel (%p473) target = $region52
      $region51: #{crnn_vgg_forward.25} parent=47 // pred_region
        %p476 = scmp.lt.s32.totalorder %s22, 1
        %s477 = scalar_select %p476, %s22, 1
        %p478 = scmp.lt.s32.totalorder %s23, 0
        %s479 = scalar_select %p478, %s23, 0
        %s480 = sadd.s32 %s479, %s477
        %s481 = smul.addr %s480, 4
        %s482 = scalar_lea.vmem %s5, %s481
      $region52: #{crnn_vgg_forward.25} parent=47 // pred_fallthru
        _
    $region48: #{crnn_vgg_forward.25} parent=5 // pred_fallthru
      _
  $region6: #{crnn_vgg_forward.25} parent=0 // loop_footer
    %s15 = sadd.s32 1, %s11
  $region7: #{crnn_vgg_forward.25} parent=0 // loop_footer_branch
    %10 = sbr.rel target = $region3
  $region8: #{crnn_vgg_forward.25} parent=0 // loop_exit
    _

</llo_original>
